<compile_context>
chip_gen: v7x
topology: tpu7x:2x2x1
jax: 0.10.0
libtpu: 0.0.40
codegen_flags: <defaults>
</compile_context>

<pallas_src>
import math

import jax
import jax.numpy as jnp
import numpy as np
from jax.experimental import pallas as pl
from jax.experimental.pallas import tpu as pltpu

_VMEM = pl.BlockSpec(memory_space=pltpu.MemorySpace.VMEM)


# --------------------------------------------------------------------------
# Fused forward kernel (built per static config via closure)
# --------------------------------------------------------------------------
def _make_fused_kernel(T, B, D_in, H, n1, n2):
    """Returns a kernel computing:  x -> rnn1 -> fc1 -> fc2 -> rnn2 -> y.

    Kernel ref order:
      x (T,B,D_in),
      rnn1 layers  (w_ih (D,4H), w_hh (H,4H), bias (1,4H)) * n1,
      fc1_w (T*H, target), fc1_b (1, target),
      fc2_w (target, T*H), fc2_b (1, T*H),
      rnn2 layers  (w_ih, w_hh, bias) * n2,
      y (T,B,D_in)  [output]
    """

    def kernel(*refs):
        it = iter(refs)
        x_ref = next(it)
        rnn1 = [(next(it), next(it), next(it)) for _ in range(n1)]
        fc1_w_ref = next(it)
        fc1_b_ref = next(it)
        fc2_w_ref = next(it)
        fc2_b_ref = next(it)
        rnn2 = [(next(it), next(it), next(it)) for _ in range(n2)]
        y_ref = next(it)

        def run_lstm_stack(xs, layers):
            # xs: Python list of T arrays, each (B, D_layer), f32.
            for wih_ref, whh_ref, b_ref in layers:
                wih = wih_ref[...]                    # (D, 4H_l)
                whh = whh_ref[...]                    # (H_l, 4H_l)
                hl = whh.shape[0]
                # Bias broadcast hoisted: materialized once per layer.
                bb = jnp.broadcast_to(b_ref[...], (B, 4 * hl)).astype(jnp.float32)
                # Hoisted input projection for every timestep: off the serial
                # h->h chain; with the loop fully unrolled the scheduler can
                # overlap these MXU pushes with the recurrence.
                proj = [
                    jnp.dot(x_t.astype(wih.dtype), wih,
                            preferred_element_type=jnp.float32) + bb
                    for x_t in xs
                ]
                h = jnp.zeros((B, hl), jnp.float32)
                c = jnp.zeros((B, hl), jnp.float32)
                ys = []
                for t in range(T):                    # fully unrolled (T static)
                    gates = proj[t] + jnp.dot(
                        h.astype(whh.dtype), whh,
                        preferred_element_type=jnp.float32)   # (B, 4H_l)
                    # Sub-128-lane gate slices relayout via XLU (accepted: XLU
                    # has slack and keeping a single (H,4H) matmul per step
                    # keeps one MXU push on the recurrent chain).
                    i = jax.nn.sigmoid(gates[:, 0:hl])
                    f = jax.nn.sigmoid(gates[:, hl:2 * hl])
                    g = jnp.tanh(gates[:, 2 * hl:3 * hl])
                    o = jax.nn.sigmoid(gates[:, 3 * hl:4 * hl])
                    c = f * c + i * g
                    h = o * jnp.tanh(c)
                    ys.append(h)
                xs = ys
            return xs

        # ---- encoder LSTM stack -------------------------------------------
        xs = [x_ref[t] for t in range(T)]             # T x (B, D_in)
        h1 = run_lstm_stack(xs, rnn1)                 # T x (B, H)

        # ---- fc1 (on the batch-first flattening of the rnn1 outputs) ------
        # flat[b] = concat_t h1[t][b]; enc = flat @ W1 + b1 computed as a sum
        # over aligned 32-row blocks of W1 (no 256-lane concat in-kernel).
        w1 = fc1_w_ref[...]                           # (T*H, target)
        enc = jnp.broadcast_to(fc1_b_ref[...],
                               (B, w1.shape[1])).astype(jnp.float32)
        for t in range(T):
            enc = enc + jnp.dot(h1[t].astype(w1.dtype),
                                w1[t * H:(t + 1) * H, :],
                                preferred_element_type=jnp.float32)

        # ---- fc2 (fused, VMEM-resident) ------------------------------------
        w2 = fc2_w_ref[...]                           # (target, T*H)
        dec = jnp.dot(enc.astype(w2.dtype), w2,
                      preferred_element_type=jnp.float32) + fc2_b_ref[...]

        # ---- decoder LSTM stack --------------------------------------------
        xs2 = [dec[:, t * H:(t + 1) * H] for t in range(T)]   # T x (B, H)
        h2 = run_lstm_stack(xs2, rnn2)                # T x (B, D_in)

        for t in range(T):
            y_ref[t] = h2[t]

    return kernel


# --------------------------------------------------------------------------
# Wrapper
# --------------------------------------------------------------------------
def autoencoder_forward(x_btd, prep):
    """Batched forward: x (B, T, input_size) -> (B, T, input_size)."""
    # TODO(synk): unbatched (2-D input) path of the PyTorch module not implemented.
    B, T, D_in = x_btd.shape
    H = prep["rnn1"][-1][1].shape[0]                  # hidden_size
    n1, n2 = len(prep["rnn1"]), len(prep["rnn2"])

    operands = [jnp.transpose(x_btd, (1, 0, 2))]      # time-major (T, B, D_in)
    for layer in prep["rnn1"]:
        operands.extend(layer)
    operands.extend([prep["fc1_w"], prep["fc1_b"], prep["fc2_w"], prep["fc2_b"]])
    for layer in prep["rnn2"]:
        operands.extend(layer)

    y_tbd = pl.pallas_call(
        _make_fused_kernel(T, B, D_in, H, n1, n2),
        out_shape=jax.ShapeDtypeStruct((T, B, D_in), jnp.float32),
        in_specs=[_VMEM] * len(operands),
        out_specs=_VMEM,
        # TODO(synk): at production sizes, tile fc weights / the sequence with a
        # grid + pl.Buffered BlockSpecs instead of whole-array VMEM residency
        # (v7x has only 64 MiB VMEM), and add a batch grid axis with
        # dimension_semantics=("parallel",) to use both v7x TensorCores.
    )(*operands)
    return jnp.transpose(y_tbd, (1, 0, 2))


# --------------------------------------------------------------------------
# Parameter init (PyTorch layout) + one-time kernel-layout preparation
# --------------------------------------------------------------------------
def _uniform(key, shape, bound):
    return jax.random.uniform(key, shape, jnp.float32, -bound, bound)


def init_lstm_params(key, input_size, hidden_size, num_layer):
    layers = []
    bound = 1.0 / math.sqrt(hidden_size)
    for l in range(num_layer):
        d_in = input_size if l == 0 else hidden_size
        key, k1, k2, k3, k4 = jax.random.split(key, 5)
        layers.append((
            _uniform(k1, (4 * hidden_size, d_in), bound),          # w_ih
            _uniform(k2, (4 * hidden_size, hidden_size), bound),   # w_hh
            _uniform(k3, (4 * hidden_size,), bound),                # b_ih
            _uniform(k4, (4 * hidden_size,), bound),                # b_hh
        ))
    return layers, key


def init_params(key, input_size, target_size, hidden_size, num_layer, seq_len):
    rnn1, key = init_lstm_params(key, input_size, hidden_size, num_layer)
    rnn2, key = init_lstm_params(key, hidden_size, input_size, num_layer)
    key, k1, k2, k3, k4 = jax.random.split(key, 5)
    b1 = 1.0 / math.sqrt(hidden_size * seq_len)
    b2 = 1.0 / math.sqrt(target_size)
    return {
        "hidden_size": hidden_size,
        "rnn1": rnn1,
        "rnn2": rnn2,
        "fc1_w": _uniform(k1, (target_size, hidden_size * seq_len), b1),
        "fc1_b": _uniform(k2, (target_size,), b1),
        "fc2_w": _uniform(k3, (hidden_size * seq_len, target_size), b2),
        "fc2_b": _uniform(k4, (hidden_size * seq_len,), b2),
    }


def prepare_params(params, weights_dtype=jnp.float32):
    """One-time relayout of PyTorch-layout params into the kernel layout.

    Weights are stored pre-transposed ((in, out) / (in, 4H)) and the two LSTM
    biases are pre-combined, so no per-forward-call transposes remain.
    Use weights_dtype=jnp.bfloat16 on v6e/v7x to halve weight VMEM/bandwidth
    (matmuls still accumulate in f32; cell state & gate math stay f32).
    """
    def prep_lstm(layers):
        out = []
        for w_ih, w_hh, b_ih, b_hh in layers:
            h4 = w_ih.shape[0]
            out.append((
                jnp.transpose(w_ih).astype(weights_dtype),     # (D, 4H)
                jnp.transpose(w_hh).astype(weights_dtype),     # (H, 4H)
                (b_ih + b_hh).reshape(1, h4).astype(jnp.float32),
            ))
        return tuple(out)

    return {
        "rnn1": prep_lstm(params["rnn1"]),
        "rnn2": prep_lstm(params["rnn2"]),
        "fc1_w": jnp.transpose(params["fc1_w"]).astype(weights_dtype),  # (T*H, target)
        "fc1_b": params["fc1_b"].reshape(1, -1).astype(jnp.float32),
        "fc2_w": jnp.transpose(params["fc2_w"]).astype(weights_dtype),  # (target, T*H)
        "fc2_b": params["fc2_b"].reshape(1, -1).astype(jnp.float32),
    }


# --------------------------------------------------------------------------
# Pure-JAX reference (for correctness check)
# --------------------------------------------------------------------------
def _ref_lstm_layer(x_btd, w_ih, w_hh, b_ih, b_hh):
    B = x_btd.shape[0]
    H = w_hh.shape[1]

    def step(carry, x_t):
        h, c = carry
        gates = x_t @ w_ih.T + h @ w_hh.T + b_ih + b_hh
        i, f, g, o = jnp.split(gates, 4, axis=-1)
        c = jax.nn.sigmoid(f) * c + jax.nn.sigmoid(i) * jnp.tanh(g)
        h = jax.nn.sigmoid(o) * jnp.tanh(c)
        return (h, c), h

    x_tbd = jnp.transpose(x_btd, (1, 0, 2))
    init = (jnp.zeros((B, H), jnp.float32), jnp.zeros((B, H), jnp.float32))
    _, ys = jax.lax.scan(step, init, x_tbd)
    return jnp.transpose(ys, (1, 0, 2))


def _ref_forward(x, params):
    B, T, _ = x.shape
    H = params["hidden_size"]
    h = x
    for p in params["rnn1"]:
        h = _ref_lstm_layer(h, *p)
    flat = h.reshape(B, T * H)
    enc = flat @ params["fc1_w"].T + params["fc1_b"]
    dec = enc @ params["fc2_w"].T + params["fc2_b"]
    y = dec.reshape(B, T, H)
    for p in params["rnn2"]:
        y = _ref_lstm_layer(y, *p)
    return y


# --------------------------------------------------------------------------
if __name__ == "__main__":
    input_size, target_size, hidden_size = 4, 16, 32
    num_layer, seq_len, batch = 2, 8, 2

    key = jax.random.PRNGKey(0)
    key, kx = jax.random.split(key)
    x = jax.random.normal(kx, (batch, seq_len, input_size), jnp.float32)

    params = init_params(key, input_size, target_size, hidden_size,
                         num_layer, seq_len)
    # One-time weight relayout (pass weights_dtype=jnp.bfloat16 on v6e/v7x).
    prep = prepare_params(params)

    fwd = jax.jit(autoencoder_forward)
    y = jax.block_until_ready(fwd(x, prep))
    y_ref = jax.block_until_ready(_ref_forward(x, params))

    assert y.shape == (batch, seq_len, input_size), y.shape
    np.testing.assert_allclose(np.asarray(y), np.asarray(y_ref),
                               rtol=1e-4, atol=1e-5)
    print("KERNEL_OK")
</pallas_src>

<mosaic_0001>
module attributes {stable_mosaic.version = 11 : i64} {
  func.func @kernel(%arg0: memref<8x2x4xf32, #tpu.memory_space<vmem>>, %arg1: memref<4x128xf32, #tpu.memory_space<vmem>>, %arg2: memref<32x128xf32, #tpu.memory_space<vmem>>, %arg3: memref<1x128xf32, #tpu.memory_space<vmem>>, %arg4: memref<32x128xf32, #tpu.memory_space<vmem>>, %arg5: memref<32x128xf32, #tpu.memory_space<vmem>>, %arg6: memref<1x128xf32, #tpu.memory_space<vmem>>, %arg7: memref<256x16xf32, #tpu.memory_space<vmem>>, %arg8: memref<1x16xf32, #tpu.memory_space<vmem>>, %arg9: memref<16x256xf32, #tpu.memory_space<vmem>>, %arg10: memref<1x256xf32, #tpu.memory_space<vmem>>, %arg11: memref<32x16xf32, #tpu.memory_space<vmem>>, %arg12: memref<4x16xf32, #tpu.memory_space<vmem>>, %arg13: memref<1x16xf32, #tpu.memory_space<vmem>>, %arg14: memref<4x16xf32, #tpu.memory_space<vmem>>, %arg15: memref<4x16xf32, #tpu.memory_space<vmem>>, %arg16: memref<1x16xf32, #tpu.memory_space<vmem>>, %arg17: memref<8x2x4xf32, #tpu.memory_space<vmem>>) attributes {dimension_semantics = [], scalar_prefetch = 0 : i64, scratch_operands = 0 : i64, tpu.core_type = #tpu.core_type<tc>} {
    %c0 = arith.constant 0 : index
    %c0_0 = arith.constant 0 : index
    %c0_1 = arith.constant 0 : index
    %0 = vector.load %arg0[%c0, %c0_0, %c0_1] : memref<8x2x4xf32, #tpu.memory_space<vmem>>, vector<1x2x4xf32>
    %1 = vector.shape_cast %0 : vector<1x2x4xf32> to vector<2x4xf32>
    %c1 = arith.constant 1 : index
    %c0_2 = arith.constant 0 : index
    %c0_3 = arith.constant 0 : index
    %2 = vector.load %arg0[%c1, %c0_2, %c0_3] : memref<8x2x4xf32, #tpu.memory_space<vmem>>, vector<1x2x4xf32>
    %3 = vector.shape_cast %2 : vector<1x2x4xf32> to vector<2x4xf32>
    %c2 = arith.constant 2 : index
    %c0_4 = arith.constant 0 : index
    %c0_5 = arith.constant 0 : index
    %4 = vector.load %arg0[%c2, %c0_4, %c0_5] : memref<8x2x4xf32, #tpu.memory_space<vmem>>, vector<1x2x4xf32>
    %5 = vector.shape_cast %4 : vector<1x2x4xf32> to vector<2x4xf32>
    %c3 = arith.constant 3 : index
    %c0_6 = arith.constant 0 : index
    %c0_7 = arith.constant 0 : index
    %6 = vector.load %arg0[%c3, %c0_6, %c0_7] : memref<8x2x4xf32, #tpu.memory_space<vmem>>, vector<1x2x4xf32>
    %7 = vector.shape_cast %6 : vector<1x2x4xf32> to vector<2x4xf32>
    %c4 = arith.constant 4 : index
    %c0_8 = arith.constant 0 : index
    %c0_9 = arith.constant 0 : index
    %8 = vector.load %arg0[%c4, %c0_8, %c0_9] : memref<8x2x4xf32, #tpu.memory_space<vmem>>, vector<1x2x4xf32>
    %9 = vector.shape_cast %8 : vector<1x2x4xf32> to vector<2x4xf32>
    %c5 = arith.constant 5 : index
    %c0_10 = arith.constant 0 : index
    %c0_11 = arith.constant 0 : index
    %10 = vector.load %arg0[%c5, %c0_10, %c0_11] : memref<8x2x4xf32, #tpu.memory_space<vmem>>, vector<1x2x4xf32>
    %11 = vector.shape_cast %10 : vector<1x2x4xf32> to vector<2x4xf32>
    %c6 = arith.constant 6 : index
    %c0_12 = arith.constant 0 : index
    %c0_13 = arith.constant 0 : index
    %12 = vector.load %arg0[%c6, %c0_12, %c0_13] : memref<8x2x4xf32, #tpu.memory_space<vmem>>, vector<1x2x4xf32>
    %13 = vector.shape_cast %12 : vector<1x2x4xf32> to vector<2x4xf32>
    %c7 = arith.constant 7 : index
    %c0_14 = arith.constant 0 : index
    %c0_15 = arith.constant 0 : index
    %14 = vector.load %arg0[%c7, %c0_14, %c0_15] : memref<8x2x4xf32, #tpu.memory_space<vmem>>, vector<1x2x4xf32>
    %15 = vector.shape_cast %14 : vector<1x2x4xf32> to vector<2x4xf32>
    %c0_16 = arith.constant 0 : index
    %c0_17 = arith.constant 0 : index
    %16 = vector.load %arg1[%c0_16, %c0_17] : memref<4x128xf32, #tpu.memory_space<vmem>>, vector<4x128xf32>
    %c0_18 = arith.constant 0 : index
    %c0_19 = arith.constant 0 : index
    %17 = vector.load %arg2[%c0_18, %c0_19] : memref<32x128xf32, #tpu.memory_space<vmem>>, vector<32x128xf32>
    %c0_20 = arith.constant 0 : index
    %c0_21 = arith.constant 0 : index
    %18 = vector.load %arg3[%c0_20, %c0_21] : memref<1x128xf32, #tpu.memory_space<vmem>>, vector<1x128xf32>
    %19 = vector.shape_cast %18 : vector<1x128xf32> to vector<1x128xf32>
    %20 = vector.broadcast %19 : vector<1x128xf32> to vector<2x128xf32>
    %cst = arith.constant dense<0.000000e+00> : vector<2x128xf32>
    %21 = tpu.matmul %1, %16, %cst {dimension_numbers = #tpu.dot_dimension_numbers<[1], [0], [0], [1], [0, 0, 1, 1], [], []>} : vector<2x4xf32>, vector<4x128xf32>, vector<2x128xf32> -> vector<2x128xf32>
    %22 = arith.addf %21, %20 : vector<2x128xf32>
    %cst_22 = arith.constant dense<0.000000e+00> : vector<2x128xf32>
    %23 = tpu.matmul %3, %16, %cst_22 {dimension_numbers = #tpu.dot_dimension_numbers<[1], [0], [0], [1], [0, 0, 1, 1], [], []>} : vector<2x4xf32>, vector<4x128xf32>, vector<2x128xf32> -> vector<2x128xf32>
    %24 = arith.addf %23, %20 : vector<2x128xf32>
    %cst_23 = arith.constant dense<0.000000e+00> : vector<2x128xf32>
    %25 = tpu.matmul %5, %16, %cst_23 {dimension_numbers = #tpu.dot_dimension_numbers<[1], [0], [0], [1], [0, 0, 1, 1], [], []>} : vector<2x4xf32>, vector<4x128xf32>, vector<2x128xf32> -> vector<2x128xf32>
    %26 = arith.addf %25, %20 : vector<2x128xf32>
    %cst_24 = arith.constant dense<0.000000e+00> : vector<2x128xf32>
    %27 = tpu.matmul %7, %16, %cst_24 {dimension_numbers = #tpu.dot_dimension_numbers<[1], [0], [0], [1], [0, 0, 1, 1], [], []>} : vector<2x4xf32>, vector<4x128xf32>, vector<2x128xf32> -> vector<2x128xf32>
    %28 = arith.addf %27, %20 : vector<2x128xf32>
    %cst_25 = arith.constant dense<0.000000e+00> : vector<2x128xf32>
    %29 = tpu.matmul %9, %16, %cst_25 {dimension_numbers = #tpu.dot_dimension_numbers<[1], [0], [0], [1], [0, 0, 1, 1], [], []>} : vector<2x4xf32>, vector<4x128xf32>, vector<2x128xf32> -> vector<2x128xf32>
    %30 = arith.addf %29, %20 : vector<2x128xf32>
    %cst_26 = arith.constant dense<0.000000e+00> : vector<2x128xf32>
    %31 = tpu.matmul %11, %16, %cst_26 {dimension_numbers = #tpu.dot_dimension_numbers<[1], [0], [0], [1], [0, 0, 1, 1], [], []>} : vector<2x4xf32>, vector<4x128xf32>, vector<2x128xf32> -> vector<2x128xf32>
    %32 = arith.addf %31, %20 : vector<2x128xf32>
    %cst_27 = arith.constant dense<0.000000e+00> : vector<2x128xf32>
    %33 = tpu.matmul %13, %16, %cst_27 {dimension_numbers = #tpu.dot_dimension_numbers<[1], [0], [0], [1], [0, 0, 1, 1], [], []>} : vector<2x4xf32>, vector<4x128xf32>, vector<2x128xf32> -> vector<2x128xf32>
    %34 = arith.addf %33, %20 : vector<2x128xf32>
    %cst_28 = arith.constant dense<0.000000e+00> : vector<2x128xf32>
    %35 = tpu.matmul %15, %16, %cst_28 {dimension_numbers = #tpu.dot_dimension_numbers<[1], [0], [0], [1], [0, 0, 1, 1], [], []>} : vector<2x4xf32>, vector<4x128xf32>, vector<2x128xf32> -> vector<2x128xf32>
    %36 = arith.addf %35, %20 : vector<2x128xf32>
    %cst_29 = arith.constant 0.000000e+00 : f32
    %37 = vector.broadcast %cst_29 : f32 to vector<2x32xf32>
    %cst_30 = arith.constant 0.000000e+00 : f32
    %38 = vector.broadcast %cst_30 : f32 to vector<2x32xf32>
    %cst_31 = arith.constant dense<0.000000e+00> : vector<2x128xf32>
    %39 = tpu.matmul %37, %17, %cst_31 {dimension_numbers = #tpu.dot_dimension_numbers<[1], [0], [0], [1], [0, 0, 1, 1], [], []>} : vector<2x32xf32>, vector<32x128xf32>, vector<2x128xf32> -> vector<2x128xf32>
    %40 = arith.addf %22, %39 : vector<2x128xf32>
    %41 = vector.extract_strided_slice %40 {offsets = [0, 0], sizes = [2, 32], strides = [1, 1]} : vector<2x128xf32> to vector<2x32xf32>
    %42 = arith.negf %41 : vector<2x32xf32>
    %43 = math.exp %42 : vector<2x32xf32>
    %cst_32 = arith.constant 1.000000e+00 : f32
    %44 = vector.broadcast %cst_32 : f32 to vector<2x32xf32>
    %45 = arith.addf %44, %43 : vector<2x32xf32>
    %46 = arith.divf %44, %45 : vector<2x32xf32>
    %47 = vector.extract_strided_slice %40 {offsets = [0, 32], sizes = [2, 32], strides = [1, 1]} : vector<2x128xf32> to vector<2x32xf32>
    %48 = arith.negf %47 : vector<2x32xf32>
    %49 = math.exp %48 : vector<2x32xf32>
    %cst_33 = arith.constant 1.000000e+00 : f32
    %50 = vector.broadcast %cst_33 : f32 to vector<2x32xf32>
    %51 = arith.addf %50, %49 : vector<2x32xf32>
    %52 = arith.divf %50, %51 : vector<2x32xf32>
    %53 = vector.extract_strided_slice %40 {offsets = [0, 64], sizes = [2, 32], strides = [1, 1]} : vector<2x128xf32> to vector<2x32xf32>
    %54 = math.tanh %53 : vector<2x32xf32>
    %55 = vector.extract_strided_slice %40 {offsets = [0, 96], sizes = [2, 32], strides = [1, 1]} : vector<2x128xf32> to vector<2x32xf32>
    %56 = arith.negf %55 : vector<2x32xf32>
    %57 = math.exp %56 : vector<2x32xf32>
    %cst_34 = arith.constant 1.000000e+00 : f32
    %58 = vector.broadcast %cst_34 : f32 to vector<2x32xf32>
    %59 = arith.addf %58, %57 : vector<2x32xf32>
    %60 = arith.divf %58, %59 : vector<2x32xf32>
    %61 = arith.mulf %52, %38 : vector<2x32xf32>
    %62 = arith.mulf %46, %54 : vector<2x32xf32>
    %63 = arith.addf %61, %62 : vector<2x32xf32>
    %64 = math.tanh %63 : vector<2x32xf32>
    %65 = arith.mulf %60, %64 : vector<2x32xf32>
    %cst_35 = arith.constant dense<0.000000e+00> : vector<2x128xf32>
    %66 = tpu.matmul %65, %17, %cst_35 {dimension_numbers = #tpu.dot_dimension_numbers<[1], [0], [0], [1], [0, 0, 1, 1], [], []>} : vector<2x32xf32>, vector<32x128xf32>, vector<2x128xf32> -> vector<2x128xf32>
    %67 = arith.addf %24, %66 : vector<2x128xf32>
    %68 = vector.extract_strided_slice %67 {offsets = [0, 0], sizes = [2, 32], strides = [1, 1]} : vector<2x128xf32> to vector<2x32xf32>
    %69 = arith.negf %68 : vector<2x32xf32>
    %70 = math.exp %69 : vector<2x32xf32>
    %cst_36 = arith.constant 1.000000e+00 : f32
    %71 = vector.broadcast %cst_36 : f32 to vector<2x32xf32>
    %72 = arith.addf %71, %70 : vector<2x32xf32>
    %73 = arith.divf %71, %72 : vector<2x32xf32>
    %74 = vector.extract_strided_slice %67 {offsets = [0, 32], sizes = [2, 32], strides = [1, 1]} : vector<2x128xf32> to vector<2x32xf32>
    %75 = arith.negf %74 : vector<2x32xf32>
    %76 = math.exp %75 : vector<2x32xf32>
    %cst_37 = arith.constant 1.000000e+00 : f32
    %77 = vector.broadcast %cst_37 : f32 to vector<2x32xf32>
    %78 = arith.addf %77, %76 : vector<2x32xf32>
    %79 = arith.divf %77, %78 : vector<2x32xf32>
    %80 = vector.extract_strided_slice %67 {offsets = [0, 64], sizes = [2, 32], strides = [1, 1]} : vector<2x128xf32> to vector<2x32xf32>
    %81 = math.tanh %80 : vector<2x32xf32>
    %82 = vector.extract_strided_slice %67 {offsets = [0, 96], sizes = [2, 32], strides = [1, 1]} : vector<2x128xf32> to vector<2x32xf32>
    %83 = arith.negf %82 : vector<2x32xf32>
    %84 = math.exp %83 : vector<2x32xf32>
    %cst_38 = arith.constant 1.000000e+00 : f32
    %85 = vector.broadcast %cst_38 : f32 to vector<2x32xf32>
    %86 = arith.addf %85, %84 : vector<2x32xf32>
    %87 = arith.divf %85, %86 : vector<2x32xf32>
    %88 = arith.mulf %79, %63 : vector<2x32xf32>
    %89 = arith.mulf %73, %81 : vector<2x32xf32>
    %90 = arith.addf %88, %89 : vector<2x32xf32>
    %91 = math.tanh %90 : vector<2x32xf32>
    %92 = arith.mulf %87, %91 : vector<2x32xf32>
    %cst_39 = arith.constant dense<0.000000e+00> : vector<2x128xf32>
    %93 = tpu.matmul %92, %17, %cst_39 {dimension_numbers = #tpu.dot_dimension_numbers<[1], [0], [0], [1], [0, 0, 1, 1], [], []>} : vector<2x32xf32>, vector<32x128xf32>, vector<2x128xf32> -> vector<2x128xf32>
    %94 = arith.addf %26, %93 : vector<2x128xf32>
    %95 = vector.extract_strided_slice %94 {offsets = [0, 0], sizes = [2, 32], strides = [1, 1]} : vector<2x128xf32> to vector<2x32xf32>
    %96 = arith.negf %95 : vector<2x32xf32>
    %97 = math.exp %96 : vector<2x32xf32>
    %cst_40 = arith.constant 1.000000e+00 : f32
    %98 = vector.broadcast %cst_40 : f32 to vector<2x32xf32>
    %99 = arith.addf %98, %97 : vector<2x32xf32>
    %100 = arith.divf %98, %99 : vector<2x32xf32>
    %101 = vector.extract_strided_slice %94 {offsets = [0, 32], sizes = [2, 32], strides = [1, 1]} : vector<2x128xf32> to vector<2x32xf32>
    %102 = arith.negf %101 : vector<2x32xf32>
    %103 = math.exp %102 : vector<2x32xf32>
    %cst_41 = arith.constant 1.000000e+00 : f32
    %104 = vector.broadcast %cst_41 : f32 to vector<2x32xf32>
    %105 = arith.addf %104, %103 : vector<2x32xf32>
    %106 = arith.divf %104, %105 : vector<2x32xf32>
    %107 = vector.extract_strided_slice %94 {offsets = [0, 64], sizes = [2, 32], strides = [1, 1]} : vector<2x128xf32> to vector<2x32xf32>
    %108 = math.tanh %107 : vector<2x32xf32>
    %109 = vector.extract_strided_slice %94 {offsets = [0, 96], sizes = [2, 32], strides = [1, 1]} : vector<2x128xf32> to vector<2x32xf32>
    %110 = arith.negf %109 : vector<2x32xf32>
    %111 = math.exp %110 : vector<2x32xf32>
    %cst_42 = arith.constant 1.000000e+00 : f32
    %112 = vector.broadcast %cst_42 : f32 to vector<2x32xf32>
    %113 = arith.addf %112, %111 : vector<2x32xf32>
    %114 = arith.divf %112, %113 : vector<2x32xf32>
    %115 = arith.mulf %106, %90 : vector<2x32xf32>
    %116 = arith.mulf %100, %108 : vector<2x32xf32>
    %117 = arith.addf %115, %116 : vector<2x32xf32>
    %118 = math.tanh %117 : vector<2x32xf32>
    %119 = arith.mulf %114, %118 : vector<2x32xf32>
    %cst_43 = arith.constant dense<0.000000e+00> : vector<2x128xf32>
    %120 = tpu.matmul %119, %17, %cst_43 {dimension_numbers = #tpu.dot_dimension_numbers<[1], [0], [0], [1], [0, 0, 1, 1], [], []>} : vector<2x32xf32>, vector<32x128xf32>, vector<2x128xf32> -> vector<2x128xf32>
    %121 = arith.addf %28, %120 : vector<2x128xf32>
    %122 = vector.extract_strided_slice %121 {offsets = [0, 0], sizes = [2, 32], strides = [1, 1]} : vector<2x128xf32> to vector<2x32xf32>
    %123 = arith.negf %122 : vector<2x32xf32>
    %124 = math.exp %123 : vector<2x32xf32>
    %cst_44 = arith.constant 1.000000e+00 : f32
    %125 = vector.broadcast %cst_44 : f32 to vector<2x32xf32>
    %126 = arith.addf %125, %124 : vector<2x32xf32>
    %127 = arith.divf %125, %126 : vector<2x32xf32>
    %128 = vector.extract_strided_slice %121 {offsets = [0, 32], sizes = [2, 32], strides = [1, 1]} : vector<2x128xf32> to vector<2x32xf32>
    %129 = arith.negf %128 : vector<2x32xf32>
    %130 = math.exp %129 : vector<2x32xf32>
    %cst_45 = arith.constant 1.000000e+00 : f32
    %131 = vector.broadcast %cst_45 : f32 to vector<2x32xf32>
    %132 = arith.addf %131, %130 : vector<2x32xf32>
    %133 = arith.divf %131, %132 : vector<2x32xf32>
    %134 = vector.extract_strided_slice %121 {offsets = [0, 64], sizes = [2, 32], strides = [1, 1]} : vector<2x128xf32> to vector<2x32xf32>
    %135 = math.tanh %134 : vector<2x32xf32>
    %136 = vector.extract_strided_slice %121 {offsets = [0, 96], sizes = [2, 32], strides = [1, 1]} : vector<2x128xf32> to vector<2x32xf32>
    %137 = arith.negf %136 : vector<2x32xf32>
    %138 = math.exp %137 : vector<2x32xf32>
    %cst_46 = arith.constant 1.000000e+00 : f32
    %139 = vector.broadcast %cst_46 : f32 to vector<2x32xf32>
    %140 = arith.addf %139, %138 : vector<2x32xf32>
    %141 = arith.divf %139, %140 : vector<2x32xf32>
    %142 = arith.mulf %133, %117 : vector<2x32xf32>
    %143 = arith.mulf %127, %135 : vector<2x32xf32>
    %144 = arith.addf %142, %143 : vector<2x32xf32>
    %145 = math.tanh %144 : vector<2x32xf32>
    %146 = arith.mulf %141, %145 : vector<2x32xf32>
    %cst_47 = arith.constant dense<0.000000e+00> : vector<2x128xf32>
    %147 = tpu.matmul %146, %17, %cst_47 {dimension_numbers = #tpu.dot_dimension_numbers<[1], [0], [0], [1], [0, 0, 1, 1], [], []>} : vector<2x32xf32>, vector<32x128xf32>, vector<2x128xf32> -> vector<2x128xf32>
    %148 = arith.addf %30, %147 : vector<2x128xf32>
    %149 = vector.extract_strided_slice %148 {offsets = [0, 0], sizes = [2, 32], strides = [1, 1]} : vector<2x128xf32> to vector<2x32xf32>
    %150 = arith.negf %149 : vector<2x32xf32>
    %151 = math.exp %150 : vector<2x32xf32>
    %cst_48 = arith.constant 1.000000e+00 : f32
    %152 = vector.broadcast %cst_48 : f32 to vector<2x32xf32>
    %153 = arith.addf %152, %151 : vector<2x32xf32>
    %154 = arith.divf %152, %153 : vector<2x32xf32>
    %155 = vector.extract_strided_slice %148 {offsets = [0, 32], sizes = [2, 32], strides = [1, 1]} : vector<2x128xf32> to vector<2x32xf32>
    %156 = arith.negf %155 : vector<2x32xf32>
    %157 = math.exp %156 : vector<2x32xf32>
    %cst_49 = arith.constant 1.000000e+00 : f32
    %158 = vector.broadcast %cst_49 : f32 to vector<2x32xf32>
    %159 = arith.addf %158, %157 : vector<2x32xf32>
    %160 = arith.divf %158, %159 : vector<2x32xf32>
    %161 = vector.extract_strided_slice %148 {offsets = [0, 64], sizes = [2, 32], strides = [1, 1]} : vector<2x128xf32> to vector<2x32xf32>
    %162 = math.tanh %161 : vector<2x32xf32>
    %163 = vector.extract_strided_slice %148 {offsets = [0, 96], sizes = [2, 32], strides = [1, 1]} : vector<2x128xf32> to vector<2x32xf32>
    %164 = arith.negf %163 : vector<2x32xf32>
    %165 = math.exp %164 : vector<2x32xf32>
    %cst_50 = arith.constant 1.000000e+00 : f32
    %166 = vector.broadcast %cst_50 : f32 to vector<2x32xf32>
    %167 = arith.addf %166, %165 : vector<2x32xf32>
    %168 = arith.divf %166, %167 : vector<2x32xf32>
    %169 = arith.mulf %160, %144 : vector<2x32xf32>
    %170 = arith.mulf %154, %162 : vector<2x32xf32>
    %171 = arith.addf %169, %170 : vector<2x32xf32>
    %172 = math.tanh %171 : vector<2x32xf32>
    %173 = arith.mulf %168, %172 : vector<2x32xf32>
    %cst_51 = arith.constant dense<0.000000e+00> : vector<2x128xf32>
    %174 = tpu.matmul %173, %17, %cst_51 {dimension_numbers = #tpu.dot_dimension_numbers<[1], [0], [0], [1], [0, 0, 1, 1], [], []>} : vector<2x32xf32>, vector<32x128xf32>, vector<2x128xf32> -> vector<2x128xf32>
    %175 = arith.addf %32, %174 : vector<2x128xf32>
    %176 = vector.extract_strided_slice %175 {offsets = [0, 0], sizes = [2, 32], strides = [1, 1]} : vector<2x128xf32> to vector<2x32xf32>
    %177 = arith.negf %176 : vector<2x32xf32>
    %178 = math.exp %177 : vector<2x32xf32>
    %cst_52 = arith.constant 1.000000e+00 : f32
    %179 = vector.broadcast %cst_52 : f32 to vector<2x32xf32>
    %180 = arith.addf %179, %178 : vector<2x32xf32>
    %181 = arith.divf %179, %180 : vector<2x32xf32>
    %182 = vector.extract_strided_slice %175 {offsets = [0, 32], sizes = [2, 32], strides = [1, 1]} : vector<2x128xf32> to vector<2x32xf32>
    %183 = arith.negf %182 : vector<2x32xf32>
    %184 = math.exp %183 : vector<2x32xf32>
    %cst_53 = arith.constant 1.000000e+00 : f32
    %185 = vector.broadcast %cst_53 : f32 to vector<2x32xf32>
    %186 = arith.addf %185, %184 : vector<2x32xf32>
    %187 = arith.divf %185, %186 : vector<2x32xf32>
    %188 = vector.extract_strided_slice %175 {offsets = [0, 64], sizes = [2, 32], strides = [1, 1]} : vector<2x128xf32> to vector<2x32xf32>
    %189 = math.tanh %188 : vector<2x32xf32>
    %190 = vector.extract_strided_slice %175 {offsets = [0, 96], sizes = [2, 32], strides = [1, 1]} : vector<2x128xf32> to vector<2x32xf32>
    %191 = arith.negf %190 : vector<2x32xf32>
    %192 = math.exp %191 : vector<2x32xf32>
    %cst_54 = arith.constant 1.000000e+00 : f32
    %193 = vector.broadcast %cst_54 : f32 to vector<2x32xf32>
    %194 = arith.addf %193, %192 : vector<2x32xf32>
    %195 = arith.divf %193, %194 : vector<2x32xf32>
    %196 = arith.mulf %187, %171 : vector<2x32xf32>
    %197 = arith.mulf %181, %189 : vector<2x32xf32>
    %198 = arith.addf %196, %197 : vector<2x32xf32>
    %199 = math.tanh %198 : vector<2x32xf32>
    %200 = arith.mulf %195, %199 : vector<2x32xf32>
    %cst_55 = arith.constant dense<0.000000e+00> : vector<2x128xf32>
    %201 = tpu.matmul %200, %17, %cst_55 {dimension_numbers = #tpu.dot_dimension_numbers<[1], [0], [0], [1], [0, 0, 1, 1], [], []>} : vector<2x32xf32>, vector<32x128xf32>, vector<2x128xf32> -> vector<2x128xf32>
    %202 = arith.addf %34, %201 : vector<2x128xf32>
    %203 = vector.extract_strided_slice %202 {offsets = [0, 0], sizes = [2, 32], strides = [1, 1]} : vector<2x128xf32> to vector<2x32xf32>
    %204 = arith.negf %203 : vector<2x32xf32>
    %205 = math.exp %204 : vector<2x32xf32>
    %cst_56 = arith.constant 1.000000e+00 : f32
    %206 = vector.broadcast %cst_56 : f32 to vector<2x32xf32>
    %207 = arith.addf %206, %205 : vector<2x32xf32>
    %208 = arith.divf %206, %207 : vector<2x32xf32>
    %209 = vector.extract_strided_slice %202 {offsets = [0, 32], sizes = [2, 32], strides = [1, 1]} : vector<2x128xf32> to vector<2x32xf32>
    %210 = arith.negf %209 : vector<2x32xf32>
    %211 = math.exp %210 : vector<2x32xf32>
    %cst_57 = arith.constant 1.000000e+00 : f32
    %212 = vector.broadcast %cst_57 : f32 to vector<2x32xf32>
    %213 = arith.addf %212, %211 : vector<2x32xf32>
    %214 = arith.divf %212, %213 : vector<2x32xf32>
    %215 = vector.extract_strided_slice %202 {offsets = [0, 64], sizes = [2, 32], strides = [1, 1]} : vector<2x128xf32> to vector<2x32xf32>
    %216 = math.tanh %215 : vector<2x32xf32>
    %217 = vector.extract_strided_slice %202 {offsets = [0, 96], sizes = [2, 32], strides = [1, 1]} : vector<2x128xf32> to vector<2x32xf32>
    %218 = arith.negf %217 : vector<2x32xf32>
    %219 = math.exp %218 : vector<2x32xf32>
    %cst_58 = arith.constant 1.000000e+00 : f32
    %220 = vector.broadcast %cst_58 : f32 to vector<2x32xf32>
    %221 = arith.addf %220, %219 : vector<2x32xf32>
    %222 = arith.divf %220, %221 : vector<2x32xf32>
    %223 = arith.mulf %214, %198 : vector<2x32xf32>
    %224 = arith.mulf %208, %216 : vector<2x32xf32>
    %225 = arith.addf %223, %224 : vector<2x32xf32>
    %226 = math.tanh %225 : vector<2x32xf32>
    %227 = arith.mulf %222, %226 : vector<2x32xf32>
    %cst_59 = arith.constant dense<0.000000e+00> : vector<2x128xf32>
    %228 = tpu.matmul %227, %17, %cst_59 {dimension_numbers = #tpu.dot_dimension_numbers<[1], [0], [0], [1], [0, 0, 1, 1], [], []>} : vector<2x32xf32>, vector<32x128xf32>, vector<2x128xf32> -> vector<2x128xf32>
    %229 = arith.addf %36, %228 : vector<2x128xf32>
    %230 = vector.extract_strided_slice %229 {offsets = [0, 0], sizes = [2, 32], strides = [1, 1]} : vector<2x128xf32> to vector<2x32xf32>
    %231 = arith.negf %230 : vector<2x32xf32>
    %232 = math.exp %231 : vector<2x32xf32>
    %cst_60 = arith.constant 1.000000e+00 : f32
    %233 = vector.broadcast %cst_60 : f32 to vector<2x32xf32>
    %234 = arith.addf %233, %232 : vector<2x32xf32>
    %235 = arith.divf %233, %234 : vector<2x32xf32>
    %236 = vector.extract_strided_slice %229 {offsets = [0, 32], sizes = [2, 32], strides = [1, 1]} : vector<2x128xf32> to vector<2x32xf32>
    %237 = arith.negf %236 : vector<2x32xf32>
    %238 = math.exp %237 : vector<2x32xf32>
    %cst_61 = arith.constant 1.000000e+00 : f32
    %239 = vector.broadcast %cst_61 : f32 to vector<2x32xf32>
    %240 = arith.addf %239, %238 : vector<2x32xf32>
    %241 = arith.divf %239, %240 : vector<2x32xf32>
    %242 = vector.extract_strided_slice %229 {offsets = [0, 64], sizes = [2, 32], strides = [1, 1]} : vector<2x128xf32> to vector<2x32xf32>
    %243 = math.tanh %242 : vector<2x32xf32>
    %244 = vector.extract_strided_slice %229 {offsets = [0, 96], sizes = [2, 32], strides = [1, 1]} : vector<2x128xf32> to vector<2x32xf32>
    %245 = arith.negf %244 : vector<2x32xf32>
    %246 = math.exp %245 : vector<2x32xf32>
    %cst_62 = arith.constant 1.000000e+00 : f32
    %247 = vector.broadcast %cst_62 : f32 to vector<2x32xf32>
    %248 = arith.addf %247, %246 : vector<2x32xf32>
    %249 = arith.divf %247, %248 : vector<2x32xf32>
    %250 = arith.mulf %241, %225 : vector<2x32xf32>
    %251 = arith.mulf %235, %243 : vector<2x32xf32>
    %252 = arith.addf %250, %251 : vector<2x32xf32>
    %253 = math.tanh %252 : vector<2x32xf32>
    %254 = arith.mulf %249, %253 : vector<2x32xf32>
    %c0_63 = arith.constant 0 : index
    %c0_64 = arith.constant 0 : index
    %255 = vector.load %arg4[%c0_63, %c0_64] : memref<32x128xf32, #tpu.memory_space<vmem>>, vector<32x128xf32>
    %c0_65 = arith.constant 0 : index
    %c0_66 = arith.constant 0 : index
    %256 = vector.load %arg5[%c0_65, %c0_66] : memref<32x128xf32, #tpu.memory_space<vmem>>, vector<32x128xf32>
    %c0_67 = arith.constant 0 : index
    %c0_68 = arith.constant 0 : index
    %257 = vector.load %arg6[%c0_67, %c0_68] : memref<1x128xf32, #tpu.memory_space<vmem>>, vector<1x128xf32>
    %258 = vector.shape_cast %257 : vector<1x128xf32> to vector<1x128xf32>
    %259 = vector.broadcast %258 : vector<1x128xf32> to vector<2x128xf32>
    %cst_69 = arith.constant dense<0.000000e+00> : vector<2x128xf32>
    %260 = tpu.matmul %65, %255, %cst_69 {dimension_numbers = #tpu.dot_dimension_numbers<[1], [0], [0], [1], [0, 0, 1, 1], [], []>} : vector<2x32xf32>, vector<32x128xf32>, vector<2x128xf32> -> vector<2x128xf32>
    %261 = arith.addf %260, %259 : vector<2x128xf32>
    %cst_70 = arith.constant dense<0.000000e+00> : vector<2x128xf32>
    %262 = tpu.matmul %92, %255, %cst_70 {dimension_numbers = #tpu.dot_dimension_numbers<[1], [0], [0], [1], [0, 0, 1, 1], [], []>} : vector<2x32xf32>, vector<32x128xf32>, vector<2x128xf32> -> vector<2x128xf32>
    %263 = arith.addf %262, %259 : vector<2x128xf32>
    %cst_71 = arith.constant dense<0.000000e+00> : vector<2x128xf32>
    %264 = tpu.matmul %119, %255, %cst_71 {dimension_numbers = #tpu.dot_dimension_numbers<[1], [0], [0], [1], [0, 0, 1, 1], [], []>} : vector<2x32xf32>, vector<32x128xf32>, vector<2x128xf32> -> vector<2x128xf32>
    %265 = arith.addf %264, %259 : vector<2x128xf32>
    %cst_72 = arith.constant dense<0.000000e+00> : vector<2x128xf32>
    %266 = tpu.matmul %146, %255, %cst_72 {dimension_numbers = #tpu.dot_dimension_numbers<[1], [0], [0], [1], [0, 0, 1, 1], [], []>} : vector<2x32xf32>, vector<32x128xf32>, vector<2x128xf32> -> vector<2x128xf32>
    %267 = arith.addf %266, %259 : vector<2x128xf32>
    %cst_73 = arith.constant dense<0.000000e+00> : vector<2x128xf32>
    %268 = tpu.matmul %173, %255, %cst_73 {dimension_numbers = #tpu.dot_dimension_numbers<[1], [0], [0], [1], [0, 0, 1, 1], [], []>} : vector<2x32xf32>, vector<32x128xf32>, vector<2x128xf32> -> vector<2x128xf32>
    %269 = arith.addf %268, %259 : vector<2x128xf32>
    %cst_74 = arith.constant dense<0.000000e+00> : vector<2x128xf32>
    %270 = tpu.matmul %200, %255, %cst_74 {dimension_numbers = #tpu.dot_dimension_numbers<[1], [0], [0], [1], [0, 0, 1, 1], [], []>} : vector<2x32xf32>, vector<32x128xf32>, vector<2x128xf32> -> vector<2x128xf32>
    %271 = arith.addf %270, %259 : vector<2x128xf32>
    %cst_75 = arith.constant dense<0.000000e+00> : vector<2x128xf32>
    %272 = tpu.matmul %227, %255, %cst_75 {dimension_numbers = #tpu.dot_dimension_numbers<[1], [0], [0], [1], [0, 0, 1, 1], [], []>} : vector<2x32xf32>, vector<32x128xf32>, vector<2x128xf32> -> vector<2x128xf32>
    %273 = arith.addf %272, %259 : vector<2x128xf32>
    %cst_76 = arith.constant dense<0.000000e+00> : vector<2x128xf32>
    %274 = tpu.matmul %254, %255, %cst_76 {dimension_numbers = #tpu.dot_dimension_numbers<[1], [0], [0], [1], [0, 0, 1, 1], [], []>} : vector<2x32xf32>, vector<32x128xf32>, vector<2x128xf32> -> vector<2x128xf32>
    %275 = arith.addf %274, %259 : vector<2x128xf32>
    %cst_77 = arith.constant 0.000000e+00 : f32
    %276 = vector.broadcast %cst_77 : f32 to vector<2x32xf32>
    %cst_78 = arith.constant 0.000000e+00 : f32
    %277 = vector.broadcast %cst_78 : f32 to vector<2x32xf32>
    %cst_79 = arith.constant dense<0.000000e+00> : vector<2x128xf32>
    %278 = tpu.matmul %276, %256, %cst_79 {dimension_numbers = #tpu.dot_dimension_numbers<[1], [0], [0], [1], [0, 0, 1, 1], [], []>} : vector<2x32xf32>, vector<32x128xf32>, vector<2x128xf32> -> vector<2x128xf32>
    %279 = arith.addf %261, %278 : vector<2x128xf32>
    %280 = vector.extract_strided_slice %279 {offsets = [0, 0], sizes = [2, 32], strides = [1, 1]} : vector<2x128xf32> to vector<2x32xf32>
    %281 = arith.negf %280 : vector<2x32xf32>
    %282 = math.exp %281 : vector<2x32xf32>
    %cst_80 = arith.constant 1.000000e+00 : f32
    %283 = vector.broadcast %cst_80 : f32 to vector<2x32xf32>
    %284 = arith.addf %283, %282 : vector<2x32xf32>
    %285 = arith.divf %283, %284 : vector<2x32xf32>
    %286 = vector.extract_strided_slice %279 {offsets = [0, 32], sizes = [2, 32], strides = [1, 1]} : vector<2x128xf32> to vector<2x32xf32>
    %287 = arith.negf %286 : vector<2x32xf32>
    %288 = math.exp %287 : vector<2x32xf32>
    %cst_81 = arith.constant 1.000000e+00 : f32
    %289 = vector.broadcast %cst_81 : f32 to vector<2x32xf32>
    %290 = arith.addf %289, %288 : vector<2x32xf32>
    %291 = arith.divf %289, %290 : vector<2x32xf32>
    %292 = vector.extract_strided_slice %279 {offsets = [0, 64], sizes = [2, 32], strides = [1, 1]} : vector<2x128xf32> to vector<2x32xf32>
    %293 = math.tanh %292 : vector<2x32xf32>
    %294 = vector.extract_strided_slice %279 {offsets = [0, 96], sizes = [2, 32], strides = [1, 1]} : vector<2x128xf32> to vector<2x32xf32>
    %295 = arith.negf %294 : vector<2x32xf32>
    %296 = math.exp %295 : vector<2x32xf32>
    %cst_82 = arith.constant 1.000000e+00 : f32
    %297 = vector.broadcast %cst_82 : f32 to vector<2x32xf32>
    %298 = arith.addf %297, %296 : vector<2x32xf32>
    %299 = arith.divf %297, %298 : vector<2x32xf32>
    %300 = arith.mulf %291, %277 : vector<2x32xf32>
    %301 = arith.mulf %285, %293 : vector<2x32xf32>
    %302 = arith.addf %300, %301 : vector<2x32xf32>
    %303 = math.tanh %302 : vector<2x32xf32>
    %304 = arith.mulf %299, %303 : vector<2x32xf32>
    %cst_83 = arith.constant dense<0.000000e+00> : vector<2x128xf32>
    %305 = tpu.matmul %304, %256, %cst_83 {dimension_numbers = #tpu.dot_dimension_numbers<[1], [0], [0], [1], [0, 0, 1, 1], [], []>} : vector<2x32xf32>, vector<32x128xf32>, vector<2x128xf32> -> vector<2x128xf32>
    %306 = arith.addf %263, %305 : vector<2x128xf32>
    %307 = vector.extract_strided_slice %306 {offsets = [0, 0], sizes = [2, 32], strides = [1, 1]} : vector<2x128xf32> to vector<2x32xf32>
    %308 = arith.negf %307 : vector<2x32xf32>
    %309 = math.exp %308 : vector<2x32xf32>
    %cst_84 = arith.constant 1.000000e+00 : f32
    %310 = vector.broadcast %cst_84 : f32 to vector<2x32xf32>
    %311 = arith.addf %310, %309 : vector<2x32xf32>
    %312 = arith.divf %310, %311 : vector<2x32xf32>
    %313 = vector.extract_strided_slice %306 {offsets = [0, 32], sizes = [2, 32], strides = [1, 1]} : vector<2x128xf32> to vector<2x32xf32>
    %314 = arith.negf %313 : vector<2x32xf32>
    %315 = math.exp %314 : vector<2x32xf32>
    %cst_85 = arith.constant 1.000000e+00 : f32
    %316 = vector.broadcast %cst_85 : f32 to vector<2x32xf32>
    %317 = arith.addf %316, %315 : vector<2x32xf32>
    %318 = arith.divf %316, %317 : vector<2x32xf32>
    %319 = vector.extract_strided_slice %306 {offsets = [0, 64], sizes = [2, 32], strides = [1, 1]} : vector<2x128xf32> to vector<2x32xf32>
    %320 = math.tanh %319 : vector<2x32xf32>
    %321 = vector.extract_strided_slice %306 {offsets = [0, 96], sizes = [2, 32], strides = [1, 1]} : vector<2x128xf32> to vector<2x32xf32>
    %322 = arith.negf %321 : vector<2x32xf32>
    %323 = math.exp %322 : vector<2x32xf32>
    %cst_86 = arith.constant 1.000000e+00 : f32
    %324 = vector.broadcast %cst_86 : f32 to vector<2x32xf32>
    %325 = arith.addf %324, %323 : vector<2x32xf32>
    %326 = arith.divf %324, %325 : vector<2x32xf32>
    %327 = arith.mulf %318, %302 : vector<2x32xf32>
    %328 = arith.mulf %312, %320 : vector<2x32xf32>
    %329 = arith.addf %327, %328 : vector<2x32xf32>
    %330 = math.tanh %329 : vector<2x32xf32>
    %331 = arith.mulf %326, %330 : vector<2x32xf32>
    %cst_87 = arith.constant dense<0.000000e+00> : vector<2x128xf32>
    %332 = tpu.matmul %331, %256, %cst_87 {dimension_numbers = #tpu.dot_dimension_numbers<[1], [0], [0], [1], [0, 0, 1, 1], [], []>} : vector<2x32xf32>, vector<32x128xf32>, vector<2x128xf32> -> vector<2x128xf32>
    %333 = arith.addf %265, %332 : vector<2x128xf32>
    %334 = vector.extract_strided_slice %333 {offsets = [0, 0], sizes = [2, 32], strides = [1, 1]} : vector<2x128xf32> to vector<2x32xf32>
    %335 = arith.negf %334 : vector<2x32xf32>
    %336 = math.exp %335 : vector<2x32xf32>
    %cst_88 = arith.constant 1.000000e+00 : f32
    %337 = vector.broadcast %cst_88 : f32 to vector<2x32xf32>
    %338 = arith.addf %337, %336 : vector<2x32xf32>
    %339 = arith.divf %337, %338 : vector<2x32xf32>
    %340 = vector.extract_strided_slice %333 {offsets = [0, 32], sizes = [2, 32], strides = [1, 1]} : vector<2x128xf32> to vector<2x32xf32>
    %341 = arith.negf %340 : vector<2x32xf32>
    %342 = math.exp %341 : vector<2x32xf32>
    %cst_89 = arith.constant 1.000000e+00 : f32
    %343 = vector.broadcast %cst_89 : f32 to vector<2x32xf32>
    %344 = arith.addf %343, %342 : vector<2x32xf32>
    %345 = arith.divf %343, %344 : vector<2x32xf32>
    %346 = vector.extract_strided_slice %333 {offsets = [0, 64], sizes = [2, 32], strides = [1, 1]} : vector<2x128xf32> to vector<2x32xf32>
    %347 = math.tanh %346 : vector<2x32xf32>
    %348 = vector.extract_strided_slice %333 {offsets = [0, 96], sizes = [2, 32], strides = [1, 1]} : vector<2x128xf32> to vector<2x32xf32>
    %349 = arith.negf %348 : vector<2x32xf32>
    %350 = math.exp %349 : vector<2x32xf32>
    %cst_90 = arith.constant 1.000000e+00 : f32
    %351 = vector.broadcast %cst_90 : f32 to vector<2x32xf32>
    %352 = arith.addf %351, %350 : vector<2x32xf32>
    %353 = arith.divf %351, %352 : vector<2x32xf32>
    %354 = arith.mulf %345, %329 : vector<2x32xf32>
    %355 = arith.mulf %339, %347 : vector<2x32xf32>
    %356 = arith.addf %354, %355 : vector<2x32xf32>
    %357 = math.tanh %356 : vector<2x32xf32>
    %358 = arith.mulf %353, %357 : vector<2x32xf32>
    %cst_91 = arith.constant dense<0.000000e+00> : vector<2x128xf32>
    %359 = tpu.matmul %358, %256, %cst_91 {dimension_numbers = #tpu.dot_dimension_numbers<[1], [0], [0], [1], [0, 0, 1, 1], [], []>} : vector<2x32xf32>, vector<32x128xf32>, vector<2x128xf32> -> vector<2x128xf32>
    %360 = arith.addf %267, %359 : vector<2x128xf32>
    %361 = vector.extract_strided_slice %360 {offsets = [0, 0], sizes = [2, 32], strides = [1, 1]} : vector<2x128xf32> to vector<2x32xf32>
    %362 = arith.negf %361 : vector<2x32xf32>
    %363 = math.exp %362 : vector<2x32xf32>
    %cst_92 = arith.constant 1.000000e+00 : f32
    %364 = vector.broadcast %cst_92 : f32 to vector<2x32xf32>
    %365 = arith.addf %364, %363 : vector<2x32xf32>
    %366 = arith.divf %364, %365 : vector<2x32xf32>
    %367 = vector.extract_strided_slice %360 {offsets = [0, 32], sizes = [2, 32], strides = [1, 1]} : vector<2x128xf32> to vector<2x32xf32>
    %368 = arith.negf %367 : vector<2x32xf32>
    %369 = math.exp %368 : vector<2x32xf32>
    %cst_93 = arith.constant 1.000000e+00 : f32
    %370 = vector.broadcast %cst_93 : f32 to vector<2x32xf32>
    %371 = arith.addf %370, %369 : vector<2x32xf32>
    %372 = arith.divf %370, %371 : vector<2x32xf32>
    %373 = vector.extract_strided_slice %360 {offsets = [0, 64], sizes = [2, 32], strides = [1, 1]} : vector<2x128xf32> to vector<2x32xf32>
    %374 = math.tanh %373 : vector<2x32xf32>
    %375 = vector.extract_strided_slice %360 {offsets = [0, 96], sizes = [2, 32], strides = [1, 1]} : vector<2x128xf32> to vector<2x32xf32>
    %376 = arith.negf %375 : vector<2x32xf32>
    %377 = math.exp %376 : vector<2x32xf32>
    %cst_94 = arith.constant 1.000000e+00 : f32
    %378 = vector.broadcast %cst_94 : f32 to vector<2x32xf32>
    %379 = arith.addf %378, %377 : vector<2x32xf32>
    %380 = arith.divf %378, %379 : vector<2x32xf32>
    %381 = arith.mulf %372, %356 : vector<2x32xf32>
    %382 = arith.mulf %366, %374 : vector<2x32xf32>
    %383 = arith.addf %381, %382 : vector<2x32xf32>
    %384 = math.tanh %383 : vector<2x32xf32>
    %385 = arith.mulf %380, %384 : vector<2x32xf32>
    %cst_95 = arith.constant dense<0.000000e+00> : vector<2x128xf32>
    %386 = tpu.matmul %385, %256, %cst_95 {dimension_numbers = #tpu.dot_dimension_numbers<[1], [0], [0], [1], [0, 0, 1, 1], [], []>} : vector<2x32xf32>, vector<32x128xf32>, vector<2x128xf32> -> vector<2x128xf32>
    %387 = arith.addf %269, %386 : vector<2x128xf32>
    %388 = vector.extract_strided_slice %387 {offsets = [0, 0], sizes = [2, 32], strides = [1, 1]} : vector<2x128xf32> to vector<2x32xf32>
    %389 = arith.negf %388 : vector<2x32xf32>
    %390 = math.exp %389 : vector<2x32xf32>
    %cst_96 = arith.constant 1.000000e+00 : f32
    %391 = vector.broadcast %cst_96 : f32 to vector<2x32xf32>
    %392 = arith.addf %391, %390 : vector<2x32xf32>
    %393 = arith.divf %391, %392 : vector<2x32xf32>
    %394 = vector.extract_strided_slice %387 {offsets = [0, 32], sizes = [2, 32], strides = [1, 1]} : vector<2x128xf32> to vector<2x32xf32>
    %395 = arith.negf %394 : vector<2x32xf32>
    %396 = math.exp %395 : vector<2x32xf32>
    %cst_97 = arith.constant 1.000000e+00 : f32
    %397 = vector.broadcast %cst_97 : f32 to vector<2x32xf32>
    %398 = arith.addf %397, %396 : vector<2x32xf32>
    %399 = arith.divf %397, %398 : vector<2x32xf32>
    %400 = vector.extract_strided_slice %387 {offsets = [0, 64], sizes = [2, 32], strides = [1, 1]} : vector<2x128xf32> to vector<2x32xf32>
    %401 = math.tanh %400 : vector<2x32xf32>
    %402 = vector.extract_strided_slice %387 {offsets = [0, 96], sizes = [2, 32], strides = [1, 1]} : vector<2x128xf32> to vector<2x32xf32>
    %403 = arith.negf %402 : vector<2x32xf32>
    %404 = math.exp %403 : vector<2x32xf32>
    %cst_98 = arith.constant 1.000000e+00 : f32
    %405 = vector.broadcast %cst_98 : f32 to vector<2x32xf32>
    %406 = arith.addf %405, %404 : vector<2x32xf32>
    %407 = arith.divf %405, %406 : vector<2x32xf32>
    %408 = arith.mulf %399, %383 : vector<2x32xf32>
    %409 = arith.mulf %393, %401 : vector<2x32xf32>
    %410 = arith.addf %408, %409 : vector<2x32xf32>
    %411 = math.tanh %410 : vector<2x32xf32>
    %412 = arith.mulf %407, %411 : vector<2x32xf32>
    %cst_99 = arith.constant dense<0.000000e+00> : vector<2x128xf32>
    %413 = tpu.matmul %412, %256, %cst_99 {dimension_numbers = #tpu.dot_dimension_numbers<[1], [0], [0], [1], [0, 0, 1, 1], [], []>} : vector<2x32xf32>, vector<32x128xf32>, vector<2x128xf32> -> vector<2x128xf32>
    %414 = arith.addf %271, %413 : vector<2x128xf32>
    %415 = vector.extract_strided_slice %414 {offsets = [0, 0], sizes = [2, 32], strides = [1, 1]} : vector<2x128xf32> to vector<2x32xf32>
    %416 = arith.negf %415 : vector<2x32xf32>
    %417 = math.exp %416 : vector<2x32xf32>
    %cst_100 = arith.constant 1.000000e+00 : f32
    %418 = vector.broadcast %cst_100 : f32 to vector<2x32xf32>
    %419 = arith.addf %418, %417 : vector<2x32xf32>
    %420 = arith.divf %418, %419 : vector<2x32xf32>
    %421 = vector.extract_strided_slice %414 {offsets = [0, 32], sizes = [2, 32], strides = [1, 1]} : vector<2x128xf32> to vector<2x32xf32>
    %422 = arith.negf %421 : vector<2x32xf32>
    %423 = math.exp %422 : vector<2x32xf32>
    %cst_101 = arith.constant 1.000000e+00 : f32
    %424 = vector.broadcast %cst_101 : f32 to vector<2x32xf32>
    %425 = arith.addf %424, %423 : vector<2x32xf32>
    %426 = arith.divf %424, %425 : vector<2x32xf32>
    %427 = vector.extract_strided_slice %414 {offsets = [0, 64], sizes = [2, 32], strides = [1, 1]} : vector<2x128xf32> to vector<2x32xf32>
    %428 = math.tanh %427 : vector<2x32xf32>
    %429 = vector.extract_strided_slice %414 {offsets = [0, 96], sizes = [2, 32], strides = [1, 1]} : vector<2x128xf32> to vector<2x32xf32>
    %430 = arith.negf %429 : vector<2x32xf32>
    %431 = math.exp %430 : vector<2x32xf32>
    %cst_102 = arith.constant 1.000000e+00 : f32
    %432 = vector.broadcast %cst_102 : f32 to vector<2x32xf32>
    %433 = arith.addf %432, %431 : vector<2x32xf32>
    %434 = arith.divf %432, %433 : vector<2x32xf32>
    %435 = arith.mulf %426, %410 : vector<2x32xf32>
    %436 = arith.mulf %420, %428 : vector<2x32xf32>
    %437 = arith.addf %435, %436 : vector<2x32xf32>
    %438 = math.tanh %437 : vector<2x32xf32>
    %439 = arith.mulf %434, %438 : vector<2x32xf32>
    %cst_103 = arith.constant dense<0.000000e+00> : vector<2x128xf32>
    %440 = tpu.matmul %439, %256, %cst_103 {dimension_numbers = #tpu.dot_dimension_numbers<[1], [0], [0], [1], [0, 0, 1, 1], [], []>} : vector<2x32xf32>, vector<32x128xf32>, vector<2x128xf32> -> vector<2x128xf32>
    %441 = arith.addf %273, %440 : vector<2x128xf32>
    %442 = vector.extract_strided_slice %441 {offsets = [0, 0], sizes = [2, 32], strides = [1, 1]} : vector<2x128xf32> to vector<2x32xf32>
    %443 = arith.negf %442 : vector<2x32xf32>
    %444 = math.exp %443 : vector<2x32xf32>
    %cst_104 = arith.constant 1.000000e+00 : f32
    %445 = vector.broadcast %cst_104 : f32 to vector<2x32xf32>
    %446 = arith.addf %445, %444 : vector<2x32xf32>
    %447 = arith.divf %445, %446 : vector<2x32xf32>
    %448 = vector.extract_strided_slice %441 {offsets = [0, 32], sizes = [2, 32], strides = [1, 1]} : vector<2x128xf32> to vector<2x32xf32>
    %449 = arith.negf %448 : vector<2x32xf32>
    %450 = math.exp %449 : vector<2x32xf32>
    %cst_105 = arith.constant 1.000000e+00 : f32
    %451 = vector.broadcast %cst_105 : f32 to vector<2x32xf32>
    %452 = arith.addf %451, %450 : vector<2x32xf32>
    %453 = arith.divf %451, %452 : vector<2x32xf32>
    %454 = vector.extract_strided_slice %441 {offsets = [0, 64], sizes = [2, 32], strides = [1, 1]} : vector<2x128xf32> to vector<2x32xf32>
    %455 = math.tanh %454 : vector<2x32xf32>
    %456 = vector.extract_strided_slice %441 {offsets = [0, 96], sizes = [2, 32], strides = [1, 1]} : vector<2x128xf32> to vector<2x32xf32>
    %457 = arith.negf %456 : vector<2x32xf32>
    %458 = math.exp %457 : vector<2x32xf32>
    %cst_106 = arith.constant 1.000000e+00 : f32
    %459 = vector.broadcast %cst_106 : f32 to vector<2x32xf32>
    %460 = arith.addf %459, %458 : vector<2x32xf32>
    %461 = arith.divf %459, %460 : vector<2x32xf32>
    %462 = arith.mulf %453, %437 : vector<2x32xf32>
    %463 = arith.mulf %447, %455 : vector<2x32xf32>
    %464 = arith.addf %462, %463 : vector<2x32xf32>
    %465 = math.tanh %464 : vector<2x32xf32>
    %466 = arith.mulf %461, %465 : vector<2x32xf32>
    %cst_107 = arith.constant dense<0.000000e+00> : vector<2x128xf32>
    %467 = tpu.matmul %466, %256, %cst_107 {dimension_numbers = #tpu.dot_dimension_numbers<[1], [0], [0], [1], [0, 0, 1, 1], [], []>} : vector<2x32xf32>, vector<32x128xf32>, vector<2x128xf32> -> vector<2x128xf32>
    %468 = arith.addf %275, %467 : vector<2x128xf32>
    %469 = vector.extract_strided_slice %468 {offsets = [0, 0], sizes = [2, 32], strides = [1, 1]} : vector<2x128xf32> to vector<2x32xf32>
    %470 = arith.negf %469 : vector<2x32xf32>
    %471 = math.exp %470 : vector<2x32xf32>
    %cst_108 = arith.constant 1.000000e+00 : f32
    %472 = vector.broadcast %cst_108 : f32 to vector<2x32xf32>
    %473 = arith.addf %472, %471 : vector<2x32xf32>
    %474 = arith.divf %472, %473 : vector<2x32xf32>
    %475 = vector.extract_strided_slice %468 {offsets = [0, 32], sizes = [2, 32], strides = [1, 1]} : vector<2x128xf32> to vector<2x32xf32>
    %476 = arith.negf %475 : vector<2x32xf32>
    %477 = math.exp %476 : vector<2x32xf32>
    %cst_109 = arith.constant 1.000000e+00 : f32
    %478 = vector.broadcast %cst_109 : f32 to vector<2x32xf32>
    %479 = arith.addf %478, %477 : vector<2x32xf32>
    %480 = arith.divf %478, %479 : vector<2x32xf32>
    %481 = vector.extract_strided_slice %468 {offsets = [0, 64], sizes = [2, 32], strides = [1, 1]} : vector<2x128xf32> to vector<2x32xf32>
    %482 = math.tanh %481 : vector<2x32xf32>
    %483 = vector.extract_strided_slice %468 {offsets = [0, 96], sizes = [2, 32], strides = [1, 1]} : vector<2x128xf32> to vector<2x32xf32>
    %484 = arith.negf %483 : vector<2x32xf32>
    %485 = math.exp %484 : vector<2x32xf32>
    %cst_110 = arith.constant 1.000000e+00 : f32
    %486 = vector.broadcast %cst_110 : f32 to vector<2x32xf32>
    %487 = arith.addf %486, %485 : vector<2x32xf32>
    %488 = arith.divf %486, %487 : vector<2x32xf32>
    %489 = arith.mulf %480, %464 : vector<2x32xf32>
    %490 = arith.mulf %474, %482 : vector<2x32xf32>
    %491 = arith.addf %489, %490 : vector<2x32xf32>
    %492 = math.tanh %491 : vector<2x32xf32>
    %493 = arith.mulf %488, %492 : vector<2x32xf32>
    %c0_111 = arith.constant 0 : index
    %c0_112 = arith.constant 0 : index
    %494 = vector.load %arg7[%c0_111, %c0_112] : memref<256x16xf32, #tpu.memory_space<vmem>>, vector<256x16xf32>
    %c0_113 = arith.constant 0 : index
    %c0_114 = arith.constant 0 : index
    %495 = vector.load %arg8[%c0_113, %c0_114] : memref<1x16xf32, #tpu.memory_space<vmem>>, vector<1x16xf32>
    %496 = vector.shape_cast %495 : vector<1x16xf32> to vector<1x16xf32>
    %497 = vector.broadcast %496 : vector<1x16xf32> to vector<2x16xf32>
    %498 = vector.extract_strided_slice %494 {offsets = [0, 0], sizes = [32, 16], strides = [1, 1]} : vector<256x16xf32> to vector<32x16xf32>
    %cst_115 = arith.constant dense<0.000000e+00> : vector<2x16xf32>
    %499 = tpu.matmul %304, %498, %cst_115 {dimension_numbers = #tpu.dot_dimension_numbers<[1], [0], [0], [1], [0, 0, 1, 1], [], []>} : vector<2x32xf32>, vector<32x16xf32>, vector<2x16xf32> -> vector<2x16xf32>
    %500 = arith.addf %497, %499 : vector<2x16xf32>
    %501 = vector.extract_strided_slice %494 {offsets = [32, 0], sizes = [32, 16], strides = [1, 1]} : vector<256x16xf32> to vector<32x16xf32>
    %cst_116 = arith.constant dense<0.000000e+00> : vector<2x16xf32>
    %502 = tpu.matmul %331, %501, %cst_116 {dimension_numbers = #tpu.dot_dimension_numbers<[1], [0], [0], [1], [0, 0, 1, 1], [], []>} : vector<2x32xf32>, vector<32x16xf32>, vector<2x16xf32> -> vector<2x16xf32>
    %503 = arith.addf %500, %502 : vector<2x16xf32>
    %504 = vector.extract_strided_slice %494 {offsets = [64, 0], sizes = [32, 16], strides = [1, 1]} : vector<256x16xf32> to vector<32x16xf32>
    %cst_117 = arith.constant dense<0.000000e+00> : vector<2x16xf32>
    %505 = tpu.matmul %358, %504, %cst_117 {dimension_numbers = #tpu.dot_dimension_numbers<[1], [0], [0], [1], [0, 0, 1, 1], [], []>} : vector<2x32xf32>, vector<32x16xf32>, vector<2x16xf32> -> vector<2x16xf32>
    %506 = arith.addf %503, %505 : vector<2x16xf32>
    %507 = vector.extract_strided_slice %494 {offsets = [96, 0], sizes = [32, 16], strides = [1, 1]} : vector<256x16xf32> to vector<32x16xf32>
    %cst_118 = arith.constant dense<0.000000e+00> : vector<2x16xf32>
    %508 = tpu.matmul %385, %507, %cst_118 {dimension_numbers = #tpu.dot_dimension_numbers<[1], [0], [0], [1], [0, 0, 1, 1], [], []>} : vector<2x32xf32>, vector<32x16xf32>, vector<2x16xf32> -> vector<2x16xf32>
    %509 = arith.addf %506, %508 : vector<2x16xf32>
    %510 = vector.extract_strided_slice %494 {offsets = [128, 0], sizes = [32, 16], strides = [1, 1]} : vector<256x16xf32> to vector<32x16xf32>
    %cst_119 = arith.constant dense<0.000000e+00> : vector<2x16xf32>
    %511 = tpu.matmul %412, %510, %cst_119 {dimension_numbers = #tpu.dot_dimension_numbers<[1], [0], [0], [1], [0, 0, 1, 1], [], []>} : vector<2x32xf32>, vector<32x16xf32>, vector<2x16xf32> -> vector<2x16xf32>
    %512 = arith.addf %509, %511 : vector<2x16xf32>
    %513 = vector.extract_strided_slice %494 {offsets = [160, 0], sizes = [32, 16], strides = [1, 1]} : vector<256x16xf32> to vector<32x16xf32>
    %cst_120 = arith.constant dense<0.000000e+00> : vector<2x16xf32>
    %514 = tpu.matmul %439, %513, %cst_120 {dimension_numbers = #tpu.dot_dimension_numbers<[1], [0], [0], [1], [0, 0, 1, 1], [], []>} : vector<2x32xf32>, vector<32x16xf32>, vector<2x16xf32> -> vector<2x16xf32>
    %515 = arith.addf %512, %514 : vector<2x16xf32>
    %516 = vector.extract_strided_slice %494 {offsets = [192, 0], sizes = [32, 16], strides = [1, 1]} : vector<256x16xf32> to vector<32x16xf32>
    %cst_121 = arith.constant dense<0.000000e+00> : vector<2x16xf32>
    %517 = tpu.matmul %466, %516, %cst_121 {dimension_numbers = #tpu.dot_dimension_numbers<[1], [0], [0], [1], [0, 0, 1, 1], [], []>} : vector<2x32xf32>, vector<32x16xf32>, vector<2x16xf32> -> vector<2x16xf32>
    %518 = arith.addf %515, %517 : vector<2x16xf32>
    %519 = vector.extract_strided_slice %494 {offsets = [224, 0], sizes = [32, 16], strides = [1, 1]} : vector<256x16xf32> to vector<32x16xf32>
    %cst_122 = arith.constant dense<0.000000e+00> : vector<2x16xf32>
    %520 = tpu.matmul %493, %519, %cst_122 {dimension_numbers = #tpu.dot_dimension_numbers<[1], [0], [0], [1], [0, 0, 1, 1], [], []>} : vector<2x32xf32>, vector<32x16xf32>, vector<2x16xf32> -> vector<2x16xf32>
    %521 = arith.addf %518, %520 : vector<2x16xf32>
    %c0_123 = arith.constant 0 : index
    %c0_124 = arith.constant 0 : index
    %522 = vector.load %arg9[%c0_123, %c0_124] : memref<16x256xf32, #tpu.memory_space<vmem>>, vector<16x256xf32>
    %cst_125 = arith.constant dense<0.000000e+00> : vector<2x256xf32>
    %523 = tpu.matmul %521, %522, %cst_125 {dimension_numbers = #tpu.dot_dimension_numbers<[1], [0], [0], [1], [0, 0, 1, 1], [], []>} : vector<2x16xf32>, vector<16x256xf32>, vector<2x256xf32> -> vector<2x256xf32>
    %c0_126 = arith.constant 0 : index
    %c0_127 = arith.constant 0 : index
    %524 = vector.load %arg10[%c0_126, %c0_127] : memref<1x256xf32, #tpu.memory_space<vmem>>, vector<1x256xf32>
    %525 = vector.broadcast %524 : vector<1x256xf32> to vector<2x256xf32>
    %526 = arith.addf %523, %525 : vector<2x256xf32>
    %527 = vector.extract_strided_slice %526 {offsets = [0, 0], sizes = [2, 32], strides = [1, 1]} : vector<2x256xf32> to vector<2x32xf32>
    %528 = vector.extract_strided_slice %526 {offsets = [0, 32], sizes = [2, 32], strides = [1, 1]} : vector<2x256xf32> to vector<2x32xf32>
    %529 = vector.extract_strided_slice %526 {offsets = [0, 64], sizes = [2, 32], strides = [1, 1]} : vector<2x256xf32> to vector<2x32xf32>
    %530 = vector.extract_strided_slice %526 {offsets = [0, 96], sizes = [2, 32], strides = [1, 1]} : vector<2x256xf32> to vector<2x32xf32>
    %531 = vector.extract_strided_slice %526 {offsets = [0, 128], sizes = [2, 32], strides = [1, 1]} : vector<2x256xf32> to vector<2x32xf32>
    %532 = vector.extract_strided_slice %526 {offsets = [0, 160], sizes = [2, 32], strides = [1, 1]} : vector<2x256xf32> to vector<2x32xf32>
    %533 = vector.extract_strided_slice %526 {offsets = [0, 192], sizes = [2, 32], strides = [1, 1]} : vector<2x256xf32> to vector<2x32xf32>
    %534 = vector.extract_strided_slice %526 {offsets = [0, 224], sizes = [2, 32], strides = [1, 1]} : vector<2x256xf32> to vector<2x32xf32>
    %c0_128 = arith.constant 0 : index
    %c0_129 = arith.constant 0 : index
    %535 = vector.load %arg11[%c0_128, %c0_129] : memref<32x16xf32, #tpu.memory_space<vmem>>, vector<32x16xf32>
    %c0_130 = arith.constant 0 : index
    %c0_131 = arith.constant 0 : index
    %536 = vector.load %arg12[%c0_130, %c0_131] : memref<4x16xf32, #tpu.memory_space<vmem>>, vector<4x16xf32>
    %c0_132 = arith.constant 0 : index
    %c0_133 = arith.constant 0 : index
    %537 = vector.load %arg13[%c0_132, %c0_133] : memref<1x16xf32, #tpu.memory_space<vmem>>, vector<1x16xf32>
    %538 = vector.shape_cast %537 : vector<1x16xf32> to vector<1x16xf32>
    %539 = vector.broadcast %538 : vector<1x16xf32> to vector<2x16xf32>
    %cst_134 = arith.constant dense<0.000000e+00> : vector<2x16xf32>
    %540 = tpu.matmul %527, %535, %cst_134 {dimension_numbers = #tpu.dot_dimension_numbers<[1], [0], [0], [1], [0, 0, 1, 1], [], []>} : vector<2x32xf32>, vector<32x16xf32>, vector<2x16xf32> -> vector<2x16xf32>
    %541 = arith.addf %540, %539 : vector<2x16xf32>
    %cst_135 = arith.constant dense<0.000000e+00> : vector<2x16xf32>
    %542 = tpu.matmul %528, %535, %cst_135 {dimension_numbers = #tpu.dot_dimension_numbers<[1], [0], [0], [1], [0, 0, 1, 1], [], []>} : vector<2x32xf32>, vector<32x16xf32>, vector<2x16xf32> -> vector<2x16xf32>
    %543 = arith.addf %542, %539 : vector<2x16xf32>
    %cst_136 = arith.constant dense<0.000000e+00> : vector<2x16xf32>
    %544 = tpu.matmul %529, %535, %cst_136 {dimension_numbers = #tpu.dot_dimension_numbers<[1], [0], [0], [1], [0, 0, 1, 1], [], []>} : vector<2x32xf32>, vector<32x16xf32>, vector<2x16xf32> -> vector<2x16xf32>
    %545 = arith.addf %544, %539 : vector<2x16xf32>
    %cst_137 = arith.constant dense<0.000000e+00> : vector<2x16xf32>
    %546 = tpu.matmul %530, %535, %cst_137 {dimension_numbers = #tpu.dot_dimension_numbers<[1], [0], [0], [1], [0, 0, 1, 1], [], []>} : vector<2x32xf32>, vector<32x16xf32>, vector<2x16xf32> -> vector<2x16xf32>
    %547 = arith.addf %546, %539 : vector<2x16xf32>
    %cst_138 = arith.constant dense<0.000000e+00> : vector<2x16xf32>
    %548 = tpu.matmul %531, %535, %cst_138 {dimension_numbers = #tpu.dot_dimension_numbers<[1], [0], [0], [1], [0, 0, 1, 1], [], []>} : vector<2x32xf32>, vector<32x16xf32>, vector<2x16xf32> -> vector<2x16xf32>
    %549 = arith.addf %548, %539 : vector<2x16xf32>
    %cst_139 = arith.constant dense<0.000000e+00> : vector<2x16xf32>
    %550 = tpu.matmul %532, %535, %cst_139 {dimension_numbers = #tpu.dot_dimension_numbers<[1], [0], [0], [1], [0, 0, 1, 1], [], []>} : vector<2x32xf32>, vector<32x16xf32>, vector<2x16xf32> -> vector<2x16xf32>
    %551 = arith.addf %550, %539 : vector<2x16xf32>
    %cst_140 = arith.constant dense<0.000000e+00> : vector<2x16xf32>
    %552 = tpu.matmul %533, %535, %cst_140 {dimension_numbers = #tpu.dot_dimension_numbers<[1], [0], [0], [1], [0, 0, 1, 1], [], []>} : vector<2x32xf32>, vector<32x16xf32>, vector<2x16xf32> -> vector<2x16xf32>
    %553 = arith.addf %552, %539 : vector<2x16xf32>
    %cst_141 = arith.constant dense<0.000000e+00> : vector<2x16xf32>
    %554 = tpu.matmul %534, %535, %cst_141 {dimension_numbers = #tpu.dot_dimension_numbers<[1], [0], [0], [1], [0, 0, 1, 1], [], []>} : vector<2x32xf32>, vector<32x16xf32>, vector<2x16xf32> -> vector<2x16xf32>
    %555 = arith.addf %554, %539 : vector<2x16xf32>
    %cst_142 = arith.constant 0.000000e+00 : f32
    %556 = vector.broadcast %cst_142 : f32 to vector<2x4xf32>
    %cst_143 = arith.constant 0.000000e+00 : f32
    %557 = vector.broadcast %cst_143 : f32 to vector<2x4xf32>
    %cst_144 = arith.constant dense<0.000000e+00> : vector<2x16xf32>
    %558 = tpu.matmul %556, %536, %cst_144 {dimension_numbers = #tpu.dot_dimension_numbers<[1], [0], [0], [1], [0, 0, 1, 1], [], []>} : vector<2x4xf32>, vector<4x16xf32>, vector<2x16xf32> -> vector<2x16xf32>
    %559 = arith.addf %541, %558 : vector<2x16xf32>
    %560 = vector.extract_strided_slice %559 {offsets = [0, 0], sizes = [2, 4], strides = [1, 1]} : vector<2x16xf32> to vector<2x4xf32>
    %561 = arith.negf %560 : vector<2x4xf32>
    %562 = math.exp %561 : vector<2x4xf32>
    %cst_145 = arith.constant 1.000000e+00 : f32
    %563 = vector.broadcast %cst_145 : f32 to vector<2x4xf32>
    %564 = arith.addf %563, %562 : vector<2x4xf32>
    %565 = arith.divf %563, %564 : vector<2x4xf32>
    %566 = vector.extract_strided_slice %559 {offsets = [0, 4], sizes = [2, 4], strides = [1, 1]} : vector<2x16xf32> to vector<2x4xf32>
    %567 = arith.negf %566 : vector<2x4xf32>
    %568 = math.exp %567 : vector<2x4xf32>
    %cst_146 = arith.constant 1.000000e+00 : f32
    %569 = vector.broadcast %cst_146 : f32 to vector<2x4xf32>
    %570 = arith.addf %569, %568 : vector<2x4xf32>
    %571 = arith.divf %569, %570 : vector<2x4xf32>
    %572 = vector.extract_strided_slice %559 {offsets = [0, 8], sizes = [2, 4], strides = [1, 1]} : vector<2x16xf32> to vector<2x4xf32>
    %573 = math.tanh %572 : vector<2x4xf32>
    %574 = vector.extract_strided_slice %559 {offsets = [0, 12], sizes = [2, 4], strides = [1, 1]} : vector<2x16xf32> to vector<2x4xf32>
    %575 = arith.negf %574 : vector<2x4xf32>
    %576 = math.exp %575 : vector<2x4xf32>
    %cst_147 = arith.constant 1.000000e+00 : f32
    %577 = vector.broadcast %cst_147 : f32 to vector<2x4xf32>
    %578 = arith.addf %577, %576 : vector<2x4xf32>
    %579 = arith.divf %577, %578 : vector<2x4xf32>
    %580 = arith.mulf %571, %557 : vector<2x4xf32>
    %581 = arith.mulf %565, %573 : vector<2x4xf32>
    %582 = arith.addf %580, %581 : vector<2x4xf32>
    %583 = math.tanh %582 : vector<2x4xf32>
    %584 = arith.mulf %579, %583 : vector<2x4xf32>
    %cst_148 = arith.constant dense<0.000000e+00> : vector<2x16xf32>
    %585 = tpu.matmul %584, %536, %cst_148 {dimension_numbers = #tpu.dot_dimension_numbers<[1], [0], [0], [1], [0, 0, 1, 1], [], []>} : vector<2x4xf32>, vector<4x16xf32>, vector<2x16xf32> -> vector<2x16xf32>
    %586 = arith.addf %543, %585 : vector<2x16xf32>
    %587 = vector.extract_strided_slice %586 {offsets = [0, 0], sizes = [2, 4], strides = [1, 1]} : vector<2x16xf32> to vector<2x4xf32>
    %588 = arith.negf %587 : vector<2x4xf32>
    %589 = math.exp %588 : vector<2x4xf32>
    %cst_149 = arith.constant 1.000000e+00 : f32
    %590 = vector.broadcast %cst_149 : f32 to vector<2x4xf32>
    %591 = arith.addf %590, %589 : vector<2x4xf32>
    %592 = arith.divf %590, %591 : vector<2x4xf32>
    %593 = vector.extract_strided_slice %586 {offsets = [0, 4], sizes = [2, 4], strides = [1, 1]} : vector<2x16xf32> to vector<2x4xf32>
    %594 = arith.negf %593 : vector<2x4xf32>
    %595 = math.exp %594 : vector<2x4xf32>
    %cst_150 = arith.constant 1.000000e+00 : f32
    %596 = vector.broadcast %cst_150 : f32 to vector<2x4xf32>
    %597 = arith.addf %596, %595 : vector<2x4xf32>
    %598 = arith.divf %596, %597 : vector<2x4xf32>
    %599 = vector.extract_strided_slice %586 {offsets = [0, 8], sizes = [2, 4], strides = [1, 1]} : vector<2x16xf32> to vector<2x4xf32>
    %600 = math.tanh %599 : vector<2x4xf32>
    %601 = vector.extract_strided_slice %586 {offsets = [0, 12], sizes = [2, 4], strides = [1, 1]} : vector<2x16xf32> to vector<2x4xf32>
    %602 = arith.negf %601 : vector<2x4xf32>
    %603 = math.exp %602 : vector<2x4xf32>
    %cst_151 = arith.constant 1.000000e+00 : f32
    %604 = vector.broadcast %cst_151 : f32 to vector<2x4xf32>
    %605 = arith.addf %604, %603 : vector<2x4xf32>
    %606 = arith.divf %604, %605 : vector<2x4xf32>
    %607 = arith.mulf %598, %582 : vector<2x4xf32>
    %608 = arith.mulf %592, %600 : vector<2x4xf32>
    %609 = arith.addf %607, %608 : vector<2x4xf32>
    %610 = math.tanh %609 : vector<2x4xf32>
    %611 = arith.mulf %606, %610 : vector<2x4xf32>
    %cst_152 = arith.constant dense<0.000000e+00> : vector<2x16xf32>
    %612 = tpu.matmul %611, %536, %cst_152 {dimension_numbers = #tpu.dot_dimension_numbers<[1], [0], [0], [1], [0, 0, 1, 1], [], []>} : vector<2x4xf32>, vector<4x16xf32>, vector<2x16xf32> -> vector<2x16xf32>
    %613 = arith.addf %545, %612 : vector<2x16xf32>
    %614 = vector.extract_strided_slice %613 {offsets = [0, 0], sizes = [2, 4], strides = [1, 1]} : vector<2x16xf32> to vector<2x4xf32>
    %615 = arith.negf %614 : vector<2x4xf32>
    %616 = math.exp %615 : vector<2x4xf32>
    %cst_153 = arith.constant 1.000000e+00 : f32
    %617 = vector.broadcast %cst_153 : f32 to vector<2x4xf32>
    %618 = arith.addf %617, %616 : vector<2x4xf32>
    %619 = arith.divf %617, %618 : vector<2x4xf32>
    %620 = vector.extract_strided_slice %613 {offsets = [0, 4], sizes = [2, 4], strides = [1, 1]} : vector<2x16xf32> to vector<2x4xf32>
    %621 = arith.negf %620 : vector<2x4xf32>
    %622 = math.exp %621 : vector<2x4xf32>
    %cst_154 = arith.constant 1.000000e+00 : f32
    %623 = vector.broadcast %cst_154 : f32 to vector<2x4xf32>
    %624 = arith.addf %623, %622 : vector<2x4xf32>
    %625 = arith.divf %623, %624 : vector<2x4xf32>
    %626 = vector.extract_strided_slice %613 {offsets = [0, 8], sizes = [2, 4], strides = [1, 1]} : vector<2x16xf32> to vector<2x4xf32>
    %627 = math.tanh %626 : vector<2x4xf32>
    %628 = vector.extract_strided_slice %613 {offsets = [0, 12], sizes = [2, 4], strides = [1, 1]} : vector<2x16xf32> to vector<2x4xf32>
    %629 = arith.negf %628 : vector<2x4xf32>
    %630 = math.exp %629 : vector<2x4xf32>
    %cst_155 = arith.constant 1.000000e+00 : f32
    %631 = vector.broadcast %cst_155 : f32 to vector<2x4xf32>
    %632 = arith.addf %631, %630 : vector<2x4xf32>
    %633 = arith.divf %631, %632 : vector<2x4xf32>
    %634 = arith.mulf %625, %609 : vector<2x4xf32>
    %635 = arith.mulf %619, %627 : vector<2x4xf32>
    %636 = arith.addf %634, %635 : vector<2x4xf32>
    %637 = math.tanh %636 : vector<2x4xf32>
    %638 = arith.mulf %633, %637 : vector<2x4xf32>
    %cst_156 = arith.constant dense<0.000000e+00> : vector<2x16xf32>
    %639 = tpu.matmul %638, %536, %cst_156 {dimension_numbers = #tpu.dot_dimension_numbers<[1], [0], [0], [1], [0, 0, 1, 1], [], []>} : vector<2x4xf32>, vector<4x16xf32>, vector<2x16xf32> -> vector<2x16xf32>
    %640 = arith.addf %547, %639 : vector<2x16xf32>
    %641 = vector.extract_strided_slice %640 {offsets = [0, 0], sizes = [2, 4], strides = [1, 1]} : vector<2x16xf32> to vector<2x4xf32>
    %642 = arith.negf %641 : vector<2x4xf32>
    %643 = math.exp %642 : vector<2x4xf32>
    %cst_157 = arith.constant 1.000000e+00 : f32
    %644 = vector.broadcast %cst_157 : f32 to vector<2x4xf32>
    %645 = arith.addf %644, %643 : vector<2x4xf32>
    %646 = arith.divf %644, %645 : vector<2x4xf32>
    %647 = vector.extract_strided_slice %640 {offsets = [0, 4], sizes = [2, 4], strides = [1, 1]} : vector<2x16xf32> to vector<2x4xf32>
    %648 = arith.negf %647 : vector<2x4xf32>
    %649 = math.exp %648 : vector<2x4xf32>
    %cst_158 = arith.constant 1.000000e+00 : f32
    %650 = vector.broadcast %cst_158 : f32 to vector<2x4xf32>
    %651 = arith.addf %650, %649 : vector<2x4xf32>
    %652 = arith.divf %650, %651 : vector<2x4xf32>
    %653 = vector.extract_strided_slice %640 {offsets = [0, 8], sizes = [2, 4], strides = [1, 1]} : vector<2x16xf32> to vector<2x4xf32>
    %654 = math.tanh %653 : vector<2x4xf32>
    %655 = vector.extract_strided_slice %640 {offsets = [0, 12], sizes = [2, 4], strides = [1, 1]} : vector<2x16xf32> to vector<2x4xf32>
    %656 = arith.negf %655 : vector<2x4xf32>
    %657 = math.exp %656 : vector<2x4xf32>
    %cst_159 = arith.constant 1.000000e+00 : f32
    %658 = vector.broadcast %cst_159 : f32 to vector<2x4xf32>
    %659 = arith.addf %658, %657 : vector<2x4xf32>
    %660 = arith.divf %658, %659 : vector<2x4xf32>
    %661 = arith.mulf %652, %636 : vector<2x4xf32>
    %662 = arith.mulf %646, %654 : vector<2x4xf32>
    %663 = arith.addf %661, %662 : vector<2x4xf32>
    %664 = math.tanh %663 : vector<2x4xf32>
    %665 = arith.mulf %660, %664 : vector<2x4xf32>
    %cst_160 = arith.constant dense<0.000000e+00> : vector<2x16xf32>
    %666 = tpu.matmul %665, %536, %cst_160 {dimension_numbers = #tpu.dot_dimension_numbers<[1], [0], [0], [1], [0, 0, 1, 1], [], []>} : vector<2x4xf32>, vector<4x16xf32>, vector<2x16xf32> -> vector<2x16xf32>
    %667 = arith.addf %549, %666 : vector<2x16xf32>
    %668 = vector.extract_strided_slice %667 {offsets = [0, 0], sizes = [2, 4], strides = [1, 1]} : vector<2x16xf32> to vector<2x4xf32>
    %669 = arith.negf %668 : vector<2x4xf32>
    %670 = math.exp %669 : vector<2x4xf32>
    %cst_161 = arith.constant 1.000000e+00 : f32
    %671 = vector.broadcast %cst_161 : f32 to vector<2x4xf32>
    %672 = arith.addf %671, %670 : vector<2x4xf32>
    %673 = arith.divf %671, %672 : vector<2x4xf32>
    %674 = vector.extract_strided_slice %667 {offsets = [0, 4], sizes = [2, 4], strides = [1, 1]} : vector<2x16xf32> to vector<2x4xf32>
    %675 = arith.negf %674 : vector<2x4xf32>
    %676 = math.exp %675 : vector<2x4xf32>
    %cst_162 = arith.constant 1.000000e+00 : f32
    %677 = vector.broadcast %cst_162 : f32 to vector<2x4xf32>
    %678 = arith.addf %677, %676 : vector<2x4xf32>
    %679 = arith.divf %677, %678 : vector<2x4xf32>
    %680 = vector.extract_strided_slice %667 {offsets = [0, 8], sizes = [2, 4], strides = [1, 1]} : vector<2x16xf32> to vector<2x4xf32>
    %681 = math.tanh %680 : vector<2x4xf32>
    %682 = vector.extract_strided_slice %667 {offsets = [0, 12], sizes = [2, 4], strides = [1, 1]} : vector<2x16xf32> to vector<2x4xf32>
    %683 = arith.negf %682 : vector<2x4xf32>
    %684 = math.exp %683 : vector<2x4xf32>
    %cst_163 = arith.constant 1.000000e+00 : f32
    %685 = vector.broadcast %cst_163 : f32 to vector<2x4xf32>
    %686 = arith.addf %685, %684 : vector<2x4xf32>
    %687 = arith.divf %685, %686 : vector<2x4xf32>
    %688 = arith.mulf %679, %663 : vector<2x4xf32>
    %689 = arith.mulf %673, %681 : vector<2x4xf32>
    %690 = arith.addf %688, %689 : vector<2x4xf32>
    %691 = math.tanh %690 : vector<2x4xf32>
    %692 = arith.mulf %687, %691 : vector<2x4xf32>
    %cst_164 = arith.constant dense<0.000000e+00> : vector<2x16xf32>
    %693 = tpu.matmul %692, %536, %cst_164 {dimension_numbers = #tpu.dot_dimension_numbers<[1], [0], [0], [1], [0, 0, 1, 1], [], []>} : vector<2x4xf32>, vector<4x16xf32>, vector<2x16xf32> -> vector<2x16xf32>
    %694 = arith.addf %551, %693 : vector<2x16xf32>
    %695 = vector.extract_strided_slice %694 {offsets = [0, 0], sizes = [2, 4], strides = [1, 1]} : vector<2x16xf32> to vector<2x4xf32>
    %696 = arith.negf %695 : vector<2x4xf32>
    %697 = math.exp %696 : vector<2x4xf32>
    %cst_165 = arith.constant 1.000000e+00 : f32
    %698 = vector.broadcast %cst_165 : f32 to vector<2x4xf32>
    %699 = arith.addf %698, %697 : vector<2x4xf32>
    %700 = arith.divf %698, %699 : vector<2x4xf32>
    %701 = vector.extract_strided_slice %694 {offsets = [0, 4], sizes = [2, 4], strides = [1, 1]} : vector<2x16xf32> to vector<2x4xf32>
    %702 = arith.negf %701 : vector<2x4xf32>
    %703 = math.exp %702 : vector<2x4xf32>
    %cst_166 = arith.constant 1.000000e+00 : f32
    %704 = vector.broadcast %cst_166 : f32 to vector<2x4xf32>
    %705 = arith.addf %704, %703 : vector<2x4xf32>
    %706 = arith.divf %704, %705 : vector<2x4xf32>
    %707 = vector.extract_strided_slice %694 {offsets = [0, 8], sizes = [2, 4], strides = [1, 1]} : vector<2x16xf32> to vector<2x4xf32>
    %708 = math.tanh %707 : vector<2x4xf32>
    %709 = vector.extract_strided_slice %694 {offsets = [0, 12], sizes = [2, 4], strides = [1, 1]} : vector<2x16xf32> to vector<2x4xf32>
    %710 = arith.negf %709 : vector<2x4xf32>
    %711 = math.exp %710 : vector<2x4xf32>
    %cst_167 = arith.constant 1.000000e+00 : f32
    %712 = vector.broadcast %cst_167 : f32 to vector<2x4xf32>
    %713 = arith.addf %712, %711 : vector<2x4xf32>
    %714 = arith.divf %712, %713 : vector<2x4xf32>
    %715 = arith.mulf %706, %690 : vector<2x4xf32>
    %716 = arith.mulf %700, %708 : vector<2x4xf32>
    %717 = arith.addf %715, %716 : vector<2x4xf32>
    %718 = math.tanh %717 : vector<2x4xf32>
    %719 = arith.mulf %714, %718 : vector<2x4xf32>
    %cst_168 = arith.constant dense<0.000000e+00> : vector<2x16xf32>
    %720 = tpu.matmul %719, %536, %cst_168 {dimension_numbers = #tpu.dot_dimension_numbers<[1], [0], [0], [1], [0, 0, 1, 1], [], []>} : vector<2x4xf32>, vector<4x16xf32>, vector<2x16xf32> -> vector<2x16xf32>
    %721 = arith.addf %553, %720 : vector<2x16xf32>
    %722 = vector.extract_strided_slice %721 {offsets = [0, 0], sizes = [2, 4], strides = [1, 1]} : vector<2x16xf32> to vector<2x4xf32>
    %723 = arith.negf %722 : vector<2x4xf32>
    %724 = math.exp %723 : vector<2x4xf32>
    %cst_169 = arith.constant 1.000000e+00 : f32
    %725 = vector.broadcast %cst_169 : f32 to vector<2x4xf32>
    %726 = arith.addf %725, %724 : vector<2x4xf32>
    %727 = arith.divf %725, %726 : vector<2x4xf32>
    %728 = vector.extract_strided_slice %721 {offsets = [0, 4], sizes = [2, 4], strides = [1, 1]} : vector<2x16xf32> to vector<2x4xf32>
    %729 = arith.negf %728 : vector<2x4xf32>
    %730 = math.exp %729 : vector<2x4xf32>
    %cst_170 = arith.constant 1.000000e+00 : f32
    %731 = vector.broadcast %cst_170 : f32 to vector<2x4xf32>
    %732 = arith.addf %731, %730 : vector<2x4xf32>
    %733 = arith.divf %731, %732 : vector<2x4xf32>
    %734 = vector.extract_strided_slice %721 {offsets = [0, 8], sizes = [2, 4], strides = [1, 1]} : vector<2x16xf32> to vector<2x4xf32>
    %735 = math.tanh %734 : vector<2x4xf32>
    %736 = vector.extract_strided_slice %721 {offsets = [0, 12], sizes = [2, 4], strides = [1, 1]} : vector<2x16xf32> to vector<2x4xf32>
    %737 = arith.negf %736 : vector<2x4xf32>
    %738 = math.exp %737 : vector<2x4xf32>
    %cst_171 = arith.constant 1.000000e+00 : f32
    %739 = vector.broadcast %cst_171 : f32 to vector<2x4xf32>
    %740 = arith.addf %739, %738 : vector<2x4xf32>
    %741 = arith.divf %739, %740 : vector<2x4xf32>
    %742 = arith.mulf %733, %717 : vector<2x4xf32>
    %743 = arith.mulf %727, %735 : vector<2x4xf32>
    %744 = arith.addf %742, %743 : vector<2x4xf32>
    %745 = math.tanh %744 : vector<2x4xf32>
    %746 = arith.mulf %741, %745 : vector<2x4xf32>
    %cst_172 = arith.constant dense<0.000000e+00> : vector<2x16xf32>
    %747 = tpu.matmul %746, %536, %cst_172 {dimension_numbers = #tpu.dot_dimension_numbers<[1], [0], [0], [1], [0, 0, 1, 1], [], []>} : vector<2x4xf32>, vector<4x16xf32>, vector<2x16xf32> -> vector<2x16xf32>
    %748 = arith.addf %555, %747 : vector<2x16xf32>
    %749 = vector.extract_strided_slice %748 {offsets = [0, 0], sizes = [2, 4], strides = [1, 1]} : vector<2x16xf32> to vector<2x4xf32>
    %750 = arith.negf %749 : vector<2x4xf32>
    %751 = math.exp %750 : vector<2x4xf32>
    %cst_173 = arith.constant 1.000000e+00 : f32
    %752 = vector.broadcast %cst_173 : f32 to vector<2x4xf32>
    %753 = arith.addf %752, %751 : vector<2x4xf32>
    %754 = arith.divf %752, %753 : vector<2x4xf32>
    %755 = vector.extract_strided_slice %748 {offsets = [0, 4], sizes = [2, 4], strides = [1, 1]} : vector<2x16xf32> to vector<2x4xf32>
    %756 = arith.negf %755 : vector<2x4xf32>
    %757 = math.exp %756 : vector<2x4xf32>
    %cst_174 = arith.constant 1.000000e+00 : f32
    %758 = vector.broadcast %cst_174 : f32 to vector<2x4xf32>
    %759 = arith.addf %758, %757 : vector<2x4xf32>
    %760 = arith.divf %758, %759 : vector<2x4xf32>
    %761 = vector.extract_strided_slice %748 {offsets = [0, 8], sizes = [2, 4], strides = [1, 1]} : vector<2x16xf32> to vector<2x4xf32>
    %762 = math.tanh %761 : vector<2x4xf32>
    %763 = vector.extract_strided_slice %748 {offsets = [0, 12], sizes = [2, 4], strides = [1, 1]} : vector<2x16xf32> to vector<2x4xf32>
    %764 = arith.negf %763 : vector<2x4xf32>
    %765 = math.exp %764 : vector<2x4xf32>
    %cst_175 = arith.constant 1.000000e+00 : f32
    %766 = vector.broadcast %cst_175 : f32 to vector<2x4xf32>
    %767 = arith.addf %766, %765 : vector<2x4xf32>
    %768 = arith.divf %766, %767 : vector<2x4xf32>
    %769 = arith.mulf %760, %744 : vector<2x4xf32>
    %770 = arith.mulf %754, %762 : vector<2x4xf32>
    %771 = arith.addf %769, %770 : vector<2x4xf32>
    %772 = math.tanh %771 : vector<2x4xf32>
    %773 = arith.mulf %768, %772 : vector<2x4xf32>
    %c0_176 = arith.constant 0 : index
    %c0_177 = arith.constant 0 : index
    %774 = vector.load %arg14[%c0_176, %c0_177] : memref<4x16xf32, #tpu.memory_space<vmem>>, vector<4x16xf32>
    %c0_178 = arith.constant 0 : index
    %c0_179 = arith.constant 0 : index
    %775 = vector.load %arg15[%c0_178, %c0_179] : memref<4x16xf32, #tpu.memory_space<vmem>>, vector<4x16xf32>
    %c0_180 = arith.constant 0 : index
    %c0_181 = arith.constant 0 : index
    %776 = vector.load %arg16[%c0_180, %c0_181] : memref<1x16xf32, #tpu.memory_space<vmem>>, vector<1x16xf32>
    %777 = vector.shape_cast %776 : vector<1x16xf32> to vector<1x16xf32>
    %778 = vector.broadcast %777 : vector<1x16xf32> to vector<2x16xf32>
    %cst_182 = arith.constant dense<0.000000e+00> : vector<2x16xf32>
    %779 = tpu.matmul %584, %774, %cst_182 {dimension_numbers = #tpu.dot_dimension_numbers<[1], [0], [0], [1], [0, 0, 1, 1], [], []>} : vector<2x4xf32>, vector<4x16xf32>, vector<2x16xf32> -> vector<2x16xf32>
    %780 = arith.addf %779, %778 : vector<2x16xf32>
    %cst_183 = arith.constant dense<0.000000e+00> : vector<2x16xf32>
    %781 = tpu.matmul %611, %774, %cst_183 {dimension_numbers = #tpu.dot_dimension_numbers<[1], [0], [0], [1], [0, 0, 1, 1], [], []>} : vector<2x4xf32>, vector<4x16xf32>, vector<2x16xf32> -> vector<2x16xf32>
    %782 = arith.addf %781, %778 : vector<2x16xf32>
    %cst_184 = arith.constant dense<0.000000e+00> : vector<2x16xf32>
    %783 = tpu.matmul %638, %774, %cst_184 {dimension_numbers = #tpu.dot_dimension_numbers<[1], [0], [0], [1], [0, 0, 1, 1], [], []>} : vector<2x4xf32>, vector<4x16xf32>, vector<2x16xf32> -> vector<2x16xf32>
    %784 = arith.addf %783, %778 : vector<2x16xf32>
    %cst_185 = arith.constant dense<0.000000e+00> : vector<2x16xf32>
    %785 = tpu.matmul %665, %774, %cst_185 {dimension_numbers = #tpu.dot_dimension_numbers<[1], [0], [0], [1], [0, 0, 1, 1], [], []>} : vector<2x4xf32>, vector<4x16xf32>, vector<2x16xf32> -> vector<2x16xf32>
    %786 = arith.addf %785, %778 : vector<2x16xf32>
    %cst_186 = arith.constant dense<0.000000e+00> : vector<2x16xf32>
    %787 = tpu.matmul %692, %774, %cst_186 {dimension_numbers = #tpu.dot_dimension_numbers<[1], [0], [0], [1], [0, 0, 1, 1], [], []>} : vector<2x4xf32>, vector<4x16xf32>, vector<2x16xf32> -> vector<2x16xf32>
    %788 = arith.addf %787, %778 : vector<2x16xf32>
    %cst_187 = arith.constant dense<0.000000e+00> : vector<2x16xf32>
    %789 = tpu.matmul %719, %774, %cst_187 {dimension_numbers = #tpu.dot_dimension_numbers<[1], [0], [0], [1], [0, 0, 1, 1], [], []>} : vector<2x4xf32>, vector<4x16xf32>, vector<2x16xf32> -> vector<2x16xf32>
    %790 = arith.addf %789, %778 : vector<2x16xf32>
    %cst_188 = arith.constant dense<0.000000e+00> : vector<2x16xf32>
    %791 = tpu.matmul %746, %774, %cst_188 {dimension_numbers = #tpu.dot_dimension_numbers<[1], [0], [0], [1], [0, 0, 1, 1], [], []>} : vector<2x4xf32>, vector<4x16xf32>, vector<2x16xf32> -> vector<2x16xf32>
    %792 = arith.addf %791, %778 : vector<2x16xf32>
    %cst_189 = arith.constant dense<0.000000e+00> : vector<2x16xf32>
    %793 = tpu.matmul %773, %774, %cst_189 {dimension_numbers = #tpu.dot_dimension_numbers<[1], [0], [0], [1], [0, 0, 1, 1], [], []>} : vector<2x4xf32>, vector<4x16xf32>, vector<2x16xf32> -> vector<2x16xf32>
    %794 = arith.addf %793, %778 : vector<2x16xf32>
    %cst_190 = arith.constant 0.000000e+00 : f32
    %795 = vector.broadcast %cst_190 : f32 to vector<2x4xf32>
    %cst_191 = arith.constant 0.000000e+00 : f32
    %796 = vector.broadcast %cst_191 : f32 to vector<2x4xf32>
    %cst_192 = arith.constant dense<0.000000e+00> : vector<2x16xf32>
    %797 = tpu.matmul %795, %775, %cst_192 {dimension_numbers = #tpu.dot_dimension_numbers<[1], [0], [0], [1], [0, 0, 1, 1], [], []>} : vector<2x4xf32>, vector<4x16xf32>, vector<2x16xf32> -> vector<2x16xf32>
    %798 = arith.addf %780, %797 : vector<2x16xf32>
    %799 = vector.extract_strided_slice %798 {offsets = [0, 0], sizes = [2, 4], strides = [1, 1]} : vector<2x16xf32> to vector<2x4xf32>
    %800 = arith.negf %799 : vector<2x4xf32>
    %801 = math.exp %800 : vector<2x4xf32>
    %cst_193 = arith.constant 1.000000e+00 : f32
    %802 = vector.broadcast %cst_193 : f32 to vector<2x4xf32>
    %803 = arith.addf %802, %801 : vector<2x4xf32>
    %804 = arith.divf %802, %803 : vector<2x4xf32>
    %805 = vector.extract_strided_slice %798 {offsets = [0, 4], sizes = [2, 4], strides = [1, 1]} : vector<2x16xf32> to vector<2x4xf32>
    %806 = arith.negf %805 : vector<2x4xf32>
    %807 = math.exp %806 : vector<2x4xf32>
    %cst_194 = arith.constant 1.000000e+00 : f32
    %808 = vector.broadcast %cst_194 : f32 to vector<2x4xf32>
    %809 = arith.addf %808, %807 : vector<2x4xf32>
    %810 = arith.divf %808, %809 : vector<2x4xf32>
    %811 = vector.extract_strided_slice %798 {offsets = [0, 8], sizes = [2, 4], strides = [1, 1]} : vector<2x16xf32> to vector<2x4xf32>
    %812 = math.tanh %811 : vector<2x4xf32>
    %813 = vector.extract_strided_slice %798 {offsets = [0, 12], sizes = [2, 4], strides = [1, 1]} : vector<2x16xf32> to vector<2x4xf32>
    %814 = arith.negf %813 : vector<2x4xf32>
    %815 = math.exp %814 : vector<2x4xf32>
    %cst_195 = arith.constant 1.000000e+00 : f32
    %816 = vector.broadcast %cst_195 : f32 to vector<2x4xf32>
    %817 = arith.addf %816, %815 : vector<2x4xf32>
    %818 = arith.divf %816, %817 : vector<2x4xf32>
    %819 = arith.mulf %810, %796 : vector<2x4xf32>
    %820 = arith.mulf %804, %812 : vector<2x4xf32>
    %821 = arith.addf %819, %820 : vector<2x4xf32>
    %822 = math.tanh %821 : vector<2x4xf32>
    %823 = arith.mulf %818, %822 : vector<2x4xf32>
    %cst_196 = arith.constant dense<0.000000e+00> : vector<2x16xf32>
    %824 = tpu.matmul %823, %775, %cst_196 {dimension_numbers = #tpu.dot_dimension_numbers<[1], [0], [0], [1], [0, 0, 1, 1], [], []>} : vector<2x4xf32>, vector<4x16xf32>, vector<2x16xf32> -> vector<2x16xf32>
    %825 = arith.addf %782, %824 : vector<2x16xf32>
    %826 = vector.extract_strided_slice %825 {offsets = [0, 0], sizes = [2, 4], strides = [1, 1]} : vector<2x16xf32> to vector<2x4xf32>
    %827 = arith.negf %826 : vector<2x4xf32>
    %828 = math.exp %827 : vector<2x4xf32>
    %cst_197 = arith.constant 1.000000e+00 : f32
    %829 = vector.broadcast %cst_197 : f32 to vector<2x4xf32>
    %830 = arith.addf %829, %828 : vector<2x4xf32>
    %831 = arith.divf %829, %830 : vector<2x4xf32>
    %832 = vector.extract_strided_slice %825 {offsets = [0, 4], sizes = [2, 4], strides = [1, 1]} : vector<2x16xf32> to vector<2x4xf32>
    %833 = arith.negf %832 : vector<2x4xf32>
    %834 = math.exp %833 : vector<2x4xf32>
    %cst_198 = arith.constant 1.000000e+00 : f32
    %835 = vector.broadcast %cst_198 : f32 to vector<2x4xf32>
    %836 = arith.addf %835, %834 : vector<2x4xf32>
    %837 = arith.divf %835, %836 : vector<2x4xf32>
    %838 = vector.extract_strided_slice %825 {offsets = [0, 8], sizes = [2, 4], strides = [1, 1]} : vector<2x16xf32> to vector<2x4xf32>
    %839 = math.tanh %838 : vector<2x4xf32>
    %840 = vector.extract_strided_slice %825 {offsets = [0, 12], sizes = [2, 4], strides = [1, 1]} : vector<2x16xf32> to vector<2x4xf32>
    %841 = arith.negf %840 : vector<2x4xf32>
    %842 = math.exp %841 : vector<2x4xf32>
    %cst_199 = arith.constant 1.000000e+00 : f32
    %843 = vector.broadcast %cst_199 : f32 to vector<2x4xf32>
    %844 = arith.addf %843, %842 : vector<2x4xf32>
    %845 = arith.divf %843, %844 : vector<2x4xf32>
    %846 = arith.mulf %837, %821 : vector<2x4xf32>
    %847 = arith.mulf %831, %839 : vector<2x4xf32>
    %848 = arith.addf %846, %847 : vector<2x4xf32>
    %849 = math.tanh %848 : vector<2x4xf32>
    %850 = arith.mulf %845, %849 : vector<2x4xf32>
    %cst_200 = arith.constant dense<0.000000e+00> : vector<2x16xf32>
    %851 = tpu.matmul %850, %775, %cst_200 {dimension_numbers = #tpu.dot_dimension_numbers<[1], [0], [0], [1], [0, 0, 1, 1], [], []>} : vector<2x4xf32>, vector<4x16xf32>, vector<2x16xf32> -> vector<2x16xf32>
    %852 = arith.addf %784, %851 : vector<2x16xf32>
    %853 = vector.extract_strided_slice %852 {offsets = [0, 0], sizes = [2, 4], strides = [1, 1]} : vector<2x16xf32> to vector<2x4xf32>
    %854 = arith.negf %853 : vector<2x4xf32>
    %855 = math.exp %854 : vector<2x4xf32>
    %cst_201 = arith.constant 1.000000e+00 : f32
    %856 = vector.broadcast %cst_201 : f32 to vector<2x4xf32>
    %857 = arith.addf %856, %855 : vector<2x4xf32>
    %858 = arith.divf %856, %857 : vector<2x4xf32>
    %859 = vector.extract_strided_slice %852 {offsets = [0, 4], sizes = [2, 4], strides = [1, 1]} : vector<2x16xf32> to vector<2x4xf32>
    %860 = arith.negf %859 : vector<2x4xf32>
    %861 = math.exp %860 : vector<2x4xf32>
    %cst_202 = arith.constant 1.000000e+00 : f32
    %862 = vector.broadcast %cst_202 : f32 to vector<2x4xf32>
    %863 = arith.addf %862, %861 : vector<2x4xf32>
    %864 = arith.divf %862, %863 : vector<2x4xf32>
    %865 = vector.extract_strided_slice %852 {offsets = [0, 8], sizes = [2, 4], strides = [1, 1]} : vector<2x16xf32> to vector<2x4xf32>
    %866 = math.tanh %865 : vector<2x4xf32>
    %867 = vector.extract_strided_slice %852 {offsets = [0, 12], sizes = [2, 4], strides = [1, 1]} : vector<2x16xf32> to vector<2x4xf32>
    %868 = arith.negf %867 : vector<2x4xf32>
    %869 = math.exp %868 : vector<2x4xf32>
    %cst_203 = arith.constant 1.000000e+00 : f32
    %870 = vector.broadcast %cst_203 : f32 to vector<2x4xf32>
    %871 = arith.addf %870, %869 : vector<2x4xf32>
    %872 = arith.divf %870, %871 : vector<2x4xf32>
    %873 = arith.mulf %864, %848 : vector<2x4xf32>
    %874 = arith.mulf %858, %866 : vector<2x4xf32>
    %875 = arith.addf %873, %874 : vector<2x4xf32>
    %876 = math.tanh %875 : vector<2x4xf32>
    %877 = arith.mulf %872, %876 : vector<2x4xf32>
    %cst_204 = arith.constant dense<0.000000e+00> : vector<2x16xf32>
    %878 = tpu.matmul %877, %775, %cst_204 {dimension_numbers = #tpu.dot_dimension_numbers<[1], [0], [0], [1], [0, 0, 1, 1], [], []>} : vector<2x4xf32>, vector<4x16xf32>, vector<2x16xf32> -> vector<2x16xf32>
    %879 = arith.addf %786, %878 : vector<2x16xf32>
    %880 = vector.extract_strided_slice %879 {offsets = [0, 0], sizes = [2, 4], strides = [1, 1]} : vector<2x16xf32> to vector<2x4xf32>
    %881 = arith.negf %880 : vector<2x4xf32>
    %882 = math.exp %881 : vector<2x4xf32>
    %cst_205 = arith.constant 1.000000e+00 : f32
    %883 = vector.broadcast %cst_205 : f32 to vector<2x4xf32>
    %884 = arith.addf %883, %882 : vector<2x4xf32>
    %885 = arith.divf %883, %884 : vector<2x4xf32>
    %886 = vector.extract_strided_slice %879 {offsets = [0, 4], sizes = [2, 4], strides = [1, 1]} : vector<2x16xf32> to vector<2x4xf32>
    %887 = arith.negf %886 : vector<2x4xf32>
    %888 = math.exp %887 : vector<2x4xf32>
    %cst_206 = arith.constant 1.000000e+00 : f32
    %889 = vector.broadcast %cst_206 : f32 to vector<2x4xf32>
    %890 = arith.addf %889, %888 : vector<2x4xf32>
    %891 = arith.divf %889, %890 : vector<2x4xf32>
    %892 = vector.extract_strided_slice %879 {offsets = [0, 8], sizes = [2, 4], strides = [1, 1]} : vector<2x16xf32> to vector<2x4xf32>
    %893 = math.tanh %892 : vector<2x4xf32>
    %894 = vector.extract_strided_slice %879 {offsets = [0, 12], sizes = [2, 4], strides = [1, 1]} : vector<2x16xf32> to vector<2x4xf32>
    %895 = arith.negf %894 : vector<2x4xf32>
    %896 = math.exp %895 : vector<2x4xf32>
    %cst_207 = arith.constant 1.000000e+00 : f32
    %897 = vector.broadcast %cst_207 : f32 to vector<2x4xf32>
    %898 = arith.addf %897, %896 : vector<2x4xf32>
    %899 = arith.divf %897, %898 : vector<2x4xf32>
    %900 = arith.mulf %891, %875 : vector<2x4xf32>
    %901 = arith.mulf %885, %893 : vector<2x4xf32>
    %902 = arith.addf %900, %901 : vector<2x4xf32>
    %903 = math.tanh %902 : vector<2x4xf32>
    %904 = arith.mulf %899, %903 : vector<2x4xf32>
    %cst_208 = arith.constant dense<0.000000e+00> : vector<2x16xf32>
    %905 = tpu.matmul %904, %775, %cst_208 {dimension_numbers = #tpu.dot_dimension_numbers<[1], [0], [0], [1], [0, 0, 1, 1], [], []>} : vector<2x4xf32>, vector<4x16xf32>, vector<2x16xf32> -> vector<2x16xf32>
    %906 = arith.addf %788, %905 : vector<2x16xf32>
    %907 = vector.extract_strided_slice %906 {offsets = [0, 0], sizes = [2, 4], strides = [1, 1]} : vector<2x16xf32> to vector<2x4xf32>
    %908 = arith.negf %907 : vector<2x4xf32>
    %909 = math.exp %908 : vector<2x4xf32>
    %cst_209 = arith.constant 1.000000e+00 : f32
    %910 = vector.broadcast %cst_209 : f32 to vector<2x4xf32>
    %911 = arith.addf %910, %909 : vector<2x4xf32>
    %912 = arith.divf %910, %911 : vector<2x4xf32>
    %913 = vector.extract_strided_slice %906 {offsets = [0, 4], sizes = [2, 4], strides = [1, 1]} : vector<2x16xf32> to vector<2x4xf32>
    %914 = arith.negf %913 : vector<2x4xf32>
    %915 = math.exp %914 : vector<2x4xf32>
    %cst_210 = arith.constant 1.000000e+00 : f32
    %916 = vector.broadcast %cst_210 : f32 to vector<2x4xf32>
    %917 = arith.addf %916, %915 : vector<2x4xf32>
    %918 = arith.divf %916, %917 : vector<2x4xf32>
    %919 = vector.extract_strided_slice %906 {offsets = [0, 8], sizes = [2, 4], strides = [1, 1]} : vector<2x16xf32> to vector<2x4xf32>
    %920 = math.tanh %919 : vector<2x4xf32>
    %921 = vector.extract_strided_slice %906 {offsets = [0, 12], sizes = [2, 4], strides = [1, 1]} : vector<2x16xf32> to vector<2x4xf32>
    %922 = arith.negf %921 : vector<2x4xf32>
    %923 = math.exp %922 : vector<2x4xf32>
    %cst_211 = arith.constant 1.000000e+00 : f32
    %924 = vector.broadcast %cst_211 : f32 to vector<2x4xf32>
    %925 = arith.addf %924, %923 : vector<2x4xf32>
    %926 = arith.divf %924, %925 : vector<2x4xf32>
    %927 = arith.mulf %918, %902 : vector<2x4xf32>
    %928 = arith.mulf %912, %920 : vector<2x4xf32>
    %929 = arith.addf %927, %928 : vector<2x4xf32>
    %930 = math.tanh %929 : vector<2x4xf32>
    %931 = arith.mulf %926, %930 : vector<2x4xf32>
    %cst_212 = arith.constant dense<0.000000e+00> : vector<2x16xf32>
    %932 = tpu.matmul %931, %775, %cst_212 {dimension_numbers = #tpu.dot_dimension_numbers<[1], [0], [0], [1], [0, 0, 1, 1], [], []>} : vector<2x4xf32>, vector<4x16xf32>, vector<2x16xf32> -> vector<2x16xf32>
    %933 = arith.addf %790, %932 : vector<2x16xf32>
    %934 = vector.extract_strided_slice %933 {offsets = [0, 0], sizes = [2, 4], strides = [1, 1]} : vector<2x16xf32> to vector<2x4xf32>
    %935 = arith.negf %934 : vector<2x4xf32>
    %936 = math.exp %935 : vector<2x4xf32>
    %cst_213 = arith.constant 1.000000e+00 : f32
    %937 = vector.broadcast %cst_213 : f32 to vector<2x4xf32>
    %938 = arith.addf %937, %936 : vector<2x4xf32>
    %939 = arith.divf %937, %938 : vector<2x4xf32>
    %940 = vector.extract_strided_slice %933 {offsets = [0, 4], sizes = [2, 4], strides = [1, 1]} : vector<2x16xf32> to vector<2x4xf32>
    %941 = arith.negf %940 : vector<2x4xf32>
    %942 = math.exp %941 : vector<2x4xf32>
    %cst_214 = arith.constant 1.000000e+00 : f32
    %943 = vector.broadcast %cst_214 : f32 to vector<2x4xf32>
    %944 = arith.addf %943, %942 : vector<2x4xf32>
    %945 = arith.divf %943, %944 : vector<2x4xf32>
    %946 = vector.extract_strided_slice %933 {offsets = [0, 8], sizes = [2, 4], strides = [1, 1]} : vector<2x16xf32> to vector<2x4xf32>
    %947 = math.tanh %946 : vector<2x4xf32>
    %948 = vector.extract_strided_slice %933 {offsets = [0, 12], sizes = [2, 4], strides = [1, 1]} : vector<2x16xf32> to vector<2x4xf32>
    %949 = arith.negf %948 : vector<2x4xf32>
    %950 = math.exp %949 : vector<2x4xf32>
    %cst_215 = arith.constant 1.000000e+00 : f32
    %951 = vector.broadcast %cst_215 : f32 to vector<2x4xf32>
    %952 = arith.addf %951, %950 : vector<2x4xf32>
    %953 = arith.divf %951, %952 : vector<2x4xf32>
    %954 = arith.mulf %945, %929 : vector<2x4xf32>
    %955 = arith.mulf %939, %947 : vector<2x4xf32>
    %956 = arith.addf %954, %955 : vector<2x4xf32>
    %957 = math.tanh %956 : vector<2x4xf32>
    %958 = arith.mulf %953, %957 : vector<2x4xf32>
    %cst_216 = arith.constant dense<0.000000e+00> : vector<2x16xf32>
    %959 = tpu.matmul %958, %775, %cst_216 {dimension_numbers = #tpu.dot_dimension_numbers<[1], [0], [0], [1], [0, 0, 1, 1], [], []>} : vector<2x4xf32>, vector<4x16xf32>, vector<2x16xf32> -> vector<2x16xf32>
    %960 = arith.addf %792, %959 : vector<2x16xf32>
    %961 = vector.extract_strided_slice %960 {offsets = [0, 0], sizes = [2, 4], strides = [1, 1]} : vector<2x16xf32> to vector<2x4xf32>
    %962 = arith.negf %961 : vector<2x4xf32>
    %963 = math.exp %962 : vector<2x4xf32>
    %cst_217 = arith.constant 1.000000e+00 : f32
    %964 = vector.broadcast %cst_217 : f32 to vector<2x4xf32>
    %965 = arith.addf %964, %963 : vector<2x4xf32>
    %966 = arith.divf %964, %965 : vector<2x4xf32>
    %967 = vector.extract_strided_slice %960 {offsets = [0, 4], sizes = [2, 4], strides = [1, 1]} : vector<2x16xf32> to vector<2x4xf32>
    %968 = arith.negf %967 : vector<2x4xf32>
    %969 = math.exp %968 : vector<2x4xf32>
    %cst_218 = arith.constant 1.000000e+00 : f32
    %970 = vector.broadcast %cst_218 : f32 to vector<2x4xf32>
    %971 = arith.addf %970, %969 : vector<2x4xf32>
    %972 = arith.divf %970, %971 : vector<2x4xf32>
    %973 = vector.extract_strided_slice %960 {offsets = [0, 8], sizes = [2, 4], strides = [1, 1]} : vector<2x16xf32> to vector<2x4xf32>
    %974 = math.tanh %973 : vector<2x4xf32>
    %975 = vector.extract_strided_slice %960 {offsets = [0, 12], sizes = [2, 4], strides = [1, 1]} : vector<2x16xf32> to vector<2x4xf32>
    %976 = arith.negf %975 : vector<2x4xf32>
    %977 = math.exp %976 : vector<2x4xf32>
    %cst_219 = arith.constant 1.000000e+00 : f32
    %978 = vector.broadcast %cst_219 : f32 to vector<2x4xf32>
    %979 = arith.addf %978, %977 : vector<2x4xf32>
    %980 = arith.divf %978, %979 : vector<2x4xf32>
    %981 = arith.mulf %972, %956 : vector<2x4xf32>
    %982 = arith.mulf %966, %974 : vector<2x4xf32>
    %983 = arith.addf %981, %982 : vector<2x4xf32>
    %984 = math.tanh %983 : vector<2x4xf32>
    %985 = arith.mulf %980, %984 : vector<2x4xf32>
    %cst_220 = arith.constant dense<0.000000e+00> : vector<2x16xf32>
    %986 = tpu.matmul %985, %775, %cst_220 {dimension_numbers = #tpu.dot_dimension_numbers<[1], [0], [0], [1], [0, 0, 1, 1], [], []>} : vector<2x4xf32>, vector<4x16xf32>, vector<2x16xf32> -> vector<2x16xf32>
    %987 = arith.addf %794, %986 : vector<2x16xf32>
    %988 = vector.extract_strided_slice %987 {offsets = [0, 0], sizes = [2, 4], strides = [1, 1]} : vector<2x16xf32> to vector<2x4xf32>
    %989 = arith.negf %988 : vector<2x4xf32>
    %990 = math.exp %989 : vector<2x4xf32>
    %cst_221 = arith.constant 1.000000e+00 : f32
    %991 = vector.broadcast %cst_221 : f32 to vector<2x4xf32>
    %992 = arith.addf %991, %990 : vector<2x4xf32>
    %993 = arith.divf %991, %992 : vector<2x4xf32>
    %994 = vector.extract_strided_slice %987 {offsets = [0, 4], sizes = [2, 4], strides = [1, 1]} : vector<2x16xf32> to vector<2x4xf32>
    %995 = arith.negf %994 : vector<2x4xf32>
    %996 = math.exp %995 : vector<2x4xf32>
    %cst_222 = arith.constant 1.000000e+00 : f32
    %997 = vector.broadcast %cst_222 : f32 to vector<2x4xf32>
    %998 = arith.addf %997, %996 : vector<2x4xf32>
    %999 = arith.divf %997, %998 : vector<2x4xf32>
    %1000 = vector.extract_strided_slice %987 {offsets = [0, 8], sizes = [2, 4], strides = [1, 1]} : vector<2x16xf32> to vector<2x4xf32>
    %1001 = math.tanh %1000 : vector<2x4xf32>
    %1002 = vector.extract_strided_slice %987 {offsets = [0, 12], sizes = [2, 4], strides = [1, 1]} : vector<2x16xf32> to vector<2x4xf32>
    %1003 = arith.negf %1002 : vector<2x4xf32>
    %1004 = math.exp %1003 : vector<2x4xf32>
    %cst_223 = arith.constant 1.000000e+00 : f32
    %1005 = vector.broadcast %cst_223 : f32 to vector<2x4xf32>
    %1006 = arith.addf %1005, %1004 : vector<2x4xf32>
    %1007 = arith.divf %1005, %1006 : vector<2x4xf32>
    %1008 = arith.mulf %999, %983 : vector<2x4xf32>
    %1009 = arith.mulf %993, %1001 : vector<2x4xf32>
    %1010 = arith.addf %1008, %1009 : vector<2x4xf32>
    %1011 = math.tanh %1010 : vector<2x4xf32>
    %1012 = arith.mulf %1007, %1011 : vector<2x4xf32>
    %c0_224 = arith.constant 0 : index
    %c0_225 = arith.constant 0 : index
    %c0_226 = arith.constant 0 : index
    %1013 = vector.load %arg17[%c0_224, %c0_225, %c0_226] : memref<8x2x4xf32, #tpu.memory_space<vmem>>, vector<1x2x4xf32>
    %1014 = vector.shape_cast %1013 : vector<1x2x4xf32> to vector<2x4xf32>
    %1015 = vector.shape_cast %823 : vector<2x4xf32> to vector<1x2x4xf32>
    tpu.vector_store %arg17[%c0_224, %c0_225, %c0_226], %1015 {strides = array<i32>} : memref<8x2x4xf32, #tpu.memory_space<vmem>>, vector<1x2x4xf32>,
    %c1_227 = arith.constant 1 : index
    %c0_228 = arith.constant 0 : index
    %c0_229 = arith.constant 0 : index
    %1016 = vector.load %arg17[%c1_227, %c0_228, %c0_229] : memref<8x2x4xf32, #tpu.memory_space<vmem>>, vector<1x2x4xf32>
    %1017 = vector.shape_cast %1016 : vector<1x2x4xf32> to vector<2x4xf32>
    %1018 = vector.shape_cast %850 : vector<2x4xf32> to vector<1x2x4xf32>
    tpu.vector_store %arg17[%c1_227, %c0_228, %c0_229], %1018 {strides = array<i32>} : memref<8x2x4xf32, #tpu.memory_space<vmem>>, vector<1x2x4xf32>,
    %c2_230 = arith.constant 2 : index
    %c0_231 = arith.constant 0 : index
    %c0_232 = arith.constant 0 : index
    %1019 = vector.load %arg17[%c2_230, %c0_231, %c0_232] : memref<8x2x4xf32, #tpu.memory_space<vmem>>, vector<1x2x4xf32>
    %1020 = vector.shape_cast %1019 : vector<1x2x4xf32> to vector<2x4xf32>
    %1021 = vector.shape_cast %877 : vector<2x4xf32> to vector<1x2x4xf32>
    tpu.vector_store %arg17[%c2_230, %c0_231, %c0_232], %1021 {strides = array<i32>} : memref<8x2x4xf32, #tpu.memory_space<vmem>>, vector<1x2x4xf32>,
    %c3_233 = arith.constant 3 : index
    %c0_234 = arith.constant 0 : index
    %c0_235 = arith.constant 0 : index
    %1022 = vector.load %arg17[%c3_233, %c0_234, %c0_235] : memref<8x2x4xf32, #tpu.memory_space<vmem>>, vector<1x2x4xf32>
    %1023 = vector.shape_cast %1022 : vector<1x2x4xf32> to vector<2x4xf32>
    %1024 = vector.shape_cast %904 : vector<2x4xf32> to vector<1x2x4xf32>
    tpu.vector_store %arg17[%c3_233, %c0_234, %c0_235], %1024 {strides = array<i32>} : memref<8x2x4xf32, #tpu.memory_space<vmem>>, vector<1x2x4xf32>,
    %c4_236 = arith.constant 4 : index
    %c0_237 = arith.constant 0 : index
    %c0_238 = arith.constant 0 : index
    %1025 = vector.load %arg17[%c4_236, %c0_237, %c0_238] : memref<8x2x4xf32, #tpu.memory_space<vmem>>, vector<1x2x4xf32>
    %1026 = vector.shape_cast %1025 : vector<1x2x4xf32> to vector<2x4xf32>
    %1027 = vector.shape_cast %931 : vector<2x4xf32> to vector<1x2x4xf32>
    tpu.vector_store %arg17[%c4_236, %c0_237, %c0_238], %1027 {strides = array<i32>} : memref<8x2x4xf32, #tpu.memory_space<vmem>>, vector<1x2x4xf32>,
    %c5_239 = arith.constant 5 : index
    %c0_240 = arith.constant 0 : index
    %c0_241 = arith.constant 0 : index
    %1028 = vector.load %arg17[%c5_239, %c0_240, %c0_241] : memref<8x2x4xf32, #tpu.memory_space<vmem>>, vector<1x2x4xf32>
    %1029 = vector.shape_cast %1028 : vector<1x2x4xf32> to vector<2x4xf32>
    %1030 = vector.shape_cast %958 : vector<2x4xf32> to vector<1x2x4xf32>
    tpu.vector_store %arg17[%c5_239, %c0_240, %c0_241], %1030 {strides = array<i32>} : memref<8x2x4xf32, #tpu.memory_space<vmem>>, vector<1x2x4xf32>,
    %c6_242 = arith.constant 6 : index
    %c0_243 = arith.constant 0 : index
    %c0_244 = arith.constant 0 : index
    %1031 = vector.load %arg17[%c6_242, %c0_243, %c0_244] : memref<8x2x4xf32, #tpu.memory_space<vmem>>, vector<1x2x4xf32>
    %1032 = vector.shape_cast %1031 : vector<1x2x4xf32> to vector<2x4xf32>
    %1033 = vector.shape_cast %985 : vector<2x4xf32> to vector<1x2x4xf32>
    tpu.vector_store %arg17[%c6_242, %c0_243, %c0_244], %1033 {strides = array<i32>} : memref<8x2x4xf32, #tpu.memory_space<vmem>>, vector<1x2x4xf32>,
    %c7_245 = arith.constant 7 : index
    %c0_246 = arith.constant 0 : index
    %c0_247 = arith.constant 0 : index
    %1034 = vector.load %arg17[%c7_245, %c0_246, %c0_247] : memref<8x2x4xf32, #tpu.memory_space<vmem>>, vector<1x2x4xf32>
    %1035 = vector.shape_cast %1034 : vector<1x2x4xf32> to vector<2x4xf32>
    %1036 = vector.shape_cast %1012 : vector<2x4xf32> to vector<1x2x4xf32>
    tpu.vector_store %arg17[%c7_245, %c0_246, %c0_247], %1036 {strides = array<i32>} : memref<8x2x4xf32, #tpu.memory_space<vmem>>, vector<1x2x4xf32>,
    return
  }
}

</mosaic_0001>

<llo_original>
// kernel: autoencoder_forward.1
$region0: #{autoencoder_forward.1}
  #allocation0 [shape = 'u32[]', space=smem, size = 0x4, offset = 0x4, fixed_abs, tag = 'smem constant byte address 0x4 - core index']
  #allocation1 [shape = 'u32[144,128]{1,0:T(1,128)}', space=vmem, size = 0x12000, scoped, tag = 'internal scratch']
  %s0 = inlined_call_operand.vmem [shape: f32[8,2,4], index: 0, kind: input, shape index: {}]
  %s1 = inlined_call_operand.vmem [shape: f32[4,128], index: 1, kind: input, shape index: {}]
  %s2 = inlined_call_operand.vmem [shape: f32[32,128], index: 2, kind: input, shape index: {}]
  %s3 = inlined_call_operand.vmem [shape: f32[1,128], index: 3, kind: input, shape index: {}]
  %s4 = inlined_call_operand.vmem [shape: f32[32,128], index: 4, kind: input, shape index: {}]
  %s5 = inlined_call_operand.vmem [shape: f32[32,128], index: 5, kind: input, shape index: {}]
  %s6 = inlined_call_operand.vmem [shape: f32[1,128], index: 6, kind: input, shape index: {}]
  %s7 = inlined_call_operand.vmem [shape: f32[256,16], index: 7, kind: input, shape index: {}]
  %s8 = inlined_call_operand.vmem [shape: f32[1,16], index: 8, kind: input, shape index: {}]
  %s9 = inlined_call_operand.vmem [shape: f32[16,256], index: 9, kind: input, shape index: {}]
  %s10 = inlined_call_operand.vmem [shape: f32[1,256], index: 10, kind: input, shape index: {}]
  %s11 = inlined_call_operand.vmem [shape: f32[32,16], index: 11, kind: input, shape index: {}]
  %s12 = inlined_call_operand.vmem [shape: f32[4,16], index: 12, kind: input, shape index: {}]
  %s13 = inlined_call_operand.vmem [shape: f32[1,16], index: 13, kind: input, shape index: {}]
  %s14 = inlined_call_operand.vmem [shape: f32[4,16], index: 14, kind: input, shape index: {}]
  %s15 = inlined_call_operand.vmem [shape: f32[4,16], index: 15, kind: input, shape index: {}]
  %s16 = inlined_call_operand.vmem [shape: f32[1,16], index: 16, kind: input, shape index: {}]
  %s17 = inlined_call_operand.vmem [shape: f32[8,2,4], index: 17, kind: output, shape index: {}]
  %s18 = sld [smem:[#allocation0]]
  $region78: #{autoencoder_forward.1} parent=0
    _
  %s20 = ssub.s32 1, %s18
  %s21 = scalar_select 0, %s20, %s18
  // Predicated region
  $region2: #{autoencoder_forward.1} parent=0 // pred_check
    _
  $region3: #{autoencoder_forward.1} parent=0 // pred_check_branch
    %23 = sbr.rel (0) target = $region5
  $region4: #{autoencoder_forward.1} parent=0 // pred_region
    _
  $region5: #{autoencoder_forward.1} parent=0 // pred_fallthru
    _
  // Predicated region
  $region6: #{autoencoder_forward.1} parent=0 // pred_check
    _
  $region7: #{autoencoder_forward.1} parent=0 // pred_check_branch
    %25 = sbr.rel (0) target = $region9
  $region8: #{autoencoder_forward.1} parent=0 // pred_region
    _
  $region9: #{autoencoder_forward.1} parent=0 // pred_fallthru
    _
  // Predicated region
  $region10: #{autoencoder_forward.1} parent=0 // pred_check
    _
  $region11: #{autoencoder_forward.1} parent=0 // pred_check_branch
    %27 = sbr.rel (0) target = $region13
  $region12: #{autoencoder_forward.1} parent=0 // pred_region
    _
  $region13: #{autoencoder_forward.1} parent=0 // pred_fallthru
    _
  // Predicated region
  $region14: #{autoencoder_forward.1} parent=0 // pred_check
    _
  $region15: #{autoencoder_forward.1} parent=0 // pred_check_branch
    %29 = sbr.rel (0) target = $region17
  $region16: #{autoencoder_forward.1} parent=0 // pred_region
    _
  $region17: #{autoencoder_forward.1} parent=0 // pred_fallthru
    _
  // Predicated region
  $region18: #{autoencoder_forward.1} parent=0 // pred_check
    _
  $region19: #{autoencoder_forward.1} parent=0 // pred_check_branch
    %31 = sbr.rel (0) target = $region21
  $region20: #{autoencoder_forward.1} parent=0 // pred_region
    _
  $region21: #{autoencoder_forward.1} parent=0 // pred_fallthru
    _
  // Predicated region
  $region22: #{autoencoder_forward.1} parent=0 // pred_check
    _
  $region23: #{autoencoder_forward.1} parent=0 // pred_check_branch
    %33 = sbr.rel (0) target = $region25
  $region24: #{autoencoder_forward.1} parent=0 // pred_region
    _
  $region25: #{autoencoder_forward.1} parent=0 // pred_fallthru
    _
  // Predicated region
  $region26: #{autoencoder_forward.1} parent=0 // pred_check
    _
  $region27: #{autoencoder_forward.1} parent=0 // pred_check_branch
    %35 = sbr.rel (0) target = $region29
  $region28: #{autoencoder_forward.1} parent=0 // pred_region
    _
  $region29: #{autoencoder_forward.1} parent=0 // pred_fallthru
    _
  // Predicated region
  $region30: #{autoencoder_forward.1} parent=0 // pred_check
    _
  $region31: #{autoencoder_forward.1} parent=0 // pred_check_branch
    %37 = sbr.rel (0) target = $region33
  $region32: #{autoencoder_forward.1} parent=0 // pred_region
    _
  $region33: #{autoencoder_forward.1} parent=0 // pred_fallthru
    _
  // Predicated region
  $region34: #{autoencoder_forward.1} parent=0 // pred_check
    _
  $region35: #{autoencoder_forward.1} parent=0 // pred_check_branch
    %39 = sbr.rel (0) target = $region37
  $region36: #{autoencoder_forward.1} parent=0 // pred_region
    _
  $region37: #{autoencoder_forward.1} parent=0 // pred_fallthru
    _
  // Predicated region
  $region38: #{autoencoder_forward.1} parent=0 // pred_check
    _
  $region39: #{autoencoder_forward.1} parent=0 // pred_check_branch
    %41 = sbr.rel (0) target = $region41
  $region40: #{autoencoder_forward.1} parent=0 // pred_region
    _
  $region41: #{autoencoder_forward.1} parent=0 // pred_fallthru
    _
  // Predicated region
  $region42: #{autoencoder_forward.1} parent=0 // pred_check
    _
  $region43: #{autoencoder_forward.1} parent=0 // pred_check_branch
    %43 = sbr.rel (0) target = $region45
  $region44: #{autoencoder_forward.1} parent=0 // pred_region
    _
  $region45: #{autoencoder_forward.1} parent=0 // pred_fallthru
    _
  // Predicated region
  $region46: #{autoencoder_forward.1} parent=0 // pred_check
    _
  $region47: #{autoencoder_forward.1} parent=0 // pred_check_branch
    %45 = sbr.rel (0) target = $region49
  $region48: #{autoencoder_forward.1} parent=0 // pred_region
    _
  $region49: #{autoencoder_forward.1} parent=0 // pred_fallthru
    _
  // Predicated region
  $region50: #{autoencoder_forward.1} parent=0 // pred_check
    _
  $region51: #{autoencoder_forward.1} parent=0 // pred_check_branch
    %47 = sbr.rel (0) target = $region53
  $region52: #{autoencoder_forward.1} parent=0 // pred_region
    _
  $region53: #{autoencoder_forward.1} parent=0 // pred_fallthru
    _
  // Predicated region
  $region54: #{autoencoder_forward.1} parent=0 // pred_check
    _
  $region55: #{autoencoder_forward.1} parent=0 // pred_check_branch
    %49 = sbr.rel (0) target = $region57
  $region56: #{autoencoder_forward.1} parent=0 // pred_region
    _
  $region57: #{autoencoder_forward.1} parent=0 // pred_fallthru
    _
  // Predicated region
  $region58: #{autoencoder_forward.1} parent=0 // pred_check
    _
  $region59: #{autoencoder_forward.1} parent=0 // pred_check_branch
    %51 = sbr.rel (0) target = $region61
  $region60: #{autoencoder_forward.1} parent=0 // pred_region
    _
  $region61: #{autoencoder_forward.1} parent=0 // pred_fallthru
    _
  // Predicated region
  $region62: #{autoencoder_forward.1} parent=0 // pred_check
    _
  $region63: #{autoencoder_forward.1} parent=0 // pred_check_branch
    %53 = sbr.rel (0) target = $region65
  $region64: #{autoencoder_forward.1} parent=0 // pred_region
    _
  $region65: #{autoencoder_forward.1} parent=0 // pred_fallthru
    _
  // Predicated region
  $region66: #{autoencoder_forward.1} parent=0 // pred_check
    _
  $region67: #{autoencoder_forward.1} parent=0 // pred_check_branch
    %55 = sbr.rel (0) target = $region69
  $region68: #{autoencoder_forward.1} parent=0 // pred_region
    _
  $region69: #{autoencoder_forward.1} parent=0 // pred_fallthru
    _
  %v56 = vld [vmem:[%s0] sm:$0x3]
  %s57 = scalar_lea.vmem %s0, 2
  %v58 = vld [vmem:[%s57] sm:$0x3]
  %s59 = scalar_lea.vmem %s0, 4
  %v60 = vld [vmem:[%s59] sm:$0x3]
  %s61 = scalar_lea.vmem %s0, 6
  %v62 = vld [vmem:[%s61] sm:$0x3]
  %s63 = scalar_lea.vmem %s0, 8
  %v64 = vld [vmem:[%s63] sm:$0x3]
  %s65 = scalar_lea.vmem %s0, 10
  %v66 = vld [vmem:[%s65] sm:$0x3]
  %s67 = scalar_lea.vmem %s0, 12
  %v68 = vld [vmem:[%s67] sm:$0x3]
  %s69 = scalar_lea.vmem %s0, 14
  %v70 = vld [vmem:[%s69] sm:$0x3]
  %v71 = vld [vmem:[%s1] sm:$0xf]
  %v72 = vld [vmem:[%s2] sm:$0xff]
  %v73 = vld [vmem:[%s2 + $0x8] sm:$0xff]
  %v74 = vld [vmem:[%s2 + $0x10] sm:$0xff]
  %v75 = vld [vmem:[%s2 + $0x18] sm:$0xff]
  %v76 = vld [vmem:[%s3] sm:$0x1]
  %v78 = vlaneseq
  %v79 = vshrl.u32 %v78, 7
  %v80 = vsub.s32 0, %v79
  %v81 = vrot.slane %v76, %v80
  %vm83 = vcmask 31744
  %v85 = vsel %vm83, %v56, 0
  %vm87 = vcmask 1043456
  %v89 = vsel %vm87, %v71, 0
  %91 = vmatprep.subr.mxu0 0.0
  %92 = vmatpush1.msra.mxu0 %v89
  %93 = vmatprep.subr.mxu0 0.0
  %94 = vmatpush1.msra.mxu0 0.0
  %95 = vmatprep.subr.mxu0 0.0
  %96 = vmatpush1.msra.mxu0 0.0
  %97 = vmatprep.subr.mxu0 0.0
  %98 = vmatpush1.msra.mxu0 0.0
  %99 = vmatprep.subr.mxu0 0.0
  %100 = vmatpush1.msra.mxu0 0.0
  %101 = vmatprep.subr.mxu0 0.0
  %102 = vmatpush1.msra.mxu0 0.0
  %103 = vmatprep.subr.mxu0 0.0
  %104 = vmatpush1.msra.mxu0 0.0
  %105 = vmatprep.subr.mxu0 0.0
  %106 = vmatpush1.msra.mxu0 0.0
  %107 = vmatprep.subr.mxu0 0.0
  %108 = vmatpush1.msra.mxu0 0.0
  %109 = vmatprep.subr.mxu0 0.0
  %110 = vmatpush1.msra.mxu0 0.0
  %111 = vmatprep.subr.mxu0 0.0
  %112 = vmatpush1.msra.mxu0 0.0
  %113 = vmatprep.subr.mxu0 0.0
  %114 = vmatpush1.msra.mxu0 0.0
  %115 = vmatprep.subr.mxu0 0.0
  %116 = vmatpush1.msra.mxu0 0.0
  %117 = vmatprep.subr.mxu0 0.0
  %118 = vmatpush1.msra.mxu0 0.0
  %119 = vmatprep.subr.mxu0 0.0
  %120 = vmatpush1.msra.mxu0 0.0
  %121 = vmatprep.subr.mxu0 0.0
  %122 = vmatpush1.msra.mxu0 0.0
  %123 = vmatprep.subr.mxu0 0.0
  %124 = vmatpush1.msra.mxu0 0.0
  %125 = vmatprep.subr.mxu0 0.0
  %126 = vmatpush1.msra.mxu0 0.0
  %127 = vmatprep.subr.mxu0 0.0
  %128 = vmatpush1.msra.mxu0 0.0
  %129 = vmatprep.subr.mxu0 0.0
  %130 = vmatpush1.msra.mxu0 0.0
  %131 = vmatprep.subr.mxu0 0.0
  %132 = vmatpush1.msra.mxu0 0.0
  %133 = vmatprep.subr.mxu0 0.0
  %134 = vmatpush1.msra.mxu0 0.0
  %135 = vmatprep.subr.mxu0 0.0
  %136 = vmatpush1.msra.mxu0 0.0
  %137 = vmatprep.subr.mxu0 0.0
  %138 = vmatpush1.msra.mxu0 0.0
  %139 = vmatprep.subr.mxu0 0.0
  %140 = vmatpush1.msra.mxu0 0.0
  %141 = vmatprep.subr.mxu0 0.0
  %142 = vmatpush1.msra.mxu0 0.0
  %143 = vmatprep.subr.mxu0 0.0
  %144 = vmatpush1.msra.mxu0 0.0
  %145 = vmatprep.subr.mxu0 0.0
  %146 = vmatpush1.msra.mxu0 0.0
  %147 = vmatprep.subr.mxu0 0.0
  %148 = vmatpush1.msra.mxu0 0.0
  %149 = vmatprep.subr.mxu0 0.0
  %150 = vmatpush1.msra.mxu0 0.0
  %151 = vmatprep.subr.mxu0 0.0
  %152 = vmatpush1.msra.mxu0 0.0
  %153 = vmatprep.subr.mxu0 0.0
  %154 = vmatpush1.msra.mxu0 0.0
  %155 = vmatprep.mubr.f32.mxu0 0.0
  %156 = vmatmul.mubr.f32.gmra.mrb[0].mxu0 %v85
  %v157 = vpop.f32.mrb[0].mxu0
  %v158 = vadd.f32 %v81, %v157
  %v159 = vpop.f32.mrb[0].mxu0
  %160 = vdwg.mxu0
  %v162 = vsel %vm83, %v58, 0
  %164 = vmatprep.subr.mxu0 0.0
  %165 = vmatpush1.msra.mxu0 %v89
  %166 = vmatprep.subr.mxu0 0.0
  %167 = vmatpush1.msra.mxu0 0.0
  %168 = vmatprep.subr.mxu0 0.0
  %169 = vmatpush1.msra.mxu0 0.0
  %170 = vmatprep.subr.mxu0 0.0
  %171 = vmatpush1.msra.mxu0 0.0
  %172 = vmatprep.subr.mxu0 0.0
  %173 = vmatpush1.msra.mxu0 0.0
  %174 = vmatprep.subr.mxu0 0.0
  %175 = vmatpush1.msra.mxu0 0.0
  %176 = vmatprep.subr.mxu0 0.0
  %177 = vmatpush1.msra.mxu0 0.0
  %178 = vmatprep.subr.mxu0 0.0
  %179 = vmatpush1.msra.mxu0 0.0
  %180 = vmatprep.subr.mxu0 0.0
  %181 = vmatpush1.msra.mxu0 0.0
  %182 = vmatprep.subr.mxu0 0.0
  %183 = vmatpush1.msra.mxu0 0.0
  %184 = vmatprep.subr.mxu0 0.0
  %185 = vmatpush1.msra.mxu0 0.0
  %186 = vmatprep.subr.mxu0 0.0
  %187 = vmatpush1.msra.mxu0 0.0
  %188 = vmatprep.subr.mxu0 0.0
  %189 = vmatpush1.msra.mxu0 0.0
  %190 = vmatprep.subr.mxu0 0.0
  %191 = vmatpush1.msra.mxu0 0.0
  %192 = vmatprep.subr.mxu0 0.0
  %193 = vmatpush1.msra.mxu0 0.0
  %194 = vmatprep.subr.mxu0 0.0
  %195 = vmatpush1.msra.mxu0 0.0
  %196 = vmatprep.subr.mxu0 0.0
  %197 = vmatpush1.msra.mxu0 0.0
  %198 = vmatprep.subr.mxu0 0.0
  %199 = vmatpush1.msra.mxu0 0.0
  %200 = vmatprep.subr.mxu0 0.0
  %201 = vmatpush1.msra.mxu0 0.0
  %202 = vmatprep.subr.mxu0 0.0
  %203 = vmatpush1.msra.mxu0 0.0
  %204 = vmatprep.subr.mxu0 0.0
  %205 = vmatpush1.msra.mxu0 0.0
  %206 = vmatprep.subr.mxu0 0.0
  %207 = vmatpush1.msra.mxu0 0.0
  %208 = vmatprep.subr.mxu0 0.0
  %209 = vmatpush1.msra.mxu0 0.0
  %210 = vmatprep.subr.mxu0 0.0
  %211 = vmatpush1.msra.mxu0 0.0
  %212 = vmatprep.subr.mxu0 0.0
  %213 = vmatpush1.msra.mxu0 0.0
  %214 = vmatprep.subr.mxu0 0.0
  %215 = vmatpush1.msra.mxu0 0.0
  %216 = vmatprep.subr.mxu0 0.0
  %217 = vmatpush1.msra.mxu0 0.0
  %218 = vmatprep.subr.mxu0 0.0
  %219 = vmatpush1.msra.mxu0 0.0
  %220 = vmatprep.subr.mxu0 0.0
  %221 = vmatpush1.msra.mxu0 0.0
  %222 = vmatprep.subr.mxu0 0.0
  %223 = vmatpush1.msra.mxu0 0.0
  %224 = vmatprep.subr.mxu0 0.0
  %225 = vmatpush1.msra.mxu0 0.0
  %226 = vmatprep.subr.mxu0 0.0
  %227 = vmatpush1.msra.mxu0 0.0
  %228 = vmatprep.mubr.f32.mxu0 0.0
  %229 = vmatmul.mubr.f32.gmra.mrb[0].mxu0 %v162
  %v230 = vpop.f32.mrb[0].mxu0
  %v231 = vadd.f32 %v81, %v230
  %v232 = vpop.f32.mrb[0].mxu0
  %233 = vdwg.mxu0
  %v235 = vsel %vm83, %v60, 0
  %237 = vmatprep.subr.mxu0 0.0
  %238 = vmatpush1.msra.mxu0 %v89
  %239 = vmatprep.subr.mxu0 0.0
  %240 = vmatpush1.msra.mxu0 0.0
  %241 = vmatprep.subr.mxu0 0.0
  %242 = vmatpush1.msra.mxu0 0.0
  %243 = vmatprep.subr.mxu0 0.0
  %244 = vmatpush1.msra.mxu0 0.0
  %245 = vmatprep.subr.mxu0 0.0
  %246 = vmatpush1.msra.mxu0 0.0
  %247 = vmatprep.subr.mxu0 0.0
  %248 = vmatpush1.msra.mxu0 0.0
  %249 = vmatprep.subr.mxu0 0.0
  %250 = vmatpush1.msra.mxu0 0.0
  %251 = vmatprep.subr.mxu0 0.0
  %252 = vmatpush1.msra.mxu0 0.0
  %253 = vmatprep.subr.mxu0 0.0
  %254 = vmatpush1.msra.mxu0 0.0
  %255 = vmatprep.subr.mxu0 0.0
  %256 = vmatpush1.msra.mxu0 0.0
  %257 = vmatprep.subr.mxu0 0.0
  %258 = vmatpush1.msra.mxu0 0.0
  %259 = vmatprep.subr.mxu0 0.0
  %260 = vmatpush1.msra.mxu0 0.0
  %261 = vmatprep.subr.mxu0 0.0
  %262 = vmatpush1.msra.mxu0 0.0
  %263 = vmatprep.subr.mxu0 0.0
  %264 = vmatpush1.msra.mxu0 0.0
  %265 = vmatprep.subr.mxu0 0.0
  %266 = vmatpush1.msra.mxu0 0.0
  %267 = vmatprep.subr.mxu0 0.0
  %268 = vmatpush1.msra.mxu0 0.0
  %269 = vmatprep.subr.mxu0 0.0
  %270 = vmatpush1.msra.mxu0 0.0
  %271 = vmatprep.subr.mxu0 0.0
  %272 = vmatpush1.msra.mxu0 0.0
  %273 = vmatprep.subr.mxu0 0.0
  %274 = vmatpush1.msra.mxu0 0.0
  %275 = vmatprep.subr.mxu0 0.0
  %276 = vmatpush1.msra.mxu0 0.0
  %277 = vmatprep.subr.mxu0 0.0
  %278 = vmatpush1.msra.mxu0 0.0
  %279 = vmatprep.subr.mxu0 0.0
  %280 = vmatpush1.msra.mxu0 0.0
  %281 = vmatprep.subr.mxu0 0.0
  %282 = vmatpush1.msra.mxu0 0.0
  %283 = vmatprep.subr.mxu0 0.0
  %284 = vmatpush1.msra.mxu0 0.0
  %285 = vmatprep.subr.mxu0 0.0
  %286 = vmatpush1.msra.mxu0 0.0
  %287 = vmatprep.subr.mxu0 0.0
  %288 = vmatpush1.msra.mxu0 0.0
  %289 = vmatprep.subr.mxu0 0.0
  %290 = vmatpush1.msra.mxu0 0.0
  %291 = vmatprep.subr.mxu0 0.0
  %292 = vmatpush1.msra.mxu0 0.0
  %293 = vmatprep.subr.mxu0 0.0
  %294 = vmatpush1.msra.mxu0 0.0
  %295 = vmatprep.subr.mxu0 0.0
  %296 = vmatpush1.msra.mxu0 0.0
  %297 = vmatprep.subr.mxu0 0.0
  %298 = vmatpush1.msra.mxu0 0.0
  %299 = vmatprep.subr.mxu0 0.0
  %300 = vmatpush1.msra.mxu0 0.0
  %301 = vmatprep.mubr.f32.mxu0 0.0
  %302 = vmatmul.mubr.f32.gmra.mrb[0].mxu0 %v235
  %v303 = vpop.f32.mrb[0].mxu0
  %v304 = vadd.f32 %v81, %v303
  %v305 = vpop.f32.mrb[0].mxu0
  %306 = vdwg.mxu0
  %v308 = vsel %vm83, %v62, 0
  %310 = vmatprep.subr.mxu0 0.0
  %311 = vmatpush1.msra.mxu0 %v89
  %312 = vmatprep.subr.mxu0 0.0
  %313 = vmatpush1.msra.mxu0 0.0
  %314 = vmatprep.subr.mxu0 0.0
  %315 = vmatpush1.msra.mxu0 0.0
  %316 = vmatprep.subr.mxu0 0.0
  %317 = vmatpush1.msra.mxu0 0.0
  %318 = vmatprep.subr.mxu0 0.0
  %319 = vmatpush1.msra.mxu0 0.0
  %320 = vmatprep.subr.mxu0 0.0
  %321 = vmatpush1.msra.mxu0 0.0
  %322 = vmatprep.subr.mxu0 0.0
  %323 = vmatpush1.msra.mxu0 0.0
  %324 = vmatprep.subr.mxu0 0.0
  %325 = vmatpush1.msra.mxu0 0.0
  %326 = vmatprep.subr.mxu0 0.0
  %327 = vmatpush1.msra.mxu0 0.0
  %328 = vmatprep.subr.mxu0 0.0
  %329 = vmatpush1.msra.mxu0 0.0
  %330 = vmatprep.subr.mxu0 0.0
  %331 = vmatpush1.msra.mxu0 0.0
  %332 = vmatprep.subr.mxu0 0.0
  %333 = vmatpush1.msra.mxu0 0.0
  %334 = vmatprep.subr.mxu0 0.0
  %335 = vmatpush1.msra.mxu0 0.0
  %336 = vmatprep.subr.mxu0 0.0
  %337 = vmatpush1.msra.mxu0 0.0
  %338 = vmatprep.subr.mxu0 0.0
  %339 = vmatpush1.msra.mxu0 0.0
  %340 = vmatprep.subr.mxu0 0.0
  %341 = vmatpush1.msra.mxu0 0.0
  %342 = vmatprep.subr.mxu0 0.0
  %343 = vmatpush1.msra.mxu0 0.0
  %344 = vmatprep.subr.mxu0 0.0
  %345 = vmatpush1.msra.mxu0 0.0
  %346 = vmatprep.subr.mxu0 0.0
  %347 = vmatpush1.msra.mxu0 0.0
  %348 = vmatprep.subr.mxu0 0.0
  %349 = vmatpush1.msra.mxu0 0.0
  %350 = vmatprep.subr.mxu0 0.0
  %351 = vmatpush1.msra.mxu0 0.0
  %352 = vmatprep.subr.mxu0 0.0
  %353 = vmatpush1.msra.mxu0 0.0
  %354 = vmatprep.subr.mxu0 0.0
  %355 = vmatpush1.msra.mxu0 0.0
  %356 = vmatprep.subr.mxu0 0.0
  %357 = vmatpush1.msra.mxu0 0.0
  %358 = vmatprep.subr.mxu0 0.0
  %359 = vmatpush1.msra.mxu0 0.0
  %360 = vmatprep.subr.mxu0 0.0
  %361 = vmatpush1.msra.mxu0 0.0
  %362 = vmatprep.subr.mxu0 0.0
  %363 = vmatpush1.msra.mxu0 0.0
  %364 = vmatprep.subr.mxu0 0.0
  %365 = vmatpush1.msra.mxu0 0.0
  %366 = vmatprep.subr.mxu0 0.0
  %367 = vmatpush1.msra.mxu0 0.0
  %368 = vmatprep.subr.mxu0 0.0
  %369 = vmatpush1.msra.mxu0 0.0
  %370 = vmatprep.subr.mxu0 0.0
  %371 = vmatpush1.msra.mxu0 0.0
  %372 = vmatprep.subr.mxu0 0.0
  %373 = vmatpush1.msra.mxu0 0.0
  %374 = vmatprep.mubr.f32.mxu0 0.0
  %375 = vmatmul.mubr.f32.gmra.mrb[0].mxu0 %v308
  %v376 = vpop.f32.mrb[0].mxu0
  %v377 = vadd.f32 %v81, %v376
  %v378 = vpop.f32.mrb[0].mxu0
  %379 = vdwg.mxu0
  %v381 = vsel %vm83, %v64, 0
  %383 = vmatprep.subr.mxu0 0.0
  %384 = vmatpush1.msra.mxu0 %v89
  %385 = vmatprep.subr.mxu0 0.0
  %386 = vmatpush1.msra.mxu0 0.0
  %387 = vmatprep.subr.mxu0 0.0
  %388 = vmatpush1.msra.mxu0 0.0
  %389 = vmatprep.subr.mxu0 0.0
  %390 = vmatpush1.msra.mxu0 0.0
  %391 = vmatprep.subr.mxu0 0.0
  %392 = vmatpush1.msra.mxu0 0.0
  %393 = vmatprep.subr.mxu0 0.0
  %394 = vmatpush1.msra.mxu0 0.0
  %395 = vmatprep.subr.mxu0 0.0
  %396 = vmatpush1.msra.mxu0 0.0
  %397 = vmatprep.subr.mxu0 0.0
  %398 = vmatpush1.msra.mxu0 0.0
  %399 = vmatprep.subr.mxu0 0.0
  %400 = vmatpush1.msra.mxu0 0.0
  %401 = vmatprep.subr.mxu0 0.0
  %402 = vmatpush1.msra.mxu0 0.0
  %403 = vmatprep.subr.mxu0 0.0
  %404 = vmatpush1.msra.mxu0 0.0
  %405 = vmatprep.subr.mxu0 0.0
  %406 = vmatpush1.msra.mxu0 0.0
  %407 = vmatprep.subr.mxu0 0.0
  %408 = vmatpush1.msra.mxu0 0.0
  %409 = vmatprep.subr.mxu0 0.0
  %410 = vmatpush1.msra.mxu0 0.0
  %411 = vmatprep.subr.mxu0 0.0
  %412 = vmatpush1.msra.mxu0 0.0
  %413 = vmatprep.subr.mxu0 0.0
  %414 = vmatpush1.msra.mxu0 0.0
  %415 = vmatprep.subr.mxu0 0.0
  %416 = vmatpush1.msra.mxu0 0.0
  %417 = vmatprep.subr.mxu0 0.0
  %418 = vmatpush1.msra.mxu0 0.0
  %419 = vmatprep.subr.mxu0 0.0
  %420 = vmatpush1.msra.mxu0 0.0
  %421 = vmatprep.subr.mxu0 0.0
  %422 = vmatpush1.msra.mxu0 0.0
  %423 = vmatprep.subr.mxu0 0.0
  %424 = vmatpush1.msra.mxu0 0.0
  %425 = vmatprep.subr.mxu0 0.0
  %426 = vmatpush1.msra.mxu0 0.0
  %427 = vmatprep.subr.mxu0 0.0
  %428 = vmatpush1.msra.mxu0 0.0
  %429 = vmatprep.subr.mxu0 0.0
  %430 = vmatpush1.msra.mxu0 0.0
  %431 = vmatprep.subr.mxu0 0.0
  %432 = vmatpush1.msra.mxu0 0.0
  %433 = vmatprep.subr.mxu0 0.0
  %434 = vmatpush1.msra.mxu0 0.0
  %435 = vmatprep.subr.mxu0 0.0
  %436 = vmatpush1.msra.mxu0 0.0
  %437 = vmatprep.subr.mxu0 0.0
  %438 = vmatpush1.msra.mxu0 0.0
  %439 = vmatprep.subr.mxu0 0.0
  %440 = vmatpush1.msra.mxu0 0.0
  %441 = vmatprep.subr.mxu0 0.0
  %442 = vmatpush1.msra.mxu0 0.0
  %443 = vmatprep.subr.mxu0 0.0
  %444 = vmatpush1.msra.mxu0 0.0
  %445 = vmatprep.subr.mxu0 0.0
  %446 = vmatpush1.msra.mxu0 0.0
  %447 = vmatprep.mubr.f32.mxu0 0.0
  %448 = vmatmul.mubr.f32.gmra.mrb[0].mxu0 %v381
  %v449 = vpop.f32.mrb[0].mxu0
  %v450 = vadd.f32 %v81, %v449
  %v451 = vpop.f32.mrb[0].mxu0
  %452 = vdwg.mxu0
  %v454 = vsel %vm83, %v66, 0
  %456 = vmatprep.subr.mxu0 0.0
  %457 = vmatpush1.msra.mxu0 %v89
  %458 = vmatprep.subr.mxu0 0.0
  %459 = vmatpush1.msra.mxu0 0.0
  %460 = vmatprep.subr.mxu0 0.0
  %461 = vmatpush1.msra.mxu0 0.0
  %462 = vmatprep.subr.mxu0 0.0
  %463 = vmatpush1.msra.mxu0 0.0
  %464 = vmatprep.subr.mxu0 0.0
  %465 = vmatpush1.msra.mxu0 0.0
  %466 = vmatprep.subr.mxu0 0.0
  %467 = vmatpush1.msra.mxu0 0.0
  %468 = vmatprep.subr.mxu0 0.0
  %469 = vmatpush1.msra.mxu0 0.0
  %470 = vmatprep.subr.mxu0 0.0
  %471 = vmatpush1.msra.mxu0 0.0
  %472 = vmatprep.subr.mxu0 0.0
  %473 = vmatpush1.msra.mxu0 0.0
  %474 = vmatprep.subr.mxu0 0.0
  %475 = vmatpush1.msra.mxu0 0.0
  %476 = vmatprep.subr.mxu0 0.0
  %477 = vmatpush1.msra.mxu0 0.0
  %478 = vmatprep.subr.mxu0 0.0
  %479 = vmatpush1.msra.mxu0 0.0
  %480 = vmatprep.subr.mxu0 0.0
  %481 = vmatpush1.msra.mxu0 0.0
  %482 = vmatprep.subr.mxu0 0.0
  %483 = vmatpush1.msra.mxu0 0.0
  %484 = vmatprep.subr.mxu0 0.0
  %485 = vmatpush1.msra.mxu0 0.0
  %486 = vmatprep.subr.mxu0 0.0
  %487 = vmatpush1.msra.mxu0 0.0
  %488 = vmatprep.subr.mxu0 0.0
  %489 = vmatpush1.msra.mxu0 0.0
  %490 = vmatprep.subr.mxu0 0.0
  %491 = vmatpush1.msra.mxu0 0.0
  %492 = vmatprep.subr.mxu0 0.0
  %493 = vmatpush1.msra.mxu0 0.0
  %494 = vmatprep.subr.mxu0 0.0
  %495 = vmatpush1.msra.mxu0 0.0
  %496 = vmatprep.subr.mxu0 0.0
  %497 = vmatpush1.msra.mxu0 0.0
  %498 = vmatprep.subr.mxu0 0.0
  %499 = vmatpush1.msra.mxu0 0.0
  %500 = vmatprep.subr.mxu0 0.0
  %501 = vmatpush1.msra.mxu0 0.0
  %502 = vmatprep.subr.mxu0 0.0
  %503 = vmatpush1.msra.mxu0 0.0
  %504 = vmatprep.subr.mxu0 0.0
  %505 = vmatpush1.msra.mxu0 0.0
  %506 = vmatprep.subr.mxu0 0.0
  %507 = vmatpush1.msra.mxu0 0.0
  %508 = vmatprep.subr.mxu0 0.0
  %509 = vmatpush1.msra.mxu0 0.0
  %510 = vmatprep.subr.mxu0 0.0
  %511 = vmatpush1.msra.mxu0 0.0
  %512 = vmatprep.subr.mxu0 0.0
  %513 = vmatpush1.msra.mxu0 0.0
  %514 = vmatprep.subr.mxu0 0.0
  %515 = vmatpush1.msra.mxu0 0.0
  %516 = vmatprep.subr.mxu0 0.0
  %517 = vmatpush1.msra.mxu0 0.0
  %518 = vmatprep.subr.mxu0 0.0
  %519 = vmatpush1.msra.mxu0 0.0
  %520 = vmatprep.mubr.f32.mxu0 0.0
  %521 = vmatmul.mubr.f32.gmra.mrb[0].mxu0 %v454
  %v522 = vpop.f32.mrb[0].mxu0
  %v523 = vadd.f32 %v81, %v522
  %v524 = vpop.f32.mrb[0].mxu0
  %525 = vdwg.mxu0
  %v527 = vsel %vm83, %v68, 0
  %529 = vmatprep.subr.mxu0 0.0
  %530 = vmatpush1.msra.mxu0 %v89
  %531 = vmatprep.subr.mxu0 0.0
  %532 = vmatpush1.msra.mxu0 0.0
  %533 = vmatprep.subr.mxu0 0.0
  %534 = vmatpush1.msra.mxu0 0.0
  %535 = vmatprep.subr.mxu0 0.0
  %536 = vmatpush1.msra.mxu0 0.0
  %537 = vmatprep.subr.mxu0 0.0
  %538 = vmatpush1.msra.mxu0 0.0
  %539 = vmatprep.subr.mxu0 0.0
  %540 = vmatpush1.msra.mxu0 0.0
  %541 = vmatprep.subr.mxu0 0.0
  %542 = vmatpush1.msra.mxu0 0.0
  %543 = vmatprep.subr.mxu0 0.0
  %544 = vmatpush1.msra.mxu0 0.0
  %545 = vmatprep.subr.mxu0 0.0
  %546 = vmatpush1.msra.mxu0 0.0
  %547 = vmatprep.subr.mxu0 0.0
  %548 = vmatpush1.msra.mxu0 0.0
  %549 = vmatprep.subr.mxu0 0.0
  %550 = vmatpush1.msra.mxu0 0.0
  %551 = vmatprep.subr.mxu0 0.0
  %552 = vmatpush1.msra.mxu0 0.0
  %553 = vmatprep.subr.mxu0 0.0
  %554 = vmatpush1.msra.mxu0 0.0
  %555 = vmatprep.subr.mxu0 0.0
  %556 = vmatpush1.msra.mxu0 0.0
  %557 = vmatprep.subr.mxu0 0.0
  %558 = vmatpush1.msra.mxu0 0.0
  %559 = vmatprep.subr.mxu0 0.0
  %560 = vmatpush1.msra.mxu0 0.0
  %561 = vmatprep.subr.mxu0 0.0
  %562 = vmatpush1.msra.mxu0 0.0
  %563 = vmatprep.subr.mxu0 0.0
  %564 = vmatpush1.msra.mxu0 0.0
  %565 = vmatprep.subr.mxu0 0.0
  %566 = vmatpush1.msra.mxu0 0.0
  %567 = vmatprep.subr.mxu0 0.0
  %568 = vmatpush1.msra.mxu0 0.0
  %569 = vmatprep.subr.mxu0 0.0
  %570 = vmatpush1.msra.mxu0 0.0
  %571 = vmatprep.subr.mxu0 0.0
  %572 = vmatpush1.msra.mxu0 0.0
  %573 = vmatprep.subr.mxu0 0.0
  %574 = vmatpush1.msra.mxu0 0.0
  %575 = vmatprep.subr.mxu0 0.0
  %576 = vmatpush1.msra.mxu0 0.0
  %577 = vmatprep.subr.mxu0 0.0
  %578 = vmatpush1.msra.mxu0 0.0
  %579 = vmatprep.subr.mxu0 0.0
  %580 = vmatpush1.msra.mxu0 0.0
  %581 = vmatprep.subr.mxu0 0.0
  %582 = vmatpush1.msra.mxu0 0.0
  %583 = vmatprep.subr.mxu0 0.0
  %584 = vmatpush1.msra.mxu0 0.0
  %585 = vmatprep.subr.mxu0 0.0
  %586 = vmatpush1.msra.mxu0 0.0
  %587 = vmatprep.subr.mxu0 0.0
  %588 = vmatpush1.msra.mxu0 0.0
  %589 = vmatprep.subr.mxu0 0.0
  %590 = vmatpush1.msra.mxu0 0.0
  %591 = vmatprep.subr.mxu0 0.0
  %592 = vmatpush1.msra.mxu0 0.0
  %593 = vmatprep.mubr.f32.mxu0 0.0
  %594 = vmatmul.mubr.f32.gmra.mrb[0].mxu0 %v527
  %v595 = vpop.f32.mrb[0].mxu0
  %v596 = vadd.f32 %v81, %v595
  %v597 = vpop.f32.mrb[0].mxu0
  %598 = vdwg.mxu0
  %v600 = vsel %vm83, %v70, 0
  %602 = vmatprep.subr.mxu0 0.0
  %603 = vmatpush1.msra.mxu0 %v89
  %604 = vmatprep.subr.mxu0 0.0
  %605 = vmatpush1.msra.mxu0 0.0
  %606 = vmatprep.subr.mxu0 0.0
  %607 = vmatpush1.msra.mxu0 0.0
  %608 = vmatprep.subr.mxu0 0.0
  %609 = vmatpush1.msra.mxu0 0.0
  %610 = vmatprep.subr.mxu0 0.0
  %611 = vmatpush1.msra.mxu0 0.0
  %612 = vmatprep.subr.mxu0 0.0
  %613 = vmatpush1.msra.mxu0 0.0
  %614 = vmatprep.subr.mxu0 0.0
  %615 = vmatpush1.msra.mxu0 0.0
  %616 = vmatprep.subr.mxu0 0.0
  %617 = vmatpush1.msra.mxu0 0.0
  %618 = vmatprep.subr.mxu0 0.0
  %619 = vmatpush1.msra.mxu0 0.0
  %620 = vmatprep.subr.mxu0 0.0
  %621 = vmatpush1.msra.mxu0 0.0
  %622 = vmatprep.subr.mxu0 0.0
  %623 = vmatpush1.msra.mxu0 0.0
  %624 = vmatprep.subr.mxu0 0.0
  %625 = vmatpush1.msra.mxu0 0.0
  %626 = vmatprep.subr.mxu0 0.0
  %627 = vmatpush1.msra.mxu0 0.0
  %628 = vmatprep.subr.mxu0 0.0
  %629 = vmatpush1.msra.mxu0 0.0
  %630 = vmatprep.subr.mxu0 0.0
  %631 = vmatpush1.msra.mxu0 0.0
  %632 = vmatprep.subr.mxu0 0.0
  %633 = vmatpush1.msra.mxu0 0.0
  %634 = vmatprep.subr.mxu0 0.0
  %635 = vmatpush1.msra.mxu0 0.0
  %636 = vmatprep.subr.mxu0 0.0
  %637 = vmatpush1.msra.mxu0 0.0
  %638 = vmatprep.subr.mxu0 0.0
  %639 = vmatpush1.msra.mxu0 0.0
  %640 = vmatprep.subr.mxu0 0.0
  %641 = vmatpush1.msra.mxu0 0.0
  %642 = vmatprep.subr.mxu0 0.0
  %643 = vmatpush1.msra.mxu0 0.0
  %644 = vmatprep.subr.mxu0 0.0
  %645 = vmatpush1.msra.mxu0 0.0
  %646 = vmatprep.subr.mxu0 0.0
  %647 = vmatpush1.msra.mxu0 0.0
  %648 = vmatprep.subr.mxu0 0.0
  %649 = vmatpush1.msra.mxu0 0.0
  %650 = vmatprep.subr.mxu0 0.0
  %651 = vmatpush1.msra.mxu0 0.0
  %652 = vmatprep.subr.mxu0 0.0
  %653 = vmatpush1.msra.mxu0 0.0
  %654 = vmatprep.subr.mxu0 0.0
  %655 = vmatpush1.msra.mxu0 0.0
  %656 = vmatprep.subr.mxu0 0.0
  %657 = vmatpush1.msra.mxu0 0.0
  %658 = vmatprep.subr.mxu0 0.0
  %659 = vmatpush1.msra.mxu0 0.0
  %660 = vmatprep.subr.mxu0 0.0
  %661 = vmatpush1.msra.mxu0 0.0
  %662 = vmatprep.subr.mxu0 0.0
  %663 = vmatpush1.msra.mxu0 0.0
  %664 = vmatprep.subr.mxu0 0.0
  %665 = vmatpush1.msra.mxu0 0.0
  %666 = vmatprep.mubr.f32.mxu0 0.0
  %667 = vmatmul.mubr.f32.gmra.mrb[0].mxu0 %v600
  %v668 = vpop.f32.mrb[0].mxu0
  %v669 = vadd.f32 %v81, %v668
  %v670 = vpop.f32.mrb[0].mxu0
  %671 = vdwg.mxu0
  %vm672 = vcmask 261120
  %v674 = vsel %vm672, 0.0, 0
  %676 = vmatprep.subr.mxu0 0.0
  %677 = vmatpush1.msra.mxu0 %v72
  %678 = vmatprep.subr.mxu0 0.0
  %679 = vmatpush1.msra.mxu0 %v73
  %680 = vmatprep.subr.mxu0 0.0
  %681 = vmatpush1.msra.mxu0 %v74
  %682 = vmatprep.subr.mxu0 0.0
  %683 = vmatpush1.msra.mxu0 %v75
  %684 = vmatprep.subr.mxu0 0.0
  %685 = vmatpush1.msra.mxu0 0.0
  %686 = vmatprep.subr.mxu0 0.0
  %687 = vmatpush1.msra.mxu0 0.0
  %688 = vmatprep.subr.mxu0 0.0
  %689 = vmatpush1.msra.mxu0 0.0
  %690 = vmatprep.subr.mxu0 0.0
  %691 = vmatpush1.msra.mxu0 0.0
  %692 = vmatprep.subr.mxu0 0.0
  %693 = vmatpush1.msra.mxu0 0.0
  %694 = vmatprep.subr.mxu0 0.0
  %695 = vmatpush1.msra.mxu0 0.0
  %696 = vmatprep.subr.mxu0 0.0
  %697 = vmatpush1.msra.mxu0 0.0
  %698 = vmatprep.subr.mxu0 0.0
  %699 = vmatpush1.msra.mxu0 0.0
  %700 = vmatprep.subr.mxu0 0.0
  %701 = vmatpush1.msra.mxu0 0.0
  %702 = vmatprep.subr.mxu0 0.0
  %703 = vmatpush1.msra.mxu0 0.0
  %704 = vmatprep.subr.mxu0 0.0
  %705 = vmatpush1.msra.mxu0 0.0
  %706 = vmatprep.subr.mxu0 0.0
  %707 = vmatpush1.msra.mxu0 0.0
  %708 = vmatprep.subr.mxu0 0.0
  %709 = vmatpush1.msra.mxu0 0.0
  %710 = vmatprep.subr.mxu0 0.0
  %711 = vmatpush1.msra.mxu0 0.0
  %712 = vmatprep.subr.mxu0 0.0
  %713 = vmatpush1.msra.mxu0 0.0
  %714 = vmatprep.subr.mxu0 0.0
  %715 = vmatpush1.msra.mxu0 0.0
  %716 = vmatprep.subr.mxu0 0.0
  %717 = vmatpush1.msra.mxu0 0.0
  %718 = vmatprep.subr.mxu0 0.0
  %719 = vmatpush1.msra.mxu0 0.0
  %720 = vmatprep.subr.mxu0 0.0
  %721 = vmatpush1.msra.mxu0 0.0
  %722 = vmatprep.subr.mxu0 0.0
  %723 = vmatpush1.msra.mxu0 0.0
  %724 = vmatprep.subr.mxu0 0.0
  %725 = vmatpush1.msra.mxu0 0.0
  %726 = vmatprep.subr.mxu0 0.0
  %727 = vmatpush1.msra.mxu0 0.0
  %728 = vmatprep.subr.mxu0 0.0
  %729 = vmatpush1.msra.mxu0 0.0
  %730 = vmatprep.subr.mxu0 0.0
  %731 = vmatpush1.msra.mxu0 0.0
  %732 = vmatprep.subr.mxu0 0.0
  %733 = vmatpush1.msra.mxu0 0.0
  %734 = vmatprep.subr.mxu0 0.0
  %735 = vmatpush1.msra.mxu0 0.0
  %736 = vmatprep.subr.mxu0 0.0
  %737 = vmatpush1.msra.mxu0 0.0
  %738 = vmatprep.subr.mxu0 0.0
  %739 = vmatpush1.msra.mxu0 0.0
  %740 = vmatprep.mubr.f32.mxu0 0.0
  %741 = vmatmul.mubr.f32.gmra.mrb[0].mxu0 %v674
  %v742 = vpop.f32.mrb[0].mxu0
  %v743 = vadd.f32 0.0, %v742
  %v744 = vpop.f32.mrb[0].mxu0
  %745 = vdwg.mxu0
  %v746 = vadd.f32 %v158, %v743
  %v747 = vxor.u32 %v746, 2147483648
  %v748 = vmul.f32 %v747, 1.442695
  %v749 = vpow.pop %v748
  %v750 = vadd.f32 %v749, 1.0
  %v751 = vrcp.pop %v750
  %v752 = vmul.f32 1.0, %v751
  %v753 = vtanh.pop %v746
  %v754 = vmul.f32 %v752, 0.0
  %756 = vrot.lane.b32.xlu0 %v753, 64
  %v757 = vpop.permute.xlu0 %756
  %v759 = vmul.f32 %v752, %v757
  %761 = vrot.lane.b32.xlu0 %v759, 32
  %v762 = vpop.permute.xlu0 %761
  %v764 = vadd.f32 %v754, %v762
  %v765 = vtanh.pop %v764
  %767 = vrot.lane.b32.xlu0 %v765, 64
  %v768 = vpop.permute.xlu0 %767
  %v770 = vmul.f32 %v752, %v768
  %772 = vrot.lane.b32.xlu0 %v770, 32
  %v773 = vpop.permute.xlu0 %772
  %v774 = vsel %vm672, %v773, 0
  %776 = vmatprep.subr.mxu0 0.0
  %777 = vmatpush1.msra.mxu0 %v72
  %778 = vmatprep.subr.mxu0 0.0
  %779 = vmatpush1.msra.mxu0 %v73
  %780 = vmatprep.subr.mxu0 0.0
  %781 = vmatpush1.msra.mxu0 %v74
  %782 = vmatprep.subr.mxu0 0.0
  %783 = vmatpush1.msra.mxu0 %v75
  %784 = vmatprep.subr.mxu0 0.0
  %785 = vmatpush1.msra.mxu0 0.0
  %786 = vmatprep.subr.mxu0 0.0
  %787 = vmatpush1.msra.mxu0 0.0
  %788 = vmatprep.subr.mxu0 0.0
  %789 = vmatpush1.msra.mxu0 0.0
  %790 = vmatprep.subr.mxu0 0.0
  %791 = vmatpush1.msra.mxu0 0.0
  %792 = vmatprep.subr.mxu0 0.0
  %793 = vmatpush1.msra.mxu0 0.0
  %794 = vmatprep.subr.mxu0 0.0
  %795 = vmatpush1.msra.mxu0 0.0
  %796 = vmatprep.subr.mxu0 0.0
  %797 = vmatpush1.msra.mxu0 0.0
  %798 = vmatprep.subr.mxu0 0.0
  %799 = vmatpush1.msra.mxu0 0.0
  %800 = vmatprep.subr.mxu0 0.0
  %801 = vmatpush1.msra.mxu0 0.0
  %802 = vmatprep.subr.mxu0 0.0
  %803 = vmatpush1.msra.mxu0 0.0
  %804 = vmatprep.subr.mxu0 0.0
  %805 = vmatpush1.msra.mxu0 0.0
  %806 = vmatprep.subr.mxu0 0.0
  %807 = vmatpush1.msra.mxu0 0.0
  %808 = vmatprep.subr.mxu0 0.0
  %809 = vmatpush1.msra.mxu0 0.0
  %810 = vmatprep.subr.mxu0 0.0
  %811 = vmatpush1.msra.mxu0 0.0
  %812 = vmatprep.subr.mxu0 0.0
  %813 = vmatpush1.msra.mxu0 0.0
  %814 = vmatprep.subr.mxu0 0.0
  %815 = vmatpush1.msra.mxu0 0.0
  %816 = vmatprep.subr.mxu0 0.0
  %817 = vmatpush1.msra.mxu0 0.0
  %818 = vmatprep.subr.mxu0 0.0
  %819 = vmatpush1.msra.mxu0 0.0
  %820 = vmatprep.subr.mxu0 0.0
  %821 = vmatpush1.msra.mxu0 0.0
  %822 = vmatprep.subr.mxu0 0.0
  %823 = vmatpush1.msra.mxu0 0.0
  %824 = vmatprep.subr.mxu0 0.0
  %825 = vmatpush1.msra.mxu0 0.0
  %826 = vmatprep.subr.mxu0 0.0
  %827 = vmatpush1.msra.mxu0 0.0
  %828 = vmatprep.subr.mxu0 0.0
  %829 = vmatpush1.msra.mxu0 0.0
  %830 = vmatprep.subr.mxu0 0.0
  %831 = vmatpush1.msra.mxu0 0.0
  %832 = vmatprep.subr.mxu0 0.0
  %833 = vmatpush1.msra.mxu0 0.0
  %834 = vmatprep.subr.mxu0 0.0
  %835 = vmatpush1.msra.mxu0 0.0
  %836 = vmatprep.subr.mxu0 0.0
  %837 = vmatpush1.msra.mxu0 0.0
  %838 = vmatprep.subr.mxu0 0.0
  %839 = vmatpush1.msra.mxu0 0.0
  %840 = vmatprep.mubr.f32.mxu0 0.0
  %841 = vmatmul.mubr.f32.gmra.mrb[0].mxu0 %v774
  %v842 = vpop.f32.mrb[0].mxu0
  %v843 = vadd.f32 0.0, %v842
  %v844 = vpop.f32.mrb[0].mxu0
  %845 = vdwg.mxu0
  %v846 = vadd.f32 %v231, %v843
  %v847 = vxor.u32 %v846, 2147483648
  %v848 = vmul.f32 %v847, 1.442695
  %v849 = vpow.pop %v848
  %v850 = vadd.f32 %v849, 1.0
  %v851 = vrcp.pop %v850
  %v852 = vmul.f32 1.0, %v851
  %v853 = vtanh.pop %v846
  %v854 = vmul.f32 %v852, %v764
  %856 = vrot.lane.b32.xlu0 %v853, 64
  %v857 = vpop.permute.xlu0 %856
  %v859 = vmul.f32 %v852, %v857
  %861 = vrot.lane.b32.xlu0 %v859, 32
  %v862 = vpop.permute.xlu0 %861
  %v864 = vadd.f32 %v854, %v862
  %v865 = vtanh.pop %v864
  %867 = vrot.lane.b32.xlu0 %v865, 64
  %v868 = vpop.permute.xlu0 %867
  %v870 = vmul.f32 %v852, %v868
  %872 = vrot.lane.b32.xlu0 %v870, 32
  %v873 = vpop.permute.xlu0 %872
  %v874 = vsel %vm672, %v873, 0
  %876 = vmatprep.subr.mxu0 0.0
  %877 = vmatpush1.msra.mxu0 %v72
  %878 = vmatprep.subr.mxu0 0.0
  %879 = vmatpush1.msra.mxu0 %v73
  %880 = vmatprep.subr.mxu0 0.0
  %881 = vmatpush1.msra.mxu0 %v74
  %882 = vmatprep.subr.mxu0 0.0
  %883 = vmatpush1.msra.mxu0 %v75
  %884 = vmatprep.subr.mxu0 0.0
  %885 = vmatpush1.msra.mxu0 0.0
  %886 = vmatprep.subr.mxu0 0.0
  %887 = vmatpush1.msra.mxu0 0.0
  %888 = vmatprep.subr.mxu0 0.0
  %889 = vmatpush1.msra.mxu0 0.0
  %890 = vmatprep.subr.mxu0 0.0
  %891 = vmatpush1.msra.mxu0 0.0
  %892 = vmatprep.subr.mxu0 0.0
  %893 = vmatpush1.msra.mxu0 0.0
  %894 = vmatprep.subr.mxu0 0.0
  %895 = vmatpush1.msra.mxu0 0.0
  %896 = vmatprep.subr.mxu0 0.0
  %897 = vmatpush1.msra.mxu0 0.0
  %898 = vmatprep.subr.mxu0 0.0
  %899 = vmatpush1.msra.mxu0 0.0
  %900 = vmatprep.subr.mxu0 0.0
  %901 = vmatpush1.msra.mxu0 0.0
  %902 = vmatprep.subr.mxu0 0.0
  %903 = vmatpush1.msra.mxu0 0.0
  %904 = vmatprep.subr.mxu0 0.0
  %905 = vmatpush1.msra.mxu0 0.0
  %906 = vmatprep.subr.mxu0 0.0
  %907 = vmatpush1.msra.mxu0 0.0
  %908 = vmatprep.subr.mxu0 0.0
  %909 = vmatpush1.msra.mxu0 0.0
  %910 = vmatprep.subr.mxu0 0.0
  %911 = vmatpush1.msra.mxu0 0.0
  %912 = vmatprep.subr.mxu0 0.0
  %913 = vmatpush1.msra.mxu0 0.0
  %914 = vmatprep.subr.mxu0 0.0
  %915 = vmatpush1.msra.mxu0 0.0
  %916 = vmatprep.subr.mxu0 0.0
  %917 = vmatpush1.msra.mxu0 0.0
  %918 = vmatprep.subr.mxu0 0.0
  %919 = vmatpush1.msra.mxu0 0.0
  %920 = vmatprep.subr.mxu0 0.0
  %921 = vmatpush1.msra.mxu0 0.0
  %922 = vmatprep.subr.mxu0 0.0
  %923 = vmatpush1.msra.mxu0 0.0
  %924 = vmatprep.subr.mxu0 0.0
  %925 = vmatpush1.msra.mxu0 0.0
  %926 = vmatprep.subr.mxu0 0.0
  %927 = vmatpush1.msra.mxu0 0.0
  %928 = vmatprep.subr.mxu0 0.0
  %929 = vmatpush1.msra.mxu0 0.0
  %930 = vmatprep.subr.mxu0 0.0
  %931 = vmatpush1.msra.mxu0 0.0
  %932 = vmatprep.subr.mxu0 0.0
  %933 = vmatpush1.msra.mxu0 0.0
  %934 = vmatprep.subr.mxu0 0.0
  %935 = vmatpush1.msra.mxu0 0.0
  %936 = vmatprep.subr.mxu0 0.0
  %937 = vmatpush1.msra.mxu0 0.0
  %938 = vmatprep.subr.mxu0 0.0
  %939 = vmatpush1.msra.mxu0 0.0
  %940 = vmatprep.mubr.f32.mxu0 0.0
  %941 = vmatmul.mubr.f32.gmra.mrb[0].mxu0 %v874
  %v942 = vpop.f32.mrb[0].mxu0
  %v943 = vadd.f32 0.0, %v942
  %v944 = vpop.f32.mrb[0].mxu0
  %945 = vdwg.mxu0
  %v946 = vadd.f32 %v304, %v943
  %v947 = vxor.u32 %v946, 2147483648
  %v948 = vmul.f32 %v947, 1.442695
  %v949 = vpow.pop %v948
  %v950 = vadd.f32 %v949, 1.0
  %v951 = vrcp.pop %v950
  %v952 = vmul.f32 1.0, %v951
  %v953 = vtanh.pop %v946
  %v954 = vmul.f32 %v952, %v864
  %956 = vrot.lane.b32.xlu0 %v953, 64
  %v957 = vpop.permute.xlu0 %956
  %v959 = vmul.f32 %v952, %v957
  %961 = vrot.lane.b32.xlu0 %v959, 32
  %v962 = vpop.permute.xlu0 %961
  %v964 = vadd.f32 %v954, %v962
  %v965 = vtanh.pop %v964
  %967 = vrot.lane.b32.xlu0 %v965, 64
  %v968 = vpop.permute.xlu0 %967
  %v970 = vmul.f32 %v952, %v968
  %972 = vrot.lane.b32.xlu0 %v970, 32
  %v973 = vpop.permute.xlu0 %972
  %v974 = vsel %vm672, %v973, 0
  %976 = vmatprep.subr.mxu0 0.0
  %977 = vmatpush1.msra.mxu0 %v72
  %978 = vmatprep.subr.mxu0 0.0
  %979 = vmatpush1.msra.mxu0 %v73
  %980 = vmatprep.subr.mxu0 0.0
  %981 = vmatpush1.msra.mxu0 %v74
  %982 = vmatprep.subr.mxu0 0.0
  %983 = vmatpush1.msra.mxu0 %v75
  %984 = vmatprep.subr.mxu0 0.0
  %985 = vmatpush1.msra.mxu0 0.0
  %986 = vmatprep.subr.mxu0 0.0
  %987 = vmatpush1.msra.mxu0 0.0
  %988 = vmatprep.subr.mxu0 0.0
  %989 = vmatpush1.msra.mxu0 0.0
  %990 = vmatprep.subr.mxu0 0.0
  %991 = vmatpush1.msra.mxu0 0.0
  %992 = vmatprep.subr.mxu0 0.0
  %993 = vmatpush1.msra.mxu0 0.0
  %994 = vmatprep.subr.mxu0 0.0
  %995 = vmatpush1.msra.mxu0 0.0
  %996 = vmatprep.subr.mxu0 0.0
  %997 = vmatpush1.msra.mxu0 0.0
  %998 = vmatprep.subr.mxu0 0.0
  %999 = vmatpush1.msra.mxu0 0.0
  %1000 = vmatprep.subr.mxu0 0.0
  %1001 = vmatpush1.msra.mxu0 0.0
  %1002 = vmatprep.subr.mxu0 0.0
  %1003 = vmatpush1.msra.mxu0 0.0
  %1004 = vmatprep.subr.mxu0 0.0
  %1005 = vmatpush1.msra.mxu0 0.0
  %1006 = vmatprep.subr.mxu0 0.0
  %1007 = vmatpush1.msra.mxu0 0.0
  %1008 = vmatprep.subr.mxu0 0.0
  %1009 = vmatpush1.msra.mxu0 0.0
  %1010 = vmatprep.subr.mxu0 0.0
  %1011 = vmatpush1.msra.mxu0 0.0
  %1012 = vmatprep.subr.mxu0 0.0
  %1013 = vmatpush1.msra.mxu0 0.0
  %1014 = vmatprep.subr.mxu0 0.0
  %1015 = vmatpush1.msra.mxu0 0.0
  %1016 = vmatprep.subr.mxu0 0.0
  %1017 = vmatpush1.msra.mxu0 0.0
  %1018 = vmatprep.subr.mxu0 0.0
  %1019 = vmatpush1.msra.mxu0 0.0
  %1020 = vmatprep.subr.mxu0 0.0
  %1021 = vmatpush1.msra.mxu0 0.0
  %1022 = vmatprep.subr.mxu0 0.0
  %1023 = vmatpush1.msra.mxu0 0.0
  %1024 = vmatprep.subr.mxu0 0.0
  %1025 = vmatpush1.msra.mxu0 0.0
  %1026 = vmatprep.subr.mxu0 0.0
  %1027 = vmatpush1.msra.mxu0 0.0
  %1028 = vmatprep.subr.mxu0 0.0
  %1029 = vmatpush1.msra.mxu0 0.0
  %1030 = vmatprep.subr.mxu0 0.0
  %1031 = vmatpush1.msra.mxu0 0.0
  %1032 = vmatprep.subr.mxu0 0.0
  %1033 = vmatpush1.msra.mxu0 0.0
  %1034 = vmatprep.subr.mxu0 0.0
  %1035 = vmatpush1.msra.mxu0 0.0
  %1036 = vmatprep.subr.mxu0 0.0
  %1037 = vmatpush1.msra.mxu0 0.0
  %1038 = vmatprep.subr.mxu0 0.0
  %1039 = vmatpush1.msra.mxu0 0.0
  %1040 = vmatprep.mubr.f32.mxu0 0.0
  %1041 = vmatmul.mubr.f32.gmra.mrb[0].mxu0 %v974
  %v1042 = vpop.f32.mrb[0].mxu0
  %v1043 = vadd.f32 0.0, %v1042
  %v1044 = vpop.f32.mrb[0].mxu0
  %1045 = vdwg.mxu0
  %v1046 = vadd.f32 %v377, %v1043
  %v1047 = vxor.u32 %v1046, 2147483648
  %v1048 = vmul.f32 %v1047, 1.442695
  %v1049 = vpow.pop %v1048
  %v1050 = vadd.f32 %v1049, 1.0
  %v1051 = vrcp.pop %v1050
  %v1052 = vmul.f32 1.0, %v1051
  %v1053 = vtanh.pop %v1046
  %v1054 = vmul.f32 %v1052, %v964
  %1056 = vrot.lane.b32.xlu0 %v1053, 64
  %v1057 = vpop.permute.xlu0 %1056
  %v1059 = vmul.f32 %v1052, %v1057
  %1061 = vrot.lane.b32.xlu0 %v1059, 32
  %v1062 = vpop.permute.xlu0 %1061
  %v1064 = vadd.f32 %v1054, %v1062
  %v1065 = vtanh.pop %v1064
  %1067 = vrot.lane.b32.xlu0 %v1065, 64
  %v1068 = vpop.permute.xlu0 %1067
  %v1070 = vmul.f32 %v1052, %v1068
  %1072 = vrot.lane.b32.xlu0 %v1070, 32
  %v1073 = vpop.permute.xlu0 %1072
  %v1074 = vsel %vm672, %v1073, 0
  %1076 = vmatprep.subr.mxu0 0.0
  %1077 = vmatpush1.msra.mxu0 %v72
  %1078 = vmatprep.subr.mxu0 0.0
  %1079 = vmatpush1.msra.mxu0 %v73
  %1080 = vmatprep.subr.mxu0 0.0
  %1081 = vmatpush1.msra.mxu0 %v74
  %1082 = vmatprep.subr.mxu0 0.0
  %1083 = vmatpush1.msra.mxu0 %v75
  %1084 = vmatprep.subr.mxu0 0.0
  %1085 = vmatpush1.msra.mxu0 0.0
  %1086 = vmatprep.subr.mxu0 0.0
  %1087 = vmatpush1.msra.mxu0 0.0
  %1088 = vmatprep.subr.mxu0 0.0
  %1089 = vmatpush1.msra.mxu0 0.0
  %1090 = vmatprep.subr.mxu0 0.0
  %1091 = vmatpush1.msra.mxu0 0.0
  %1092 = vmatprep.subr.mxu0 0.0
  %1093 = vmatpush1.msra.mxu0 0.0
  %1094 = vmatprep.subr.mxu0 0.0
  %1095 = vmatpush1.msra.mxu0 0.0
  %1096 = vmatprep.subr.mxu0 0.0
  %1097 = vmatpush1.msra.mxu0 0.0
  %1098 = vmatprep.subr.mxu0 0.0
  %1099 = vmatpush1.msra.mxu0 0.0
  %1100 = vmatprep.subr.mxu0 0.0
  %1101 = vmatpush1.msra.mxu0 0.0
  %1102 = vmatprep.subr.mxu0 0.0
  %1103 = vmatpush1.msra.mxu0 0.0
  %1104 = vmatprep.subr.mxu0 0.0
  %1105 = vmatpush1.msra.mxu0 0.0
  %1106 = vmatprep.subr.mxu0 0.0
  %1107 = vmatpush1.msra.mxu0 0.0
  %1108 = vmatprep.subr.mxu0 0.0
  %1109 = vmatpush1.msra.mxu0 0.0
  %1110 = vmatprep.subr.mxu0 0.0
  %1111 = vmatpush1.msra.mxu0 0.0
  %1112 = vmatprep.subr.mxu0 0.0
  %1113 = vmatpush1.msra.mxu0 0.0
  %1114 = vmatprep.subr.mxu0 0.0
  %1115 = vmatpush1.msra.mxu0 0.0
  %1116 = vmatprep.subr.mxu0 0.0
  %1117 = vmatpush1.msra.mxu0 0.0
  %1118 = vmatprep.subr.mxu0 0.0
  %1119 = vmatpush1.msra.mxu0 0.0
  %1120 = vmatprep.subr.mxu0 0.0
  %1121 = vmatpush1.msra.mxu0 0.0
  %1122 = vmatprep.subr.mxu0 0.0
  %1123 = vmatpush1.msra.mxu0 0.0
  %1124 = vmatprep.subr.mxu0 0.0
  %1125 = vmatpush1.msra.mxu0 0.0
  %1126 = vmatprep.subr.mxu0 0.0
  %1127 = vmatpush1.msra.mxu0 0.0
  %1128 = vmatprep.subr.mxu0 0.0
  %1129 = vmatpush1.msra.mxu0 0.0
  %1130 = vmatprep.subr.mxu0 0.0
  %1131 = vmatpush1.msra.mxu0 0.0
  %1132 = vmatprep.subr.mxu0 0.0
  %1133 = vmatpush1.msra.mxu0 0.0
  %1134 = vmatprep.subr.mxu0 0.0
  %1135 = vmatpush1.msra.mxu0 0.0
  %1136 = vmatprep.subr.mxu0 0.0
  %1137 = vmatpush1.msra.mxu0 0.0
  %1138 = vmatprep.subr.mxu0 0.0
  %1139 = vmatpush1.msra.mxu0 0.0
  %1140 = vmatprep.mubr.f32.mxu0 0.0
  %1141 = vmatmul.mubr.f32.gmra.mrb[0].mxu0 %v1074
  %v1142 = vpop.f32.mrb[0].mxu0
  %v1143 = vadd.f32 0.0, %v1142
  %v1144 = vpop.f32.mrb[0].mxu0
  %1145 = vdwg.mxu0
  %v1146 = vadd.f32 %v450, %v1143
  %v1147 = vxor.u32 %v1146, 2147483648
  %v1148 = vmul.f32 %v1147, 1.442695
  %v1149 = vpow.pop %v1148
  %v1150 = vadd.f32 %v1149, 1.0
  %v1151 = vrcp.pop %v1150
  %v1152 = vmul.f32 1.0, %v1151
  %v1153 = vtanh.pop %v1146
  %v1154 = vmul.f32 %v1152, %v1064
  %1156 = vrot.lane.b32.xlu0 %v1153, 64
  %v1157 = vpop.permute.xlu0 %1156
  %v1159 = vmul.f32 %v1152, %v1157
  %1161 = vrot.lane.b32.xlu0 %v1159, 32
  %v1162 = vpop.permute.xlu0 %1161
  %v1164 = vadd.f32 %v1154, %v1162
  %v1165 = vtanh.pop %v1164
  %1167 = vrot.lane.b32.xlu0 %v1165, 64
  %v1168 = vpop.permute.xlu0 %1167
  %v1170 = vmul.f32 %v1152, %v1168
  %1172 = vrot.lane.b32.xlu0 %v1170, 32
  %v1173 = vpop.permute.xlu0 %1172
  %v1174 = vsel %vm672, %v1173, 0
  %1176 = vmatprep.subr.mxu0 0.0
  %1177 = vmatpush1.msra.mxu0 %v72
  %1178 = vmatprep.subr.mxu0 0.0
  %1179 = vmatpush1.msra.mxu0 %v73
  %1180 = vmatprep.subr.mxu0 0.0
  %1181 = vmatpush1.msra.mxu0 %v74
  %1182 = vmatprep.subr.mxu0 0.0
  %1183 = vmatpush1.msra.mxu0 %v75
  %1184 = vmatprep.subr.mxu0 0.0
  %1185 = vmatpush1.msra.mxu0 0.0
  %1186 = vmatprep.subr.mxu0 0.0
  %1187 = vmatpush1.msra.mxu0 0.0
  %1188 = vmatprep.subr.mxu0 0.0
  %1189 = vmatpush1.msra.mxu0 0.0
  %1190 = vmatprep.subr.mxu0 0.0
  %1191 = vmatpush1.msra.mxu0 0.0
  %1192 = vmatprep.subr.mxu0 0.0
  %1193 = vmatpush1.msra.mxu0 0.0
  %1194 = vmatprep.subr.mxu0 0.0
  %1195 = vmatpush1.msra.mxu0 0.0
  %1196 = vmatprep.subr.mxu0 0.0
  %1197 = vmatpush1.msra.mxu0 0.0
  %1198 = vmatprep.subr.mxu0 0.0
  %1199 = vmatpush1.msra.mxu0 0.0
  %1200 = vmatprep.subr.mxu0 0.0
  %1201 = vmatpush1.msra.mxu0 0.0
  %1202 = vmatprep.subr.mxu0 0.0
  %1203 = vmatpush1.msra.mxu0 0.0
  %1204 = vmatprep.subr.mxu0 0.0
  %1205 = vmatpush1.msra.mxu0 0.0
  %1206 = vmatprep.subr.mxu0 0.0
  %1207 = vmatpush1.msra.mxu0 0.0
  %1208 = vmatprep.subr.mxu0 0.0
  %1209 = vmatpush1.msra.mxu0 0.0
  %1210 = vmatprep.subr.mxu0 0.0
  %1211 = vmatpush1.msra.mxu0 0.0
  %1212 = vmatprep.subr.mxu0 0.0
  %1213 = vmatpush1.msra.mxu0 0.0
  %1214 = vmatprep.subr.mxu0 0.0
  %1215 = vmatpush1.msra.mxu0 0.0
  %1216 = vmatprep.subr.mxu0 0.0
  %1217 = vmatpush1.msra.mxu0 0.0
  %1218 = vmatprep.subr.mxu0 0.0
  %1219 = vmatpush1.msra.mxu0 0.0
  %1220 = vmatprep.subr.mxu0 0.0
  %1221 = vmatpush1.msra.mxu0 0.0
  %1222 = vmatprep.subr.mxu0 0.0
  %1223 = vmatpush1.msra.mxu0 0.0
  %1224 = vmatprep.subr.mxu0 0.0
  %1225 = vmatpush1.msra.mxu0 0.0
  %1226 = vmatprep.subr.mxu0 0.0
  %1227 = vmatpush1.msra.mxu0 0.0
  %1228 = vmatprep.subr.mxu0 0.0
  %1229 = vmatpush1.msra.mxu0 0.0
  %1230 = vmatprep.subr.mxu0 0.0
  %1231 = vmatpush1.msra.mxu0 0.0
  %1232 = vmatprep.subr.mxu0 0.0
  %1233 = vmatpush1.msra.mxu0 0.0
  %1234 = vmatprep.subr.mxu0 0.0
  %1235 = vmatpush1.msra.mxu0 0.0
  %1236 = vmatprep.subr.mxu0 0.0
  %1237 = vmatpush1.msra.mxu0 0.0
  %1238 = vmatprep.subr.mxu0 0.0
  %1239 = vmatpush1.msra.mxu0 0.0
  %1240 = vmatprep.mubr.f32.mxu0 0.0
  %1241 = vmatmul.mubr.f32.gmra.mrb[0].mxu0 %v1174
  %v1242 = vpop.f32.mrb[0].mxu0
  %v1243 = vadd.f32 0.0, %v1242
  %v1244 = vpop.f32.mrb[0].mxu0
  %1245 = vdwg.mxu0
  %v1246 = vadd.f32 %v523, %v1243
  %v1247 = vxor.u32 %v1246, 2147483648
  %v1248 = vmul.f32 %v1247, 1.442695
  %v1249 = vpow.pop %v1248
  %v1250 = vadd.f32 %v1249, 1.0
  %v1251 = vrcp.pop %v1250
  %v1252 = vmul.f32 1.0, %v1251
  %v1253 = vtanh.pop %v1246
  %v1254 = vmul.f32 %v1252, %v1164
  %1256 = vrot.lane.b32.xlu0 %v1253, 64
  %v1257 = vpop.permute.xlu0 %1256
  %v1259 = vmul.f32 %v1252, %v1257
  %1261 = vrot.lane.b32.xlu0 %v1259, 32
  %v1262 = vpop.permute.xlu0 %1261
  %v1264 = vadd.f32 %v1254, %v1262
  %v1265 = vtanh.pop %v1264
  %1267 = vrot.lane.b32.xlu0 %v1265, 64
  %v1268 = vpop.permute.xlu0 %1267
  %v1270 = vmul.f32 %v1252, %v1268
  %1272 = vrot.lane.b32.xlu0 %v1270, 32
  %v1273 = vpop.permute.xlu0 %1272
  %v1274 = vsel %vm672, %v1273, 0
  %1276 = vmatprep.subr.mxu0 0.0
  %1277 = vmatpush1.msra.mxu0 %v72
  %1278 = vmatprep.subr.mxu0 0.0
  %1279 = vmatpush1.msra.mxu0 %v73
  %1280 = vmatprep.subr.mxu0 0.0
  %1281 = vmatpush1.msra.mxu0 %v74
  %1282 = vmatprep.subr.mxu0 0.0
  %1283 = vmatpush1.msra.mxu0 %v75
  %1284 = vmatprep.subr.mxu0 0.0
  %1285 = vmatpush1.msra.mxu0 0.0
  %1286 = vmatprep.subr.mxu0 0.0
  %1287 = vmatpush1.msra.mxu0 0.0
  %1288 = vmatprep.subr.mxu0 0.0
  %1289 = vmatpush1.msra.mxu0 0.0
  %1290 = vmatprep.subr.mxu0 0.0
  %1291 = vmatpush1.msra.mxu0 0.0
  %1292 = vmatprep.subr.mxu0 0.0
  %1293 = vmatpush1.msra.mxu0 0.0
  %1294 = vmatprep.subr.mxu0 0.0
  %1295 = vmatpush1.msra.mxu0 0.0
  %1296 = vmatprep.subr.mxu0 0.0
  %1297 = vmatpush1.msra.mxu0 0.0
  %1298 = vmatprep.subr.mxu0 0.0
  %1299 = vmatpush1.msra.mxu0 0.0
  %1300 = vmatprep.subr.mxu0 0.0
  %1301 = vmatpush1.msra.mxu0 0.0
  %1302 = vmatprep.subr.mxu0 0.0
  %1303 = vmatpush1.msra.mxu0 0.0
  %1304 = vmatprep.subr.mxu0 0.0
  %1305 = vmatpush1.msra.mxu0 0.0
  %1306 = vmatprep.subr.mxu0 0.0
  %1307 = vmatpush1.msra.mxu0 0.0
  %1308 = vmatprep.subr.mxu0 0.0
  %1309 = vmatpush1.msra.mxu0 0.0
  %1310 = vmatprep.subr.mxu0 0.0
  %1311 = vmatpush1.msra.mxu0 0.0
  %1312 = vmatprep.subr.mxu0 0.0
  %1313 = vmatpush1.msra.mxu0 0.0
  %1314 = vmatprep.subr.mxu0 0.0
  %1315 = vmatpush1.msra.mxu0 0.0
  %1316 = vmatprep.subr.mxu0 0.0
  %1317 = vmatpush1.msra.mxu0 0.0
  %1318 = vmatprep.subr.mxu0 0.0
  %1319 = vmatpush1.msra.mxu0 0.0
  %1320 = vmatprep.subr.mxu0 0.0
  %1321 = vmatpush1.msra.mxu0 0.0
  %1322 = vmatprep.subr.mxu0 0.0
  %1323 = vmatpush1.msra.mxu0 0.0
  %1324 = vmatprep.subr.mxu0 0.0
  %1325 = vmatpush1.msra.mxu0 0.0
  %1326 = vmatprep.subr.mxu0 0.0
  %1327 = vmatpush1.msra.mxu0 0.0
  %1328 = vmatprep.subr.mxu0 0.0
  %1329 = vmatpush1.msra.mxu0 0.0
  %1330 = vmatprep.subr.mxu0 0.0
  %1331 = vmatpush1.msra.mxu0 0.0
  %1332 = vmatprep.subr.mxu0 0.0
  %1333 = vmatpush1.msra.mxu0 0.0
  %1334 = vmatprep.subr.mxu0 0.0
  %1335 = vmatpush1.msra.mxu0 0.0
  %1336 = vmatprep.subr.mxu0 0.0
  %1337 = vmatpush1.msra.mxu0 0.0
  %1338 = vmatprep.subr.mxu0 0.0
  %1339 = vmatpush1.msra.mxu0 0.0
  %1340 = vmatprep.mubr.f32.mxu0 0.0
  %1341 = vmatmul.mubr.f32.gmra.mrb[0].mxu0 %v1274
  %v1342 = vpop.f32.mrb[0].mxu0
  %v1343 = vadd.f32 0.0, %v1342
  %v1344 = vpop.f32.mrb[0].mxu0
  %1345 = vdwg.mxu0
  %v1346 = vadd.f32 %v596, %v1343
  %v1347 = vxor.u32 %v1346, 2147483648
  %v1348 = vmul.f32 %v1347, 1.442695
  %v1349 = vpow.pop %v1348
  %v1350 = vadd.f32 %v1349, 1.0
  %v1351 = vrcp.pop %v1350
  %v1352 = vmul.f32 1.0, %v1351
  %v1353 = vtanh.pop %v1346
  %v1354 = vmul.f32 %v1352, %v1264
  %1356 = vrot.lane.b32.xlu0 %v1353, 64
  %v1357 = vpop.permute.xlu0 %1356
  %v1359 = vmul.f32 %v1352, %v1357
  %1361 = vrot.lane.b32.xlu0 %v1359, 32
  %v1362 = vpop.permute.xlu0 %1361
  %v1364 = vadd.f32 %v1354, %v1362
  %v1365 = vtanh.pop %v1364
  %1367 = vrot.lane.b32.xlu0 %v1365, 64
  %v1368 = vpop.permute.xlu0 %1367
  %v1370 = vmul.f32 %v1352, %v1368
  %1372 = vrot.lane.b32.xlu0 %v1370, 32
  %v1373 = vpop.permute.xlu0 %1372
  %v1374 = vsel %vm672, %v1373, 0
  %1376 = vmatprep.subr.mxu0 0.0
  %1377 = vmatpush1.msra.mxu0 %v72
  %1378 = vmatprep.subr.mxu0 0.0
  %1379 = vmatpush1.msra.mxu0 %v73
  %1380 = vmatprep.subr.mxu0 0.0
  %1381 = vmatpush1.msra.mxu0 %v74
  %1382 = vmatprep.subr.mxu0 0.0
  %1383 = vmatpush1.msra.mxu0 %v75
  %1384 = vmatprep.subr.mxu0 0.0
  %1385 = vmatpush1.msra.mxu0 0.0
  %1386 = vmatprep.subr.mxu0 0.0
  %1387 = vmatpush1.msra.mxu0 0.0
  %1388 = vmatprep.subr.mxu0 0.0
  %1389 = vmatpush1.msra.mxu0 0.0
  %1390 = vmatprep.subr.mxu0 0.0
  %1391 = vmatpush1.msra.mxu0 0.0
  %1392 = vmatprep.subr.mxu0 0.0
  %1393 = vmatpush1.msra.mxu0 0.0
  %1394 = vmatprep.subr.mxu0 0.0
  %1395 = vmatpush1.msra.mxu0 0.0
  %1396 = vmatprep.subr.mxu0 0.0
  %1397 = vmatpush1.msra.mxu0 0.0
  %1398 = vmatprep.subr.mxu0 0.0
  %1399 = vmatpush1.msra.mxu0 0.0
  %1400 = vmatprep.subr.mxu0 0.0
  %1401 = vmatpush1.msra.mxu0 0.0
  %1402 = vmatprep.subr.mxu0 0.0
  %1403 = vmatpush1.msra.mxu0 0.0
  %1404 = vmatprep.subr.mxu0 0.0
  %1405 = vmatpush1.msra.mxu0 0.0
  %1406 = vmatprep.subr.mxu0 0.0
  %1407 = vmatpush1.msra.mxu0 0.0
  %1408 = vmatprep.subr.mxu0 0.0
  %1409 = vmatpush1.msra.mxu0 0.0
  %1410 = vmatprep.subr.mxu0 0.0
  %1411 = vmatpush1.msra.mxu0 0.0
  %1412 = vmatprep.subr.mxu0 0.0
  %1413 = vmatpush1.msra.mxu0 0.0
  %1414 = vmatprep.subr.mxu0 0.0
  %1415 = vmatpush1.msra.mxu0 0.0
  %1416 = vmatprep.subr.mxu0 0.0
  %1417 = vmatpush1.msra.mxu0 0.0
  %1418 = vmatprep.subr.mxu0 0.0
  %1419 = vmatpush1.msra.mxu0 0.0
  %1420 = vmatprep.subr.mxu0 0.0
  %1421 = vmatpush1.msra.mxu0 0.0
  %1422 = vmatprep.subr.mxu0 0.0
  %1423 = vmatpush1.msra.mxu0 0.0
  %1424 = vmatprep.subr.mxu0 0.0
  %1425 = vmatpush1.msra.mxu0 0.0
  %1426 = vmatprep.subr.mxu0 0.0
  %1427 = vmatpush1.msra.mxu0 0.0
  %1428 = vmatprep.subr.mxu0 0.0
  %1429 = vmatpush1.msra.mxu0 0.0
  %1430 = vmatprep.subr.mxu0 0.0
  %1431 = vmatpush1.msra.mxu0 0.0
  %1432 = vmatprep.subr.mxu0 0.0
  %1433 = vmatpush1.msra.mxu0 0.0
  %1434 = vmatprep.subr.mxu0 0.0
  %1435 = vmatpush1.msra.mxu0 0.0
  %1436 = vmatprep.subr.mxu0 0.0
  %1437 = vmatpush1.msra.mxu0 0.0
  %1438 = vmatprep.subr.mxu0 0.0
  %1439 = vmatpush1.msra.mxu0 0.0
  %1440 = vmatprep.mubr.f32.mxu0 0.0
  %1441 = vmatmul.mubr.f32.gmra.mrb[0].mxu0 %v1374
  %v1442 = vpop.f32.mrb[0].mxu0
  %v1443 = vadd.f32 0.0, %v1442
  %v1444 = vpop.f32.mrb[0].mxu0
  %1445 = vdwg.mxu0
  %v1446 = vadd.f32 %v669, %v1443
  %v1447 = vxor.u32 %v1446, 2147483648
  %v1448 = vmul.f32 %v1447, 1.442695
  %v1449 = vpow.pop %v1448
  %v1450 = vadd.f32 %v1449, 1.0
  %v1451 = vrcp.pop %v1450
  %v1452 = vmul.f32 1.0, %v1451
  %v1453 = vtanh.pop %v1446
  %v1454 = vmul.f32 %v1452, %v1364
  %1456 = vrot.lane.b32.xlu0 %v1453, 64
  %v1457 = vpop.permute.xlu0 %1456
  %v1459 = vmul.f32 %v1452, %v1457
  %1461 = vrot.lane.b32.xlu0 %v1459, 32
  %v1462 = vpop.permute.xlu0 %1461
  %v1464 = vadd.f32 %v1454, %v1462
  %v1465 = vtanh.pop %v1464
  %1467 = vrot.lane.b32.xlu0 %v1465, 64
  %v1468 = vpop.permute.xlu0 %1467
  %v1470 = vmul.f32 %v1452, %v1468
  %v1471 = vld [vmem:[%s4] sm:$0xff]
  %v1472 = vld [vmem:[%s4 + $0x8] sm:$0xff]
  %v1473 = vld [vmem:[%s4 + $0x10] sm:$0xff]
  %v1474 = vld [vmem:[%s4 + $0x18] sm:$0xff]
  %v1475 = vld [vmem:[%s5] sm:$0xff]
  %v1476 = vld [vmem:[%s5 + $0x8] sm:$0xff]
  %v1477 = vld [vmem:[%s5 + $0x10] sm:$0xff]
  %v1478 = vld [vmem:[%s5 + $0x18] sm:$0xff]
  %v1479 = vld [vmem:[%s6] sm:$0x1]
  %v1481 = vlaneseq
  %v1482 = vshrl.u32 %v1481, 7
  %v1483 = vsub.s32 0, %v1482
  %v1484 = vrot.slane %v1479, %v1483
  %1486 = vmatprep.subr.mxu0 0.0
  %1487 = vmatpush1.msra.mxu0 %v1471
  %1488 = vmatprep.subr.mxu0 0.0
  %1489 = vmatpush1.msra.mxu0 %v1472
  %1490 = vmatprep.subr.mxu0 0.0
  %1491 = vmatpush1.msra.mxu0 %v1473
  %1492 = vmatprep.subr.mxu0 0.0
  %1493 = vmatpush1.msra.mxu0 %v1474
  %1494 = vmatprep.subr.mxu0 0.0
  %1495 = vmatpush1.msra.mxu0 0.0
  %1496 = vmatprep.subr.mxu0 0.0
  %1497 = vmatpush1.msra.mxu0 0.0
  %1498 = vmatprep.subr.mxu0 0.0
  %1499 = vmatpush1.msra.mxu0 0.0
  %1500 = vmatprep.subr.mxu0 0.0
  %1501 = vmatpush1.msra.mxu0 0.0
  %1502 = vmatprep.subr.mxu0 0.0
  %1503 = vmatpush1.msra.mxu0 0.0
  %1504 = vmatprep.subr.mxu0 0.0
  %1505 = vmatpush1.msra.mxu0 0.0
  %1506 = vmatprep.subr.mxu0 0.0
  %1507 = vmatpush1.msra.mxu0 0.0
  %1508 = vmatprep.subr.mxu0 0.0
  %1509 = vmatpush1.msra.mxu0 0.0
  %1510 = vmatprep.subr.mxu0 0.0
  %1511 = vmatpush1.msra.mxu0 0.0
  %1512 = vmatprep.subr.mxu0 0.0
  %1513 = vmatpush1.msra.mxu0 0.0
  %1514 = vmatprep.subr.mxu0 0.0
  %1515 = vmatpush1.msra.mxu0 0.0
  %1516 = vmatprep.subr.mxu0 0.0
  %1517 = vmatpush1.msra.mxu0 0.0
  %1518 = vmatprep.subr.mxu0 0.0
  %1519 = vmatpush1.msra.mxu0 0.0
  %1520 = vmatprep.subr.mxu0 0.0
  %1521 = vmatpush1.msra.mxu0 0.0
  %1522 = vmatprep.subr.mxu0 0.0
  %1523 = vmatpush1.msra.mxu0 0.0
  %1524 = vmatprep.subr.mxu0 0.0
  %1525 = vmatpush1.msra.mxu0 0.0
  %1526 = vmatprep.subr.mxu0 0.0
  %1527 = vmatpush1.msra.mxu0 0.0
  %1528 = vmatprep.subr.mxu0 0.0
  %1529 = vmatpush1.msra.mxu0 0.0
  %1530 = vmatprep.subr.mxu0 0.0
  %1531 = vmatpush1.msra.mxu0 0.0
  %1532 = vmatprep.subr.mxu0 0.0
  %1533 = vmatpush1.msra.mxu0 0.0
  %1534 = vmatprep.subr.mxu0 0.0
  %1535 = vmatpush1.msra.mxu0 0.0
  %1536 = vmatprep.subr.mxu0 0.0
  %1537 = vmatpush1.msra.mxu0 0.0
  %1538 = vmatprep.subr.mxu0 0.0
  %1539 = vmatpush1.msra.mxu0 0.0
  %1540 = vmatprep.subr.mxu0 0.0
  %1541 = vmatpush1.msra.mxu0 0.0
  %1542 = vmatprep.subr.mxu0 0.0
  %1543 = vmatpush1.msra.mxu0 0.0
  %1544 = vmatprep.subr.mxu0 0.0
  %1545 = vmatpush1.msra.mxu0 0.0
  %1546 = vmatprep.subr.mxu0 0.0
  %1547 = vmatpush1.msra.mxu0 0.0
  %1548 = vmatprep.subr.mxu0 0.0
  %1549 = vmatpush1.msra.mxu0 0.0
  %1550 = vmatprep.mubr.f32.mxu0 0.0
  %1551 = vmatmul.mubr.f32.gmra.mrb[0].mxu0 %v774
  %v1552 = vpop.f32.mrb[0].mxu0
  %v1553 = vadd.f32 %v1484, %v1552
  %v1554 = vpop.f32.mrb[0].mxu0
  %1555 = vdwg.mxu0
  %1556 = vmatprep.subr.mxu0 0.0
  %1557 = vmatpush1.msra.mxu0 %v1471
  %1558 = vmatprep.subr.mxu0 0.0
  %1559 = vmatpush1.msra.mxu0 %v1472
  %1560 = vmatprep.subr.mxu0 0.0
  %1561 = vmatpush1.msra.mxu0 %v1473
  %1562 = vmatprep.subr.mxu0 0.0
  %1563 = vmatpush1.msra.mxu0 %v1474
  %1564 = vmatprep.subr.mxu0 0.0
  %1565 = vmatpush1.msra.mxu0 0.0
  %1566 = vmatprep.subr.mxu0 0.0
  %1567 = vmatpush1.msra.mxu0 0.0
  %1568 = vmatprep.subr.mxu0 0.0
  %1569 = vmatpush1.msra.mxu0 0.0
  %1570 = vmatprep.subr.mxu0 0.0
  %1571 = vmatpush1.msra.mxu0 0.0
  %1572 = vmatprep.subr.mxu0 0.0
  %1573 = vmatpush1.msra.mxu0 0.0
  %1574 = vmatprep.subr.mxu0 0.0
  %1575 = vmatpush1.msra.mxu0 0.0
  %1576 = vmatprep.subr.mxu0 0.0
  %1577 = vmatpush1.msra.mxu0 0.0
  %1578 = vmatprep.subr.mxu0 0.0
  %1579 = vmatpush1.msra.mxu0 0.0
  %1580 = vmatprep.subr.mxu0 0.0
  %1581 = vmatpush1.msra.mxu0 0.0
  %1582 = vmatprep.subr.mxu0 0.0
  %1583 = vmatpush1.msra.mxu0 0.0
  %1584 = vmatprep.subr.mxu0 0.0
  %1585 = vmatpush1.msra.mxu0 0.0
  %1586 = vmatprep.subr.mxu0 0.0
  %1587 = vmatpush1.msra.mxu0 0.0
  %1588 = vmatprep.subr.mxu0 0.0
  %1589 = vmatpush1.msra.mxu0 0.0
  %1590 = vmatprep.subr.mxu0 0.0
  %1591 = vmatpush1.msra.mxu0 0.0
  %1592 = vmatprep.subr.mxu0 0.0
  %1593 = vmatpush1.msra.mxu0 0.0
  %1594 = vmatprep.subr.mxu0 0.0
  %1595 = vmatpush1.msra.mxu0 0.0
  %1596 = vmatprep.subr.mxu0 0.0
  %1597 = vmatpush1.msra.mxu0 0.0
  %1598 = vmatprep.subr.mxu0 0.0
  %1599 = vmatpush1.msra.mxu0 0.0
  %1600 = vmatprep.subr.mxu0 0.0
  %1601 = vmatpush1.msra.mxu0 0.0
  %1602 = vmatprep.subr.mxu0 0.0
  %1603 = vmatpush1.msra.mxu0 0.0
  %1604 = vmatprep.subr.mxu0 0.0
  %1605 = vmatpush1.msra.mxu0 0.0
  %1606 = vmatprep.subr.mxu0 0.0
  %1607 = vmatpush1.msra.mxu0 0.0
  %1608 = vmatprep.subr.mxu0 0.0
  %1609 = vmatpush1.msra.mxu0 0.0
  %1610 = vmatprep.subr.mxu0 0.0
  %1611 = vmatpush1.msra.mxu0 0.0
  %1612 = vmatprep.subr.mxu0 0.0
  %1613 = vmatpush1.msra.mxu0 0.0
  %1614 = vmatprep.subr.mxu0 0.0
  %1615 = vmatpush1.msra.mxu0 0.0
  %1616 = vmatprep.subr.mxu0 0.0
  %1617 = vmatpush1.msra.mxu0 0.0
  %1618 = vmatprep.subr.mxu0 0.0
  %1619 = vmatpush1.msra.mxu0 0.0
  %1620 = vmatprep.mubr.f32.mxu0 0.0
  %1621 = vmatmul.mubr.f32.gmra.mrb[0].mxu0 %v874
  %v1622 = vpop.f32.mrb[0].mxu0
  %v1623 = vadd.f32 %v1484, %v1622
  %v1624 = vpop.f32.mrb[0].mxu0
  %1625 = vdwg.mxu0
  %1626 = vmatprep.subr.mxu0 0.0
  %1627 = vmatpush1.msra.mxu0 %v1471
  %1628 = vmatprep.subr.mxu0 0.0
  %1629 = vmatpush1.msra.mxu0 %v1472
  %1630 = vmatprep.subr.mxu0 0.0
  %1631 = vmatpush1.msra.mxu0 %v1473
  %1632 = vmatprep.subr.mxu0 0.0
  %1633 = vmatpush1.msra.mxu0 %v1474
  %1634 = vmatprep.subr.mxu0 0.0
  %1635 = vmatpush1.msra.mxu0 0.0
  %1636 = vmatprep.subr.mxu0 0.0
  %1637 = vmatpush1.msra.mxu0 0.0
  %1638 = vmatprep.subr.mxu0 0.0
  %1639 = vmatpush1.msra.mxu0 0.0
  %1640 = vmatprep.subr.mxu0 0.0
  %1641 = vmatpush1.msra.mxu0 0.0
  %1642 = vmatprep.subr.mxu0 0.0
  %1643 = vmatpush1.msra.mxu0 0.0
  %1644 = vmatprep.subr.mxu0 0.0
  %1645 = vmatpush1.msra.mxu0 0.0
  %1646 = vmatprep.subr.mxu0 0.0
  %1647 = vmatpush1.msra.mxu0 0.0
  %1648 = vmatprep.subr.mxu0 0.0
  %1649 = vmatpush1.msra.mxu0 0.0
  %1650 = vmatprep.subr.mxu0 0.0
  %1651 = vmatpush1.msra.mxu0 0.0
  %1652 = vmatprep.subr.mxu0 0.0
  %1653 = vmatpush1.msra.mxu0 0.0
  %1654 = vmatprep.subr.mxu0 0.0
  %1655 = vmatpush1.msra.mxu0 0.0
  %1656 = vmatprep.subr.mxu0 0.0
  %1657 = vmatpush1.msra.mxu0 0.0
  %1658 = vmatprep.subr.mxu0 0.0
  %1659 = vmatpush1.msra.mxu0 0.0
  %1660 = vmatprep.subr.mxu0 0.0
  %1661 = vmatpush1.msra.mxu0 0.0
  %1662 = vmatprep.subr.mxu0 0.0
  %1663 = vmatpush1.msra.mxu0 0.0
  %1664 = vmatprep.subr.mxu0 0.0
  %1665 = vmatpush1.msra.mxu0 0.0
  %1666 = vmatprep.subr.mxu0 0.0
  %1667 = vmatpush1.msra.mxu0 0.0
  %1668 = vmatprep.subr.mxu0 0.0
  %1669 = vmatpush1.msra.mxu0 0.0
  %1670 = vmatprep.subr.mxu0 0.0
  %1671 = vmatpush1.msra.mxu0 0.0
  %1672 = vmatprep.subr.mxu0 0.0
  %1673 = vmatpush1.msra.mxu0 0.0
  %1674 = vmatprep.subr.mxu0 0.0
  %1675 = vmatpush1.msra.mxu0 0.0
  %1676 = vmatprep.subr.mxu0 0.0
  %1677 = vmatpush1.msra.mxu0 0.0
  %1678 = vmatprep.subr.mxu0 0.0
  %1679 = vmatpush1.msra.mxu0 0.0
  %1680 = vmatprep.subr.mxu0 0.0
  %1681 = vmatpush1.msra.mxu0 0.0
  %1682 = vmatprep.subr.mxu0 0.0
  %1683 = vmatpush1.msra.mxu0 0.0
  %1684 = vmatprep.subr.mxu0 0.0
  %1685 = vmatpush1.msra.mxu0 0.0
  %1686 = vmatprep.subr.mxu0 0.0
  %1687 = vmatpush1.msra.mxu0 0.0
  %1688 = vmatprep.subr.mxu0 0.0
  %1689 = vmatpush1.msra.mxu0 0.0
  %1690 = vmatprep.mubr.f32.mxu0 0.0
  %1691 = vmatmul.mubr.f32.gmra.mrb[0].mxu0 %v974
  %v1692 = vpop.f32.mrb[0].mxu0
  %v1693 = vadd.f32 %v1484, %v1692
  %v1694 = vpop.f32.mrb[0].mxu0
  %1695 = vdwg.mxu0
  %1696 = vmatprep.subr.mxu0 0.0
  %1697 = vmatpush1.msra.mxu0 %v1471
  %1698 = vmatprep.subr.mxu0 0.0
  %1699 = vmatpush1.msra.mxu0 %v1472
  %1700 = vmatprep.subr.mxu0 0.0
  %1701 = vmatpush1.msra.mxu0 %v1473
  %1702 = vmatprep.subr.mxu0 0.0
  %1703 = vmatpush1.msra.mxu0 %v1474
  %1704 = vmatprep.subr.mxu0 0.0
  %1705 = vmatpush1.msra.mxu0 0.0
  %1706 = vmatprep.subr.mxu0 0.0
  %1707 = vmatpush1.msra.mxu0 0.0
  %1708 = vmatprep.subr.mxu0 0.0
  %1709 = vmatpush1.msra.mxu0 0.0
  %1710 = vmatprep.subr.mxu0 0.0
  %1711 = vmatpush1.msra.mxu0 0.0
  %1712 = vmatprep.subr.mxu0 0.0
  %1713 = vmatpush1.msra.mxu0 0.0
  %1714 = vmatprep.subr.mxu0 0.0
  %1715 = vmatpush1.msra.mxu0 0.0
  %1716 = vmatprep.subr.mxu0 0.0
  %1717 = vmatpush1.msra.mxu0 0.0
  %1718 = vmatprep.subr.mxu0 0.0
  %1719 = vmatpush1.msra.mxu0 0.0
  %1720 = vmatprep.subr.mxu0 0.0
  %1721 = vmatpush1.msra.mxu0 0.0
  %1722 = vmatprep.subr.mxu0 0.0
  %1723 = vmatpush1.msra.mxu0 0.0
  %1724 = vmatprep.subr.mxu0 0.0
  %1725 = vmatpush1.msra.mxu0 0.0
  %1726 = vmatprep.subr.mxu0 0.0
  %1727 = vmatpush1.msra.mxu0 0.0
  %1728 = vmatprep.subr.mxu0 0.0
  %1729 = vmatpush1.msra.mxu0 0.0
  %1730 = vmatprep.subr.mxu0 0.0
  %1731 = vmatpush1.msra.mxu0 0.0
  %1732 = vmatprep.subr.mxu0 0.0
  %1733 = vmatpush1.msra.mxu0 0.0
  %1734 = vmatprep.subr.mxu0 0.0
  %1735 = vmatpush1.msra.mxu0 0.0
  %1736 = vmatprep.subr.mxu0 0.0
  %1737 = vmatpush1.msra.mxu0 0.0
  %1738 = vmatprep.subr.mxu0 0.0
  %1739 = vmatpush1.msra.mxu0 0.0
  %1740 = vmatprep.subr.mxu0 0.0
  %1741 = vmatpush1.msra.mxu0 0.0
  %1742 = vmatprep.subr.mxu0 0.0
  %1743 = vmatpush1.msra.mxu0 0.0
  %1744 = vmatprep.subr.mxu0 0.0
  %1745 = vmatpush1.msra.mxu0 0.0
  %1746 = vmatprep.subr.mxu0 0.0
  %1747 = vmatpush1.msra.mxu0 0.0
  %1748 = vmatprep.subr.mxu0 0.0
  %1749 = vmatpush1.msra.mxu0 0.0
  %1750 = vmatprep.subr.mxu0 0.0
  %1751 = vmatpush1.msra.mxu0 0.0
  %1752 = vmatprep.subr.mxu0 0.0
  %1753 = vmatpush1.msra.mxu0 0.0
  %1754 = vmatprep.subr.mxu0 0.0
  %1755 = vmatpush1.msra.mxu0 0.0
  %1756 = vmatprep.subr.mxu0 0.0
  %1757 = vmatpush1.msra.mxu0 0.0
  %1758 = vmatprep.subr.mxu0 0.0
  %1759 = vmatpush1.msra.mxu0 0.0
  %1760 = vmatprep.mubr.f32.mxu0 0.0
  %1761 = vmatmul.mubr.f32.gmra.mrb[0].mxu0 %v1074
  %v1762 = vpop.f32.mrb[0].mxu0
  %v1763 = vadd.f32 %v1484, %v1762
  %v1764 = vpop.f32.mrb[0].mxu0
  %1765 = vdwg.mxu0
  %1766 = vmatprep.subr.mxu0 0.0
  %1767 = vmatpush1.msra.mxu0 %v1471
  %1768 = vmatprep.subr.mxu0 0.0
  %1769 = vmatpush1.msra.mxu0 %v1472
  %1770 = vmatprep.subr.mxu0 0.0
  %1771 = vmatpush1.msra.mxu0 %v1473
  %1772 = vmatprep.subr.mxu0 0.0
  %1773 = vmatpush1.msra.mxu0 %v1474
  %1774 = vmatprep.subr.mxu0 0.0
  %1775 = vmatpush1.msra.mxu0 0.0
  %1776 = vmatprep.subr.mxu0 0.0
  %1777 = vmatpush1.msra.mxu0 0.0
  %1778 = vmatprep.subr.mxu0 0.0
  %1779 = vmatpush1.msra.mxu0 0.0
  %1780 = vmatprep.subr.mxu0 0.0
  %1781 = vmatpush1.msra.mxu0 0.0
  %1782 = vmatprep.subr.mxu0 0.0
  %1783 = vmatpush1.msra.mxu0 0.0
  %1784 = vmatprep.subr.mxu0 0.0
  %1785 = vmatpush1.msra.mxu0 0.0
  %1786 = vmatprep.subr.mxu0 0.0
  %1787 = vmatpush1.msra.mxu0 0.0
  %1788 = vmatprep.subr.mxu0 0.0
  %1789 = vmatpush1.msra.mxu0 0.0
  %1790 = vmatprep.subr.mxu0 0.0
  %1791 = vmatpush1.msra.mxu0 0.0
  %1792 = vmatprep.subr.mxu0 0.0
  %1793 = vmatpush1.msra.mxu0 0.0
  %1794 = vmatprep.subr.mxu0 0.0
  %1795 = vmatpush1.msra.mxu0 0.0
  %1796 = vmatprep.subr.mxu0 0.0
  %1797 = vmatpush1.msra.mxu0 0.0
  %1798 = vmatprep.subr.mxu0 0.0
  %1799 = vmatpush1.msra.mxu0 0.0
  %1800 = vmatprep.subr.mxu0 0.0
  %1801 = vmatpush1.msra.mxu0 0.0
  %1802 = vmatprep.subr.mxu0 0.0
  %1803 = vmatpush1.msra.mxu0 0.0
  %1804 = vmatprep.subr.mxu0 0.0
  %1805 = vmatpush1.msra.mxu0 0.0
  %1806 = vmatprep.subr.mxu0 0.0
  %1807 = vmatpush1.msra.mxu0 0.0
  %1808 = vmatprep.subr.mxu0 0.0
  %1809 = vmatpush1.msra.mxu0 0.0
  %1810 = vmatprep.subr.mxu0 0.0
  %1811 = vmatpush1.msra.mxu0 0.0
  %1812 = vmatprep.subr.mxu0 0.0
  %1813 = vmatpush1.msra.mxu0 0.0
  %1814 = vmatprep.subr.mxu0 0.0
  %1815 = vmatpush1.msra.mxu0 0.0
  %1816 = vmatprep.subr.mxu0 0.0
  %1817 = vmatpush1.msra.mxu0 0.0
  %1818 = vmatprep.subr.mxu0 0.0
  %1819 = vmatpush1.msra.mxu0 0.0
  %1820 = vmatprep.subr.mxu0 0.0
  %1821 = vmatpush1.msra.mxu0 0.0
  %1822 = vmatprep.subr.mxu0 0.0
  %1823 = vmatpush1.msra.mxu0 0.0
  %1824 = vmatprep.subr.mxu0 0.0
  %1825 = vmatpush1.msra.mxu0 0.0
  %1826 = vmatprep.subr.mxu0 0.0
  %1827 = vmatpush1.msra.mxu0 0.0
  %1828 = vmatprep.subr.mxu0 0.0
  %1829 = vmatpush1.msra.mxu0 0.0
  %1830 = vmatprep.mubr.f32.mxu0 0.0
  %1831 = vmatmul.mubr.f32.gmra.mrb[0].mxu0 %v1174
  %v1832 = vpop.f32.mrb[0].mxu0
  %v1833 = vadd.f32 %v1484, %v1832
  %v1834 = vpop.f32.mrb[0].mxu0
  %1835 = vdwg.mxu0
  %1836 = vmatprep.subr.mxu0 0.0
  %1837 = vmatpush1.msra.mxu0 %v1471
  %1838 = vmatprep.subr.mxu0 0.0
  %1839 = vmatpush1.msra.mxu0 %v1472
  %1840 = vmatprep.subr.mxu0 0.0
  %1841 = vmatpush1.msra.mxu0 %v1473
  %1842 = vmatprep.subr.mxu0 0.0
  %1843 = vmatpush1.msra.mxu0 %v1474
  %1844 = vmatprep.subr.mxu0 0.0
  %1845 = vmatpush1.msra.mxu0 0.0
  %1846 = vmatprep.subr.mxu0 0.0
  %1847 = vmatpush1.msra.mxu0 0.0
  %1848 = vmatprep.subr.mxu0 0.0
  %1849 = vmatpush1.msra.mxu0 0.0
  %1850 = vmatprep.subr.mxu0 0.0
  %1851 = vmatpush1.msra.mxu0 0.0
  %1852 = vmatprep.subr.mxu0 0.0
  %1853 = vmatpush1.msra.mxu0 0.0
  %1854 = vmatprep.subr.mxu0 0.0
  %1855 = vmatpush1.msra.mxu0 0.0
  %1856 = vmatprep.subr.mxu0 0.0
  %1857 = vmatpush1.msra.mxu0 0.0
  %1858 = vmatprep.subr.mxu0 0.0
  %1859 = vmatpush1.msra.mxu0 0.0
  %1860 = vmatprep.subr.mxu0 0.0
  %1861 = vmatpush1.msra.mxu0 0.0
  %1862 = vmatprep.subr.mxu0 0.0
  %1863 = vmatpush1.msra.mxu0 0.0
  %1864 = vmatprep.subr.mxu0 0.0
  %1865 = vmatpush1.msra.mxu0 0.0
  %1866 = vmatprep.subr.mxu0 0.0
  %1867 = vmatpush1.msra.mxu0 0.0
  %1868 = vmatprep.subr.mxu0 0.0
  %1869 = vmatpush1.msra.mxu0 0.0
  %1870 = vmatprep.subr.mxu0 0.0
  %1871 = vmatpush1.msra.mxu0 0.0
  %1872 = vmatprep.subr.mxu0 0.0
  %1873 = vmatpush1.msra.mxu0 0.0
  %1874 = vmatprep.subr.mxu0 0.0
  %1875 = vmatpush1.msra.mxu0 0.0
  %1876 = vmatprep.subr.mxu0 0.0
  %1877 = vmatpush1.msra.mxu0 0.0
  %1878 = vmatprep.subr.mxu0 0.0
  %1879 = vmatpush1.msra.mxu0 0.0
  %1880 = vmatprep.subr.mxu0 0.0
  %1881 = vmatpush1.msra.mxu0 0.0
  %1882 = vmatprep.subr.mxu0 0.0
  %1883 = vmatpush1.msra.mxu0 0.0
  %1884 = vmatprep.subr.mxu0 0.0
  %1885 = vmatpush1.msra.mxu0 0.0
  %1886 = vmatprep.subr.mxu0 0.0
  %1887 = vmatpush1.msra.mxu0 0.0
  %1888 = vmatprep.subr.mxu0 0.0
  %1889 = vmatpush1.msra.mxu0 0.0
  %1890 = vmatprep.subr.mxu0 0.0
  %1891 = vmatpush1.msra.mxu0 0.0
  %1892 = vmatprep.subr.mxu0 0.0
  %1893 = vmatpush1.msra.mxu0 0.0
  %1894 = vmatprep.subr.mxu0 0.0
  %1895 = vmatpush1.msra.mxu0 0.0
  %1896 = vmatprep.subr.mxu0 0.0
  %1897 = vmatpush1.msra.mxu0 0.0
  %1898 = vmatprep.subr.mxu0 0.0
  %1899 = vmatpush1.msra.mxu0 0.0
  %1900 = vmatprep.mubr.f32.mxu0 0.0
  %1901 = vmatmul.mubr.f32.gmra.mrb[0].mxu0 %v1274
  %v1902 = vpop.f32.mrb[0].mxu0
  %v1903 = vadd.f32 %v1484, %v1902
  %v1904 = vpop.f32.mrb[0].mxu0
  %1905 = vdwg.mxu0
  %1906 = vmatprep.subr.mxu0 0.0
  %1907 = vmatpush1.msra.mxu0 %v1471
  %1908 = vmatprep.subr.mxu0 0.0
  %1909 = vmatpush1.msra.mxu0 %v1472
  %1910 = vmatprep.subr.mxu0 0.0
  %1911 = vmatpush1.msra.mxu0 %v1473
  %1912 = vmatprep.subr.mxu0 0.0
  %1913 = vmatpush1.msra.mxu0 %v1474
  %1914 = vmatprep.subr.mxu0 0.0
  %1915 = vmatpush1.msra.mxu0 0.0
  %1916 = vmatprep.subr.mxu0 0.0
  %1917 = vmatpush1.msra.mxu0 0.0
  %1918 = vmatprep.subr.mxu0 0.0
  %1919 = vmatpush1.msra.mxu0 0.0
  %1920 = vmatprep.subr.mxu0 0.0
  %1921 = vmatpush1.msra.mxu0 0.0
  %1922 = vmatprep.subr.mxu0 0.0
  %1923 = vmatpush1.msra.mxu0 0.0
  %1924 = vmatprep.subr.mxu0 0.0
  %1925 = vmatpush1.msra.mxu0 0.0
  %1926 = vmatprep.subr.mxu0 0.0
  %1927 = vmatpush1.msra.mxu0 0.0
  %1928 = vmatprep.subr.mxu0 0.0
  %1929 = vmatpush1.msra.mxu0 0.0
  %1930 = vmatprep.subr.mxu0 0.0
  %1931 = vmatpush1.msra.mxu0 0.0
  %1932 = vmatprep.subr.mxu0 0.0
  %1933 = vmatpush1.msra.mxu0 0.0
  %1934 = vmatprep.subr.mxu0 0.0
  %1935 = vmatpush1.msra.mxu0 0.0
  %1936 = vmatprep.subr.mxu0 0.0
  %1937 = vmatpush1.msra.mxu0 0.0
  %1938 = vmatprep.subr.mxu0 0.0
  %1939 = vmatpush1.msra.mxu0 0.0
  %1940 = vmatprep.subr.mxu0 0.0
  %1941 = vmatpush1.msra.mxu0 0.0
  %1942 = vmatprep.subr.mxu0 0.0
  %1943 = vmatpush1.msra.mxu0 0.0
  %1944 = vmatprep.subr.mxu0 0.0
  %1945 = vmatpush1.msra.mxu0 0.0
  %1946 = vmatprep.subr.mxu0 0.0
  %1947 = vmatpush1.msra.mxu0 0.0
  %1948 = vmatprep.subr.mxu0 0.0
  %1949 = vmatpush1.msra.mxu0 0.0
  %1950 = vmatprep.subr.mxu0 0.0
  %1951 = vmatpush1.msra.mxu0 0.0
  %1952 = vmatprep.subr.mxu0 0.0
  %1953 = vmatpush1.msra.mxu0 0.0
  %1954 = vmatprep.subr.mxu0 0.0
  %1955 = vmatpush1.msra.mxu0 0.0
  %1956 = vmatprep.subr.mxu0 0.0
  %1957 = vmatpush1.msra.mxu0 0.0
  %1958 = vmatprep.subr.mxu0 0.0
  %1959 = vmatpush1.msra.mxu0 0.0
  %1960 = vmatprep.subr.mxu0 0.0
  %1961 = vmatpush1.msra.mxu0 0.0
  %1962 = vmatprep.subr.mxu0 0.0
  %1963 = vmatpush1.msra.mxu0 0.0
  %1964 = vmatprep.subr.mxu0 0.0
  %1965 = vmatpush1.msra.mxu0 0.0
  %1966 = vmatprep.subr.mxu0 0.0
  %1967 = vmatpush1.msra.mxu0 0.0
  %1968 = vmatprep.subr.mxu0 0.0
  %1969 = vmatpush1.msra.mxu0 0.0
  %1970 = vmatprep.mubr.f32.mxu0 0.0
  %1971 = vmatmul.mubr.f32.gmra.mrb[0].mxu0 %v1374
  %v1972 = vpop.f32.mrb[0].mxu0
  %v1973 = vadd.f32 %v1484, %v1972
  %v1974 = vpop.f32.mrb[0].mxu0
  %1975 = vdwg.mxu0
  %1977 = vrot.lane.b32.xlu0 %v1470, 32
  %v1978 = vpop.permute.xlu0 %1977
  %v1979 = vsel %vm672, %v1978, 0
  %1981 = vmatprep.subr.mxu0 0.0
  %1982 = vmatpush1.msra.mxu0 %v1471
  %1983 = vmatprep.subr.mxu0 0.0
  %1984 = vmatpush1.msra.mxu0 %v1472
  %1985 = vmatprep.subr.mxu0 0.0
  %1986 = vmatpush1.msra.mxu0 %v1473
  %1987 = vmatprep.subr.mxu0 0.0
  %1988 = vmatpush1.msra.mxu0 %v1474
  %1989 = vmatprep.subr.mxu0 0.0
  %1990 = vmatpush1.msra.mxu0 0.0
  %1991 = vmatprep.subr.mxu0 0.0
  %1992 = vmatpush1.msra.mxu0 0.0
  %1993 = vmatprep.subr.mxu0 0.0
  %1994 = vmatpush1.msra.mxu0 0.0
  %1995 = vmatprep.subr.mxu0 0.0
  %1996 = vmatpush1.msra.mxu0 0.0
  %1997 = vmatprep.subr.mxu0 0.0
  %1998 = vmatpush1.msra.mxu0 0.0
  %1999 = vmatprep.subr.mxu0 0.0
  %2000 = vmatpush1.msra.mxu0 0.0
  %2001 = vmatprep.subr.mxu0 0.0
  %2002 = vmatpush1.msra.mxu0 0.0
  %2003 = vmatprep.subr.mxu0 0.0
  %2004 = vmatpush1.msra.mxu0 0.0
  %2005 = vmatprep.subr.mxu0 0.0
  %2006 = vmatpush1.msra.mxu0 0.0
  %2007 = vmatprep.subr.mxu0 0.0
  %2008 = vmatpush1.msra.mxu0 0.0
  %2009 = vmatprep.subr.mxu0 0.0
  %2010 = vmatpush1.msra.mxu0 0.0
  %2011 = vmatprep.subr.mxu0 0.0
  %2012 = vmatpush1.msra.mxu0 0.0
  %2013 = vmatprep.subr.mxu0 0.0
  %2014 = vmatpush1.msra.mxu0 0.0
  %2015 = vmatprep.subr.mxu0 0.0
  %2016 = vmatpush1.msra.mxu0 0.0
  %2017 = vmatprep.subr.mxu0 0.0
  %2018 = vmatpush1.msra.mxu0 0.0
  %2019 = vmatprep.subr.mxu0 0.0
  %2020 = vmatpush1.msra.mxu0 0.0
  %2021 = vmatprep.subr.mxu0 0.0
  %2022 = vmatpush1.msra.mxu0 0.0
  %2023 = vmatprep.subr.mxu0 0.0
  %2024 = vmatpush1.msra.mxu0 0.0
  %2025 = vmatprep.subr.mxu0 0.0
  %2026 = vmatpush1.msra.mxu0 0.0
  %2027 = vmatprep.subr.mxu0 0.0
  %2028 = vmatpush1.msra.mxu0 0.0
  %2029 = vmatprep.subr.mxu0 0.0
  %2030 = vmatpush1.msra.mxu0 0.0
  %2031 = vmatprep.subr.mxu0 0.0
  %2032 = vmatpush1.msra.mxu0 0.0
  %2033 = vmatprep.subr.mxu0 0.0
  %2034 = vmatpush1.msra.mxu0 0.0
  %2035 = vmatprep.subr.mxu0 0.0
  %2036 = vmatpush1.msra.mxu0 0.0
  %2037 = vmatprep.subr.mxu0 0.0
  %2038 = vmatpush1.msra.mxu0 0.0
  %2039 = vmatprep.subr.mxu0 0.0
  %2040 = vmatpush1.msra.mxu0 0.0
  %2041 = vmatprep.subr.mxu0 0.0
  %2042 = vmatpush1.msra.mxu0 0.0
  %2043 = vmatprep.subr.mxu0 0.0
  %2044 = vmatpush1.msra.mxu0 0.0
  %2045 = vmatprep.mubr.f32.mxu0 0.0
  %2046 = vmatmul.mubr.f32.gmra.mrb[0].mxu0 %v1979
  %v2047 = vpop.f32.mrb[0].mxu0
  %v2048 = vadd.f32 %v1484, %v2047
  %v2049 = vpop.f32.mrb[0].mxu0
  %2050 = vdwg.mxu0
  %2051 = vmatprep.subr.mxu0 0.0
  %2052 = vmatpush1.msra.mxu0 %v1475
  %2053 = vmatprep.subr.mxu0 0.0
  %2054 = vmatpush1.msra.mxu0 %v1476
  %2055 = vmatprep.subr.mxu0 0.0
  %2056 = vmatpush1.msra.mxu0 %v1477
  %2057 = vmatprep.subr.mxu0 0.0
  %2058 = vmatpush1.msra.mxu0 %v1478
  %2059 = vmatprep.subr.mxu0 0.0
  %2060 = vmatpush1.msra.mxu0 0.0
  %2061 = vmatprep.subr.mxu0 0.0
  %2062 = vmatpush1.msra.mxu0 0.0
  %2063 = vmatprep.subr.mxu0 0.0
  %2064 = vmatpush1.msra.mxu0 0.0
  %2065 = vmatprep.subr.mxu0 0.0
  %2066 = vmatpush1.msra.mxu0 0.0
  %2067 = vmatprep.subr.mxu0 0.0
  %2068 = vmatpush1.msra.mxu0 0.0
  %2069 = vmatprep.subr.mxu0 0.0
  %2070 = vmatpush1.msra.mxu0 0.0
  %2071 = vmatprep.subr.mxu0 0.0
  %2072 = vmatpush1.msra.mxu0 0.0
  %2073 = vmatprep.subr.mxu0 0.0
  %2074 = vmatpush1.msra.mxu0 0.0
  %2075 = vmatprep.subr.mxu0 0.0
  %2076 = vmatpush1.msra.mxu0 0.0
  %2077 = vmatprep.subr.mxu0 0.0
  %2078 = vmatpush1.msra.mxu0 0.0
  %2079 = vmatprep.subr.mxu0 0.0
  %2080 = vmatpush1.msra.mxu0 0.0
  %2081 = vmatprep.subr.mxu0 0.0
  %2082 = vmatpush1.msra.mxu0 0.0
  %2083 = vmatprep.subr.mxu0 0.0
  %2084 = vmatpush1.msra.mxu0 0.0
  %2085 = vmatprep.subr.mxu0 0.0
  %2086 = vmatpush1.msra.mxu0 0.0
  %2087 = vmatprep.subr.mxu0 0.0
  %2088 = vmatpush1.msra.mxu0 0.0
  %2089 = vmatprep.subr.mxu0 0.0
  %2090 = vmatpush1.msra.mxu0 0.0
  %2091 = vmatprep.subr.mxu0 0.0
  %2092 = vmatpush1.msra.mxu0 0.0
  %2093 = vmatprep.subr.mxu0 0.0
  %2094 = vmatpush1.msra.mxu0 0.0
  %2095 = vmatprep.subr.mxu0 0.0
  %2096 = vmatpush1.msra.mxu0 0.0
  %2097 = vmatprep.subr.mxu0 0.0
  %2098 = vmatpush1.msra.mxu0 0.0
  %2099 = vmatprep.subr.mxu0 0.0
  %2100 = vmatpush1.msra.mxu0 0.0
  %2101 = vmatprep.subr.mxu0 0.0
  %2102 = vmatpush1.msra.mxu0 0.0
  %2103 = vmatprep.subr.mxu0 0.0
  %2104 = vmatpush1.msra.mxu0 0.0
  %2105 = vmatprep.subr.mxu0 0.0
  %2106 = vmatpush1.msra.mxu0 0.0
  %2107 = vmatprep.subr.mxu0 0.0
  %2108 = vmatpush1.msra.mxu0 0.0
  %2109 = vmatprep.subr.mxu0 0.0
  %2110 = vmatpush1.msra.mxu0 0.0
  %2111 = vmatprep.subr.mxu0 0.0
  %2112 = vmatpush1.msra.mxu0 0.0
  %2113 = vmatprep.subr.mxu0 0.0
  %2114 = vmatpush1.msra.mxu0 0.0
  %2115 = vmatprep.mubr.f32.mxu0 0.0
  %2116 = vmatmul.mubr.f32.gmra.mrb[0].mxu0 %v674
  %v2117 = vpop.f32.mrb[0].mxu0
  %v2118 = vadd.f32 0.0, %v2117
  %v2119 = vpop.f32.mrb[0].mxu0
  %2120 = vdwg.mxu0
  %v2121 = vadd.f32 %v1553, %v2118
  %v2122 = vxor.u32 %v2121, 2147483648
  %v2123 = vmul.f32 %v2122, 1.442695
  %v2124 = vpow.pop %v2123
  %v2125 = vadd.f32 %v2124, 1.0
  %v2126 = vrcp.pop %v2125
  %v2127 = vmul.f32 1.0, %v2126
  %v2128 = vtanh.pop %v2121
  %v2129 = vmul.f32 %v2127, 0.0
  %2131 = vrot.lane.b32.xlu0 %v2128, 64
  %v2132 = vpop.permute.xlu0 %2131
  %v2134 = vmul.f32 %v2127, %v2132
  %2136 = vrot.lane.b32.xlu0 %v2134, 32
  %v2137 = vpop.permute.xlu0 %2136
  %v2139 = vadd.f32 %v2129, %v2137
  %v2140 = vtanh.pop %v2139
  %2142 = vrot.lane.b32.xlu0 %v2140, 64
  %v2143 = vpop.permute.xlu0 %2142
  %v2145 = vmul.f32 %v2127, %v2143
  %2147 = vrot.lane.b32.xlu0 %v2145, 32
  %v2148 = vpop.permute.xlu0 %2147
  %v2149 = vsel %vm672, %v2148, 0
  %2151 = vmatprep.subr.mxu0 0.0
  %2152 = vmatpush1.msra.mxu0 %v1475
  %2153 = vmatprep.subr.mxu0 0.0
  %2154 = vmatpush1.msra.mxu0 %v1476
  %2155 = vmatprep.subr.mxu0 0.0
  %2156 = vmatpush1.msra.mxu0 %v1477
  %2157 = vmatprep.subr.mxu0 0.0
  %2158 = vmatpush1.msra.mxu0 %v1478
  %2159 = vmatprep.subr.mxu0 0.0
  %2160 = vmatpush1.msra.mxu0 0.0
  %2161 = vmatprep.subr.mxu0 0.0
  %2162 = vmatpush1.msra.mxu0 0.0
  %2163 = vmatprep.subr.mxu0 0.0
  %2164 = vmatpush1.msra.mxu0 0.0
  %2165 = vmatprep.subr.mxu0 0.0
  %2166 = vmatpush1.msra.mxu0 0.0
  %2167 = vmatprep.subr.mxu0 0.0
  %2168 = vmatpush1.msra.mxu0 0.0
  %2169 = vmatprep.subr.mxu0 0.0
  %2170 = vmatpush1.msra.mxu0 0.0
  %2171 = vmatprep.subr.mxu0 0.0
  %2172 = vmatpush1.msra.mxu0 0.0
  %2173 = vmatprep.subr.mxu0 0.0
  %2174 = vmatpush1.msra.mxu0 0.0
  %2175 = vmatprep.subr.mxu0 0.0
  %2176 = vmatpush1.msra.mxu0 0.0
  %2177 = vmatprep.subr.mxu0 0.0
  %2178 = vmatpush1.msra.mxu0 0.0
  %2179 = vmatprep.subr.mxu0 0.0
  %2180 = vmatpush1.msra.mxu0 0.0
  %2181 = vmatprep.subr.mxu0 0.0
  %2182 = vmatpush1.msra.mxu0 0.0
  %2183 = vmatprep.subr.mxu0 0.0
  %2184 = vmatpush1.msra.mxu0 0.0
  %2185 = vmatprep.subr.mxu0 0.0
  %2186 = vmatpush1.msra.mxu0 0.0
  %2187 = vmatprep.subr.mxu0 0.0
  %2188 = vmatpush1.msra.mxu0 0.0
  %2189 = vmatprep.subr.mxu0 0.0
  %2190 = vmatpush1.msra.mxu0 0.0
  %2191 = vmatprep.subr.mxu0 0.0
  %2192 = vmatpush1.msra.mxu0 0.0
  %2193 = vmatprep.subr.mxu0 0.0
  %2194 = vmatpush1.msra.mxu0 0.0
  %2195 = vmatprep.subr.mxu0 0.0
  %2196 = vmatpush1.msra.mxu0 0.0
  %2197 = vmatprep.subr.mxu0 0.0
  %2198 = vmatpush1.msra.mxu0 0.0
  %2199 = vmatprep.subr.mxu0 0.0
  %2200 = vmatpush1.msra.mxu0 0.0
  %2201 = vmatprep.subr.mxu0 0.0
  %2202 = vmatpush1.msra.mxu0 0.0
  %2203 = vmatprep.subr.mxu0 0.0
  %2204 = vmatpush1.msra.mxu0 0.0
  %2205 = vmatprep.subr.mxu0 0.0
  %2206 = vmatpush1.msra.mxu0 0.0
  %2207 = vmatprep.subr.mxu0 0.0
  %2208 = vmatpush1.msra.mxu0 0.0
  %2209 = vmatprep.subr.mxu0 0.0
  %2210 = vmatpush1.msra.mxu0 0.0
  %2211 = vmatprep.subr.mxu0 0.0
  %2212 = vmatpush1.msra.mxu0 0.0
  %2213 = vmatprep.subr.mxu0 0.0
  %2214 = vmatpush1.msra.mxu0 0.0
  %2215 = vmatprep.mubr.f32.mxu0 0.0
  %2216 = vmatmul.mubr.f32.gmra.mrb[0].mxu0 %v2149
  %v2217 = vpop.f32.mrb[0].mxu0
  %v2218 = vadd.f32 0.0, %v2217
  %v2219 = vpop.f32.mrb[0].mxu0
  %2220 = vdwg.mxu0
  %v2221 = vadd.f32 %v1623, %v2218
  %v2222 = vxor.u32 %v2221, 2147483648
  %v2223 = vmul.f32 %v2222, 1.442695
  %v2224 = vpow.pop %v2223
  %v2225 = vadd.f32 %v2224, 1.0
  %v2226 = vrcp.pop %v2225
  %v2227 = vmul.f32 1.0, %v2226
  %v2228 = vtanh.pop %v2221
  %v2229 = vmul.f32 %v2227, %v2139
  %2231 = vrot.lane.b32.xlu0 %v2228, 64
  %v2232 = vpop.permute.xlu0 %2231
  %v2234 = vmul.f32 %v2227, %v2232
  %2236 = vrot.lane.b32.xlu0 %v2234, 32
  %v2237 = vpop.permute.xlu0 %2236
  %v2239 = vadd.f32 %v2229, %v2237
  %v2240 = vtanh.pop %v2239
  %2242 = vrot.lane.b32.xlu0 %v2240, 64
  %v2243 = vpop.permute.xlu0 %2242
  %v2245 = vmul.f32 %v2227, %v2243
  %2247 = vrot.lane.b32.xlu0 %v2245, 32
  %v2248 = vpop.permute.xlu0 %2247
  %v2249 = vsel %vm672, %v2248, 0
  %2251 = vmatprep.subr.mxu0 0.0
  %2252 = vmatpush1.msra.mxu0 %v1475
  %2253 = vmatprep.subr.mxu0 0.0
  %2254 = vmatpush1.msra.mxu0 %v1476
  %2255 = vmatprep.subr.mxu0 0.0
  %2256 = vmatpush1.msra.mxu0 %v1477
  %2257 = vmatprep.subr.mxu0 0.0
  %2258 = vmatpush1.msra.mxu0 %v1478
  %2259 = vmatprep.subr.mxu0 0.0
  %2260 = vmatpush1.msra.mxu0 0.0
  %2261 = vmatprep.subr.mxu0 0.0
  %2262 = vmatpush1.msra.mxu0 0.0
  %2263 = vmatprep.subr.mxu0 0.0
  %2264 = vmatpush1.msra.mxu0 0.0
  %2265 = vmatprep.subr.mxu0 0.0
  %2266 = vmatpush1.msra.mxu0 0.0
  %2267 = vmatprep.subr.mxu0 0.0
  %2268 = vmatpush1.msra.mxu0 0.0
  %2269 = vmatprep.subr.mxu0 0.0
  %2270 = vmatpush1.msra.mxu0 0.0
  %2271 = vmatprep.subr.mxu0 0.0
  %2272 = vmatpush1.msra.mxu0 0.0
  %2273 = vmatprep.subr.mxu0 0.0
  %2274 = vmatpush1.msra.mxu0 0.0
  %2275 = vmatprep.subr.mxu0 0.0
  %2276 = vmatpush1.msra.mxu0 0.0
  %2277 = vmatprep.subr.mxu0 0.0
  %2278 = vmatpush1.msra.mxu0 0.0
  %2279 = vmatprep.subr.mxu0 0.0
  %2280 = vmatpush1.msra.mxu0 0.0
  %2281 = vmatprep.subr.mxu0 0.0
  %2282 = vmatpush1.msra.mxu0 0.0
  %2283 = vmatprep.subr.mxu0 0.0
  %2284 = vmatpush1.msra.mxu0 0.0
  %2285 = vmatprep.subr.mxu0 0.0
  %2286 = vmatpush1.msra.mxu0 0.0
  %2287 = vmatprep.subr.mxu0 0.0
  %2288 = vmatpush1.msra.mxu0 0.0
  %2289 = vmatprep.subr.mxu0 0.0
  %2290 = vmatpush1.msra.mxu0 0.0
  %2291 = vmatprep.subr.mxu0 0.0
  %2292 = vmatpush1.msra.mxu0 0.0
  %2293 = vmatprep.subr.mxu0 0.0
  %2294 = vmatpush1.msra.mxu0 0.0
  %2295 = vmatprep.subr.mxu0 0.0
  %2296 = vmatpush1.msra.mxu0 0.0
  %2297 = vmatprep.subr.mxu0 0.0
  %2298 = vmatpush1.msra.mxu0 0.0
  %2299 = vmatprep.subr.mxu0 0.0
  %2300 = vmatpush1.msra.mxu0 0.0
  %2301 = vmatprep.subr.mxu0 0.0
  %2302 = vmatpush1.msra.mxu0 0.0
  %2303 = vmatprep.subr.mxu0 0.0
  %2304 = vmatpush1.msra.mxu0 0.0
  %2305 = vmatprep.subr.mxu0 0.0
  %2306 = vmatpush1.msra.mxu0 0.0
  %2307 = vmatprep.subr.mxu0 0.0
  %2308 = vmatpush1.msra.mxu0 0.0
  %2309 = vmatprep.subr.mxu0 0.0
  %2310 = vmatpush1.msra.mxu0 0.0
  %2311 = vmatprep.subr.mxu0 0.0
  %2312 = vmatpush1.msra.mxu0 0.0
  %2313 = vmatprep.subr.mxu0 0.0
  %2314 = vmatpush1.msra.mxu0 0.0
  %2315 = vmatprep.mubr.f32.mxu0 0.0
  %2316 = vmatmul.mubr.f32.gmra.mrb[0].mxu0 %v2249
  %v2317 = vpop.f32.mrb[0].mxu0
  %v2318 = vadd.f32 0.0, %v2317
  %v2319 = vpop.f32.mrb[0].mxu0
  %2320 = vdwg.mxu0
  %v2321 = vadd.f32 %v1693, %v2318
  %v2322 = vxor.u32 %v2321, 2147483648
  %v2323 = vmul.f32 %v2322, 1.442695
  %v2324 = vpow.pop %v2323
  %v2325 = vadd.f32 %v2324, 1.0
  %v2326 = vrcp.pop %v2325
  %v2327 = vmul.f32 1.0, %v2326
  %v2328 = vtanh.pop %v2321
  %v2329 = vmul.f32 %v2327, %v2239
  %2331 = vrot.lane.b32.xlu0 %v2328, 64
  %v2332 = vpop.permute.xlu0 %2331
  %v2334 = vmul.f32 %v2327, %v2332
  %2336 = vrot.lane.b32.xlu0 %v2334, 32
  %v2337 = vpop.permute.xlu0 %2336
  %v2339 = vadd.f32 %v2329, %v2337
  %v2340 = vtanh.pop %v2339
  %2342 = vrot.lane.b32.xlu0 %v2340, 64
  %v2343 = vpop.permute.xlu0 %2342
  %v2345 = vmul.f32 %v2327, %v2343
  %2347 = vrot.lane.b32.xlu0 %v2345, 32
  %v2348 = vpop.permute.xlu0 %2347
  %v2349 = vsel %vm672, %v2348, 0
  %2351 = vmatprep.subr.mxu0 0.0
  %2352 = vmatpush1.msra.mxu0 %v1475
  %2353 = vmatprep.subr.mxu0 0.0
  %2354 = vmatpush1.msra.mxu0 %v1476
  %2355 = vmatprep.subr.mxu0 0.0
  %2356 = vmatpush1.msra.mxu0 %v1477
  %2357 = vmatprep.subr.mxu0 0.0
  %2358 = vmatpush1.msra.mxu0 %v1478
  %2359 = vmatprep.subr.mxu0 0.0
  %2360 = vmatpush1.msra.mxu0 0.0
  %2361 = vmatprep.subr.mxu0 0.0
  %2362 = vmatpush1.msra.mxu0 0.0
  %2363 = vmatprep.subr.mxu0 0.0
  %2364 = vmatpush1.msra.mxu0 0.0
  %2365 = vmatprep.subr.mxu0 0.0
  %2366 = vmatpush1.msra.mxu0 0.0
  %2367 = vmatprep.subr.mxu0 0.0
  %2368 = vmatpush1.msra.mxu0 0.0
  %2369 = vmatprep.subr.mxu0 0.0
  %2370 = vmatpush1.msra.mxu0 0.0
  %2371 = vmatprep.subr.mxu0 0.0
  %2372 = vmatpush1.msra.mxu0 0.0
  %2373 = vmatprep.subr.mxu0 0.0
  %2374 = vmatpush1.msra.mxu0 0.0
  %2375 = vmatprep.subr.mxu0 0.0
  %2376 = vmatpush1.msra.mxu0 0.0
  %2377 = vmatprep.subr.mxu0 0.0
  %2378 = vmatpush1.msra.mxu0 0.0
  %2379 = vmatprep.subr.mxu0 0.0
  %2380 = vmatpush1.msra.mxu0 0.0
  %2381 = vmatprep.subr.mxu0 0.0
  %2382 = vmatpush1.msra.mxu0 0.0
  %2383 = vmatprep.subr.mxu0 0.0
  %2384 = vmatpush1.msra.mxu0 0.0
  %2385 = vmatprep.subr.mxu0 0.0
  %2386 = vmatpush1.msra.mxu0 0.0
  %2387 = vmatprep.subr.mxu0 0.0
  %2388 = vmatpush1.msra.mxu0 0.0
  %2389 = vmatprep.subr.mxu0 0.0
  %2390 = vmatpush1.msra.mxu0 0.0
  %2391 = vmatprep.subr.mxu0 0.0
  %2392 = vmatpush1.msra.mxu0 0.0
  %2393 = vmatprep.subr.mxu0 0.0
  %2394 = vmatpush1.msra.mxu0 0.0
  %2395 = vmatprep.subr.mxu0 0.0
  %2396 = vmatpush1.msra.mxu0 0.0
  %2397 = vmatprep.subr.mxu0 0.0
  %2398 = vmatpush1.msra.mxu0 0.0
  %2399 = vmatprep.subr.mxu0 0.0
  %2400 = vmatpush1.msra.mxu0 0.0
  %2401 = vmatprep.subr.mxu0 0.0
  %2402 = vmatpush1.msra.mxu0 0.0
  %2403 = vmatprep.subr.mxu0 0.0
  %2404 = vmatpush1.msra.mxu0 0.0
  %2405 = vmatprep.subr.mxu0 0.0
  %2406 = vmatpush1.msra.mxu0 0.0
  %2407 = vmatprep.subr.mxu0 0.0
  %2408 = vmatpush1.msra.mxu0 0.0
  %2409 = vmatprep.subr.mxu0 0.0
  %2410 = vmatpush1.msra.mxu0 0.0
  %2411 = vmatprep.subr.mxu0 0.0
  %2412 = vmatpush1.msra.mxu0 0.0
  %2413 = vmatprep.subr.mxu0 0.0
  %2414 = vmatpush1.msra.mxu0 0.0
  %2415 = vmatprep.mubr.f32.mxu0 0.0
  %2416 = vmatmul.mubr.f32.gmra.mrb[0].mxu0 %v2349
  %v2417 = vpop.f32.mrb[0].mxu0
  %v2418 = vadd.f32 0.0, %v2417
  %v2419 = vpop.f32.mrb[0].mxu0
  %2420 = vdwg.mxu0
  %v2421 = vadd.f32 %v1763, %v2418
  %v2422 = vxor.u32 %v2421, 2147483648
  %v2423 = vmul.f32 %v2422, 1.442695
  %v2424 = vpow.pop %v2423
  %v2425 = vadd.f32 %v2424, 1.0
  %v2426 = vrcp.pop %v2425
  %v2427 = vmul.f32 1.0, %v2426
  %v2428 = vtanh.pop %v2421
  %v2429 = vmul.f32 %v2427, %v2339
  %2431 = vrot.lane.b32.xlu0 %v2428, 64
  %v2432 = vpop.permute.xlu0 %2431
  %v2434 = vmul.f32 %v2427, %v2432
  %2436 = vrot.lane.b32.xlu0 %v2434, 32
  %v2437 = vpop.permute.xlu0 %2436
  %v2439 = vadd.f32 %v2429, %v2437
  %v2440 = vtanh.pop %v2439
  %2442 = vrot.lane.b32.xlu0 %v2440, 64
  %v2443 = vpop.permute.xlu0 %2442
  %v2445 = vmul.f32 %v2427, %v2443
  %2447 = vrot.lane.b32.xlu0 %v2445, 32
  %v2448 = vpop.permute.xlu0 %2447
  %v2449 = vsel %vm672, %v2448, 0
  %2451 = vmatprep.subr.mxu0 0.0
  %2452 = vmatpush1.msra.mxu0 %v1475
  %2453 = vmatprep.subr.mxu0 0.0
  %2454 = vmatpush1.msra.mxu0 %v1476
  %2455 = vmatprep.subr.mxu0 0.0
  %2456 = vmatpush1.msra.mxu0 %v1477
  %2457 = vmatprep.subr.mxu0 0.0
  %2458 = vmatpush1.msra.mxu0 %v1478
  %2459 = vmatprep.subr.mxu0 0.0
  %2460 = vmatpush1.msra.mxu0 0.0
  %2461 = vmatprep.subr.mxu0 0.0
  %2462 = vmatpush1.msra.mxu0 0.0
  %2463 = vmatprep.subr.mxu0 0.0
  %2464 = vmatpush1.msra.mxu0 0.0
  %2465 = vmatprep.subr.mxu0 0.0
  %2466 = vmatpush1.msra.mxu0 0.0
  %2467 = vmatprep.subr.mxu0 0.0
  %2468 = vmatpush1.msra.mxu0 0.0
  %2469 = vmatprep.subr.mxu0 0.0
  %2470 = vmatpush1.msra.mxu0 0.0
  %2471 = vmatprep.subr.mxu0 0.0
  %2472 = vmatpush1.msra.mxu0 0.0
  %2473 = vmatprep.subr.mxu0 0.0
  %2474 = vmatpush1.msra.mxu0 0.0
  %2475 = vmatprep.subr.mxu0 0.0
  %2476 = vmatpush1.msra.mxu0 0.0
  %2477 = vmatprep.subr.mxu0 0.0
  %2478 = vmatpush1.msra.mxu0 0.0
  %2479 = vmatprep.subr.mxu0 0.0
  %2480 = vmatpush1.msra.mxu0 0.0
  %2481 = vmatprep.subr.mxu0 0.0
  %2482 = vmatpush1.msra.mxu0 0.0
  %2483 = vmatprep.subr.mxu0 0.0
  %2484 = vmatpush1.msra.mxu0 0.0
  %2485 = vmatprep.subr.mxu0 0.0
  %2486 = vmatpush1.msra.mxu0 0.0
  %2487 = vmatprep.subr.mxu0 0.0
  %2488 = vmatpush1.msra.mxu0 0.0
  %2489 = vmatprep.subr.mxu0 0.0
  %2490 = vmatpush1.msra.mxu0 0.0
  %2491 = vmatprep.subr.mxu0 0.0
  %2492 = vmatpush1.msra.mxu0 0.0
  %2493 = vmatprep.subr.mxu0 0.0
  %2494 = vmatpush1.msra.mxu0 0.0
  %2495 = vmatprep.subr.mxu0 0.0
  %2496 = vmatpush1.msra.mxu0 0.0
  %2497 = vmatprep.subr.mxu0 0.0
  %2498 = vmatpush1.msra.mxu0 0.0
  %2499 = vmatprep.subr.mxu0 0.0
  %2500 = vmatpush1.msra.mxu0 0.0
  %2501 = vmatprep.subr.mxu0 0.0
  %2502 = vmatpush1.msra.mxu0 0.0
  %2503 = vmatprep.subr.mxu0 0.0
  %2504 = vmatpush1.msra.mxu0 0.0
  %2505 = vmatprep.subr.mxu0 0.0
  %2506 = vmatpush1.msra.mxu0 0.0
  %2507 = vmatprep.subr.mxu0 0.0
  %2508 = vmatpush1.msra.mxu0 0.0
  %2509 = vmatprep.subr.mxu0 0.0
  %2510 = vmatpush1.msra.mxu0 0.0
  %2511 = vmatprep.subr.mxu0 0.0
  %2512 = vmatpush1.msra.mxu0 0.0
  %2513 = vmatprep.subr.mxu0 0.0
  %2514 = vmatpush1.msra.mxu0 0.0
  %2515 = vmatprep.mubr.f32.mxu0 0.0
  %2516 = vmatmul.mubr.f32.gmra.mrb[0].mxu0 %v2449
  %v2517 = vpop.f32.mrb[0].mxu0
  %v2518 = vadd.f32 0.0, %v2517
  %v2519 = vpop.f32.mrb[0].mxu0
  %2520 = vdwg.mxu0
  %v2521 = vadd.f32 %v1833, %v2518
  %v2522 = vxor.u32 %v2521, 2147483648
  %v2523 = vmul.f32 %v2522, 1.442695
  %v2524 = vpow.pop %v2523
  %v2525 = vadd.f32 %v2524, 1.0
  %v2526 = vrcp.pop %v2525
  %v2527 = vmul.f32 1.0, %v2526
  %v2528 = vtanh.pop %v2521
  %v2529 = vmul.f32 %v2527, %v2439
  %2531 = vrot.lane.b32.xlu0 %v2528, 64
  %v2532 = vpop.permute.xlu0 %2531
  %v2534 = vmul.f32 %v2527, %v2532
  %2536 = vrot.lane.b32.xlu0 %v2534, 32
  %v2537 = vpop.permute.xlu0 %2536
  %v2539 = vadd.f32 %v2529, %v2537
  %v2540 = vtanh.pop %v2539
  %2542 = vrot.lane.b32.xlu0 %v2540, 64
  %v2543 = vpop.permute.xlu0 %2542
  %v2545 = vmul.f32 %v2527, %v2543
  %2547 = vrot.lane.b32.xlu0 %v2545, 32
  %v2548 = vpop.permute.xlu0 %2547
  %v2549 = vsel %vm672, %v2548, 0
  %2551 = vmatprep.subr.mxu0 0.0
  %2552 = vmatpush1.msra.mxu0 %v1475
  %2553 = vmatprep.subr.mxu0 0.0
  %2554 = vmatpush1.msra.mxu0 %v1476
  %2555 = vmatprep.subr.mxu0 0.0
  %2556 = vmatpush1.msra.mxu0 %v1477
  %2557 = vmatprep.subr.mxu0 0.0
  %2558 = vmatpush1.msra.mxu0 %v1478
  %2559 = vmatprep.subr.mxu0 0.0
  %2560 = vmatpush1.msra.mxu0 0.0
  %2561 = vmatprep.subr.mxu0 0.0
  %2562 = vmatpush1.msra.mxu0 0.0
  %2563 = vmatprep.subr.mxu0 0.0
  %2564 = vmatpush1.msra.mxu0 0.0
  %2565 = vmatprep.subr.mxu0 0.0
  %2566 = vmatpush1.msra.mxu0 0.0
  %2567 = vmatprep.subr.mxu0 0.0
  %2568 = vmatpush1.msra.mxu0 0.0
  %2569 = vmatprep.subr.mxu0 0.0
  %2570 = vmatpush1.msra.mxu0 0.0
  %2571 = vmatprep.subr.mxu0 0.0
  %2572 = vmatpush1.msra.mxu0 0.0
  %2573 = vmatprep.subr.mxu0 0.0
  %2574 = vmatpush1.msra.mxu0 0.0
  %2575 = vmatprep.subr.mxu0 0.0
  %2576 = vmatpush1.msra.mxu0 0.0
  %2577 = vmatprep.subr.mxu0 0.0
  %2578 = vmatpush1.msra.mxu0 0.0
  %2579 = vmatprep.subr.mxu0 0.0
  %2580 = vmatpush1.msra.mxu0 0.0
  %2581 = vmatprep.subr.mxu0 0.0
  %2582 = vmatpush1.msra.mxu0 0.0
  %2583 = vmatprep.subr.mxu0 0.0
  %2584 = vmatpush1.msra.mxu0 0.0
  %2585 = vmatprep.subr.mxu0 0.0
  %2586 = vmatpush1.msra.mxu0 0.0
  %2587 = vmatprep.subr.mxu0 0.0
  %2588 = vmatpush1.msra.mxu0 0.0
  %2589 = vmatprep.subr.mxu0 0.0
  %2590 = vmatpush1.msra.mxu0 0.0
  %2591 = vmatprep.subr.mxu0 0.0
  %2592 = vmatpush1.msra.mxu0 0.0
  %2593 = vmatprep.subr.mxu0 0.0
  %2594 = vmatpush1.msra.mxu0 0.0
  %2595 = vmatprep.subr.mxu0 0.0
  %2596 = vmatpush1.msra.mxu0 0.0
  %2597 = vmatprep.subr.mxu0 0.0
  %2598 = vmatpush1.msra.mxu0 0.0
  %2599 = vmatprep.subr.mxu0 0.0
  %2600 = vmatpush1.msra.mxu0 0.0
  %2601 = vmatprep.subr.mxu0 0.0
  %2602 = vmatpush1.msra.mxu0 0.0
  %2603 = vmatprep.subr.mxu0 0.0
  %2604 = vmatpush1.msra.mxu0 0.0
  %2605 = vmatprep.subr.mxu0 0.0
  %2606 = vmatpush1.msra.mxu0 0.0
  %2607 = vmatprep.subr.mxu0 0.0
  %2608 = vmatpush1.msra.mxu0 0.0
  %2609 = vmatprep.subr.mxu0 0.0
  %2610 = vmatpush1.msra.mxu0 0.0
  %2611 = vmatprep.subr.mxu0 0.0
  %2612 = vmatpush1.msra.mxu0 0.0
  %2613 = vmatprep.subr.mxu0 0.0
  %2614 = vmatpush1.msra.mxu0 0.0
  %2615 = vmatprep.mubr.f32.mxu0 0.0
  %2616 = vmatmul.mubr.f32.gmra.mrb[0].mxu0 %v2549
  %v2617 = vpop.f32.mrb[0].mxu0
  %v2618 = vadd.f32 0.0, %v2617
  %v2619 = vpop.f32.mrb[0].mxu0
  %2620 = vdwg.mxu0
  %v2621 = vadd.f32 %v1903, %v2618
  %v2622 = vxor.u32 %v2621, 2147483648
  %v2623 = vmul.f32 %v2622, 1.442695
  %v2624 = vpow.pop %v2623
  %v2625 = vadd.f32 %v2624, 1.0
  %v2626 = vrcp.pop %v2625
  %v2627 = vmul.f32 1.0, %v2626
  %v2628 = vtanh.pop %v2621
  %v2629 = vmul.f32 %v2627, %v2539
  %2631 = vrot.lane.b32.xlu0 %v2628, 64
  %v2632 = vpop.permute.xlu0 %2631
  %v2634 = vmul.f32 %v2627, %v2632
  %2636 = vrot.lane.b32.xlu0 %v2634, 32
  %v2637 = vpop.permute.xlu0 %2636
  %v2639 = vadd.f32 %v2629, %v2637
  %v2640 = vtanh.pop %v2639
  %2642 = vrot.lane.b32.xlu0 %v2640, 64
  %v2643 = vpop.permute.xlu0 %2642
  %v2645 = vmul.f32 %v2627, %v2643
  %2647 = vrot.lane.b32.xlu0 %v2645, 32
  %v2648 = vpop.permute.xlu0 %2647
  %v2649 = vsel %vm672, %v2648, 0
  %2651 = vmatprep.subr.mxu0 0.0
  %2652 = vmatpush1.msra.mxu0 %v1475
  %2653 = vmatprep.subr.mxu0 0.0
  %2654 = vmatpush1.msra.mxu0 %v1476
  %2655 = vmatprep.subr.mxu0 0.0
  %2656 = vmatpush1.msra.mxu0 %v1477
  %2657 = vmatprep.subr.mxu0 0.0
  %2658 = vmatpush1.msra.mxu0 %v1478
  %2659 = vmatprep.subr.mxu0 0.0
  %2660 = vmatpush1.msra.mxu0 0.0
  %2661 = vmatprep.subr.mxu0 0.0
  %2662 = vmatpush1.msra.mxu0 0.0
  %2663 = vmatprep.subr.mxu0 0.0
  %2664 = vmatpush1.msra.mxu0 0.0
  %2665 = vmatprep.subr.mxu0 0.0
  %2666 = vmatpush1.msra.mxu0 0.0
  %2667 = vmatprep.subr.mxu0 0.0
  %2668 = vmatpush1.msra.mxu0 0.0
  %2669 = vmatprep.subr.mxu0 0.0
  %2670 = vmatpush1.msra.mxu0 0.0
  %2671 = vmatprep.subr.mxu0 0.0
  %2672 = vmatpush1.msra.mxu0 0.0
  %2673 = vmatprep.subr.mxu0 0.0
  %2674 = vmatpush1.msra.mxu0 0.0
  %2675 = vmatprep.subr.mxu0 0.0
  %2676 = vmatpush1.msra.mxu0 0.0
  %2677 = vmatprep.subr.mxu0 0.0
  %2678 = vmatpush1.msra.mxu0 0.0
  %2679 = vmatprep.subr.mxu0 0.0
  %2680 = vmatpush1.msra.mxu0 0.0
  %2681 = vmatprep.subr.mxu0 0.0
  %2682 = vmatpush1.msra.mxu0 0.0
  %2683 = vmatprep.subr.mxu0 0.0
  %2684 = vmatpush1.msra.mxu0 0.0
  %2685 = vmatprep.subr.mxu0 0.0
  %2686 = vmatpush1.msra.mxu0 0.0
  %2687 = vmatprep.subr.mxu0 0.0
  %2688 = vmatpush1.msra.mxu0 0.0
  %2689 = vmatprep.subr.mxu0 0.0
  %2690 = vmatpush1.msra.mxu0 0.0
  %2691 = vmatprep.subr.mxu0 0.0
  %2692 = vmatpush1.msra.mxu0 0.0
  %2693 = vmatprep.subr.mxu0 0.0
  %2694 = vmatpush1.msra.mxu0 0.0
  %2695 = vmatprep.subr.mxu0 0.0
  %2696 = vmatpush1.msra.mxu0 0.0
  %2697 = vmatprep.subr.mxu0 0.0
  %2698 = vmatpush1.msra.mxu0 0.0
  %2699 = vmatprep.subr.mxu0 0.0
  %2700 = vmatpush1.msra.mxu0 0.0
  %2701 = vmatprep.subr.mxu0 0.0
  %2702 = vmatpush1.msra.mxu0 0.0
  %2703 = vmatprep.subr.mxu0 0.0
  %2704 = vmatpush1.msra.mxu0 0.0
  %2705 = vmatprep.subr.mxu0 0.0
  %2706 = vmatpush1.msra.mxu0 0.0
  %2707 = vmatprep.subr.mxu0 0.0
  %2708 = vmatpush1.msra.mxu0 0.0
  %2709 = vmatprep.subr.mxu0 0.0
  %2710 = vmatpush1.msra.mxu0 0.0
  %2711 = vmatprep.subr.mxu0 0.0
  %2712 = vmatpush1.msra.mxu0 0.0
  %2713 = vmatprep.subr.mxu0 0.0
  %2714 = vmatpush1.msra.mxu0 0.0
  %2715 = vmatprep.mubr.f32.mxu0 0.0
  %2716 = vmatmul.mubr.f32.gmra.mrb[0].mxu0 %v2649
  %v2717 = vpop.f32.mrb[0].mxu0
  %v2718 = vadd.f32 0.0, %v2717
  %v2719 = vpop.f32.mrb[0].mxu0
  %2720 = vdwg.mxu0
  %v2721 = vadd.f32 %v1973, %v2718
  %v2722 = vxor.u32 %v2721, 2147483648
  %v2723 = vmul.f32 %v2722, 1.442695
  %v2724 = vpow.pop %v2723
  %v2725 = vadd.f32 %v2724, 1.0
  %v2726 = vrcp.pop %v2725
  %v2727 = vmul.f32 1.0, %v2726
  %v2728 = vtanh.pop %v2721
  %v2729 = vmul.f32 %v2727, %v2639
  %2731 = vrot.lane.b32.xlu0 %v2728, 64
  %v2732 = vpop.permute.xlu0 %2731
  %v2734 = vmul.f32 %v2727, %v2732
  %2736 = vrot.lane.b32.xlu0 %v2734, 32
  %v2737 = vpop.permute.xlu0 %2736
  %v2739 = vadd.f32 %v2729, %v2737
  %v2740 = vtanh.pop %v2739
  %2742 = vrot.lane.b32.xlu0 %v2740, 64
  %v2743 = vpop.permute.xlu0 %2742
  %v2745 = vmul.f32 %v2727, %v2743
  %2747 = vrot.lane.b32.xlu0 %v2745, 32
  %v2748 = vpop.permute.xlu0 %2747
  %v2749 = vsel %vm672, %v2748, 0
  %2751 = vmatprep.subr.mxu0 0.0
  %2752 = vmatpush1.msra.mxu0 %v1475
  %2753 = vmatprep.subr.mxu0 0.0
  %2754 = vmatpush1.msra.mxu0 %v1476
  %2755 = vmatprep.subr.mxu0 0.0
  %2756 = vmatpush1.msra.mxu0 %v1477
  %2757 = vmatprep.subr.mxu0 0.0
  %2758 = vmatpush1.msra.mxu0 %v1478
  %2759 = vmatprep.subr.mxu0 0.0
  %2760 = vmatpush1.msra.mxu0 0.0
  %2761 = vmatprep.subr.mxu0 0.0
  %2762 = vmatpush1.msra.mxu0 0.0
  %2763 = vmatprep.subr.mxu0 0.0
  %2764 = vmatpush1.msra.mxu0 0.0
  %2765 = vmatprep.subr.mxu0 0.0
  %2766 = vmatpush1.msra.mxu0 0.0
  %2767 = vmatprep.subr.mxu0 0.0
  %2768 = vmatpush1.msra.mxu0 0.0
  %2769 = vmatprep.subr.mxu0 0.0
  %2770 = vmatpush1.msra.mxu0 0.0
  %2771 = vmatprep.subr.mxu0 0.0
  %2772 = vmatpush1.msra.mxu0 0.0
  %2773 = vmatprep.subr.mxu0 0.0
  %2774 = vmatpush1.msra.mxu0 0.0
  %2775 = vmatprep.subr.mxu0 0.0
  %2776 = vmatpush1.msra.mxu0 0.0
  %2777 = vmatprep.subr.mxu0 0.0
  %2778 = vmatpush1.msra.mxu0 0.0
  %2779 = vmatprep.subr.mxu0 0.0
  %2780 = vmatpush1.msra.mxu0 0.0
  %2781 = vmatprep.subr.mxu0 0.0
  %2782 = vmatpush1.msra.mxu0 0.0
  %2783 = vmatprep.subr.mxu0 0.0
  %2784 = vmatpush1.msra.mxu0 0.0
  %2785 = vmatprep.subr.mxu0 0.0
  %2786 = vmatpush1.msra.mxu0 0.0
  %2787 = vmatprep.subr.mxu0 0.0
  %2788 = vmatpush1.msra.mxu0 0.0
  %2789 = vmatprep.subr.mxu0 0.0
  %2790 = vmatpush1.msra.mxu0 0.0
  %2791 = vmatprep.subr.mxu0 0.0
  %2792 = vmatpush1.msra.mxu0 0.0
  %2793 = vmatprep.subr.mxu0 0.0
  %2794 = vmatpush1.msra.mxu0 0.0
  %2795 = vmatprep.subr.mxu0 0.0
  %2796 = vmatpush1.msra.mxu0 0.0
  %2797 = vmatprep.subr.mxu0 0.0
  %2798 = vmatpush1.msra.mxu0 0.0
  %2799 = vmatprep.subr.mxu0 0.0
  %2800 = vmatpush1.msra.mxu0 0.0
  %2801 = vmatprep.subr.mxu0 0.0
  %2802 = vmatpush1.msra.mxu0 0.0
  %2803 = vmatprep.subr.mxu0 0.0
  %2804 = vmatpush1.msra.mxu0 0.0
  %2805 = vmatprep.subr.mxu0 0.0
  %2806 = vmatpush1.msra.mxu0 0.0
  %2807 = vmatprep.subr.mxu0 0.0
  %2808 = vmatpush1.msra.mxu0 0.0
  %2809 = vmatprep.subr.mxu0 0.0
  %2810 = vmatpush1.msra.mxu0 0.0
  %2811 = vmatprep.subr.mxu0 0.0
  %2812 = vmatpush1.msra.mxu0 0.0
  %2813 = vmatprep.subr.mxu0 0.0
  %2814 = vmatpush1.msra.mxu0 0.0
  %2815 = vmatprep.mubr.f32.mxu0 0.0
  %2816 = vmatmul.mubr.f32.gmra.mrb[0].mxu0 %v2749
  %v2817 = vpop.f32.mrb[0].mxu0
  %v2818 = vadd.f32 0.0, %v2817
  %v2819 = vpop.f32.mrb[0].mxu0
  %2820 = vdwg.mxu0
  %v2821 = vadd.f32 %v2048, %v2818
  %v2822 = vxor.u32 %v2821, 2147483648
  %v2823 = vmul.f32 %v2822, 1.442695
  %v2824 = vpow.pop %v2823
  %v2825 = vadd.f32 %v2824, 1.0
  %v2826 = vrcp.pop %v2825
  %v2827 = vmul.f32 1.0, %v2826
  %v2828 = vtanh.pop %v2821
  %v2829 = vmul.f32 %v2827, %v2739
  %2831 = vrot.lane.b32.xlu0 %v2828, 64
  %v2832 = vpop.permute.xlu0 %2831
  %v2834 = vmul.f32 %v2827, %v2832
  %2836 = vrot.lane.b32.xlu0 %v2834, 32
  %v2837 = vpop.permute.xlu0 %2836
  %v2839 = vadd.f32 %v2829, %v2837
  %v2840 = vtanh.pop %v2839
  %2842 = vrot.lane.b32.xlu0 %v2840, 64
  %v2843 = vpop.permute.xlu0 %2842
  %v2845 = vmul.f32 %v2827, %v2843
  %v2846 = vld [vmem:[%s7] sm:$0xff]
  %v2847 = vld [vmem:[%s7 + $0x8] sm:$0xff]
  %v2848 = vld [vmem:[%s7 + $0x10] sm:$0xff]
  %v2849 = vld [vmem:[%s7 + $0x18] sm:$0xff]
  %v2850 = vld [vmem:[%s7 + $0x20] sm:$0xff]
  %v2851 = vld [vmem:[%s7 + $0x28] sm:$0xff]
  %v2852 = vld [vmem:[%s7 + $0x30] sm:$0xff]
  %v2853 = vld [vmem:[%s7 + $0x38] sm:$0xff]
  %v2854 = vld [vmem:[%s7 + $0x40] sm:$0xff]
  %v2855 = vld [vmem:[%s7 + $0x48] sm:$0xff]
  %v2856 = vld [vmem:[%s7 + $0x50] sm:$0xff]
  %v2857 = vld [vmem:[%s7 + $0x58] sm:$0xff]
  %v2858 = vld [vmem:[%s7 + $0x60] sm:$0xff]
  %v2859 = vld [vmem:[%s7 + $0x68] sm:$0xff]
  %v2860 = vld [vmem:[%s7 + $0x70] sm:$0xff]
  %v2861 = vld [vmem:[%s7 + $0x78] sm:$0xff]
  %v2862 = vld [vmem:[%s7 + $0x80] sm:$0xff]
  %v2863 = vld [vmem:[%s7 + $0x88] sm:$0xff]
  %v2864 = vld [vmem:[%s7 + $0x90] sm:$0xff]
  %v2865 = vld [vmem:[%s7 + $0x98] sm:$0xff]
  %v2866 = vld [vmem:[%s7 + $0xa0] sm:$0xff]
  %v2867 = vld [vmem:[%s7 + $0xa8] sm:$0xff]
  %v2868 = vld [vmem:[%s7 + $0xb0] sm:$0xff]
  %v2869 = vld [vmem:[%s7 + $0xb8] sm:$0xff]
  %v2870 = vld [vmem:[%s7 + $0xc0] sm:$0xff]
  %v2871 = vld [vmem:[%s7 + $0xc8] sm:$0xff]
  %v2872 = vld [vmem:[%s7 + $0xd0] sm:$0xff]
  %v2873 = vld [vmem:[%s7 + $0xd8] sm:$0xff]
  %v2874 = vld [vmem:[%s7 + $0xe0] sm:$0xff]
  %v2875 = vld [vmem:[%s7 + $0xe8] sm:$0xff]
  %v2876 = vld [vmem:[%s7 + $0xf0] sm:$0xff]
  %v2877 = vld [vmem:[%s7 + $0xf8] sm:$0xff]
  %v2878 = vld [vmem:[%s8] sm:$0x1]
  %v2880 = vlaneseq
  %v2881 = vshrl.u32 %v2880, 7
  %v2882 = vsub.s32 0, %v2881
  %v2883 = vrot.slane %v2878, %v2882
  %2885 = vmatprep.subr.mxu0 0.0
  %2886 = vmatpush1.msra.mxu0 %v2846
  %2887 = vmatprep.subr.mxu0 0.0
  %2888 = vmatpush1.msra.mxu0 %v2847
  %2889 = vmatprep.subr.mxu0 0.0
  %2890 = vmatpush1.msra.mxu0 %v2848
  %2891 = vmatprep.subr.mxu0 0.0
  %2892 = vmatpush1.msra.mxu0 %v2849
  %2893 = vmatprep.subr.mxu0 0.0
  %2894 = vmatpush1.msra.mxu0 0.0
  %2895 = vmatprep.subr.mxu0 0.0
  %2896 = vmatpush1.msra.mxu0 0.0
  %2897 = vmatprep.subr.mxu0 0.0
  %2898 = vmatpush1.msra.mxu0 0.0
  %2899 = vmatprep.subr.mxu0 0.0
  %2900 = vmatpush1.msra.mxu0 0.0
  %2901 = vmatprep.subr.mxu0 0.0
  %2902 = vmatpush1.msra.mxu0 0.0
  %2903 = vmatprep.subr.mxu0 0.0
  %2904 = vmatpush1.msra.mxu0 0.0
  %2905 = vmatprep.subr.mxu0 0.0
  %2906 = vmatpush1.msra.mxu0 0.0
  %2907 = vmatprep.subr.mxu0 0.0
  %2908 = vmatpush1.msra.mxu0 0.0
  %2909 = vmatprep.subr.mxu0 0.0
  %2910 = vmatpush1.msra.mxu0 0.0
  %2911 = vmatprep.subr.mxu0 0.0
  %2912 = vmatpush1.msra.mxu0 0.0
  %2913 = vmatprep.subr.mxu0 0.0
  %2914 = vmatpush1.msra.mxu0 0.0
  %2915 = vmatprep.subr.mxu0 0.0
  %2916 = vmatpush1.msra.mxu0 0.0
  %2917 = vmatprep.subr.mxu0 0.0
  %2918 = vmatpush1.msra.mxu0 0.0
  %2919 = vmatprep.subr.mxu0 0.0
  %2920 = vmatpush1.msra.mxu0 0.0
  %2921 = vmatprep.subr.mxu0 0.0
  %2922 = vmatpush1.msra.mxu0 0.0
  %2923 = vmatprep.subr.mxu0 0.0
  %2924 = vmatpush1.msra.mxu0 0.0
  %2925 = vmatprep.subr.mxu0 0.0
  %2926 = vmatpush1.msra.mxu0 0.0
  %2927 = vmatprep.subr.mxu0 0.0
  %2928 = vmatpush1.msra.mxu0 0.0
  %2929 = vmatprep.subr.mxu0 0.0
  %2930 = vmatpush1.msra.mxu0 0.0
  %2931 = vmatprep.subr.mxu0 0.0
  %2932 = vmatpush1.msra.mxu0 0.0
  %2933 = vmatprep.subr.mxu0 0.0
  %2934 = vmatpush1.msra.mxu0 0.0
  %2935 = vmatprep.subr.mxu0 0.0
  %2936 = vmatpush1.msra.mxu0 0.0
  %2937 = vmatprep.subr.mxu0 0.0
  %2938 = vmatpush1.msra.mxu0 0.0
  %2939 = vmatprep.subr.mxu0 0.0
  %2940 = vmatpush1.msra.mxu0 0.0
  %2941 = vmatprep.subr.mxu0 0.0
  %2942 = vmatpush1.msra.mxu0 0.0
  %2943 = vmatprep.subr.mxu0 0.0
  %2944 = vmatpush1.msra.mxu0 0.0
  %2945 = vmatprep.subr.mxu0 0.0
  %2946 = vmatpush1.msra.mxu0 0.0
  %2947 = vmatprep.subr.mxu0 0.0
  %2948 = vmatpush1.msra.mxu0 0.0
  %2949 = vmatprep.mubr.f32.mxu0 0.0
  %2950 = vmatmul.mubr.f32.gmra.mrb[0].mxu0 %v2149
  %v2951 = vpop.f32.mrb[0].mxu0
  %v2952 = vadd.f32 0.0, %v2951
  %v2953 = vpop.f32.mrb[0].mxu0
  %2954 = vdwg.mxu0
  %v2955 = vadd.f32 %v2883, %v2952
  %2956 = vmatprep.subr.mxu0 0.0
  %2957 = vmatpush1.msra.mxu0 %v2850
  %2958 = vmatprep.subr.mxu0 0.0
  %2959 = vmatpush1.msra.mxu0 %v2851
  %2960 = vmatprep.subr.mxu0 0.0
  %2961 = vmatpush1.msra.mxu0 %v2852
  %2962 = vmatprep.subr.mxu0 0.0
  %2963 = vmatpush1.msra.mxu0 %v2853
  %2964 = vmatprep.subr.mxu0 0.0
  %2965 = vmatpush1.msra.mxu0 0.0
  %2966 = vmatprep.subr.mxu0 0.0
  %2967 = vmatpush1.msra.mxu0 0.0
  %2968 = vmatprep.subr.mxu0 0.0
  %2969 = vmatpush1.msra.mxu0 0.0
  %2970 = vmatprep.subr.mxu0 0.0
  %2971 = vmatpush1.msra.mxu0 0.0
  %2972 = vmatprep.subr.mxu0 0.0
  %2973 = vmatpush1.msra.mxu0 0.0
  %2974 = vmatprep.subr.mxu0 0.0
  %2975 = vmatpush1.msra.mxu0 0.0
  %2976 = vmatprep.subr.mxu0 0.0
  %2977 = vmatpush1.msra.mxu0 0.0
  %2978 = vmatprep.subr.mxu0 0.0
  %2979 = vmatpush1.msra.mxu0 0.0
  %2980 = vmatprep.subr.mxu0 0.0
  %2981 = vmatpush1.msra.mxu0 0.0
  %2982 = vmatprep.subr.mxu0 0.0
  %2983 = vmatpush1.msra.mxu0 0.0
  %2984 = vmatprep.subr.mxu0 0.0
  %2985 = vmatpush1.msra.mxu0 0.0
  %2986 = vmatprep.subr.mxu0 0.0
  %2987 = vmatpush1.msra.mxu0 0.0
  %2988 = vmatprep.subr.mxu0 0.0
  %2989 = vmatpush1.msra.mxu0 0.0
  %2990 = vmatprep.subr.mxu0 0.0
  %2991 = vmatpush1.msra.mxu0 0.0
  %2992 = vmatprep.subr.mxu0 0.0
  %2993 = vmatpush1.msra.mxu0 0.0
  %2994 = vmatprep.subr.mxu0 0.0
  %2995 = vmatpush1.msra.mxu0 0.0
  %2996 = vmatprep.subr.mxu0 0.0
  %2997 = vmatpush1.msra.mxu0 0.0
  %2998 = vmatprep.subr.mxu0 0.0
  %2999 = vmatpush1.msra.mxu0 0.0
  %3000 = vmatprep.subr.mxu0 0.0
  %3001 = vmatpush1.msra.mxu0 0.0
  %3002 = vmatprep.subr.mxu0 0.0
  %3003 = vmatpush1.msra.mxu0 0.0
  %3004 = vmatprep.subr.mxu0 0.0
  %3005 = vmatpush1.msra.mxu0 0.0
  %3006 = vmatprep.subr.mxu0 0.0
  %3007 = vmatpush1.msra.mxu0 0.0
  %3008 = vmatprep.subr.mxu0 0.0
  %3009 = vmatpush1.msra.mxu0 0.0
  %3010 = vmatprep.subr.mxu0 0.0
  %3011 = vmatpush1.msra.mxu0 0.0
  %3012 = vmatprep.subr.mxu0 0.0
  %3013 = vmatpush1.msra.mxu0 0.0
  %3014 = vmatprep.subr.mxu0 0.0
  %3015 = vmatpush1.msra.mxu0 0.0
  %3016 = vmatprep.subr.mxu0 0.0
  %3017 = vmatpush1.msra.mxu0 0.0
  %3018 = vmatprep.subr.mxu0 0.0
  %3019 = vmatpush1.msra.mxu0 0.0
  %3020 = vmatprep.mubr.f32.mxu0 0.0
  %3021 = vmatmul.mubr.f32.gmra.mrb[0].mxu0 %v2249
  %v3022 = vpop.f32.mrb[0].mxu0
  %v3023 = vadd.f32 0.0, %v3022
  %v3024 = vpop.f32.mrb[0].mxu0
  %3025 = vdwg.mxu0
  %v3026 = vadd.f32 %v2955, %v3023
  %3027 = vmatprep.subr.mxu0 0.0
  %3028 = vmatpush1.msra.mxu0 %v2854
  %3029 = vmatprep.subr.mxu0 0.0
  %3030 = vmatpush1.msra.mxu0 %v2855
  %3031 = vmatprep.subr.mxu0 0.0
  %3032 = vmatpush1.msra.mxu0 %v2856
  %3033 = vmatprep.subr.mxu0 0.0
  %3034 = vmatpush1.msra.mxu0 %v2857
  %3035 = vmatprep.subr.mxu0 0.0
  %3036 = vmatpush1.msra.mxu0 0.0
  %3037 = vmatprep.subr.mxu0 0.0
  %3038 = vmatpush1.msra.mxu0 0.0
  %3039 = vmatprep.subr.mxu0 0.0
  %3040 = vmatpush1.msra.mxu0 0.0
  %3041 = vmatprep.subr.mxu0 0.0
  %3042 = vmatpush1.msra.mxu0 0.0
  %3043 = vmatprep.subr.mxu0 0.0
  %3044 = vmatpush1.msra.mxu0 0.0
  %3045 = vmatprep.subr.mxu0 0.0
  %3046 = vmatpush1.msra.mxu0 0.0
  %3047 = vmatprep.subr.mxu0 0.0
  %3048 = vmatpush1.msra.mxu0 0.0
  %3049 = vmatprep.subr.mxu0 0.0
  %3050 = vmatpush1.msra.mxu0 0.0
  %3051 = vmatprep.subr.mxu0 0.0
  %3052 = vmatpush1.msra.mxu0 0.0
  %3053 = vmatprep.subr.mxu0 0.0
  %3054 = vmatpush1.msra.mxu0 0.0
  %3055 = vmatprep.subr.mxu0 0.0
  %3056 = vmatpush1.msra.mxu0 0.0
  %3057 = vmatprep.subr.mxu0 0.0
  %3058 = vmatpush1.msra.mxu0 0.0
  %3059 = vmatprep.subr.mxu0 0.0
  %3060 = vmatpush1.msra.mxu0 0.0
  %3061 = vmatprep.subr.mxu0 0.0
  %3062 = vmatpush1.msra.mxu0 0.0
  %3063 = vmatprep.subr.mxu0 0.0
  %3064 = vmatpush1.msra.mxu0 0.0
  %3065 = vmatprep.subr.mxu0 0.0
  %3066 = vmatpush1.msra.mxu0 0.0
  %3067 = vmatprep.subr.mxu0 0.0
  %3068 = vmatpush1.msra.mxu0 0.0
  %3069 = vmatprep.subr.mxu0 0.0
  %3070 = vmatpush1.msra.mxu0 0.0
  %3071 = vmatprep.subr.mxu0 0.0
  %3072 = vmatpush1.msra.mxu0 0.0
  %3073 = vmatprep.subr.mxu0 0.0
  %3074 = vmatpush1.msra.mxu0 0.0
  %3075 = vmatprep.subr.mxu0 0.0
  %3076 = vmatpush1.msra.mxu0 0.0
  %3077 = vmatprep.subr.mxu0 0.0
  %3078 = vmatpush1.msra.mxu0 0.0
  %3079 = vmatprep.subr.mxu0 0.0
  %3080 = vmatpush1.msra.mxu0 0.0
  %3081 = vmatprep.subr.mxu0 0.0
  %3082 = vmatpush1.msra.mxu0 0.0
  %3083 = vmatprep.subr.mxu0 0.0
  %3084 = vmatpush1.msra.mxu0 0.0
  %3085 = vmatprep.subr.mxu0 0.0
  %3086 = vmatpush1.msra.mxu0 0.0
  %3087 = vmatprep.subr.mxu0 0.0
  %3088 = vmatpush1.msra.mxu0 0.0
  %3089 = vmatprep.subr.mxu0 0.0
  %3090 = vmatpush1.msra.mxu0 0.0
  %3091 = vmatprep.mubr.f32.mxu0 0.0
  %3092 = vmatmul.mubr.f32.gmra.mrb[0].mxu0 %v2349
  %v3093 = vpop.f32.mrb[0].mxu0
  %v3094 = vadd.f32 0.0, %v3093
  %v3095 = vpop.f32.mrb[0].mxu0
  %3096 = vdwg.mxu0
  %v3097 = vadd.f32 %v3026, %v3094
  %3098 = vmatprep.subr.mxu0 0.0
  %3099 = vmatpush1.msra.mxu0 %v2858
  %3100 = vmatprep.subr.mxu0 0.0
  %3101 = vmatpush1.msra.mxu0 %v2859
  %3102 = vmatprep.subr.mxu0 0.0
  %3103 = vmatpush1.msra.mxu0 %v2860
  %3104 = vmatprep.subr.mxu0 0.0
  %3105 = vmatpush1.msra.mxu0 %v2861
  %3106 = vmatprep.subr.mxu0 0.0
  %3107 = vmatpush1.msra.mxu0 0.0
  %3108 = vmatprep.subr.mxu0 0.0
  %3109 = vmatpush1.msra.mxu0 0.0
  %3110 = vmatprep.subr.mxu0 0.0
  %3111 = vmatpush1.msra.mxu0 0.0
  %3112 = vmatprep.subr.mxu0 0.0
  %3113 = vmatpush1.msra.mxu0 0.0
  %3114 = vmatprep.subr.mxu0 0.0
  %3115 = vmatpush1.msra.mxu0 0.0
  %3116 = vmatprep.subr.mxu0 0.0
  %3117 = vmatpush1.msra.mxu0 0.0
  %3118 = vmatprep.subr.mxu0 0.0
  %3119 = vmatpush1.msra.mxu0 0.0
  %3120 = vmatprep.subr.mxu0 0.0
  %3121 = vmatpush1.msra.mxu0 0.0
  %3122 = vmatprep.subr.mxu0 0.0
  %3123 = vmatpush1.msra.mxu0 0.0
  %3124 = vmatprep.subr.mxu0 0.0
  %3125 = vmatpush1.msra.mxu0 0.0
  %3126 = vmatprep.subr.mxu0 0.0
  %3127 = vmatpush1.msra.mxu0 0.0
  %3128 = vmatprep.subr.mxu0 0.0
  %3129 = vmatpush1.msra.mxu0 0.0
  %3130 = vmatprep.subr.mxu0 0.0
  %3131 = vmatpush1.msra.mxu0 0.0
  %3132 = vmatprep.subr.mxu0 0.0
  %3133 = vmatpush1.msra.mxu0 0.0
  %3134 = vmatprep.subr.mxu0 0.0
  %3135 = vmatpush1.msra.mxu0 0.0
  %3136 = vmatprep.subr.mxu0 0.0
  %3137 = vmatpush1.msra.mxu0 0.0
  %3138 = vmatprep.subr.mxu0 0.0
  %3139 = vmatpush1.msra.mxu0 0.0
  %3140 = vmatprep.subr.mxu0 0.0
  %3141 = vmatpush1.msra.mxu0 0.0
  %3142 = vmatprep.subr.mxu0 0.0
  %3143 = vmatpush1.msra.mxu0 0.0
  %3144 = vmatprep.subr.mxu0 0.0
  %3145 = vmatpush1.msra.mxu0 0.0
  %3146 = vmatprep.subr.mxu0 0.0
  %3147 = vmatpush1.msra.mxu0 0.0
  %3148 = vmatprep.subr.mxu0 0.0
  %3149 = vmatpush1.msra.mxu0 0.0
  %3150 = vmatprep.subr.mxu0 0.0
  %3151 = vmatpush1.msra.mxu0 0.0
  %3152 = vmatprep.subr.mxu0 0.0
  %3153 = vmatpush1.msra.mxu0 0.0
  %3154 = vmatprep.subr.mxu0 0.0
  %3155 = vmatpush1.msra.mxu0 0.0
  %3156 = vmatprep.subr.mxu0 0.0
  %3157 = vmatpush1.msra.mxu0 0.0
  %3158 = vmatprep.subr.mxu0 0.0
  %3159 = vmatpush1.msra.mxu0 0.0
  %3160 = vmatprep.subr.mxu0 0.0
  %3161 = vmatpush1.msra.mxu0 0.0
  %3162 = vmatprep.mubr.f32.mxu0 0.0
  %3163 = vmatmul.mubr.f32.gmra.mrb[0].mxu0 %v2449
  %v3164 = vpop.f32.mrb[0].mxu0
  %v3165 = vadd.f32 0.0, %v3164
  %v3166 = vpop.f32.mrb[0].mxu0
  %3167 = vdwg.mxu0
  %v3168 = vadd.f32 %v3097, %v3165
  %3169 = vmatprep.subr.mxu0 0.0
  %3170 = vmatpush1.msra.mxu0 %v2862
  %3171 = vmatprep.subr.mxu0 0.0
  %3172 = vmatpush1.msra.mxu0 %v2863
  %3173 = vmatprep.subr.mxu0 0.0
  %3174 = vmatpush1.msra.mxu0 %v2864
  %3175 = vmatprep.subr.mxu0 0.0
  %3176 = vmatpush1.msra.mxu0 %v2865
  %3177 = vmatprep.subr.mxu0 0.0
  %3178 = vmatpush1.msra.mxu0 0.0
  %3179 = vmatprep.subr.mxu0 0.0
  %3180 = vmatpush1.msra.mxu0 0.0
  %3181 = vmatprep.subr.mxu0 0.0
  %3182 = vmatpush1.msra.mxu0 0.0
  %3183 = vmatprep.subr.mxu0 0.0
  %3184 = vmatpush1.msra.mxu0 0.0
  %3185 = vmatprep.subr.mxu0 0.0
  %3186 = vmatpush1.msra.mxu0 0.0
  %3187 = vmatprep.subr.mxu0 0.0
  %3188 = vmatpush1.msra.mxu0 0.0
  %3189 = vmatprep.subr.mxu0 0.0
  %3190 = vmatpush1.msra.mxu0 0.0
  %3191 = vmatprep.subr.mxu0 0.0
  %3192 = vmatpush1.msra.mxu0 0.0
  %3193 = vmatprep.subr.mxu0 0.0
  %3194 = vmatpush1.msra.mxu0 0.0
  %3195 = vmatprep.subr.mxu0 0.0
  %3196 = vmatpush1.msra.mxu0 0.0
  %3197 = vmatprep.subr.mxu0 0.0
  %3198 = vmatpush1.msra.mxu0 0.0
  %3199 = vmatprep.subr.mxu0 0.0
  %3200 = vmatpush1.msra.mxu0 0.0
  %3201 = vmatprep.subr.mxu0 0.0
  %3202 = vmatpush1.msra.mxu0 0.0
  %3203 = vmatprep.subr.mxu0 0.0
  %3204 = vmatpush1.msra.mxu0 0.0
  %3205 = vmatprep.subr.mxu0 0.0
  %3206 = vmatpush1.msra.mxu0 0.0
  %3207 = vmatprep.subr.mxu0 0.0
  %3208 = vmatpush1.msra.mxu0 0.0
  %3209 = vmatprep.subr.mxu0 0.0
  %3210 = vmatpush1.msra.mxu0 0.0
  %3211 = vmatprep.subr.mxu0 0.0
  %3212 = vmatpush1.msra.mxu0 0.0
  %3213 = vmatprep.subr.mxu0 0.0
  %3214 = vmatpush1.msra.mxu0 0.0
  %3215 = vmatprep.subr.mxu0 0.0
  %3216 = vmatpush1.msra.mxu0 0.0
  %3217 = vmatprep.subr.mxu0 0.0
  %3218 = vmatpush1.msra.mxu0 0.0
  %3219 = vmatprep.subr.mxu0 0.0
  %3220 = vmatpush1.msra.mxu0 0.0
  %3221 = vmatprep.subr.mxu0 0.0
  %3222 = vmatpush1.msra.mxu0 0.0
  %3223 = vmatprep.subr.mxu0 0.0
  %3224 = vmatpush1.msra.mxu0 0.0
  %3225 = vmatprep.subr.mxu0 0.0
  %3226 = vmatpush1.msra.mxu0 0.0
  %3227 = vmatprep.subr.mxu0 0.0
  %3228 = vmatpush1.msra.mxu0 0.0
  %3229 = vmatprep.subr.mxu0 0.0
  %3230 = vmatpush1.msra.mxu0 0.0
  %3231 = vmatprep.subr.mxu0 0.0
  %3232 = vmatpush1.msra.mxu0 0.0
  %3233 = vmatprep.mubr.f32.mxu0 0.0
  %3234 = vmatmul.mubr.f32.gmra.mrb[0].mxu0 %v2549
  %v3235 = vpop.f32.mrb[0].mxu0
  %v3236 = vadd.f32 0.0, %v3235
  %v3237 = vpop.f32.mrb[0].mxu0
  %3238 = vdwg.mxu0
  %v3239 = vadd.f32 %v3168, %v3236
  %3240 = vmatprep.subr.mxu0 0.0
  %3241 = vmatpush1.msra.mxu0 %v2866
  %3242 = vmatprep.subr.mxu0 0.0
  %3243 = vmatpush1.msra.mxu0 %v2867
  %3244 = vmatprep.subr.mxu0 0.0
  %3245 = vmatpush1.msra.mxu0 %v2868
  %3246 = vmatprep.subr.mxu0 0.0
  %3247 = vmatpush1.msra.mxu0 %v2869
  %3248 = vmatprep.subr.mxu0 0.0
  %3249 = vmatpush1.msra.mxu0 0.0
  %3250 = vmatprep.subr.mxu0 0.0
  %3251 = vmatpush1.msra.mxu0 0.0
  %3252 = vmatprep.subr.mxu0 0.0
  %3253 = vmatpush1.msra.mxu0 0.0
  %3254 = vmatprep.subr.mxu0 0.0
  %3255 = vmatpush1.msra.mxu0 0.0
  %3256 = vmatprep.subr.mxu0 0.0
  %3257 = vmatpush1.msra.mxu0 0.0
  %3258 = vmatprep.subr.mxu0 0.0
  %3259 = vmatpush1.msra.mxu0 0.0
  %3260 = vmatprep.subr.mxu0 0.0
  %3261 = vmatpush1.msra.mxu0 0.0
  %3262 = vmatprep.subr.mxu0 0.0
  %3263 = vmatpush1.msra.mxu0 0.0
  %3264 = vmatprep.subr.mxu0 0.0
  %3265 = vmatpush1.msra.mxu0 0.0
  %3266 = vmatprep.subr.mxu0 0.0
  %3267 = vmatpush1.msra.mxu0 0.0
  %3268 = vmatprep.subr.mxu0 0.0
  %3269 = vmatpush1.msra.mxu0 0.0
  %3270 = vmatprep.subr.mxu0 0.0
  %3271 = vmatpush1.msra.mxu0 0.0
  %3272 = vmatprep.subr.mxu0 0.0
  %3273 = vmatpush1.msra.mxu0 0.0
  %3274 = vmatprep.subr.mxu0 0.0
  %3275 = vmatpush1.msra.mxu0 0.0
  %3276 = vmatprep.subr.mxu0 0.0
  %3277 = vmatpush1.msra.mxu0 0.0
  %3278 = vmatprep.subr.mxu0 0.0
  %3279 = vmatpush1.msra.mxu0 0.0
  %3280 = vmatprep.subr.mxu0 0.0
  %3281 = vmatpush1.msra.mxu0 0.0
  %3282 = vmatprep.subr.mxu0 0.0
  %3283 = vmatpush1.msra.mxu0 0.0
  %3284 = vmatprep.subr.mxu0 0.0
  %3285 = vmatpush1.msra.mxu0 0.0
  %3286 = vmatprep.subr.mxu0 0.0
  %3287 = vmatpush1.msra.mxu0 0.0
  %3288 = vmatprep.subr.mxu0 0.0
  %3289 = vmatpush1.msra.mxu0 0.0
  %3290 = vmatprep.subr.mxu0 0.0
  %3291 = vmatpush1.msra.mxu0 0.0
  %3292 = vmatprep.subr.mxu0 0.0
  %3293 = vmatpush1.msra.mxu0 0.0
  %3294 = vmatprep.subr.mxu0 0.0
  %3295 = vmatpush1.msra.mxu0 0.0
  %3296 = vmatprep.subr.mxu0 0.0
  %3297 = vmatpush1.msra.mxu0 0.0
  %3298 = vmatprep.subr.mxu0 0.0
  %3299 = vmatpush1.msra.mxu0 0.0
  %3300 = vmatprep.subr.mxu0 0.0
  %3301 = vmatpush1.msra.mxu0 0.0
  %3302 = vmatprep.subr.mxu0 0.0
  %3303 = vmatpush1.msra.mxu0 0.0
  %3304 = vmatprep.mubr.f32.mxu0 0.0
  %3305 = vmatmul.mubr.f32.gmra.mrb[0].mxu0 %v2649
  %v3306 = vpop.f32.mrb[0].mxu0
  %v3307 = vadd.f32 0.0, %v3306
  %v3308 = vpop.f32.mrb[0].mxu0
  %3309 = vdwg.mxu0
  %v3310 = vadd.f32 %v3239, %v3307
  %3311 = vmatprep.subr.mxu0 0.0
  %3312 = vmatpush1.msra.mxu0 %v2870
  %3313 = vmatprep.subr.mxu0 0.0
  %3314 = vmatpush1.msra.mxu0 %v2871
  %3315 = vmatprep.subr.mxu0 0.0
  %3316 = vmatpush1.msra.mxu0 %v2872
  %3317 = vmatprep.subr.mxu0 0.0
  %3318 = vmatpush1.msra.mxu0 %v2873
  %3319 = vmatprep.subr.mxu0 0.0
  %3320 = vmatpush1.msra.mxu0 0.0
  %3321 = vmatprep.subr.mxu0 0.0
  %3322 = vmatpush1.msra.mxu0 0.0
  %3323 = vmatprep.subr.mxu0 0.0
  %3324 = vmatpush1.msra.mxu0 0.0
  %3325 = vmatprep.subr.mxu0 0.0
  %3326 = vmatpush1.msra.mxu0 0.0
  %3327 = vmatprep.subr.mxu0 0.0
  %3328 = vmatpush1.msra.mxu0 0.0
  %3329 = vmatprep.subr.mxu0 0.0
  %3330 = vmatpush1.msra.mxu0 0.0
  %3331 = vmatprep.subr.mxu0 0.0
  %3332 = vmatpush1.msra.mxu0 0.0
  %3333 = vmatprep.subr.mxu0 0.0
  %3334 = vmatpush1.msra.mxu0 0.0
  %3335 = vmatprep.subr.mxu0 0.0
  %3336 = vmatpush1.msra.mxu0 0.0
  %3337 = vmatprep.subr.mxu0 0.0
  %3338 = vmatpush1.msra.mxu0 0.0
  %3339 = vmatprep.subr.mxu0 0.0
  %3340 = vmatpush1.msra.mxu0 0.0
  %3341 = vmatprep.subr.mxu0 0.0
  %3342 = vmatpush1.msra.mxu0 0.0
  %3343 = vmatprep.subr.mxu0 0.0
  %3344 = vmatpush1.msra.mxu0 0.0
  %3345 = vmatprep.subr.mxu0 0.0
  %3346 = vmatpush1.msra.mxu0 0.0
  %3347 = vmatprep.subr.mxu0 0.0
  %3348 = vmatpush1.msra.mxu0 0.0
  %3349 = vmatprep.subr.mxu0 0.0
  %3350 = vmatpush1.msra.mxu0 0.0
  %3351 = vmatprep.subr.mxu0 0.0
  %3352 = vmatpush1.msra.mxu0 0.0
  %3353 = vmatprep.subr.mxu0 0.0
  %3354 = vmatpush1.msra.mxu0 0.0
  %3355 = vmatprep.subr.mxu0 0.0
  %3356 = vmatpush1.msra.mxu0 0.0
  %3357 = vmatprep.subr.mxu0 0.0
  %3358 = vmatpush1.msra.mxu0 0.0
  %3359 = vmatprep.subr.mxu0 0.0
  %3360 = vmatpush1.msra.mxu0 0.0
  %3361 = vmatprep.subr.mxu0 0.0
  %3362 = vmatpush1.msra.mxu0 0.0
  %3363 = vmatprep.subr.mxu0 0.0
  %3364 = vmatpush1.msra.mxu0 0.0
  %3365 = vmatprep.subr.mxu0 0.0
  %3366 = vmatpush1.msra.mxu0 0.0
  %3367 = vmatprep.subr.mxu0 0.0
  %3368 = vmatpush1.msra.mxu0 0.0
  %3369 = vmatprep.subr.mxu0 0.0
  %3370 = vmatpush1.msra.mxu0 0.0
  %3371 = vmatprep.subr.mxu0 0.0
  %3372 = vmatpush1.msra.mxu0 0.0
  %3373 = vmatprep.subr.mxu0 0.0
  %3374 = vmatpush1.msra.mxu0 0.0
  %3375 = vmatprep.mubr.f32.mxu0 0.0
  %3376 = vmatmul.mubr.f32.gmra.mrb[0].mxu0 %v2749
  %v3377 = vpop.f32.mrb[0].mxu0
  %v3378 = vadd.f32 0.0, %v3377
  %v3379 = vpop.f32.mrb[0].mxu0
  %3380 = vdwg.mxu0
  %v3381 = vadd.f32 %v3310, %v3378
  %3383 = vrot.lane.b32.xlu0 %v2845, 32
  %v3384 = vpop.permute.xlu0 %3383
  %v3385 = vsel %vm672, %v3384, 0
  %3387 = vmatprep.subr.mxu0 0.0
  %3388 = vmatpush1.msra.mxu0 %v2874
  %3389 = vmatprep.subr.mxu0 0.0
  %3390 = vmatpush1.msra.mxu0 %v2875
  %3391 = vmatprep.subr.mxu0 0.0
  %3392 = vmatpush1.msra.mxu0 %v2876
  %3393 = vmatprep.subr.mxu0 0.0
  %3394 = vmatpush1.msra.mxu0 %v2877
  %3395 = vmatprep.subr.mxu0 0.0
  %3396 = vmatpush1.msra.mxu0 0.0
  %3397 = vmatprep.subr.mxu0 0.0
  %3398 = vmatpush1.msra.mxu0 0.0
  %3399 = vmatprep.subr.mxu0 0.0
  %3400 = vmatpush1.msra.mxu0 0.0
  %3401 = vmatprep.subr.mxu0 0.0
  %3402 = vmatpush1.msra.mxu0 0.0
  %3403 = vmatprep.subr.mxu0 0.0
  %3404 = vmatpush1.msra.mxu0 0.0
  %3405 = vmatprep.subr.mxu0 0.0
  %3406 = vmatpush1.msra.mxu0 0.0
  %3407 = vmatprep.subr.mxu0 0.0
  %3408 = vmatpush1.msra.mxu0 0.0
  %3409 = vmatprep.subr.mxu0 0.0
  %3410 = vmatpush1.msra.mxu0 0.0
  %3411 = vmatprep.subr.mxu0 0.0
  %3412 = vmatpush1.msra.mxu0 0.0
  %3413 = vmatprep.subr.mxu0 0.0
  %3414 = vmatpush1.msra.mxu0 0.0
  %3415 = vmatprep.subr.mxu0 0.0
  %3416 = vmatpush1.msra.mxu0 0.0
  %3417 = vmatprep.subr.mxu0 0.0
  %3418 = vmatpush1.msra.mxu0 0.0
  %3419 = vmatprep.subr.mxu0 0.0
  %3420 = vmatpush1.msra.mxu0 0.0
  %3421 = vmatprep.subr.mxu0 0.0
  %3422 = vmatpush1.msra.mxu0 0.0
  %3423 = vmatprep.subr.mxu0 0.0
  %3424 = vmatpush1.msra.mxu0 0.0
  %3425 = vmatprep.subr.mxu0 0.0
  %3426 = vmatpush1.msra.mxu0 0.0
  %3427 = vmatprep.subr.mxu0 0.0
  %3428 = vmatpush1.msra.mxu0 0.0
  %3429 = vmatprep.subr.mxu0 0.0
  %3430 = vmatpush1.msra.mxu0 0.0
  %3431 = vmatprep.subr.mxu0 0.0
  %3432 = vmatpush1.msra.mxu0 0.0
  %3433 = vmatprep.subr.mxu0 0.0
  %3434 = vmatpush1.msra.mxu0 0.0
  %3435 = vmatprep.subr.mxu0 0.0
  %3436 = vmatpush1.msra.mxu0 0.0
  %3437 = vmatprep.subr.mxu0 0.0
  %3438 = vmatpush1.msra.mxu0 0.0
  %3439 = vmatprep.subr.mxu0 0.0
  %3440 = vmatpush1.msra.mxu0 0.0
  %3441 = vmatprep.subr.mxu0 0.0
  %3442 = vmatpush1.msra.mxu0 0.0
  %3443 = vmatprep.subr.mxu0 0.0
  %3444 = vmatpush1.msra.mxu0 0.0
  %3445 = vmatprep.subr.mxu0 0.0
  %3446 = vmatpush1.msra.mxu0 0.0
  %3447 = vmatprep.subr.mxu0 0.0
  %3448 = vmatpush1.msra.mxu0 0.0
  %3449 = vmatprep.subr.mxu0 0.0
  %3450 = vmatpush1.msra.mxu0 0.0
  %3451 = vmatprep.mubr.f32.mxu0 0.0
  %3452 = vmatmul.mubr.f32.gmra.mrb[0].mxu0 %v3385
  %v3453 = vpop.f32.mrb[0].mxu0
  %v3454 = vadd.f32 0.0, %v3453
  %v3455 = vpop.f32.mrb[0].mxu0
  %3456 = vdwg.mxu0
  %v3457 = vadd.f32 %v3381, %v3454
  %v3458 = vld [vmem:[%s9] sm:$0xff]
  %v3459 = vld [vmem:[%s9 + $0x8] sm:$0xff]
  %v3460 = vld [vmem:[%s9 + $0x10] sm:$0xff]
  %v3461 = vld [vmem:[%s9 + $0x18] sm:$0xff]
  %v3462 = vld [vmem:[%s10] sm:$0x3]
  %v3464 = vlaneseq
  %v3465 = vshrl.u32 %v3464, 7
  %v3466 = vsub.s32 0, %v3465
  %v3467 = vrot.slane %v3462, %v3466
  %v3468 = vlaneseq
  %v3469 = vshrl.u32 %v3468, 7
  %v3470 = vsub.s32 1, %v3469
  %v3471 = vrot.slane %v3462, %v3470
  %vm3474 = vcmask 130048
  %v3476 = vsel %vm3474, %v3457, 0
  %3478 = vmatprep.subr.mxu0 %v3459
  %3479 = vmatpush1.msra.mxu0 %v3458
  %3480 = vmatprep.subr.mxu0 %v3461
  %3481 = vmatpush1.msra.mxu0 %v3460
  %3482 = vmatprep.subr.mxu0 0.0
  %3483 = vmatpush1.msra.mxu0 0.0
  %3484 = vmatprep.subr.mxu0 0.0
  %3485 = vmatpush1.msra.mxu0 0.0
  %3486 = vmatprep.subr.mxu0 0.0
  %3487 = vmatpush1.msra.mxu0 0.0
  %3488 = vmatprep.subr.mxu0 0.0
  %3489 = vmatpush1.msra.mxu0 0.0
  %3490 = vmatprep.subr.mxu0 0.0
  %3491 = vmatpush1.msra.mxu0 0.0
  %3492 = vmatprep.subr.mxu0 0.0
  %3493 = vmatpush1.msra.mxu0 0.0
  %3494 = vmatprep.subr.mxu0 0.0
  %3495 = vmatpush1.msra.mxu0 0.0
  %3496 = vmatprep.subr.mxu0 0.0
  %3497 = vmatpush1.msra.mxu0 0.0
  %3498 = vmatprep.subr.mxu0 0.0
  %3499 = vmatpush1.msra.mxu0 0.0
  %3500 = vmatprep.subr.mxu0 0.0
  %3501 = vmatpush1.msra.mxu0 0.0
  %3502 = vmatprep.subr.mxu0 0.0
  %3503 = vmatpush1.msra.mxu0 0.0
  %3504 = vmatprep.subr.mxu0 0.0
  %3505 = vmatpush1.msra.mxu0 0.0
  %3506 = vmatprep.subr.mxu0 0.0
  %3507 = vmatpush1.msra.mxu0 0.0
  %3508 = vmatprep.subr.mxu0 0.0
  %3509 = vmatpush1.msra.mxu0 0.0
  %3510 = vmatprep.subr.mxu0 0.0
  %3511 = vmatpush1.msra.mxu0 0.0
  %3512 = vmatprep.subr.mxu0 0.0
  %3513 = vmatpush1.msra.mxu0 0.0
  %3514 = vmatprep.subr.mxu0 0.0
  %3515 = vmatpush1.msra.mxu0 0.0
  %3516 = vmatprep.subr.mxu0 0.0
  %3517 = vmatpush1.msra.mxu0 0.0
  %3518 = vmatprep.subr.mxu0 0.0
  %3519 = vmatpush1.msra.mxu0 0.0
  %3520 = vmatprep.subr.mxu0 0.0
  %3521 = vmatpush1.msra.mxu0 0.0
  %3522 = vmatprep.subr.mxu0 0.0
  %3523 = vmatpush1.msra.mxu0 0.0
  %3524 = vmatprep.subr.mxu0 0.0
  %3525 = vmatpush1.msra.mxu0 0.0
  %3526 = vmatprep.subr.mxu0 0.0
  %3527 = vmatpush1.msra.mxu0 0.0
  %3528 = vmatprep.subr.mxu0 0.0
  %3529 = vmatpush1.msra.mxu0 0.0
  %3530 = vmatprep.subr.mxu0 0.0
  %3531 = vmatpush1.msra.mxu0 0.0
  %3532 = vmatprep.subr.mxu0 0.0
  %3533 = vmatpush1.msra.mxu0 0.0
  %3534 = vmatprep.subr.mxu0 0.0
  %3535 = vmatpush1.msra.mxu0 0.0
  %3536 = vmatprep.subr.mxu0 0.0
  %3537 = vmatpush1.msra.mxu0 0.0
  %3538 = vmatprep.subr.mxu0 0.0
  %3539 = vmatpush1.msra.mxu0 0.0
  %3540 = vmatprep.subr.mxu0 0.0
  %3541 = vmatpush1.msra.mxu0 0.0
  %3542 = vmatprep.mubr.f32.mxu0 0.0
  %3543 = vmatmul.mubr.f32.gmra.mrb[0].mxu0 %v3476
  %v3544 = vpop.f32.mrb[0].mxu0
  %v3545 = vadd.f32 %v3467, %v3544
  %v3546 = vpop.f32.mrb[0].mxu0
  %v3547 = vadd.f32 %v3471, %v3546
  %3548 = vdwg.mxu0
  %v3549 = vld [vmem:[%s11] sm:$0xff]
  %v3550 = vld [vmem:[%s11 + $0x8] sm:$0xff]
  %v3551 = vld [vmem:[%s11 + $0x10] sm:$0xff]
  %v3552 = vld [vmem:[%s11 + $0x18] sm:$0xff]
  %v3553 = vld [vmem:[%s12] sm:$0xf]
  %v3554 = vld [vmem:[%s13] sm:$0x1]
  %v3556 = vlaneseq
  %v3557 = vshrl.u32 %v3556, 7
  %v3558 = vsub.s32 0, %v3557
  %v3559 = vrot.slane %v3554, %v3558
  %v3562 = vsel %vm672, %v3545, 0
  %3564 = vmatprep.subr.mxu0 0.0
  %3565 = vmatpush1.msra.mxu0 %v3549
  %3566 = vmatprep.subr.mxu0 0.0
  %3567 = vmatpush1.msra.mxu0 %v3550
  %3568 = vmatprep.subr.mxu0 0.0
  %3569 = vmatpush1.msra.mxu0 %v3551
  %3570 = vmatprep.subr.mxu0 0.0
  %3571 = vmatpush1.msra.mxu0 %v3552
  %3572 = vmatprep.subr.mxu0 0.0
  %3573 = vmatpush1.msra.mxu0 0.0
  %3574 = vmatprep.subr.mxu0 0.0
  %3575 = vmatpush1.msra.mxu0 0.0
  %3576 = vmatprep.subr.mxu0 0.0
  %3577 = vmatpush1.msra.mxu0 0.0
  %3578 = vmatprep.subr.mxu0 0.0
  %3579 = vmatpush1.msra.mxu0 0.0
  %3580 = vmatprep.subr.mxu0 0.0
  %3581 = vmatpush1.msra.mxu0 0.0
  %3582 = vmatprep.subr.mxu0 0.0
  %3583 = vmatpush1.msra.mxu0 0.0
  %3584 = vmatprep.subr.mxu0 0.0
  %3585 = vmatpush1.msra.mxu0 0.0
  %3586 = vmatprep.subr.mxu0 0.0
  %3587 = vmatpush1.msra.mxu0 0.0
  %3588 = vmatprep.subr.mxu0 0.0
  %3589 = vmatpush1.msra.mxu0 0.0
  %3590 = vmatprep.subr.mxu0 0.0
  %3591 = vmatpush1.msra.mxu0 0.0
  %3592 = vmatprep.subr.mxu0 0.0
  %3593 = vmatpush1.msra.mxu0 0.0
  %3594 = vmatprep.subr.mxu0 0.0
  %3595 = vmatpush1.msra.mxu0 0.0
  %3596 = vmatprep.subr.mxu0 0.0
  %3597 = vmatpush1.msra.mxu0 0.0
  %3598 = vmatprep.subr.mxu0 0.0
  %3599 = vmatpush1.msra.mxu0 0.0
  %3600 = vmatprep.subr.mxu0 0.0
  %3601 = vmatpush1.msra.mxu0 0.0
  %3602 = vmatprep.subr.mxu0 0.0
  %3603 = vmatpush1.msra.mxu0 0.0
  %3604 = vmatprep.subr.mxu0 0.0
  %3605 = vmatpush1.msra.mxu0 0.0
  %3606 = vmatprep.subr.mxu0 0.0
  %3607 = vmatpush1.msra.mxu0 0.0
  %3608 = vmatprep.subr.mxu0 0.0
  %3609 = vmatpush1.msra.mxu0 0.0
  %3610 = vmatprep.subr.mxu0 0.0
  %3611 = vmatpush1.msra.mxu0 0.0
  %3612 = vmatprep.subr.mxu0 0.0
  %3613 = vmatpush1.msra.mxu0 0.0
  %3614 = vmatprep.subr.mxu0 0.0
  %3615 = vmatpush1.msra.mxu0 0.0
  %3616 = vmatprep.subr.mxu0 0.0
  %3617 = vmatpush1.msra.mxu0 0.0
  %3618 = vmatprep.subr.mxu0 0.0
  %3619 = vmatpush1.msra.mxu0 0.0
  %3620 = vmatprep.subr.mxu0 0.0
  %3621 = vmatpush1.msra.mxu0 0.0
  %3622 = vmatprep.subr.mxu0 0.0
  %3623 = vmatpush1.msra.mxu0 0.0
  %3624 = vmatprep.subr.mxu0 0.0
  %3625 = vmatpush1.msra.mxu0 0.0
  %3626 = vmatprep.subr.mxu0 0.0
  %3627 = vmatpush1.msra.mxu0 0.0
  %3628 = vmatprep.mubr.f32.mxu0 0.0
  %3629 = vmatmul.mubr.f32.gmra.mrb[0].mxu0 %v3562
  %v3630 = vpop.f32.mrb[0].mxu0
  %v3631 = vadd.f32 %v3559, %v3630
  %v3632 = vpop.f32.mrb[0].mxu0
  %3633 = vdwg.mxu0
  %3634 = vrot.lane.b32.xlu0 %v3545, 96
  %v3635 = vpop.permute.xlu0 %3634
  %v3636 = vsel %vm672, %v3635, 0
  %3638 = vmatprep.subr.mxu0 0.0
  %3639 = vmatpush1.msra.mxu0 %v3549
  %3640 = vmatprep.subr.mxu0 0.0
  %3641 = vmatpush1.msra.mxu0 %v3550
  %3642 = vmatprep.subr.mxu0 0.0
  %3643 = vmatpush1.msra.mxu0 %v3551
  %3644 = vmatprep.subr.mxu0 0.0
  %3645 = vmatpush1.msra.mxu0 %v3552
  %3646 = vmatprep.subr.mxu0 0.0
  %3647 = vmatpush1.msra.mxu0 0.0
  %3648 = vmatprep.subr.mxu0 0.0
  %3649 = vmatpush1.msra.mxu0 0.0
  %3650 = vmatprep.subr.mxu0 0.0
  %3651 = vmatpush1.msra.mxu0 0.0
  %3652 = vmatprep.subr.mxu0 0.0
  %3653 = vmatpush1.msra.mxu0 0.0
  %3654 = vmatprep.subr.mxu0 0.0
  %3655 = vmatpush1.msra.mxu0 0.0
  %3656 = vmatprep.subr.mxu0 0.0
  %3657 = vmatpush1.msra.mxu0 0.0
  %3658 = vmatprep.subr.mxu0 0.0
  %3659 = vmatpush1.msra.mxu0 0.0
  %3660 = vmatprep.subr.mxu0 0.0
  %3661 = vmatpush1.msra.mxu0 0.0
  %3662 = vmatprep.subr.mxu0 0.0
  %3663 = vmatpush1.msra.mxu0 0.0
  %3664 = vmatprep.subr.mxu0 0.0
  %3665 = vmatpush1.msra.mxu0 0.0
  %3666 = vmatprep.subr.mxu0 0.0
  %3667 = vmatpush1.msra.mxu0 0.0
  %3668 = vmatprep.subr.mxu0 0.0
  %3669 = vmatpush1.msra.mxu0 0.0
  %3670 = vmatprep.subr.mxu0 0.0
  %3671 = vmatpush1.msra.mxu0 0.0
  %3672 = vmatprep.subr.mxu0 0.0
  %3673 = vmatpush1.msra.mxu0 0.0
  %3674 = vmatprep.subr.mxu0 0.0
  %3675 = vmatpush1.msra.mxu0 0.0
  %3676 = vmatprep.subr.mxu0 0.0
  %3677 = vmatpush1.msra.mxu0 0.0
  %3678 = vmatprep.subr.mxu0 0.0
  %3679 = vmatpush1.msra.mxu0 0.0
  %3680 = vmatprep.subr.mxu0 0.0
  %3681 = vmatpush1.msra.mxu0 0.0
  %3682 = vmatprep.subr.mxu0 0.0
  %3683 = vmatpush1.msra.mxu0 0.0
  %3684 = vmatprep.subr.mxu0 0.0
  %3685 = vmatpush1.msra.mxu0 0.0
  %3686 = vmatprep.subr.mxu0 0.0
  %3687 = vmatpush1.msra.mxu0 0.0
  %3688 = vmatprep.subr.mxu0 0.0
  %3689 = vmatpush1.msra.mxu0 0.0
  %3690 = vmatprep.subr.mxu0 0.0
  %3691 = vmatpush1.msra.mxu0 0.0
  %3692 = vmatprep.subr.mxu0 0.0
  %3693 = vmatpush1.msra.mxu0 0.0
  %3694 = vmatprep.subr.mxu0 0.0
  %3695 = vmatpush1.msra.mxu0 0.0
  %3696 = vmatprep.subr.mxu0 0.0
  %3697 = vmatpush1.msra.mxu0 0.0
  %3698 = vmatprep.subr.mxu0 0.0
  %3699 = vmatpush1.msra.mxu0 0.0
  %3700 = vmatprep.subr.mxu0 0.0
  %3701 = vmatpush1.msra.mxu0 0.0
  %3702 = vmatprep.mubr.f32.mxu0 0.0
  %3703 = vmatmul.mubr.f32.gmra.mrb[0].mxu0 %v3636
  %v3704 = vpop.f32.mrb[0].mxu0
  %v3705 = vadd.f32 %v3559, %v3704
  %v3706 = vpop.f32.mrb[0].mxu0
  %3707 = vdwg.mxu0
  %3708 = vrot.lane.b32.xlu0 %v3545, 64
  %v3709 = vpop.permute.xlu0 %3708
  %v3710 = vsel %vm672, %v3709, 0
  %3712 = vmatprep.subr.mxu0 0.0
  %3713 = vmatpush1.msra.mxu0 %v3549
  %3714 = vmatprep.subr.mxu0 0.0
  %3715 = vmatpush1.msra.mxu0 %v3550
  %3716 = vmatprep.subr.mxu0 0.0
  %3717 = vmatpush1.msra.mxu0 %v3551
  %3718 = vmatprep.subr.mxu0 0.0
  %3719 = vmatpush1.msra.mxu0 %v3552
  %3720 = vmatprep.subr.mxu0 0.0
  %3721 = vmatpush1.msra.mxu0 0.0
  %3722 = vmatprep.subr.mxu0 0.0
  %3723 = vmatpush1.msra.mxu0 0.0
  %3724 = vmatprep.subr.mxu0 0.0
  %3725 = vmatpush1.msra.mxu0 0.0
  %3726 = vmatprep.subr.mxu0 0.0
  %3727 = vmatpush1.msra.mxu0 0.0
  %3728 = vmatprep.subr.mxu0 0.0
  %3729 = vmatpush1.msra.mxu0 0.0
  %3730 = vmatprep.subr.mxu0 0.0
  %3731 = vmatpush1.msra.mxu0 0.0
  %3732 = vmatprep.subr.mxu0 0.0
  %3733 = vmatpush1.msra.mxu0 0.0
  %3734 = vmatprep.subr.mxu0 0.0
  %3735 = vmatpush1.msra.mxu0 0.0
  %3736 = vmatprep.subr.mxu0 0.0
  %3737 = vmatpush1.msra.mxu0 0.0
  %3738 = vmatprep.subr.mxu0 0.0
  %3739 = vmatpush1.msra.mxu0 0.0
  %3740 = vmatprep.subr.mxu0 0.0
  %3741 = vmatpush1.msra.mxu0 0.0
  %3742 = vmatprep.subr.mxu0 0.0
  %3743 = vmatpush1.msra.mxu0 0.0
  %3744 = vmatprep.subr.mxu0 0.0
  %3745 = vmatpush1.msra.mxu0 0.0
  %3746 = vmatprep.subr.mxu0 0.0
  %3747 = vmatpush1.msra.mxu0 0.0
  %3748 = vmatprep.subr.mxu0 0.0
  %3749 = vmatpush1.msra.mxu0 0.0
  %3750 = vmatprep.subr.mxu0 0.0
  %3751 = vmatpush1.msra.mxu0 0.0
  %3752 = vmatprep.subr.mxu0 0.0
  %3753 = vmatpush1.msra.mxu0 0.0
  %3754 = vmatprep.subr.mxu0 0.0
  %3755 = vmatpush1.msra.mxu0 0.0
  %3756 = vmatprep.subr.mxu0 0.0
  %3757 = vmatpush1.msra.mxu0 0.0
  %3758 = vmatprep.subr.mxu0 0.0
  %3759 = vmatpush1.msra.mxu0 0.0
  %3760 = vmatprep.subr.mxu0 0.0
  %3761 = vmatpush1.msra.mxu0 0.0
  %3762 = vmatprep.subr.mxu0 0.0
  %3763 = vmatpush1.msra.mxu0 0.0
  %3764 = vmatprep.subr.mxu0 0.0
  %3765 = vmatpush1.msra.mxu0 0.0
  %3766 = vmatprep.subr.mxu0 0.0
  %3767 = vmatpush1.msra.mxu0 0.0
  %3768 = vmatprep.subr.mxu0 0.0
  %3769 = vmatpush1.msra.mxu0 0.0
  %3770 = vmatprep.subr.mxu0 0.0
  %3771 = vmatpush1.msra.mxu0 0.0
  %3772 = vmatprep.subr.mxu0 0.0
  %3773 = vmatpush1.msra.mxu0 0.0
  %3774 = vmatprep.subr.mxu0 0.0
  %3775 = vmatpush1.msra.mxu0 0.0
  %3776 = vmatprep.mubr.f32.mxu0 0.0
  %3777 = vmatmul.mubr.f32.gmra.mrb[0].mxu0 %v3710
  %v3778 = vpop.f32.mrb[0].mxu0
  %v3779 = vadd.f32 %v3559, %v3778
  %v3780 = vpop.f32.mrb[0].mxu0
  %3781 = vdwg.mxu0
  %3782 = vrot.lane.b32.xlu0 %v3545, 32
  %v3783 = vpop.permute.xlu0 %3782
  %v3784 = vsel %vm672, %v3783, 0
  %3786 = vmatprep.subr.mxu0 0.0
  %3787 = vmatpush1.msra.mxu0 %v3549
  %3788 = vmatprep.subr.mxu0 0.0
  %3789 = vmatpush1.msra.mxu0 %v3550
  %3790 = vmatprep.subr.mxu0 0.0
  %3791 = vmatpush1.msra.mxu0 %v3551
  %3792 = vmatprep.subr.mxu0 0.0
  %3793 = vmatpush1.msra.mxu0 %v3552
  %3794 = vmatprep.subr.mxu0 0.0
  %3795 = vmatpush1.msra.mxu0 0.0
  %3796 = vmatprep.subr.mxu0 0.0
  %3797 = vmatpush1.msra.mxu0 0.0
  %3798 = vmatprep.subr.mxu0 0.0
  %3799 = vmatpush1.msra.mxu0 0.0
  %3800 = vmatprep.subr.mxu0 0.0
  %3801 = vmatpush1.msra.mxu0 0.0
  %3802 = vmatprep.subr.mxu0 0.0
  %3803 = vmatpush1.msra.mxu0 0.0
  %3804 = vmatprep.subr.mxu0 0.0
  %3805 = vmatpush1.msra.mxu0 0.0
  %3806 = vmatprep.subr.mxu0 0.0
  %3807 = vmatpush1.msra.mxu0 0.0
  %3808 = vmatprep.subr.mxu0 0.0
  %3809 = vmatpush1.msra.mxu0 0.0
  %3810 = vmatprep.subr.mxu0 0.0
  %3811 = vmatpush1.msra.mxu0 0.0
  %3812 = vmatprep.subr.mxu0 0.0
  %3813 = vmatpush1.msra.mxu0 0.0
  %3814 = vmatprep.subr.mxu0 0.0
  %3815 = vmatpush1.msra.mxu0 0.0
  %3816 = vmatprep.subr.mxu0 0.0
  %3817 = vmatpush1.msra.mxu0 0.0
  %3818 = vmatprep.subr.mxu0 0.0
  %3819 = vmatpush1.msra.mxu0 0.0
  %3820 = vmatprep.subr.mxu0 0.0
  %3821 = vmatpush1.msra.mxu0 0.0
  %3822 = vmatprep.subr.mxu0 0.0
  %3823 = vmatpush1.msra.mxu0 0.0
  %3824 = vmatprep.subr.mxu0 0.0
  %3825 = vmatpush1.msra.mxu0 0.0
  %3826 = vmatprep.subr.mxu0 0.0
  %3827 = vmatpush1.msra.mxu0 0.0
  %3828 = vmatprep.subr.mxu0 0.0
  %3829 = vmatpush1.msra.mxu0 0.0
  %3830 = vmatprep.subr.mxu0 0.0
  %3831 = vmatpush1.msra.mxu0 0.0
  %3832 = vmatprep.subr.mxu0 0.0
  %3833 = vmatpush1.msra.mxu0 0.0
  %3834 = vmatprep.subr.mxu0 0.0
  %3835 = vmatpush1.msra.mxu0 0.0
  %3836 = vmatprep.subr.mxu0 0.0
  %3837 = vmatpush1.msra.mxu0 0.0
  %3838 = vmatprep.subr.mxu0 0.0
  %3839 = vmatpush1.msra.mxu0 0.0
  %3840 = vmatprep.subr.mxu0 0.0
  %3841 = vmatpush1.msra.mxu0 0.0
  %3842 = vmatprep.subr.mxu0 0.0
  %3843 = vmatpush1.msra.mxu0 0.0
  %3844 = vmatprep.subr.mxu0 0.0
  %3845 = vmatpush1.msra.mxu0 0.0
  %3846 = vmatprep.subr.mxu0 0.0
  %3847 = vmatpush1.msra.mxu0 0.0
  %3848 = vmatprep.subr.mxu0 0.0
  %3849 = vmatpush1.msra.mxu0 0.0
  %3850 = vmatprep.mubr.f32.mxu0 0.0
  %3851 = vmatmul.mubr.f32.gmra.mrb[0].mxu0 %v3784
  %v3852 = vpop.f32.mrb[0].mxu0
  %v3853 = vadd.f32 %v3559, %v3852
  %v3854 = vpop.f32.mrb[0].mxu0
  %3855 = vdwg.mxu0
  %v3857 = vsel %vm672, %v3547, 0
  %3859 = vmatprep.subr.mxu0 0.0
  %3860 = vmatpush1.msra.mxu0 %v3549
  %3861 = vmatprep.subr.mxu0 0.0
  %3862 = vmatpush1.msra.mxu0 %v3550
  %3863 = vmatprep.subr.mxu0 0.0
  %3864 = vmatpush1.msra.mxu0 %v3551
  %3865 = vmatprep.subr.mxu0 0.0
  %3866 = vmatpush1.msra.mxu0 %v3552
  %3867 = vmatprep.subr.mxu0 0.0
  %3868 = vmatpush1.msra.mxu0 0.0
  %3869 = vmatprep.subr.mxu0 0.0
  %3870 = vmatpush1.msra.mxu0 0.0
  %3871 = vmatprep.subr.mxu0 0.0
  %3872 = vmatpush1.msra.mxu0 0.0
  %3873 = vmatprep.subr.mxu0 0.0
  %3874 = vmatpush1.msra.mxu0 0.0
  %3875 = vmatprep.subr.mxu0 0.0
  %3876 = vmatpush1.msra.mxu0 0.0
  %3877 = vmatprep.subr.mxu0 0.0
  %3878 = vmatpush1.msra.mxu0 0.0
  %3879 = vmatprep.subr.mxu0 0.0
  %3880 = vmatpush1.msra.mxu0 0.0
  %3881 = vmatprep.subr.mxu0 0.0
  %3882 = vmatpush1.msra.mxu0 0.0
  %3883 = vmatprep.subr.mxu0 0.0
  %3884 = vmatpush1.msra.mxu0 0.0
  %3885 = vmatprep.subr.mxu0 0.0
  %3886 = vmatpush1.msra.mxu0 0.0
  %3887 = vmatprep.subr.mxu0 0.0
  %3888 = vmatpush1.msra.mxu0 0.0
  %3889 = vmatprep.subr.mxu0 0.0
  %3890 = vmatpush1.msra.mxu0 0.0
  %3891 = vmatprep.subr.mxu0 0.0
  %3892 = vmatpush1.msra.mxu0 0.0
  %3893 = vmatprep.subr.mxu0 0.0
  %3894 = vmatpush1.msra.mxu0 0.0
  %3895 = vmatprep.subr.mxu0 0.0
  %3896 = vmatpush1.msra.mxu0 0.0
  %3897 = vmatprep.subr.mxu0 0.0
  %3898 = vmatpush1.msra.mxu0 0.0
  %3899 = vmatprep.subr.mxu0 0.0
  %3900 = vmatpush1.msra.mxu0 0.0
  %3901 = vmatprep.subr.mxu0 0.0
  %3902 = vmatpush1.msra.mxu0 0.0
  %3903 = vmatprep.subr.mxu0 0.0
  %3904 = vmatpush1.msra.mxu0 0.0
  %3905 = vmatprep.subr.mxu0 0.0
  %3906 = vmatpush1.msra.mxu0 0.0
  %3907 = vmatprep.subr.mxu0 0.0
  %3908 = vmatpush1.msra.mxu0 0.0
  %3909 = vmatprep.subr.mxu0 0.0
  %3910 = vmatpush1.msra.mxu0 0.0
  %3911 = vmatprep.subr.mxu0 0.0
  %3912 = vmatpush1.msra.mxu0 0.0
  %3913 = vmatprep.subr.mxu0 0.0
  %3914 = vmatpush1.msra.mxu0 0.0
  %3915 = vmatprep.subr.mxu0 0.0
  %3916 = vmatpush1.msra.mxu0 0.0
  %3917 = vmatprep.subr.mxu0 0.0
  %3918 = vmatpush1.msra.mxu0 0.0
  %3919 = vmatprep.subr.mxu0 0.0
  %3920 = vmatpush1.msra.mxu0 0.0
  %3921 = vmatprep.subr.mxu0 0.0
  %3922 = vmatpush1.msra.mxu0 0.0
  %3923 = vmatprep.mubr.f32.mxu0 0.0
  %3924 = vmatmul.mubr.f32.gmra.mrb[0].mxu0 %v3857
  %v3925 = vpop.f32.mrb[0].mxu0
  %v3926 = vadd.f32 %v3559, %v3925
  %v3927 = vpop.f32.mrb[0].mxu0
  %3928 = vdwg.mxu0
  %3929 = vrot.lane.b32.xlu0 %v3547, 96
  %v3930 = vpop.permute.xlu0 %3929
  %v3931 = vsel %vm672, %v3930, 0
  %3933 = vmatprep.subr.mxu0 0.0
  %3934 = vmatpush1.msra.mxu0 %v3549
  %3935 = vmatprep.subr.mxu0 0.0
  %3936 = vmatpush1.msra.mxu0 %v3550
  %3937 = vmatprep.subr.mxu0 0.0
  %3938 = vmatpush1.msra.mxu0 %v3551
  %3939 = vmatprep.subr.mxu0 0.0
  %3940 = vmatpush1.msra.mxu0 %v3552
  %3941 = vmatprep.subr.mxu0 0.0
  %3942 = vmatpush1.msra.mxu0 0.0
  %3943 = vmatprep.subr.mxu0 0.0
  %3944 = vmatpush1.msra.mxu0 0.0
  %3945 = vmatprep.subr.mxu0 0.0
  %3946 = vmatpush1.msra.mxu0 0.0
  %3947 = vmatprep.subr.mxu0 0.0
  %3948 = vmatpush1.msra.mxu0 0.0
  %3949 = vmatprep.subr.mxu0 0.0
  %3950 = vmatpush1.msra.mxu0 0.0
  %3951 = vmatprep.subr.mxu0 0.0
  %3952 = vmatpush1.msra.mxu0 0.0
  %3953 = vmatprep.subr.mxu0 0.0
  %3954 = vmatpush1.msra.mxu0 0.0
  %3955 = vmatprep.subr.mxu0 0.0
  %3956 = vmatpush1.msra.mxu0 0.0
  %3957 = vmatprep.subr.mxu0 0.0
  %3958 = vmatpush1.msra.mxu0 0.0
  %3959 = vmatprep.subr.mxu0 0.0
  %3960 = vmatpush1.msra.mxu0 0.0
  %3961 = vmatprep.subr.mxu0 0.0
  %3962 = vmatpush1.msra.mxu0 0.0
  %3963 = vmatprep.subr.mxu0 0.0
  %3964 = vmatpush1.msra.mxu0 0.0
  %3965 = vmatprep.subr.mxu0 0.0
  %3966 = vmatpush1.msra.mxu0 0.0
  %3967 = vmatprep.subr.mxu0 0.0
  %3968 = vmatpush1.msra.mxu0 0.0
  %3969 = vmatprep.subr.mxu0 0.0
  %3970 = vmatpush1.msra.mxu0 0.0
  %3971 = vmatprep.subr.mxu0 0.0
  %3972 = vmatpush1.msra.mxu0 0.0
  %3973 = vmatprep.subr.mxu0 0.0
  %3974 = vmatpush1.msra.mxu0 0.0
  %3975 = vmatprep.subr.mxu0 0.0
  %3976 = vmatpush1.msra.mxu0 0.0
  %3977 = vmatprep.subr.mxu0 0.0
  %3978 = vmatpush1.msra.mxu0 0.0
  %3979 = vmatprep.subr.mxu0 0.0
  %3980 = vmatpush1.msra.mxu0 0.0
  %3981 = vmatprep.subr.mxu0 0.0
  %3982 = vmatpush1.msra.mxu0 0.0
  %3983 = vmatprep.subr.mxu0 0.0
  %3984 = vmatpush1.msra.mxu0 0.0
  %3985 = vmatprep.subr.mxu0 0.0
  %3986 = vmatpush1.msra.mxu0 0.0
  %3987 = vmatprep.subr.mxu0 0.0
  %3988 = vmatpush1.msra.mxu0 0.0
  %3989 = vmatprep.subr.mxu0 0.0
  %3990 = vmatpush1.msra.mxu0 0.0
  %3991 = vmatprep.subr.mxu0 0.0
  %3992 = vmatpush1.msra.mxu0 0.0
  %3993 = vmatprep.subr.mxu0 0.0
  %3994 = vmatpush1.msra.mxu0 0.0
  %3995 = vmatprep.subr.mxu0 0.0
  %3996 = vmatpush1.msra.mxu0 0.0
  %3997 = vmatprep.mubr.f32.mxu0 0.0
  %3998 = vmatmul.mubr.f32.gmra.mrb[0].mxu0 %v3931
  %v3999 = vpop.f32.mrb[0].mxu0
  %v4000 = vadd.f32 %v3559, %v3999
  %v4001 = vpop.f32.mrb[0].mxu0
  %4002 = vdwg.mxu0
  %4003 = vrot.lane.b32.xlu0 %v3547, 64
  %v4004 = vpop.permute.xlu0 %4003
  %v4005 = vsel %vm672, %v4004, 0
  %4007 = vmatprep.subr.mxu0 0.0
  %4008 = vmatpush1.msra.mxu0 %v3549
  %4009 = vmatprep.subr.mxu0 0.0
  %4010 = vmatpush1.msra.mxu0 %v3550
  %4011 = vmatprep.subr.mxu0 0.0
  %4012 = vmatpush1.msra.mxu0 %v3551
  %4013 = vmatprep.subr.mxu0 0.0
  %4014 = vmatpush1.msra.mxu0 %v3552
  %4015 = vmatprep.subr.mxu0 0.0
  %4016 = vmatpush1.msra.mxu0 0.0
  %4017 = vmatprep.subr.mxu0 0.0
  %4018 = vmatpush1.msra.mxu0 0.0
  %4019 = vmatprep.subr.mxu0 0.0
  %4020 = vmatpush1.msra.mxu0 0.0
  %4021 = vmatprep.subr.mxu0 0.0
  %4022 = vmatpush1.msra.mxu0 0.0
  %4023 = vmatprep.subr.mxu0 0.0
  %4024 = vmatpush1.msra.mxu0 0.0
  %4025 = vmatprep.subr.mxu0 0.0
  %4026 = vmatpush1.msra.mxu0 0.0
  %4027 = vmatprep.subr.mxu0 0.0
  %4028 = vmatpush1.msra.mxu0 0.0
  %4029 = vmatprep.subr.mxu0 0.0
  %4030 = vmatpush1.msra.mxu0 0.0
  %4031 = vmatprep.subr.mxu0 0.0
  %4032 = vmatpush1.msra.mxu0 0.0
  %4033 = vmatprep.subr.mxu0 0.0
  %4034 = vmatpush1.msra.mxu0 0.0
  %4035 = vmatprep.subr.mxu0 0.0
  %4036 = vmatpush1.msra.mxu0 0.0
  %4037 = vmatprep.subr.mxu0 0.0
  %4038 = vmatpush1.msra.mxu0 0.0
  %4039 = vmatprep.subr.mxu0 0.0
  %4040 = vmatpush1.msra.mxu0 0.0
  %4041 = vmatprep.subr.mxu0 0.0
  %4042 = vmatpush1.msra.mxu0 0.0
  %4043 = vmatprep.subr.mxu0 0.0
  %4044 = vmatpush1.msra.mxu0 0.0
  %4045 = vmatprep.subr.mxu0 0.0
  %4046 = vmatpush1.msra.mxu0 0.0
  %4047 = vmatprep.subr.mxu0 0.0
  %4048 = vmatpush1.msra.mxu0 0.0
  %4049 = vmatprep.subr.mxu0 0.0
  %4050 = vmatpush1.msra.mxu0 0.0
  %4051 = vmatprep.subr.mxu0 0.0
  %4052 = vmatpush1.msra.mxu0 0.0
  %4053 = vmatprep.subr.mxu0 0.0
  %4054 = vmatpush1.msra.mxu0 0.0
  %4055 = vmatprep.subr.mxu0 0.0
  %4056 = vmatpush1.msra.mxu0 0.0
  %4057 = vmatprep.subr.mxu0 0.0
  %4058 = vmatpush1.msra.mxu0 0.0
  %4059 = vmatprep.subr.mxu0 0.0
  %4060 = vmatpush1.msra.mxu0 0.0
  %4061 = vmatprep.subr.mxu0 0.0
  %4062 = vmatpush1.msra.mxu0 0.0
  %4063 = vmatprep.subr.mxu0 0.0
  %4064 = vmatpush1.msra.mxu0 0.0
  %4065 = vmatprep.subr.mxu0 0.0
  %4066 = vmatpush1.msra.mxu0 0.0
  %4067 = vmatprep.subr.mxu0 0.0
  %4068 = vmatpush1.msra.mxu0 0.0
  %4069 = vmatprep.subr.mxu0 0.0
  %4070 = vmatpush1.msra.mxu0 0.0
  %4071 = vmatprep.mubr.f32.mxu0 0.0
  %4072 = vmatmul.mubr.f32.gmra.mrb[0].mxu0 %v4005
  %v4073 = vpop.f32.mrb[0].mxu0
  %v4074 = vadd.f32 %v3559, %v4073
  %v4075 = vpop.f32.mrb[0].mxu0
  %4076 = vdwg.mxu0
  %4077 = vrot.lane.b32.xlu0 %v3547, 32
  %v4078 = vpop.permute.xlu0 %4077
  %v4079 = vsel %vm672, %v4078, 0
  %4081 = vmatprep.subr.mxu0 0.0
  %4082 = vmatpush1.msra.mxu0 %v3549
  %4083 = vmatprep.subr.mxu0 0.0
  %4084 = vmatpush1.msra.mxu0 %v3550
  %4085 = vmatprep.subr.mxu0 0.0
  %4086 = vmatpush1.msra.mxu0 %v3551
  %4087 = vmatprep.subr.mxu0 0.0
  %4088 = vmatpush1.msra.mxu0 %v3552
  %4089 = vmatprep.subr.mxu0 0.0
  %4090 = vmatpush1.msra.mxu0 0.0
  %4091 = vmatprep.subr.mxu0 0.0
  %4092 = vmatpush1.msra.mxu0 0.0
  %4093 = vmatprep.subr.mxu0 0.0
  %4094 = vmatpush1.msra.mxu0 0.0
  %4095 = vmatprep.subr.mxu0 0.0
  %4096 = vmatpush1.msra.mxu0 0.0
  %4097 = vmatprep.subr.mxu0 0.0
  %4098 = vmatpush1.msra.mxu0 0.0
  %4099 = vmatprep.subr.mxu0 0.0
  %4100 = vmatpush1.msra.mxu0 0.0
  %4101 = vmatprep.subr.mxu0 0.0
  %4102 = vmatpush1.msra.mxu0 0.0
  %4103 = vmatprep.subr.mxu0 0.0
  %4104 = vmatpush1.msra.mxu0 0.0
  %4105 = vmatprep.subr.mxu0 0.0
  %4106 = vmatpush1.msra.mxu0 0.0
  %4107 = vmatprep.subr.mxu0 0.0
  %4108 = vmatpush1.msra.mxu0 0.0
  %4109 = vmatprep.subr.mxu0 0.0
  %4110 = vmatpush1.msra.mxu0 0.0
  %4111 = vmatprep.subr.mxu0 0.0
  %4112 = vmatpush1.msra.mxu0 0.0
  %4113 = vmatprep.subr.mxu0 0.0
  %4114 = vmatpush1.msra.mxu0 0.0
  %4115 = vmatprep.subr.mxu0 0.0
  %4116 = vmatpush1.msra.mxu0 0.0
  %4117 = vmatprep.subr.mxu0 0.0
  %4118 = vmatpush1.msra.mxu0 0.0
  %4119 = vmatprep.subr.mxu0 0.0
  %4120 = vmatpush1.msra.mxu0 0.0
  %4121 = vmatprep.subr.mxu0 0.0
  %4122 = vmatpush1.msra.mxu0 0.0
  %4123 = vmatprep.subr.mxu0 0.0
  %4124 = vmatpush1.msra.mxu0 0.0
  %4125 = vmatprep.subr.mxu0 0.0
  %4126 = vmatpush1.msra.mxu0 0.0
  %4127 = vmatprep.subr.mxu0 0.0
  %4128 = vmatpush1.msra.mxu0 0.0
  %4129 = vmatprep.subr.mxu0 0.0
  %4130 = vmatpush1.msra.mxu0 0.0
  %4131 = vmatprep.subr.mxu0 0.0
  %4132 = vmatpush1.msra.mxu0 0.0
  %4133 = vmatprep.subr.mxu0 0.0
  %4134 = vmatpush1.msra.mxu0 0.0
  %4135 = vmatprep.subr.mxu0 0.0
  %4136 = vmatpush1.msra.mxu0 0.0
  %4137 = vmatprep.subr.mxu0 0.0
  %4138 = vmatpush1.msra.mxu0 0.0
  %4139 = vmatprep.subr.mxu0 0.0
  %4140 = vmatpush1.msra.mxu0 0.0
  %4141 = vmatprep.subr.mxu0 0.0
  %4142 = vmatpush1.msra.mxu0 0.0
  %4143 = vmatprep.subr.mxu0 0.0
  %4144 = vmatpush1.msra.mxu0 0.0
  %4145 = vmatprep.mubr.f32.mxu0 0.0
  %4146 = vmatmul.mubr.f32.gmra.mrb[0].mxu0 %v4079
  %v4147 = vpop.f32.mrb[0].mxu0
  %v4148 = vadd.f32 %v3559, %v4147
  %v4149 = vpop.f32.mrb[0].mxu0
  %4150 = vdwg.mxu0
  %v4151 = vsel %vm83, 0.0, 0
  %v4154 = vsel %vm87, %v3553, 0
  %4156 = vmatprep.subr.mxu0 0.0
  %4157 = vmatpush1.msra.mxu0 %v4154
  %4158 = vmatprep.subr.mxu0 0.0
  %4159 = vmatpush1.msra.mxu0 0.0
  %4160 = vmatprep.subr.mxu0 0.0
  %4161 = vmatpush1.msra.mxu0 0.0
  %4162 = vmatprep.subr.mxu0 0.0
  %4163 = vmatpush1.msra.mxu0 0.0
  %4164 = vmatprep.subr.mxu0 0.0
  %4165 = vmatpush1.msra.mxu0 0.0
  %4166 = vmatprep.subr.mxu0 0.0
  %4167 = vmatpush1.msra.mxu0 0.0
  %4168 = vmatprep.subr.mxu0 0.0
  %4169 = vmatpush1.msra.mxu0 0.0
  %4170 = vmatprep.subr.mxu0 0.0
  %4171 = vmatpush1.msra.mxu0 0.0
  %4172 = vmatprep.subr.mxu0 0.0
  %4173 = vmatpush1.msra.mxu0 0.0
  %4174 = vmatprep.subr.mxu0 0.0
  %4175 = vmatpush1.msra.mxu0 0.0
  %4176 = vmatprep.subr.mxu0 0.0
  %4177 = vmatpush1.msra.mxu0 0.0
  %4178 = vmatprep.subr.mxu0 0.0
  %4179 = vmatpush1.msra.mxu0 0.0
  %4180 = vmatprep.subr.mxu0 0.0
  %4181 = vmatpush1.msra.mxu0 0.0
  %4182 = vmatprep.subr.mxu0 0.0
  %4183 = vmatpush1.msra.mxu0 0.0
  %4184 = vmatprep.subr.mxu0 0.0
  %4185 = vmatpush1.msra.mxu0 0.0
  %4186 = vmatprep.subr.mxu0 0.0
  %4187 = vmatpush1.msra.mxu0 0.0
  %4188 = vmatprep.subr.mxu0 0.0
  %4189 = vmatpush1.msra.mxu0 0.0
  %4190 = vmatprep.subr.mxu0 0.0
  %4191 = vmatpush1.msra.mxu0 0.0
  %4192 = vmatprep.subr.mxu0 0.0
  %4193 = vmatpush1.msra.mxu0 0.0
  %4194 = vmatprep.subr.mxu0 0.0
  %4195 = vmatpush1.msra.mxu0 0.0
  %4196 = vmatprep.subr.mxu0 0.0
  %4197 = vmatpush1.msra.mxu0 0.0
  %4198 = vmatprep.subr.mxu0 0.0
  %4199 = vmatpush1.msra.mxu0 0.0
  %4200 = vmatprep.subr.mxu0 0.0
  %4201 = vmatpush1.msra.mxu0 0.0
  %4202 = vmatprep.subr.mxu0 0.0
  %4203 = vmatpush1.msra.mxu0 0.0
  %4204 = vmatprep.subr.mxu0 0.0
  %4205 = vmatpush1.msra.mxu0 0.0
  %4206 = vmatprep.subr.mxu0 0.0
  %4207 = vmatpush1.msra.mxu0 0.0
  %4208 = vmatprep.subr.mxu0 0.0
  %4209 = vmatpush1.msra.mxu0 0.0
  %4210 = vmatprep.subr.mxu0 0.0
  %4211 = vmatpush1.msra.mxu0 0.0
  %4212 = vmatprep.subr.mxu0 0.0
  %4213 = vmatpush1.msra.mxu0 0.0
  %4214 = vmatprep.subr.mxu0 0.0
  %4215 = vmatpush1.msra.mxu0 0.0
  %4216 = vmatprep.subr.mxu0 0.0
  %4217 = vmatpush1.msra.mxu0 0.0
  %4218 = vmatprep.subr.mxu0 0.0
  %4219 = vmatpush1.msra.mxu0 0.0
  %4220 = vmatprep.mubr.f32.mxu0 0.0
  %4221 = vmatmul.mubr.f32.gmra.mrb[0].mxu0 %v4151
  %v4222 = vpop.f32.mrb[0].mxu0
  %v4223 = vadd.f32 0.0, %v4222
  %v4224 = vpop.f32.mrb[0].mxu0
  %4225 = vdwg.mxu0
  %v4226 = vadd.f32 %v3631, %v4223
  %v4227 = vxor.u32 %v4226, 2147483648
  %v4228 = vmul.f32 %v4227, 1.442695
  %v4229 = vpow.pop %v4228
  %v4230 = vadd.f32 %v4229, 1.0
  %v4231 = vrcp.pop %v4230
  %v4232 = vmul.f32 1.0, %v4231
  %v4233 = vtanh.pop %v4226
  %v4234 = vmul.f32 %v4232, 0.0
  %4236 = vrot.lane.b32.xlu0 %v4233, 120
  %v4237 = vpop.permute.xlu0 %4236
  %v4239 = vmul.f32 %v4232, %v4237
  %4241 = vrot.lane.b32.xlu0 %v4239, 4
  %v4242 = vpop.permute.xlu0 %4241
  %v4244 = vadd.f32 %v4234, %v4242
  %v4245 = vtanh.pop %v4244
  %4247 = vrot.lane.b32.xlu0 %v4245, 8
  %v4248 = vpop.permute.xlu0 %4247
  %v4250 = vmul.f32 %v4232, %v4248
  %4252 = vrot.lane.b32.xlu0 %v4250, 116
  %v4253 = vpop.permute.xlu0 %4252
  %v4254 = vsel %vm83, %v4253, 0
  %4256 = vmatprep.subr.mxu0 0.0
  %4257 = vmatpush1.msra.mxu0 %v4154
  %4258 = vmatprep.subr.mxu0 0.0
  %4259 = vmatpush1.msra.mxu0 0.0
  %4260 = vmatprep.subr.mxu0 0.0
  %4261 = vmatpush1.msra.mxu0 0.0
  %4262 = vmatprep.subr.mxu0 0.0
  %4263 = vmatpush1.msra.mxu0 0.0
  %4264 = vmatprep.subr.mxu0 0.0
  %4265 = vmatpush1.msra.mxu0 0.0
  %4266 = vmatprep.subr.mxu0 0.0
  %4267 = vmatpush1.msra.mxu0 0.0
  %4268 = vmatprep.subr.mxu0 0.0
  %4269 = vmatpush1.msra.mxu0 0.0
  %4270 = vmatprep.subr.mxu0 0.0
  %4271 = vmatpush1.msra.mxu0 0.0
  %4272 = vmatprep.subr.mxu0 0.0
  %4273 = vmatpush1.msra.mxu0 0.0
  %4274 = vmatprep.subr.mxu0 0.0
  %4275 = vmatpush1.msra.mxu0 0.0
  %4276 = vmatprep.subr.mxu0 0.0
  %4277 = vmatpush1.msra.mxu0 0.0
  %4278 = vmatprep.subr.mxu0 0.0
  %4279 = vmatpush1.msra.mxu0 0.0
  %4280 = vmatprep.subr.mxu0 0.0
  %4281 = vmatpush1.msra.mxu0 0.0
  %4282 = vmatprep.subr.mxu0 0.0
  %4283 = vmatpush1.msra.mxu0 0.0
  %4284 = vmatprep.subr.mxu0 0.0
  %4285 = vmatpush1.msra.mxu0 0.0
  %4286 = vmatprep.subr.mxu0 0.0
  %4287 = vmatpush1.msra.mxu0 0.0
  %4288 = vmatprep.subr.mxu0 0.0
  %4289 = vmatpush1.msra.mxu0 0.0
  %4290 = vmatprep.subr.mxu0 0.0
  %4291 = vmatpush1.msra.mxu0 0.0
  %4292 = vmatprep.subr.mxu0 0.0
  %4293 = vmatpush1.msra.mxu0 0.0
  %4294 = vmatprep.subr.mxu0 0.0
  %4295 = vmatpush1.msra.mxu0 0.0
  %4296 = vmatprep.subr.mxu0 0.0
  %4297 = vmatpush1.msra.mxu0 0.0
  %4298 = vmatprep.subr.mxu0 0.0
  %4299 = vmatpush1.msra.mxu0 0.0
  %4300 = vmatprep.subr.mxu0 0.0
  %4301 = vmatpush1.msra.mxu0 0.0
  %4302 = vmatprep.subr.mxu0 0.0
  %4303 = vmatpush1.msra.mxu0 0.0
  %4304 = vmatprep.subr.mxu0 0.0
  %4305 = vmatpush1.msra.mxu0 0.0
  %4306 = vmatprep.subr.mxu0 0.0
  %4307 = vmatpush1.msra.mxu0 0.0
  %4308 = vmatprep.subr.mxu0 0.0
  %4309 = vmatpush1.msra.mxu0 0.0
  %4310 = vmatprep.subr.mxu0 0.0
  %4311 = vmatpush1.msra.mxu0 0.0
  %4312 = vmatprep.subr.mxu0 0.0
  %4313 = vmatpush1.msra.mxu0 0.0
  %4314 = vmatprep.subr.mxu0 0.0
  %4315 = vmatpush1.msra.mxu0 0.0
  %4316 = vmatprep.subr.mxu0 0.0
  %4317 = vmatpush1.msra.mxu0 0.0
  %4318 = vmatprep.subr.mxu0 0.0
  %4319 = vmatpush1.msra.mxu0 0.0
  %4320 = vmatprep.mubr.f32.mxu0 0.0
  %4321 = vmatmul.mubr.f32.gmra.mrb[0].mxu0 %v4254
  %v4322 = vpop.f32.mrb[0].mxu0
  %v4323 = vadd.f32 0.0, %v4322
  %v4324 = vpop.f32.mrb[0].mxu0
  %4325 = vdwg.mxu0
  %v4326 = vadd.f32 %v3705, %v4323
  %v4327 = vxor.u32 %v4326, 2147483648
  %v4328 = vmul.f32 %v4327, 1.442695
  %v4329 = vpow.pop %v4328
  %v4330 = vadd.f32 %v4329, 1.0
  %v4331 = vrcp.pop %v4330
  %v4332 = vmul.f32 1.0, %v4331
  %v4333 = vtanh.pop %v4326
  %v4334 = vmul.f32 %v4332, %v4244
  %4336 = vrot.lane.b32.xlu0 %v4333, 120
  %v4337 = vpop.permute.xlu0 %4336
  %v4339 = vmul.f32 %v4332, %v4337
  %4341 = vrot.lane.b32.xlu0 %v4339, 4
  %v4342 = vpop.permute.xlu0 %4341
  %v4344 = vadd.f32 %v4334, %v4342
  %v4345 = vtanh.pop %v4344
  %4347 = vrot.lane.b32.xlu0 %v4345, 8
  %v4348 = vpop.permute.xlu0 %4347
  %v4350 = vmul.f32 %v4332, %v4348
  %4352 = vrot.lane.b32.xlu0 %v4350, 116
  %v4353 = vpop.permute.xlu0 %4352
  %v4354 = vsel %vm83, %v4353, 0
  %4356 = vmatprep.subr.mxu0 0.0
  %4357 = vmatpush1.msra.mxu0 %v4154
  %4358 = vmatprep.subr.mxu0 0.0
  %4359 = vmatpush1.msra.mxu0 0.0
  %4360 = vmatprep.subr.mxu0 0.0
  %4361 = vmatpush1.msra.mxu0 0.0
  %4362 = vmatprep.subr.mxu0 0.0
  %4363 = vmatpush1.msra.mxu0 0.0
  %4364 = vmatprep.subr.mxu0 0.0
  %4365 = vmatpush1.msra.mxu0 0.0
  %4366 = vmatprep.subr.mxu0 0.0
  %4367 = vmatpush1.msra.mxu0 0.0
  %4368 = vmatprep.subr.mxu0 0.0
  %4369 = vmatpush1.msra.mxu0 0.0
  %4370 = vmatprep.subr.mxu0 0.0
  %4371 = vmatpush1.msra.mxu0 0.0
  %4372 = vmatprep.subr.mxu0 0.0
  %4373 = vmatpush1.msra.mxu0 0.0
  %4374 = vmatprep.subr.mxu0 0.0
  %4375 = vmatpush1.msra.mxu0 0.0
  %4376 = vmatprep.subr.mxu0 0.0
  %4377 = vmatpush1.msra.mxu0 0.0
  %4378 = vmatprep.subr.mxu0 0.0
  %4379 = vmatpush1.msra.mxu0 0.0
  %4380 = vmatprep.subr.mxu0 0.0
  %4381 = vmatpush1.msra.mxu0 0.0
  %4382 = vmatprep.subr.mxu0 0.0
  %4383 = vmatpush1.msra.mxu0 0.0
  %4384 = vmatprep.subr.mxu0 0.0
  %4385 = vmatpush1.msra.mxu0 0.0
  %4386 = vmatprep.subr.mxu0 0.0
  %4387 = vmatpush1.msra.mxu0 0.0
  %4388 = vmatprep.subr.mxu0 0.0
  %4389 = vmatpush1.msra.mxu0 0.0
  %4390 = vmatprep.subr.mxu0 0.0
  %4391 = vmatpush1.msra.mxu0 0.0
  %4392 = vmatprep.subr.mxu0 0.0
  %4393 = vmatpush1.msra.mxu0 0.0
  %4394 = vmatprep.subr.mxu0 0.0
  %4395 = vmatpush1.msra.mxu0 0.0
  %4396 = vmatprep.subr.mxu0 0.0
  %4397 = vmatpush1.msra.mxu0 0.0
  %4398 = vmatprep.subr.mxu0 0.0
  %4399 = vmatpush1.msra.mxu0 0.0
  %4400 = vmatprep.subr.mxu0 0.0
  %4401 = vmatpush1.msra.mxu0 0.0
  %4402 = vmatprep.subr.mxu0 0.0
  %4403 = vmatpush1.msra.mxu0 0.0
  %4404 = vmatprep.subr.mxu0 0.0
  %4405 = vmatpush1.msra.mxu0 0.0
  %4406 = vmatprep.subr.mxu0 0.0
  %4407 = vmatpush1.msra.mxu0 0.0
  %4408 = vmatprep.subr.mxu0 0.0
  %4409 = vmatpush1.msra.mxu0 0.0
  %4410 = vmatprep.subr.mxu0 0.0
  %4411 = vmatpush1.msra.mxu0 0.0
  %4412 = vmatprep.subr.mxu0 0.0
  %4413 = vmatpush1.msra.mxu0 0.0
  %4414 = vmatprep.subr.mxu0 0.0
  %4415 = vmatpush1.msra.mxu0 0.0
  %4416 = vmatprep.subr.mxu0 0.0
  %4417 = vmatpush1.msra.mxu0 0.0
  %4418 = vmatprep.subr.mxu0 0.0
  %4419 = vmatpush1.msra.mxu0 0.0
  %4420 = vmatprep.mubr.f32.mxu0 0.0
  %4421 = vmatmul.mubr.f32.gmra.mrb[0].mxu0 %v4354
  %v4422 = vpop.f32.mrb[0].mxu0
  %v4423 = vadd.f32 0.0, %v4422
  %v4424 = vpop.f32.mrb[0].mxu0
  %4425 = vdwg.mxu0
  %v4426 = vadd.f32 %v3779, %v4423
  %v4427 = vxor.u32 %v4426, 2147483648
  %v4428 = vmul.f32 %v4427, 1.442695
  %v4429 = vpow.pop %v4428
  %v4430 = vadd.f32 %v4429, 1.0
  %v4431 = vrcp.pop %v4430
  %v4432 = vmul.f32 1.0, %v4431
  %v4433 = vtanh.pop %v4426
  %v4434 = vmul.f32 %v4432, %v4344
  %4436 = vrot.lane.b32.xlu0 %v4433, 120
  %v4437 = vpop.permute.xlu0 %4436
  %v4439 = vmul.f32 %v4432, %v4437
  %4441 = vrot.lane.b32.xlu0 %v4439, 4
  %v4442 = vpop.permute.xlu0 %4441
  %v4444 = vadd.f32 %v4434, %v4442
  %v4445 = vtanh.pop %v4444
  %4447 = vrot.lane.b32.xlu0 %v4445, 8
  %v4448 = vpop.permute.xlu0 %4447
  %v4450 = vmul.f32 %v4432, %v4448
  %4452 = vrot.lane.b32.xlu0 %v4450, 116
  %v4453 = vpop.permute.xlu0 %4452
  %v4454 = vsel %vm83, %v4453, 0
  %4456 = vmatprep.subr.mxu0 0.0
  %4457 = vmatpush1.msra.mxu0 %v4154
  %4458 = vmatprep.subr.mxu0 0.0
  %4459 = vmatpush1.msra.mxu0 0.0
  %4460 = vmatprep.subr.mxu0 0.0
  %4461 = vmatpush1.msra.mxu0 0.0
  %4462 = vmatprep.subr.mxu0 0.0
  %4463 = vmatpush1.msra.mxu0 0.0
  %4464 = vmatprep.subr.mxu0 0.0
  %4465 = vmatpush1.msra.mxu0 0.0
  %4466 = vmatprep.subr.mxu0 0.0
  %4467 = vmatpush1.msra.mxu0 0.0
  %4468 = vmatprep.subr.mxu0 0.0
  %4469 = vmatpush1.msra.mxu0 0.0
  %4470 = vmatprep.subr.mxu0 0.0
  %4471 = vmatpush1.msra.mxu0 0.0
  %4472 = vmatprep.subr.mxu0 0.0
  %4473 = vmatpush1.msra.mxu0 0.0
  %4474 = vmatprep.subr.mxu0 0.0
  %4475 = vmatpush1.msra.mxu0 0.0
  %4476 = vmatprep.subr.mxu0 0.0
  %4477 = vmatpush1.msra.mxu0 0.0
  %4478 = vmatprep.subr.mxu0 0.0
  %4479 = vmatpush1.msra.mxu0 0.0
  %4480 = vmatprep.subr.mxu0 0.0
  %4481 = vmatpush1.msra.mxu0 0.0
  %4482 = vmatprep.subr.mxu0 0.0
  %4483 = vmatpush1.msra.mxu0 0.0
  %4484 = vmatprep.subr.mxu0 0.0
  %4485 = vmatpush1.msra.mxu0 0.0
  %4486 = vmatprep.subr.mxu0 0.0
  %4487 = vmatpush1.msra.mxu0 0.0
  %4488 = vmatprep.subr.mxu0 0.0
  %4489 = vmatpush1.msra.mxu0 0.0
  %4490 = vmatprep.subr.mxu0 0.0
  %4491 = vmatpush1.msra.mxu0 0.0
  %4492 = vmatprep.subr.mxu0 0.0
  %4493 = vmatpush1.msra.mxu0 0.0
  %4494 = vmatprep.subr.mxu0 0.0
  %4495 = vmatpush1.msra.mxu0 0.0
  %4496 = vmatprep.subr.mxu0 0.0
  %4497 = vmatpush1.msra.mxu0 0.0
  %4498 = vmatprep.subr.mxu0 0.0
  %4499 = vmatpush1.msra.mxu0 0.0
  %4500 = vmatprep.subr.mxu0 0.0
  %4501 = vmatpush1.msra.mxu0 0.0
  %4502 = vmatprep.subr.mxu0 0.0
  %4503 = vmatpush1.msra.mxu0 0.0
  %4504 = vmatprep.subr.mxu0 0.0
  %4505 = vmatpush1.msra.mxu0 0.0
  %4506 = vmatprep.subr.mxu0 0.0
  %4507 = vmatpush1.msra.mxu0 0.0
  %4508 = vmatprep.subr.mxu0 0.0
  %4509 = vmatpush1.msra.mxu0 0.0
  %4510 = vmatprep.subr.mxu0 0.0
  %4511 = vmatpush1.msra.mxu0 0.0
  %4512 = vmatprep.subr.mxu0 0.0
  %4513 = vmatpush1.msra.mxu0 0.0
  %4514 = vmatprep.subr.mxu0 0.0
  %4515 = vmatpush1.msra.mxu0 0.0
  %4516 = vmatprep.subr.mxu0 0.0
  %4517 = vmatpush1.msra.mxu0 0.0
  %4518 = vmatprep.subr.mxu0 0.0
  %4519 = vmatpush1.msra.mxu0 0.0
  %4520 = vmatprep.mubr.f32.mxu0 0.0
  %4521 = vmatmul.mubr.f32.gmra.mrb[0].mxu0 %v4454
  %v4522 = vpop.f32.mrb[0].mxu0
  %v4523 = vadd.f32 0.0, %v4522
  %v4524 = vpop.f32.mrb[0].mxu0
  %4525 = vdwg.mxu0
  %v4526 = vadd.f32 %v3853, %v4523
  %v4527 = vxor.u32 %v4526, 2147483648
  %v4528 = vmul.f32 %v4527, 1.442695
  %v4529 = vpow.pop %v4528
  %v4530 = vadd.f32 %v4529, 1.0
  %v4531 = vrcp.pop %v4530
  %v4532 = vmul.f32 1.0, %v4531
  %v4533 = vtanh.pop %v4526
  %v4534 = vmul.f32 %v4532, %v4444
  %4536 = vrot.lane.b32.xlu0 %v4533, 120
  %v4537 = vpop.permute.xlu0 %4536
  %v4539 = vmul.f32 %v4532, %v4537
  %4541 = vrot.lane.b32.xlu0 %v4539, 4
  %v4542 = vpop.permute.xlu0 %4541
  %v4544 = vadd.f32 %v4534, %v4542
  %v4545 = vtanh.pop %v4544
  %4547 = vrot.lane.b32.xlu0 %v4545, 8
  %v4548 = vpop.permute.xlu0 %4547
  %v4550 = vmul.f32 %v4532, %v4548
  %4552 = vrot.lane.b32.xlu0 %v4550, 116
  %v4553 = vpop.permute.xlu0 %4552
  %v4554 = vsel %vm83, %v4553, 0
  %4556 = vmatprep.subr.mxu0 0.0
  %4557 = vmatpush1.msra.mxu0 %v4154
  %4558 = vmatprep.subr.mxu0 0.0
  %4559 = vmatpush1.msra.mxu0 0.0
  %4560 = vmatprep.subr.mxu0 0.0
  %4561 = vmatpush1.msra.mxu0 0.0
  %4562 = vmatprep.subr.mxu0 0.0
  %4563 = vmatpush1.msra.mxu0 0.0
  %4564 = vmatprep.subr.mxu0 0.0
  %4565 = vmatpush1.msra.mxu0 0.0
  %4566 = vmatprep.subr.mxu0 0.0
  %4567 = vmatpush1.msra.mxu0 0.0
  %4568 = vmatprep.subr.mxu0 0.0
  %4569 = vmatpush1.msra.mxu0 0.0
  %4570 = vmatprep.subr.mxu0 0.0
  %4571 = vmatpush1.msra.mxu0 0.0
  %4572 = vmatprep.subr.mxu0 0.0
  %4573 = vmatpush1.msra.mxu0 0.0
  %4574 = vmatprep.subr.mxu0 0.0
  %4575 = vmatpush1.msra.mxu0 0.0
  %4576 = vmatprep.subr.mxu0 0.0
  %4577 = vmatpush1.msra.mxu0 0.0
  %4578 = vmatprep.subr.mxu0 0.0
  %4579 = vmatpush1.msra.mxu0 0.0
  %4580 = vmatprep.subr.mxu0 0.0
  %4581 = vmatpush1.msra.mxu0 0.0
  %4582 = vmatprep.subr.mxu0 0.0
  %4583 = vmatpush1.msra.mxu0 0.0
  %4584 = vmatprep.subr.mxu0 0.0
  %4585 = vmatpush1.msra.mxu0 0.0
  %4586 = vmatprep.subr.mxu0 0.0
  %4587 = vmatpush1.msra.mxu0 0.0
  %4588 = vmatprep.subr.mxu0 0.0
  %4589 = vmatpush1.msra.mxu0 0.0
  %4590 = vmatprep.subr.mxu0 0.0
  %4591 = vmatpush1.msra.mxu0 0.0
  %4592 = vmatprep.subr.mxu0 0.0
  %4593 = vmatpush1.msra.mxu0 0.0
  %4594 = vmatprep.subr.mxu0 0.0
  %4595 = vmatpush1.msra.mxu0 0.0
  %4596 = vmatprep.subr.mxu0 0.0
  %4597 = vmatpush1.msra.mxu0 0.0
  %4598 = vmatprep.subr.mxu0 0.0
  %4599 = vmatpush1.msra.mxu0 0.0
  %4600 = vmatprep.subr.mxu0 0.0
  %4601 = vmatpush1.msra.mxu0 0.0
  %4602 = vmatprep.subr.mxu0 0.0
  %4603 = vmatpush1.msra.mxu0 0.0
  %4604 = vmatprep.subr.mxu0 0.0
  %4605 = vmatpush1.msra.mxu0 0.0
  %4606 = vmatprep.subr.mxu0 0.0
  %4607 = vmatpush1.msra.mxu0 0.0
  %4608 = vmatprep.subr.mxu0 0.0
  %4609 = vmatpush1.msra.mxu0 0.0
  %4610 = vmatprep.subr.mxu0 0.0
  %4611 = vmatpush1.msra.mxu0 0.0
  %4612 = vmatprep.subr.mxu0 0.0
  %4613 = vmatpush1.msra.mxu0 0.0
  %4614 = vmatprep.subr.mxu0 0.0
  %4615 = vmatpush1.msra.mxu0 0.0
  %4616 = vmatprep.subr.mxu0 0.0
  %4617 = vmatpush1.msra.mxu0 0.0
  %4618 = vmatprep.subr.mxu0 0.0
  %4619 = vmatpush1.msra.mxu0 0.0
  %4620 = vmatprep.mubr.f32.mxu0 0.0
  %4621 = vmatmul.mubr.f32.gmra.mrb[0].mxu0 %v4554
  %v4622 = vpop.f32.mrb[0].mxu0
  %v4623 = vadd.f32 0.0, %v4622
  %v4624 = vpop.f32.mrb[0].mxu0
  %4625 = vdwg.mxu0
  %v4626 = vadd.f32 %v3926, %v4623
  %v4627 = vxor.u32 %v4626, 2147483648
  %v4628 = vmul.f32 %v4627, 1.442695
  %v4629 = vpow.pop %v4628
  %v4630 = vadd.f32 %v4629, 1.0
  %v4631 = vrcp.pop %v4630
  %v4632 = vmul.f32 1.0, %v4631
  %v4633 = vtanh.pop %v4626
  %v4634 = vmul.f32 %v4632, %v4544
  %4636 = vrot.lane.b32.xlu0 %v4633, 120
  %v4637 = vpop.permute.xlu0 %4636
  %v4639 = vmul.f32 %v4632, %v4637
  %4641 = vrot.lane.b32.xlu0 %v4639, 4
  %v4642 = vpop.permute.xlu0 %4641
  %v4644 = vadd.f32 %v4634, %v4642
  %v4645 = vtanh.pop %v4644
  %4647 = vrot.lane.b32.xlu0 %v4645, 8
  %v4648 = vpop.permute.xlu0 %4647
  %v4650 = vmul.f32 %v4632, %v4648
  %4652 = vrot.lane.b32.xlu0 %v4650, 116
  %v4653 = vpop.permute.xlu0 %4652
  %v4654 = vsel %vm83, %v4653, 0
  %4656 = vmatprep.subr.mxu0 0.0
  %4657 = vmatpush1.msra.mxu0 %v4154
  %4658 = vmatprep.subr.mxu0 0.0
  %4659 = vmatpush1.msra.mxu0 0.0
  %4660 = vmatprep.subr.mxu0 0.0
  %4661 = vmatpush1.msra.mxu0 0.0
  %4662 = vmatprep.subr.mxu0 0.0
  %4663 = vmatpush1.msra.mxu0 0.0
  %4664 = vmatprep.subr.mxu0 0.0
  %4665 = vmatpush1.msra.mxu0 0.0
  %4666 = vmatprep.subr.mxu0 0.0
  %4667 = vmatpush1.msra.mxu0 0.0
  %4668 = vmatprep.subr.mxu0 0.0
  %4669 = vmatpush1.msra.mxu0 0.0
  %4670 = vmatprep.subr.mxu0 0.0
  %4671 = vmatpush1.msra.mxu0 0.0
  %4672 = vmatprep.subr.mxu0 0.0
  %4673 = vmatpush1.msra.mxu0 0.0
  %4674 = vmatprep.subr.mxu0 0.0
  %4675 = vmatpush1.msra.mxu0 0.0
  %4676 = vmatprep.subr.mxu0 0.0
  %4677 = vmatpush1.msra.mxu0 0.0
  %4678 = vmatprep.subr.mxu0 0.0
  %4679 = vmatpush1.msra.mxu0 0.0
  %4680 = vmatprep.subr.mxu0 0.0
  %4681 = vmatpush1.msra.mxu0 0.0
  %4682 = vmatprep.subr.mxu0 0.0
  %4683 = vmatpush1.msra.mxu0 0.0
  %4684 = vmatprep.subr.mxu0 0.0
  %4685 = vmatpush1.msra.mxu0 0.0
  %4686 = vmatprep.subr.mxu0 0.0
  %4687 = vmatpush1.msra.mxu0 0.0
  %4688 = vmatprep.subr.mxu0 0.0
  %4689 = vmatpush1.msra.mxu0 0.0
  %4690 = vmatprep.subr.mxu0 0.0
  %4691 = vmatpush1.msra.mxu0 0.0
  %4692 = vmatprep.subr.mxu0 0.0
  %4693 = vmatpush1.msra.mxu0 0.0
  %4694 = vmatprep.subr.mxu0 0.0
  %4695 = vmatpush1.msra.mxu0 0.0
  %4696 = vmatprep.subr.mxu0 0.0
  %4697 = vmatpush1.msra.mxu0 0.0
  %4698 = vmatprep.subr.mxu0 0.0
  %4699 = vmatpush1.msra.mxu0 0.0
  %4700 = vmatprep.subr.mxu0 0.0
  %4701 = vmatpush1.msra.mxu0 0.0
  %4702 = vmatprep.subr.mxu0 0.0
  %4703 = vmatpush1.msra.mxu0 0.0
  %4704 = vmatprep.subr.mxu0 0.0
  %4705 = vmatpush1.msra.mxu0 0.0
  %4706 = vmatprep.subr.mxu0 0.0
  %4707 = vmatpush1.msra.mxu0 0.0
  %4708 = vmatprep.subr.mxu0 0.0
  %4709 = vmatpush1.msra.mxu0 0.0
  %4710 = vmatprep.subr.mxu0 0.0
  %4711 = vmatpush1.msra.mxu0 0.0
  %4712 = vmatprep.subr.mxu0 0.0
  %4713 = vmatpush1.msra.mxu0 0.0
  %4714 = vmatprep.subr.mxu0 0.0
  %4715 = vmatpush1.msra.mxu0 0.0
  %4716 = vmatprep.subr.mxu0 0.0
  %4717 = vmatpush1.msra.mxu0 0.0
  %4718 = vmatprep.subr.mxu0 0.0
  %4719 = vmatpush1.msra.mxu0 0.0
  %4720 = vmatprep.mubr.f32.mxu0 0.0
  %4721 = vmatmul.mubr.f32.gmra.mrb[0].mxu0 %v4654
  %v4722 = vpop.f32.mrb[0].mxu0
  %v4723 = vadd.f32 0.0, %v4722
  %v4724 = vpop.f32.mrb[0].mxu0
  %4725 = vdwg.mxu0
  %v4726 = vadd.f32 %v4000, %v4723
  %v4727 = vxor.u32 %v4726, 2147483648
  %v4728 = vmul.f32 %v4727, 1.442695
  %v4729 = vpow.pop %v4728
  %v4730 = vadd.f32 %v4729, 1.0
  %v4731 = vrcp.pop %v4730
  %v4732 = vmul.f32 1.0, %v4731
  %v4733 = vtanh.pop %v4726
  %v4734 = vmul.f32 %v4732, %v4644
  %4736 = vrot.lane.b32.xlu0 %v4733, 120
  %v4737 = vpop.permute.xlu0 %4736
  %v4739 = vmul.f32 %v4732, %v4737
  %4741 = vrot.lane.b32.xlu0 %v4739, 4
  %v4742 = vpop.permute.xlu0 %4741
  %v4744 = vadd.f32 %v4734, %v4742
  %v4745 = vtanh.pop %v4744
  %4747 = vrot.lane.b32.xlu0 %v4745, 8
  %v4748 = vpop.permute.xlu0 %4747
  %v4750 = vmul.f32 %v4732, %v4748
  %4752 = vrot.lane.b32.xlu0 %v4750, 116
  %v4753 = vpop.permute.xlu0 %4752
  %v4754 = vsel %vm83, %v4753, 0
  %4756 = vmatprep.subr.mxu0 0.0
  %4757 = vmatpush1.msra.mxu0 %v4154
  %4758 = vmatprep.subr.mxu0 0.0
  %4759 = vmatpush1.msra.mxu0 0.0
  %4760 = vmatprep.subr.mxu0 0.0
  %4761 = vmatpush1.msra.mxu0 0.0
  %4762 = vmatprep.subr.mxu0 0.0
  %4763 = vmatpush1.msra.mxu0 0.0
  %4764 = vmatprep.subr.mxu0 0.0
  %4765 = vmatpush1.msra.mxu0 0.0
  %4766 = vmatprep.subr.mxu0 0.0
  %4767 = vmatpush1.msra.mxu0 0.0
  %4768 = vmatprep.subr.mxu0 0.0
  %4769 = vmatpush1.msra.mxu0 0.0
  %4770 = vmatprep.subr.mxu0 0.0
  %4771 = vmatpush1.msra.mxu0 0.0
  %4772 = vmatprep.subr.mxu0 0.0
  %4773 = vmatpush1.msra.mxu0 0.0
  %4774 = vmatprep.subr.mxu0 0.0
  %4775 = vmatpush1.msra.mxu0 0.0
  %4776 = vmatprep.subr.mxu0 0.0
  %4777 = vmatpush1.msra.mxu0 0.0
  %4778 = vmatprep.subr.mxu0 0.0
  %4779 = vmatpush1.msra.mxu0 0.0
  %4780 = vmatprep.subr.mxu0 0.0
  %4781 = vmatpush1.msra.mxu0 0.0
  %4782 = vmatprep.subr.mxu0 0.0
  %4783 = vmatpush1.msra.mxu0 0.0
  %4784 = vmatprep.subr.mxu0 0.0
  %4785 = vmatpush1.msra.mxu0 0.0
  %4786 = vmatprep.subr.mxu0 0.0
  %4787 = vmatpush1.msra.mxu0 0.0
  %4788 = vmatprep.subr.mxu0 0.0
  %4789 = vmatpush1.msra.mxu0 0.0
  %4790 = vmatprep.subr.mxu0 0.0
  %4791 = vmatpush1.msra.mxu0 0.0
  %4792 = vmatprep.subr.mxu0 0.0
  %4793 = vmatpush1.msra.mxu0 0.0
  %4794 = vmatprep.subr.mxu0 0.0
  %4795 = vmatpush1.msra.mxu0 0.0
  %4796 = vmatprep.subr.mxu0 0.0
  %4797 = vmatpush1.msra.mxu0 0.0
  %4798 = vmatprep.subr.mxu0 0.0
  %4799 = vmatpush1.msra.mxu0 0.0
  %4800 = vmatprep.subr.mxu0 0.0
  %4801 = vmatpush1.msra.mxu0 0.0
  %4802 = vmatprep.subr.mxu0 0.0
  %4803 = vmatpush1.msra.mxu0 0.0
  %4804 = vmatprep.subr.mxu0 0.0
  %4805 = vmatpush1.msra.mxu0 0.0
  %4806 = vmatprep.subr.mxu0 0.0
  %4807 = vmatpush1.msra.mxu0 0.0
  %4808 = vmatprep.subr.mxu0 0.0
  %4809 = vmatpush1.msra.mxu0 0.0
  %4810 = vmatprep.subr.mxu0 0.0
  %4811 = vmatpush1.msra.mxu0 0.0
  %4812 = vmatprep.subr.mxu0 0.0
  %4813 = vmatpush1.msra.mxu0 0.0
  %4814 = vmatprep.subr.mxu0 0.0
  %4815 = vmatpush1.msra.mxu0 0.0
  %4816 = vmatprep.subr.mxu0 0.0
  %4817 = vmatpush1.msra.mxu0 0.0
  %4818 = vmatprep.subr.mxu0 0.0
  %4819 = vmatpush1.msra.mxu0 0.0
  %4820 = vmatprep.mubr.f32.mxu0 0.0
  %4821 = vmatmul.mubr.f32.gmra.mrb[0].mxu0 %v4754
  %v4822 = vpop.f32.mrb[0].mxu0
  %v4823 = vadd.f32 0.0, %v4822
  %v4824 = vpop.f32.mrb[0].mxu0
  %4825 = vdwg.mxu0
  %v4826 = vadd.f32 %v4074, %v4823
  %v4827 = vxor.u32 %v4826, 2147483648
  %v4828 = vmul.f32 %v4827, 1.442695
  %v4829 = vpow.pop %v4828
  %v4830 = vadd.f32 %v4829, 1.0
  %v4831 = vrcp.pop %v4830
  %v4832 = vmul.f32 1.0, %v4831
  %v4833 = vtanh.pop %v4826
  %v4834 = vmul.f32 %v4832, %v4744
  %4836 = vrot.lane.b32.xlu0 %v4833, 120
  %v4837 = vpop.permute.xlu0 %4836
  %v4839 = vmul.f32 %v4832, %v4837
  %4841 = vrot.lane.b32.xlu0 %v4839, 4
  %v4842 = vpop.permute.xlu0 %4841
  %v4844 = vadd.f32 %v4834, %v4842
  %v4845 = vtanh.pop %v4844
  %4847 = vrot.lane.b32.xlu0 %v4845, 8
  %v4848 = vpop.permute.xlu0 %4847
  %v4850 = vmul.f32 %v4832, %v4848
  %4852 = vrot.lane.b32.xlu0 %v4850, 116
  %v4853 = vpop.permute.xlu0 %4852
  %v4854 = vsel %vm83, %v4853, 0
  %4856 = vmatprep.subr.mxu0 0.0
  %4857 = vmatpush1.msra.mxu0 %v4154
  %4858 = vmatprep.subr.mxu0 0.0
  %4859 = vmatpush1.msra.mxu0 0.0
  %4860 = vmatprep.subr.mxu0 0.0
  %4861 = vmatpush1.msra.mxu0 0.0
  %4862 = vmatprep.subr.mxu0 0.0
  %4863 = vmatpush1.msra.mxu0 0.0
  %4864 = vmatprep.subr.mxu0 0.0
  %4865 = vmatpush1.msra.mxu0 0.0
  %4866 = vmatprep.subr.mxu0 0.0
  %4867 = vmatpush1.msra.mxu0 0.0
  %4868 = vmatprep.subr.mxu0 0.0
  %4869 = vmatpush1.msra.mxu0 0.0
  %4870 = vmatprep.subr.mxu0 0.0
  %4871 = vmatpush1.msra.mxu0 0.0
  %4872 = vmatprep.subr.mxu0 0.0
  %4873 = vmatpush1.msra.mxu0 0.0
  %4874 = vmatprep.subr.mxu0 0.0
  %4875 = vmatpush1.msra.mxu0 0.0
  %4876 = vmatprep.subr.mxu0 0.0
  %4877 = vmatpush1.msra.mxu0 0.0
  %4878 = vmatprep.subr.mxu0 0.0
  %4879 = vmatpush1.msra.mxu0 0.0
  %4880 = vmatprep.subr.mxu0 0.0
  %4881 = vmatpush1.msra.mxu0 0.0
  %4882 = vmatprep.subr.mxu0 0.0
  %4883 = vmatpush1.msra.mxu0 0.0
  %4884 = vmatprep.subr.mxu0 0.0
  %4885 = vmatpush1.msra.mxu0 0.0
  %4886 = vmatprep.subr.mxu0 0.0
  %4887 = vmatpush1.msra.mxu0 0.0
  %4888 = vmatprep.subr.mxu0 0.0
  %4889 = vmatpush1.msra.mxu0 0.0
  %4890 = vmatprep.subr.mxu0 0.0
  %4891 = vmatpush1.msra.mxu0 0.0
  %4892 = vmatprep.subr.mxu0 0.0
  %4893 = vmatpush1.msra.mxu0 0.0
  %4894 = vmatprep.subr.mxu0 0.0
  %4895 = vmatpush1.msra.mxu0 0.0
  %4896 = vmatprep.subr.mxu0 0.0
  %4897 = vmatpush1.msra.mxu0 0.0
  %4898 = vmatprep.subr.mxu0 0.0
  %4899 = vmatpush1.msra.mxu0 0.0
  %4900 = vmatprep.subr.mxu0 0.0
  %4901 = vmatpush1.msra.mxu0 0.0
  %4902 = vmatprep.subr.mxu0 0.0
  %4903 = vmatpush1.msra.mxu0 0.0
  %4904 = vmatprep.subr.mxu0 0.0
  %4905 = vmatpush1.msra.mxu0 0.0
  %4906 = vmatprep.subr.mxu0 0.0
  %4907 = vmatpush1.msra.mxu0 0.0
  %4908 = vmatprep.subr.mxu0 0.0
  %4909 = vmatpush1.msra.mxu0 0.0
  %4910 = vmatprep.subr.mxu0 0.0
  %4911 = vmatpush1.msra.mxu0 0.0
  %4912 = vmatprep.subr.mxu0 0.0
  %4913 = vmatpush1.msra.mxu0 0.0
  %4914 = vmatprep.subr.mxu0 0.0
  %4915 = vmatpush1.msra.mxu0 0.0
  %4916 = vmatprep.subr.mxu0 0.0
  %4917 = vmatpush1.msra.mxu0 0.0
  %4918 = vmatprep.subr.mxu0 0.0
  %4919 = vmatpush1.msra.mxu0 0.0
  %4920 = vmatprep.mubr.f32.mxu0 0.0
  %4921 = vmatmul.mubr.f32.gmra.mrb[0].mxu0 %v4854
  %v4922 = vpop.f32.mrb[0].mxu0
  %v4923 = vadd.f32 0.0, %v4922
  %v4924 = vpop.f32.mrb[0].mxu0
  %4925 = vdwg.mxu0
  %v4926 = vadd.f32 %v4148, %v4923
  %v4927 = vxor.u32 %v4926, 2147483648
  %v4928 = vmul.f32 %v4927, 1.442695
  %v4929 = vpow.pop %v4928
  %v4930 = vadd.f32 %v4929, 1.0
  %v4931 = vrcp.pop %v4930
  %v4932 = vmul.f32 1.0, %v4931
  %v4933 = vtanh.pop %v4926
  %v4934 = vmul.f32 %v4932, %v4844
  %4936 = vrot.lane.b32.xlu0 %v4933, 120
  %v4937 = vpop.permute.xlu0 %4936
  %v4939 = vmul.f32 %v4932, %v4937
  %4941 = vrot.lane.b32.xlu0 %v4939, 4
  %v4942 = vpop.permute.xlu0 %4941
  %v4944 = vadd.f32 %v4934, %v4942
  %v4945 = vtanh.pop %v4944
  %4947 = vrot.lane.b32.xlu0 %v4945, 8
  %v4948 = vpop.permute.xlu0 %4947
  %v4950 = vmul.f32 %v4932, %v4948
  %v4951 = vld [vmem:[%s14] sm:$0xf]
  %v4952 = vld [vmem:[%s15] sm:$0xf]
  %v4953 = vld [vmem:[%s16] sm:$0x1]
  %v4955 = vlaneseq
  %v4956 = vshrl.u32 %v4955, 7
  %v4957 = vsub.s32 0, %v4956
  %v4958 = vrot.slane %v4953, %v4957
  %v4961 = vsel %vm87, %v4951, 0
  %4963 = vmatprep.subr.mxu0 0.0
  %4964 = vmatpush1.msra.mxu0 %v4961
  %4965 = vmatprep.subr.mxu0 0.0
  %4966 = vmatpush1.msra.mxu0 0.0
  %4967 = vmatprep.subr.mxu0 0.0
  %4968 = vmatpush1.msra.mxu0 0.0
  %4969 = vmatprep.subr.mxu0 0.0
  %4970 = vmatpush1.msra.mxu0 0.0
  %4971 = vmatprep.subr.mxu0 0.0
  %4972 = vmatpush1.msra.mxu0 0.0
  %4973 = vmatprep.subr.mxu0 0.0
  %4974 = vmatpush1.msra.mxu0 0.0
  %4975 = vmatprep.subr.mxu0 0.0
  %4976 = vmatpush1.msra.mxu0 0.0
  %4977 = vmatprep.subr.mxu0 0.0
  %4978 = vmatpush1.msra.mxu0 0.0
  %4979 = vmatprep.subr.mxu0 0.0
  %4980 = vmatpush1.msra.mxu0 0.0
  %4981 = vmatprep.subr.mxu0 0.0
  %4982 = vmatpush1.msra.mxu0 0.0
  %4983 = vmatprep.subr.mxu0 0.0
  %4984 = vmatpush1.msra.mxu0 0.0
  %4985 = vmatprep.subr.mxu0 0.0
  %4986 = vmatpush1.msra.mxu0 0.0
  %4987 = vmatprep.subr.mxu0 0.0
  %4988 = vmatpush1.msra.mxu0 0.0
  %4989 = vmatprep.subr.mxu0 0.0
  %4990 = vmatpush1.msra.mxu0 0.0
  %4991 = vmatprep.subr.mxu0 0.0
  %4992 = vmatpush1.msra.mxu0 0.0
  %4993 = vmatprep.subr.mxu0 0.0
  %4994 = vmatpush1.msra.mxu0 0.0
  %4995 = vmatprep.subr.mxu0 0.0
  %4996 = vmatpush1.msra.mxu0 0.0
  %4997 = vmatprep.subr.mxu0 0.0
  %4998 = vmatpush1.msra.mxu0 0.0
  %4999 = vmatprep.subr.mxu0 0.0
  %5000 = vmatpush1.msra.mxu0 0.0
  %5001 = vmatprep.subr.mxu0 0.0
  %5002 = vmatpush1.msra.mxu0 0.0
  %5003 = vmatprep.subr.mxu0 0.0
  %5004 = vmatpush1.msra.mxu0 0.0
  %5005 = vmatprep.subr.mxu0 0.0
  %5006 = vmatpush1.msra.mxu0 0.0
  %5007 = vmatprep.subr.mxu0 0.0
  %5008 = vmatpush1.msra.mxu0 0.0
  %5009 = vmatprep.subr.mxu0 0.0
  %5010 = vmatpush1.msra.mxu0 0.0
  %5011 = vmatprep.subr.mxu0 0.0
  %5012 = vmatpush1.msra.mxu0 0.0
  %5013 = vmatprep.subr.mxu0 0.0
  %5014 = vmatpush1.msra.mxu0 0.0
  %5015 = vmatprep.subr.mxu0 0.0
  %5016 = vmatpush1.msra.mxu0 0.0
  %5017 = vmatprep.subr.mxu0 0.0
  %5018 = vmatpush1.msra.mxu0 0.0
  %5019 = vmatprep.subr.mxu0 0.0
  %5020 = vmatpush1.msra.mxu0 0.0
  %5021 = vmatprep.subr.mxu0 0.0
  %5022 = vmatpush1.msra.mxu0 0.0
  %5023 = vmatprep.subr.mxu0 0.0
  %5024 = vmatpush1.msra.mxu0 0.0
  %5025 = vmatprep.subr.mxu0 0.0
  %5026 = vmatpush1.msra.mxu0 0.0
  %5027 = vmatprep.mubr.f32.mxu0 0.0
  %5028 = vmatmul.mubr.f32.gmra.mrb[0].mxu0 %v4254
  %v5029 = vpop.f32.mrb[0].mxu0
  %v5030 = vadd.f32 %v4958, %v5029
  %v5031 = vpop.f32.mrb[0].mxu0
  %5032 = vdwg.mxu0
  %5033 = vmatprep.subr.mxu0 0.0
  %5034 = vmatpush1.msra.mxu0 %v4961
  %5035 = vmatprep.subr.mxu0 0.0
  %5036 = vmatpush1.msra.mxu0 0.0
  %5037 = vmatprep.subr.mxu0 0.0
  %5038 = vmatpush1.msra.mxu0 0.0
  %5039 = vmatprep.subr.mxu0 0.0
  %5040 = vmatpush1.msra.mxu0 0.0
  %5041 = vmatprep.subr.mxu0 0.0
  %5042 = vmatpush1.msra.mxu0 0.0
  %5043 = vmatprep.subr.mxu0 0.0
  %5044 = vmatpush1.msra.mxu0 0.0
  %5045 = vmatprep.subr.mxu0 0.0
  %5046 = vmatpush1.msra.mxu0 0.0
  %5047 = vmatprep.subr.mxu0 0.0
  %5048 = vmatpush1.msra.mxu0 0.0
  %5049 = vmatprep.subr.mxu0 0.0
  %5050 = vmatpush1.msra.mxu0 0.0
  %5051 = vmatprep.subr.mxu0 0.0
  %5052 = vmatpush1.msra.mxu0 0.0
  %5053 = vmatprep.subr.mxu0 0.0
  %5054 = vmatpush1.msra.mxu0 0.0
  %5055 = vmatprep.subr.mxu0 0.0
  %5056 = vmatpush1.msra.mxu0 0.0
  %5057 = vmatprep.subr.mxu0 0.0
  %5058 = vmatpush1.msra.mxu0 0.0
  %5059 = vmatprep.subr.mxu0 0.0
  %5060 = vmatpush1.msra.mxu0 0.0
  %5061 = vmatprep.subr.mxu0 0.0
  %5062 = vmatpush1.msra.mxu0 0.0
  %5063 = vmatprep.subr.mxu0 0.0
  %5064 = vmatpush1.msra.mxu0 0.0
  %5065 = vmatprep.subr.mxu0 0.0
  %5066 = vmatpush1.msra.mxu0 0.0
  %5067 = vmatprep.subr.mxu0 0.0
  %5068 = vmatpush1.msra.mxu0 0.0
  %5069 = vmatprep.subr.mxu0 0.0
  %5070 = vmatpush1.msra.mxu0 0.0
  %5071 = vmatprep.subr.mxu0 0.0
  %5072 = vmatpush1.msra.mxu0 0.0
  %5073 = vmatprep.subr.mxu0 0.0
  %5074 = vmatpush1.msra.mxu0 0.0
  %5075 = vmatprep.subr.mxu0 0.0
  %5076 = vmatpush1.msra.mxu0 0.0
  %5077 = vmatprep.subr.mxu0 0.0
  %5078 = vmatpush1.msra.mxu0 0.0
  %5079 = vmatprep.subr.mxu0 0.0
  %5080 = vmatpush1.msra.mxu0 0.0
  %5081 = vmatprep.subr.mxu0 0.0
  %5082 = vmatpush1.msra.mxu0 0.0
  %5083 = vmatprep.subr.mxu0 0.0
  %5084 = vmatpush1.msra.mxu0 0.0
  %5085 = vmatprep.subr.mxu0 0.0
  %5086 = vmatpush1.msra.mxu0 0.0
  %5087 = vmatprep.subr.mxu0 0.0
  %5088 = vmatpush1.msra.mxu0 0.0
  %5089 = vmatprep.subr.mxu0 0.0
  %5090 = vmatpush1.msra.mxu0 0.0
  %5091 = vmatprep.subr.mxu0 0.0
  %5092 = vmatpush1.msra.mxu0 0.0
  %5093 = vmatprep.subr.mxu0 0.0
  %5094 = vmatpush1.msra.mxu0 0.0
  %5095 = vmatprep.subr.mxu0 0.0
  %5096 = vmatpush1.msra.mxu0 0.0
  %5097 = vmatprep.mubr.f32.mxu0 0.0
  %5098 = vmatmul.mubr.f32.gmra.mrb[0].mxu0 %v4354
  %v5099 = vpop.f32.mrb[0].mxu0
  %v5100 = vadd.f32 %v4958, %v5099
  %v5101 = vpop.f32.mrb[0].mxu0
  %5102 = vdwg.mxu0
  %5103 = vmatprep.subr.mxu0 0.0
  %5104 = vmatpush1.msra.mxu0 %v4961
  %5105 = vmatprep.subr.mxu0 0.0
  %5106 = vmatpush1.msra.mxu0 0.0
  %5107 = vmatprep.subr.mxu0 0.0
  %5108 = vmatpush1.msra.mxu0 0.0
  %5109 = vmatprep.subr.mxu0 0.0
  %5110 = vmatpush1.msra.mxu0 0.0
  %5111 = vmatprep.subr.mxu0 0.0
  %5112 = vmatpush1.msra.mxu0 0.0
  %5113 = vmatprep.subr.mxu0 0.0
  %5114 = vmatpush1.msra.mxu0 0.0
  %5115 = vmatprep.subr.mxu0 0.0
  %5116 = vmatpush1.msra.mxu0 0.0
  %5117 = vmatprep.subr.mxu0 0.0
  %5118 = vmatpush1.msra.mxu0 0.0
  %5119 = vmatprep.subr.mxu0 0.0
  %5120 = vmatpush1.msra.mxu0 0.0
  %5121 = vmatprep.subr.mxu0 0.0
  %5122 = vmatpush1.msra.mxu0 0.0
  %5123 = vmatprep.subr.mxu0 0.0
  %5124 = vmatpush1.msra.mxu0 0.0
  %5125 = vmatprep.subr.mxu0 0.0
  %5126 = vmatpush1.msra.mxu0 0.0
  %5127 = vmatprep.subr.mxu0 0.0
  %5128 = vmatpush1.msra.mxu0 0.0
  %5129 = vmatprep.subr.mxu0 0.0
  %5130 = vmatpush1.msra.mxu0 0.0
  %5131 = vmatprep.subr.mxu0 0.0
  %5132 = vmatpush1.msra.mxu0 0.0
  %5133 = vmatprep.subr.mxu0 0.0
  %5134 = vmatpush1.msra.mxu0 0.0
  %5135 = vmatprep.subr.mxu0 0.0
  %5136 = vmatpush1.msra.mxu0 0.0
  %5137 = vmatprep.subr.mxu0 0.0
  %5138 = vmatpush1.msra.mxu0 0.0
  %5139 = vmatprep.subr.mxu0 0.0
  %5140 = vmatpush1.msra.mxu0 0.0
  %5141 = vmatprep.subr.mxu0 0.0
  %5142 = vmatpush1.msra.mxu0 0.0
  %5143 = vmatprep.subr.mxu0 0.0
  %5144 = vmatpush1.msra.mxu0 0.0
  %5145 = vmatprep.subr.mxu0 0.0
  %5146 = vmatpush1.msra.mxu0 0.0
  %5147 = vmatprep.subr.mxu0 0.0
  %5148 = vmatpush1.msra.mxu0 0.0
  %5149 = vmatprep.subr.mxu0 0.0
  %5150 = vmatpush1.msra.mxu0 0.0
  %5151 = vmatprep.subr.mxu0 0.0
  %5152 = vmatpush1.msra.mxu0 0.0
  %5153 = vmatprep.subr.mxu0 0.0
  %5154 = vmatpush1.msra.mxu0 0.0
  %5155 = vmatprep.subr.mxu0 0.0
  %5156 = vmatpush1.msra.mxu0 0.0
  %5157 = vmatprep.subr.mxu0 0.0
  %5158 = vmatpush1.msra.mxu0 0.0
  %5159 = vmatprep.subr.mxu0 0.0
  %5160 = vmatpush1.msra.mxu0 0.0
  %5161 = vmatprep.subr.mxu0 0.0
  %5162 = vmatpush1.msra.mxu0 0.0
  %5163 = vmatprep.subr.mxu0 0.0
  %5164 = vmatpush1.msra.mxu0 0.0
  %5165 = vmatprep.subr.mxu0 0.0
  %5166 = vmatpush1.msra.mxu0 0.0
  %5167 = vmatprep.mubr.f32.mxu0 0.0
  %5168 = vmatmul.mubr.f32.gmra.mrb[0].mxu0 %v4454
  %v5169 = vpop.f32.mrb[0].mxu0
  %v5170 = vadd.f32 %v4958, %v5169
  %v5171 = vpop.f32.mrb[0].mxu0
  %5172 = vdwg.mxu0
  %5173 = vmatprep.subr.mxu0 0.0
  %5174 = vmatpush1.msra.mxu0 %v4961
  %5175 = vmatprep.subr.mxu0 0.0
  %5176 = vmatpush1.msra.mxu0 0.0
  %5177 = vmatprep.subr.mxu0 0.0
  %5178 = vmatpush1.msra.mxu0 0.0
  %5179 = vmatprep.subr.mxu0 0.0
  %5180 = vmatpush1.msra.mxu0 0.0
  %5181 = vmatprep.subr.mxu0 0.0
  %5182 = vmatpush1.msra.mxu0 0.0
  %5183 = vmatprep.subr.mxu0 0.0
  %5184 = vmatpush1.msra.mxu0 0.0
  %5185 = vmatprep.subr.mxu0 0.0
  %5186 = vmatpush1.msra.mxu0 0.0
  %5187 = vmatprep.subr.mxu0 0.0
  %5188 = vmatpush1.msra.mxu0 0.0
  %5189 = vmatprep.subr.mxu0 0.0
  %5190 = vmatpush1.msra.mxu0 0.0
  %5191 = vmatprep.subr.mxu0 0.0
  %5192 = vmatpush1.msra.mxu0 0.0
  %5193 = vmatprep.subr.mxu0 0.0
  %5194 = vmatpush1.msra.mxu0 0.0
  %5195 = vmatprep.subr.mxu0 0.0
  %5196 = vmatpush1.msra.mxu0 0.0
  %5197 = vmatprep.subr.mxu0 0.0
  %5198 = vmatpush1.msra.mxu0 0.0
  %5199 = vmatprep.subr.mxu0 0.0
  %5200 = vmatpush1.msra.mxu0 0.0
  %5201 = vmatprep.subr.mxu0 0.0
  %5202 = vmatpush1.msra.mxu0 0.0
  %5203 = vmatprep.subr.mxu0 0.0
  %5204 = vmatpush1.msra.mxu0 0.0
  %5205 = vmatprep.subr.mxu0 0.0
  %5206 = vmatpush1.msra.mxu0 0.0
  %5207 = vmatprep.subr.mxu0 0.0
  %5208 = vmatpush1.msra.mxu0 0.0
  %5209 = vmatprep.subr.mxu0 0.0
  %5210 = vmatpush1.msra.mxu0 0.0
  %5211 = vmatprep.subr.mxu0 0.0
  %5212 = vmatpush1.msra.mxu0 0.0
  %5213 = vmatprep.subr.mxu0 0.0
  %5214 = vmatpush1.msra.mxu0 0.0
  %5215 = vmatprep.subr.mxu0 0.0
  %5216 = vmatpush1.msra.mxu0 0.0
  %5217 = vmatprep.subr.mxu0 0.0
  %5218 = vmatpush1.msra.mxu0 0.0
  %5219 = vmatprep.subr.mxu0 0.0
  %5220 = vmatpush1.msra.mxu0 0.0
  %5221 = vmatprep.subr.mxu0 0.0
  %5222 = vmatpush1.msra.mxu0 0.0
  %5223 = vmatprep.subr.mxu0 0.0
  %5224 = vmatpush1.msra.mxu0 0.0
  %5225 = vmatprep.subr.mxu0 0.0
  %5226 = vmatpush1.msra.mxu0 0.0
  %5227 = vmatprep.subr.mxu0 0.0
  %5228 = vmatpush1.msra.mxu0 0.0
  %5229 = vmatprep.subr.mxu0 0.0
  %5230 = vmatpush1.msra.mxu0 0.0
  %5231 = vmatprep.subr.mxu0 0.0
  %5232 = vmatpush1.msra.mxu0 0.0
  %5233 = vmatprep.subr.mxu0 0.0
  %5234 = vmatpush1.msra.mxu0 0.0
  %5235 = vmatprep.subr.mxu0 0.0
  %5236 = vmatpush1.msra.mxu0 0.0
  %5237 = vmatprep.mubr.f32.mxu0 0.0
  %5238 = vmatmul.mubr.f32.gmra.mrb[0].mxu0 %v4554
  %v5239 = vpop.f32.mrb[0].mxu0
  %v5240 = vadd.f32 %v4958, %v5239
  %v5241 = vpop.f32.mrb[0].mxu0
  %5242 = vdwg.mxu0
  %5243 = vmatprep.subr.mxu0 0.0
  %5244 = vmatpush1.msra.mxu0 %v4961
  %5245 = vmatprep.subr.mxu0 0.0
  %5246 = vmatpush1.msra.mxu0 0.0
  %5247 = vmatprep.subr.mxu0 0.0
  %5248 = vmatpush1.msra.mxu0 0.0
  %5249 = vmatprep.subr.mxu0 0.0
  %5250 = vmatpush1.msra.mxu0 0.0
  %5251 = vmatprep.subr.mxu0 0.0
  %5252 = vmatpush1.msra.mxu0 0.0
  %5253 = vmatprep.subr.mxu0 0.0
  %5254 = vmatpush1.msra.mxu0 0.0
  %5255 = vmatprep.subr.mxu0 0.0
  %5256 = vmatpush1.msra.mxu0 0.0
  %5257 = vmatprep.subr.mxu0 0.0
  %5258 = vmatpush1.msra.mxu0 0.0
  %5259 = vmatprep.subr.mxu0 0.0
  %5260 = vmatpush1.msra.mxu0 0.0
  %5261 = vmatprep.subr.mxu0 0.0
  %5262 = vmatpush1.msra.mxu0 0.0
  %5263 = vmatprep.subr.mxu0 0.0
  %5264 = vmatpush1.msra.mxu0 0.0
  %5265 = vmatprep.subr.mxu0 0.0
  %5266 = vmatpush1.msra.mxu0 0.0
  %5267 = vmatprep.subr.mxu0 0.0
  %5268 = vmatpush1.msra.mxu0 0.0
  %5269 = vmatprep.subr.mxu0 0.0
  %5270 = vmatpush1.msra.mxu0 0.0
  %5271 = vmatprep.subr.mxu0 0.0
  %5272 = vmatpush1.msra.mxu0 0.0
  %5273 = vmatprep.subr.mxu0 0.0
  %5274 = vmatpush1.msra.mxu0 0.0
  %5275 = vmatprep.subr.mxu0 0.0
  %5276 = vmatpush1.msra.mxu0 0.0
  %5277 = vmatprep.subr.mxu0 0.0
  %5278 = vmatpush1.msra.mxu0 0.0
  %5279 = vmatprep.subr.mxu0 0.0
  %5280 = vmatpush1.msra.mxu0 0.0
  %5281 = vmatprep.subr.mxu0 0.0
  %5282 = vmatpush1.msra.mxu0 0.0
  %5283 = vmatprep.subr.mxu0 0.0
  %5284 = vmatpush1.msra.mxu0 0.0
  %5285 = vmatprep.subr.mxu0 0.0
  %5286 = vmatpush1.msra.mxu0 0.0
  %5287 = vmatprep.subr.mxu0 0.0
  %5288 = vmatpush1.msra.mxu0 0.0
  %5289 = vmatprep.subr.mxu0 0.0
  %5290 = vmatpush1.msra.mxu0 0.0
  %5291 = vmatprep.subr.mxu0 0.0
  %5292 = vmatpush1.msra.mxu0 0.0
  %5293 = vmatprep.subr.mxu0 0.0
  %5294 = vmatpush1.msra.mxu0 0.0
  %5295 = vmatprep.subr.mxu0 0.0
  %5296 = vmatpush1.msra.mxu0 0.0
  %5297 = vmatprep.subr.mxu0 0.0
  %5298 = vmatpush1.msra.mxu0 0.0
  %5299 = vmatprep.subr.mxu0 0.0
  %5300 = vmatpush1.msra.mxu0 0.0
  %5301 = vmatprep.subr.mxu0 0.0
  %5302 = vmatpush1.msra.mxu0 0.0
  %5303 = vmatprep.subr.mxu0 0.0
  %5304 = vmatpush1.msra.mxu0 0.0
  %5305 = vmatprep.subr.mxu0 0.0
  %5306 = vmatpush1.msra.mxu0 0.0
  %5307 = vmatprep.mubr.f32.mxu0 0.0
  %5308 = vmatmul.mubr.f32.gmra.mrb[0].mxu0 %v4654
  %v5309 = vpop.f32.mrb[0].mxu0
  %v5310 = vadd.f32 %v4958, %v5309
  %v5311 = vpop.f32.mrb[0].mxu0
  %5312 = vdwg.mxu0
  %5313 = vmatprep.subr.mxu0 0.0
  %5314 = vmatpush1.msra.mxu0 %v4961
  %5315 = vmatprep.subr.mxu0 0.0
  %5316 = vmatpush1.msra.mxu0 0.0
  %5317 = vmatprep.subr.mxu0 0.0
  %5318 = vmatpush1.msra.mxu0 0.0
  %5319 = vmatprep.subr.mxu0 0.0
  %5320 = vmatpush1.msra.mxu0 0.0
  %5321 = vmatprep.subr.mxu0 0.0
  %5322 = vmatpush1.msra.mxu0 0.0
  %5323 = vmatprep.subr.mxu0 0.0
  %5324 = vmatpush1.msra.mxu0 0.0
  %5325 = vmatprep.subr.mxu0 0.0
  %5326 = vmatpush1.msra.mxu0 0.0
  %5327 = vmatprep.subr.mxu0 0.0
  %5328 = vmatpush1.msra.mxu0 0.0
  %5329 = vmatprep.subr.mxu0 0.0
  %5330 = vmatpush1.msra.mxu0 0.0
  %5331 = vmatprep.subr.mxu0 0.0
  %5332 = vmatpush1.msra.mxu0 0.0
  %5333 = vmatprep.subr.mxu0 0.0
  %5334 = vmatpush1.msra.mxu0 0.0
  %5335 = vmatprep.subr.mxu0 0.0
  %5336 = vmatpush1.msra.mxu0 0.0
  %5337 = vmatprep.subr.mxu0 0.0
  %5338 = vmatpush1.msra.mxu0 0.0
  %5339 = vmatprep.subr.mxu0 0.0
  %5340 = vmatpush1.msra.mxu0 0.0
  %5341 = vmatprep.subr.mxu0 0.0
  %5342 = vmatpush1.msra.mxu0 0.0
  %5343 = vmatprep.subr.mxu0 0.0
  %5344 = vmatpush1.msra.mxu0 0.0
  %5345 = vmatprep.subr.mxu0 0.0
  %5346 = vmatpush1.msra.mxu0 0.0
  %5347 = vmatprep.subr.mxu0 0.0
  %5348 = vmatpush1.msra.mxu0 0.0
  %5349 = vmatprep.subr.mxu0 0.0
  %5350 = vmatpush1.msra.mxu0 0.0
  %5351 = vmatprep.subr.mxu0 0.0
  %5352 = vmatpush1.msra.mxu0 0.0
  %5353 = vmatprep.subr.mxu0 0.0
  %5354 = vmatpush1.msra.mxu0 0.0
  %5355 = vmatprep.subr.mxu0 0.0
  %5356 = vmatpush1.msra.mxu0 0.0
  %5357 = vmatprep.subr.mxu0 0.0
  %5358 = vmatpush1.msra.mxu0 0.0
  %5359 = vmatprep.subr.mxu0 0.0
  %5360 = vmatpush1.msra.mxu0 0.0
  %5361 = vmatprep.subr.mxu0 0.0
  %5362 = vmatpush1.msra.mxu0 0.0
  %5363 = vmatprep.subr.mxu0 0.0
  %5364 = vmatpush1.msra.mxu0 0.0
  %5365 = vmatprep.subr.mxu0 0.0
  %5366 = vmatpush1.msra.mxu0 0.0
  %5367 = vmatprep.subr.mxu0 0.0
  %5368 = vmatpush1.msra.mxu0 0.0
  %5369 = vmatprep.subr.mxu0 0.0
  %5370 = vmatpush1.msra.mxu0 0.0
  %5371 = vmatprep.subr.mxu0 0.0
  %5372 = vmatpush1.msra.mxu0 0.0
  %5373 = vmatprep.subr.mxu0 0.0
  %5374 = vmatpush1.msra.mxu0 0.0
  %5375 = vmatprep.subr.mxu0 0.0
  %5376 = vmatpush1.msra.mxu0 0.0
  %5377 = vmatprep.mubr.f32.mxu0 0.0
  %5378 = vmatmul.mubr.f32.gmra.mrb[0].mxu0 %v4754
  %v5379 = vpop.f32.mrb[0].mxu0
  %v5380 = vadd.f32 %v4958, %v5379
  %v5381 = vpop.f32.mrb[0].mxu0
  %5382 = vdwg.mxu0
  %5383 = vmatprep.subr.mxu0 0.0
  %5384 = vmatpush1.msra.mxu0 %v4961
  %5385 = vmatprep.subr.mxu0 0.0
  %5386 = vmatpush1.msra.mxu0 0.0
  %5387 = vmatprep.subr.mxu0 0.0
  %5388 = vmatpush1.msra.mxu0 0.0
  %5389 = vmatprep.subr.mxu0 0.0
  %5390 = vmatpush1.msra.mxu0 0.0
  %5391 = vmatprep.subr.mxu0 0.0
  %5392 = vmatpush1.msra.mxu0 0.0
  %5393 = vmatprep.subr.mxu0 0.0
  %5394 = vmatpush1.msra.mxu0 0.0
  %5395 = vmatprep.subr.mxu0 0.0
  %5396 = vmatpush1.msra.mxu0 0.0
  %5397 = vmatprep.subr.mxu0 0.0
  %5398 = vmatpush1.msra.mxu0 0.0
  %5399 = vmatprep.subr.mxu0 0.0
  %5400 = vmatpush1.msra.mxu0 0.0
  %5401 = vmatprep.subr.mxu0 0.0
  %5402 = vmatpush1.msra.mxu0 0.0
  %5403 = vmatprep.subr.mxu0 0.0
  %5404 = vmatpush1.msra.mxu0 0.0
  %5405 = vmatprep.subr.mxu0 0.0
  %5406 = vmatpush1.msra.mxu0 0.0
  %5407 = vmatprep.subr.mxu0 0.0
  %5408 = vmatpush1.msra.mxu0 0.0
  %5409 = vmatprep.subr.mxu0 0.0
  %5410 = vmatpush1.msra.mxu0 0.0
  %5411 = vmatprep.subr.mxu0 0.0
  %5412 = vmatpush1.msra.mxu0 0.0
  %5413 = vmatprep.subr.mxu0 0.0
  %5414 = vmatpush1.msra.mxu0 0.0
  %5415 = vmatprep.subr.mxu0 0.0
  %5416 = vmatpush1.msra.mxu0 0.0
  %5417 = vmatprep.subr.mxu0 0.0
  %5418 = vmatpush1.msra.mxu0 0.0
  %5419 = vmatprep.subr.mxu0 0.0
  %5420 = vmatpush1.msra.mxu0 0.0
  %5421 = vmatprep.subr.mxu0 0.0
  %5422 = vmatpush1.msra.mxu0 0.0
  %5423 = vmatprep.subr.mxu0 0.0
  %5424 = vmatpush1.msra.mxu0 0.0
  %5425 = vmatprep.subr.mxu0 0.0
  %5426 = vmatpush1.msra.mxu0 0.0
  %5427 = vmatprep.subr.mxu0 0.0
  %5428 = vmatpush1.msra.mxu0 0.0
  %5429 = vmatprep.subr.mxu0 0.0
  %5430 = vmatpush1.msra.mxu0 0.0
  %5431 = vmatprep.subr.mxu0 0.0
  %5432 = vmatpush1.msra.mxu0 0.0
  %5433 = vmatprep.subr.mxu0 0.0
  %5434 = vmatpush1.msra.mxu0 0.0
  %5435 = vmatprep.subr.mxu0 0.0
  %5436 = vmatpush1.msra.mxu0 0.0
  %5437 = vmatprep.subr.mxu0 0.0
  %5438 = vmatpush1.msra.mxu0 0.0
  %5439 = vmatprep.subr.mxu0 0.0
  %5440 = vmatpush1.msra.mxu0 0.0
  %5441 = vmatprep.subr.mxu0 0.0
  %5442 = vmatpush1.msra.mxu0 0.0
  %5443 = vmatprep.subr.mxu0 0.0
  %5444 = vmatpush1.msra.mxu0 0.0
  %5445 = vmatprep.subr.mxu0 0.0
  %5446 = vmatpush1.msra.mxu0 0.0
  %5447 = vmatprep.mubr.f32.mxu0 0.0
  %5448 = vmatmul.mubr.f32.gmra.mrb[0].mxu0 %v4854
  %v5449 = vpop.f32.mrb[0].mxu0
  %v5450 = vadd.f32 %v4958, %v5449
  %v5451 = vpop.f32.mrb[0].mxu0
  %5452 = vdwg.mxu0
  %5454 = vrot.lane.b32.xlu0 %v4950, 116
  %v5455 = vpop.permute.xlu0 %5454
  %v5456 = vsel %vm83, %v5455, 0
  %5458 = vmatprep.subr.mxu0 0.0
  %5459 = vmatpush1.msra.mxu0 %v4961
  %5460 = vmatprep.subr.mxu0 0.0
  %5461 = vmatpush1.msra.mxu0 0.0
  %5462 = vmatprep.subr.mxu0 0.0
  %5463 = vmatpush1.msra.mxu0 0.0
  %5464 = vmatprep.subr.mxu0 0.0
  %5465 = vmatpush1.msra.mxu0 0.0
  %5466 = vmatprep.subr.mxu0 0.0
  %5467 = vmatpush1.msra.mxu0 0.0
  %5468 = vmatprep.subr.mxu0 0.0
  %5469 = vmatpush1.msra.mxu0 0.0
  %5470 = vmatprep.subr.mxu0 0.0
  %5471 = vmatpush1.msra.mxu0 0.0
  %5472 = vmatprep.subr.mxu0 0.0
  %5473 = vmatpush1.msra.mxu0 0.0
  %5474 = vmatprep.subr.mxu0 0.0
  %5475 = vmatpush1.msra.mxu0 0.0
  %5476 = vmatprep.subr.mxu0 0.0
  %5477 = vmatpush1.msra.mxu0 0.0
  %5478 = vmatprep.subr.mxu0 0.0
  %5479 = vmatpush1.msra.mxu0 0.0
  %5480 = vmatprep.subr.mxu0 0.0
  %5481 = vmatpush1.msra.mxu0 0.0
  %5482 = vmatprep.subr.mxu0 0.0
  %5483 = vmatpush1.msra.mxu0 0.0
  %5484 = vmatprep.subr.mxu0 0.0
  %5485 = vmatpush1.msra.mxu0 0.0
  %5486 = vmatprep.subr.mxu0 0.0
  %5487 = vmatpush1.msra.mxu0 0.0
  %5488 = vmatprep.subr.mxu0 0.0
  %5489 = vmatpush1.msra.mxu0 0.0
  %5490 = vmatprep.subr.mxu0 0.0
  %5491 = vmatpush1.msra.mxu0 0.0
  %5492 = vmatprep.subr.mxu0 0.0
  %5493 = vmatpush1.msra.mxu0 0.0
  %5494 = vmatprep.subr.mxu0 0.0
  %5495 = vmatpush1.msra.mxu0 0.0
  %5496 = vmatprep.subr.mxu0 0.0
  %5497 = vmatpush1.msra.mxu0 0.0
  %5498 = vmatprep.subr.mxu0 0.0
  %5499 = vmatpush1.msra.mxu0 0.0
  %5500 = vmatprep.subr.mxu0 0.0
  %5501 = vmatpush1.msra.mxu0 0.0
  %5502 = vmatprep.subr.mxu0 0.0
  %5503 = vmatpush1.msra.mxu0 0.0
  %5504 = vmatprep.subr.mxu0 0.0
  %5505 = vmatpush1.msra.mxu0 0.0
  %5506 = vmatprep.subr.mxu0 0.0
  %5507 = vmatpush1.msra.mxu0 0.0
  %5508 = vmatprep.subr.mxu0 0.0
  %5509 = vmatpush1.msra.mxu0 0.0
  %5510 = vmatprep.subr.mxu0 0.0
  %5511 = vmatpush1.msra.mxu0 0.0
  %5512 = vmatprep.subr.mxu0 0.0
  %5513 = vmatpush1.msra.mxu0 0.0
  %5514 = vmatprep.subr.mxu0 0.0
  %5515 = vmatpush1.msra.mxu0 0.0
  %5516 = vmatprep.subr.mxu0 0.0
  %5517 = vmatpush1.msra.mxu0 0.0
  %5518 = vmatprep.subr.mxu0 0.0
  %5519 = vmatpush1.msra.mxu0 0.0
  %5520 = vmatprep.subr.mxu0 0.0
  %5521 = vmatpush1.msra.mxu0 0.0
  %5522 = vmatprep.mubr.f32.mxu0 0.0
  %5523 = vmatmul.mubr.f32.gmra.mrb[0].mxu0 %v5456
  %v5524 = vpop.f32.mrb[0].mxu0
  %v5525 = vadd.f32 %v4958, %v5524
  %v5526 = vpop.f32.mrb[0].mxu0
  %5527 = vdwg.mxu0
  %v5529 = vsel %vm87, %v4952, 0
  %5531 = vmatprep.subr.mxu0 0.0
  %5532 = vmatpush1.msra.mxu0 %v5529
  %5533 = vmatprep.subr.mxu0 0.0
  %5534 = vmatpush1.msra.mxu0 0.0
  %5535 = vmatprep.subr.mxu0 0.0
  %5536 = vmatpush1.msra.mxu0 0.0
  %5537 = vmatprep.subr.mxu0 0.0
  %5538 = vmatpush1.msra.mxu0 0.0
  %5539 = vmatprep.subr.mxu0 0.0
  %5540 = vmatpush1.msra.mxu0 0.0
  %5541 = vmatprep.subr.mxu0 0.0
  %5542 = vmatpush1.msra.mxu0 0.0
  %5543 = vmatprep.subr.mxu0 0.0
  %5544 = vmatpush1.msra.mxu0 0.0
  %5545 = vmatprep.subr.mxu0 0.0
  %5546 = vmatpush1.msra.mxu0 0.0
  %5547 = vmatprep.subr.mxu0 0.0
  %5548 = vmatpush1.msra.mxu0 0.0
  %5549 = vmatprep.subr.mxu0 0.0
  %5550 = vmatpush1.msra.mxu0 0.0
  %5551 = vmatprep.subr.mxu0 0.0
  %5552 = vmatpush1.msra.mxu0 0.0
  %5553 = vmatprep.subr.mxu0 0.0
  %5554 = vmatpush1.msra.mxu0 0.0
  %5555 = vmatprep.subr.mxu0 0.0
  %5556 = vmatpush1.msra.mxu0 0.0
  %5557 = vmatprep.subr.mxu0 0.0
  %5558 = vmatpush1.msra.mxu0 0.0
  %5559 = vmatprep.subr.mxu0 0.0
  %5560 = vmatpush1.msra.mxu0 0.0
  %5561 = vmatprep.subr.mxu0 0.0
  %5562 = vmatpush1.msra.mxu0 0.0
  %5563 = vmatprep.subr.mxu0 0.0
  %5564 = vmatpush1.msra.mxu0 0.0
  %5565 = vmatprep.subr.mxu0 0.0
  %5566 = vmatpush1.msra.mxu0 0.0
  %5567 = vmatprep.subr.mxu0 0.0
  %5568 = vmatpush1.msra.mxu0 0.0
  %5569 = vmatprep.subr.mxu0 0.0
  %5570 = vmatpush1.msra.mxu0 0.0
  %5571 = vmatprep.subr.mxu0 0.0
  %5572 = vmatpush1.msra.mxu0 0.0
  %5573 = vmatprep.subr.mxu0 0.0
  %5574 = vmatpush1.msra.mxu0 0.0
  %5575 = vmatprep.subr.mxu0 0.0
  %5576 = vmatpush1.msra.mxu0 0.0
  %5577 = vmatprep.subr.mxu0 0.0
  %5578 = vmatpush1.msra.mxu0 0.0
  %5579 = vmatprep.subr.mxu0 0.0
  %5580 = vmatpush1.msra.mxu0 0.0
  %5581 = vmatprep.subr.mxu0 0.0
  %5582 = vmatpush1.msra.mxu0 0.0
  %5583 = vmatprep.subr.mxu0 0.0
  %5584 = vmatpush1.msra.mxu0 0.0
  %5585 = vmatprep.subr.mxu0 0.0
  %5586 = vmatpush1.msra.mxu0 0.0
  %5587 = vmatprep.subr.mxu0 0.0
  %5588 = vmatpush1.msra.mxu0 0.0
  %5589 = vmatprep.subr.mxu0 0.0
  %5590 = vmatpush1.msra.mxu0 0.0
  %5591 = vmatprep.subr.mxu0 0.0
  %5592 = vmatpush1.msra.mxu0 0.0
  %5593 = vmatprep.subr.mxu0 0.0
  %5594 = vmatpush1.msra.mxu0 0.0
  %5595 = vmatprep.mubr.f32.mxu0 0.0
  %5596 = vmatmul.mubr.f32.gmra.mrb[0].mxu0 %v4151
  %v5597 = vpop.f32.mrb[0].mxu0
  %v5598 = vadd.f32 0.0, %v5597
  %v5599 = vpop.f32.mrb[0].mxu0
  %5600 = vdwg.mxu0
  %v5601 = vadd.f32 %v5030, %v5598
  %v5602 = vxor.u32 %v5601, 2147483648
  %v5603 = vmul.f32 %v5602, 1.442695
  %v5604 = vpow.pop %v5603
  %v5605 = vadd.f32 %v5604, 1.0
  %v5606 = vrcp.pop %v5605
  %v5607 = vmul.f32 1.0, %v5606
  %v5608 = vtanh.pop %v5601
  %v5609 = vmul.f32 %v5607, 0.0
  %5611 = vrot.lane.b32.xlu0 %v5608, 120
  %v5612 = vpop.permute.xlu0 %5611
  %v5614 = vmul.f32 %v5607, %v5612
  %5616 = vrot.lane.b32.xlu0 %v5614, 4
  %v5617 = vpop.permute.xlu0 %5616
  %v5619 = vadd.f32 %v5609, %v5617
  %v5620 = vtanh.pop %v5619
  %5622 = vrot.lane.b32.xlu0 %v5620, 8
  %v5623 = vpop.permute.xlu0 %5622
  %v5625 = vmul.f32 %v5607, %v5623
  %5627 = vrot.lane.b32.xlu0 %v5625, 116
  %v5628 = vpop.permute.xlu0 %5627
  %v5629 = vsel %vm83, %v5628, 0
  %5631 = vmatprep.subr.mxu0 0.0
  %5632 = vmatpush1.msra.mxu0 %v5529
  %5633 = vmatprep.subr.mxu0 0.0
  %5634 = vmatpush1.msra.mxu0 0.0
  %5635 = vmatprep.subr.mxu0 0.0
  %5636 = vmatpush1.msra.mxu0 0.0
  %5637 = vmatprep.subr.mxu0 0.0
  %5638 = vmatpush1.msra.mxu0 0.0
  %5639 = vmatprep.subr.mxu0 0.0
  %5640 = vmatpush1.msra.mxu0 0.0
  %5641 = vmatprep.subr.mxu0 0.0
  %5642 = vmatpush1.msra.mxu0 0.0
  %5643 = vmatprep.subr.mxu0 0.0
  %5644 = vmatpush1.msra.mxu0 0.0
  %5645 = vmatprep.subr.mxu0 0.0
  %5646 = vmatpush1.msra.mxu0 0.0
  %5647 = vmatprep.subr.mxu0 0.0
  %5648 = vmatpush1.msra.mxu0 0.0
  %5649 = vmatprep.subr.mxu0 0.0
  %5650 = vmatpush1.msra.mxu0 0.0
  %5651 = vmatprep.subr.mxu0 0.0
  %5652 = vmatpush1.msra.mxu0 0.0
  %5653 = vmatprep.subr.mxu0 0.0
  %5654 = vmatpush1.msra.mxu0 0.0
  %5655 = vmatprep.subr.mxu0 0.0
  %5656 = vmatpush1.msra.mxu0 0.0
  %5657 = vmatprep.subr.mxu0 0.0
  %5658 = vmatpush1.msra.mxu0 0.0
  %5659 = vmatprep.subr.mxu0 0.0
  %5660 = vmatpush1.msra.mxu0 0.0
  %5661 = vmatprep.subr.mxu0 0.0
  %5662 = vmatpush1.msra.mxu0 0.0
  %5663 = vmatprep.subr.mxu0 0.0
  %5664 = vmatpush1.msra.mxu0 0.0
  %5665 = vmatprep.subr.mxu0 0.0
  %5666 = vmatpush1.msra.mxu0 0.0
  %5667 = vmatprep.subr.mxu0 0.0
  %5668 = vmatpush1.msra.mxu0 0.0
  %5669 = vmatprep.subr.mxu0 0.0
  %5670 = vmatpush1.msra.mxu0 0.0
  %5671 = vmatprep.subr.mxu0 0.0
  %5672 = vmatpush1.msra.mxu0 0.0
  %5673 = vmatprep.subr.mxu0 0.0
  %5674 = vmatpush1.msra.mxu0 0.0
  %5675 = vmatprep.subr.mxu0 0.0
  %5676 = vmatpush1.msra.mxu0 0.0
  %5677 = vmatprep.subr.mxu0 0.0
  %5678 = vmatpush1.msra.mxu0 0.0
  %5679 = vmatprep.subr.mxu0 0.0
  %5680 = vmatpush1.msra.mxu0 0.0
  %5681 = vmatprep.subr.mxu0 0.0
  %5682 = vmatpush1.msra.mxu0 0.0
  %5683 = vmatprep.subr.mxu0 0.0
  %5684 = vmatpush1.msra.mxu0 0.0
  %5685 = vmatprep.subr.mxu0 0.0
  %5686 = vmatpush1.msra.mxu0 0.0
  %5687 = vmatprep.subr.mxu0 0.0
  %5688 = vmatpush1.msra.mxu0 0.0
  %5689 = vmatprep.subr.mxu0 0.0
  %5690 = vmatpush1.msra.mxu0 0.0
  %5691 = vmatprep.subr.mxu0 0.0
  %5692 = vmatpush1.msra.mxu0 0.0
  %5693 = vmatprep.subr.mxu0 0.0
  %5694 = vmatpush1.msra.mxu0 0.0
  %5695 = vmatprep.mubr.f32.mxu0 0.0
  %5696 = vmatmul.mubr.f32.gmra.mrb[0].mxu0 %v5629
  %v5697 = vpop.f32.mrb[0].mxu0
  %v5698 = vadd.f32 0.0, %v5697
  %v5699 = vpop.f32.mrb[0].mxu0
  %5700 = vdwg.mxu0
  %v5701 = vadd.f32 %v5100, %v5698
  %v5702 = vxor.u32 %v5701, 2147483648
  %v5703 = vmul.f32 %v5702, 1.442695
  %v5704 = vpow.pop %v5703
  %v5705 = vadd.f32 %v5704, 1.0
  %v5706 = vrcp.pop %v5705
  %v5707 = vmul.f32 1.0, %v5706
  %v5708 = vtanh.pop %v5701
  %v5709 = vmul.f32 %v5707, %v5619
  %5711 = vrot.lane.b32.xlu0 %v5708, 120
  %v5712 = vpop.permute.xlu0 %5711
  %v5714 = vmul.f32 %v5707, %v5712
  %5716 = vrot.lane.b32.xlu0 %v5714, 4
  %v5717 = vpop.permute.xlu0 %5716
  %v5719 = vadd.f32 %v5709, %v5717
  %v5720 = vtanh.pop %v5719
  %5722 = vrot.lane.b32.xlu0 %v5720, 8
  %v5723 = vpop.permute.xlu0 %5722
  %v5725 = vmul.f32 %v5707, %v5723
  %5727 = vrot.lane.b32.xlu0 %v5725, 116
  %v5728 = vpop.permute.xlu0 %5727
  %v5729 = vsel %vm83, %v5728, 0
  %5731 = vmatprep.subr.mxu0 0.0
  %5732 = vmatpush1.msra.mxu0 %v5529
  %5733 = vmatprep.subr.mxu0 0.0
  %5734 = vmatpush1.msra.mxu0 0.0
  %5735 = vmatprep.subr.mxu0 0.0
  %5736 = vmatpush1.msra.mxu0 0.0
  %5737 = vmatprep.subr.mxu0 0.0
  %5738 = vmatpush1.msra.mxu0 0.0
  %5739 = vmatprep.subr.mxu0 0.0
  %5740 = vmatpush1.msra.mxu0 0.0
  %5741 = vmatprep.subr.mxu0 0.0
  %5742 = vmatpush1.msra.mxu0 0.0
  %5743 = vmatprep.subr.mxu0 0.0
  %5744 = vmatpush1.msra.mxu0 0.0
  %5745 = vmatprep.subr.mxu0 0.0
  %5746 = vmatpush1.msra.mxu0 0.0
  %5747 = vmatprep.subr.mxu0 0.0
  %5748 = vmatpush1.msra.mxu0 0.0
  %5749 = vmatprep.subr.mxu0 0.0
  %5750 = vmatpush1.msra.mxu0 0.0
  %5751 = vmatprep.subr.mxu0 0.0
  %5752 = vmatpush1.msra.mxu0 0.0
  %5753 = vmatprep.subr.mxu0 0.0
  %5754 = vmatpush1.msra.mxu0 0.0
  %5755 = vmatprep.subr.mxu0 0.0
  %5756 = vmatpush1.msra.mxu0 0.0
  %5757 = vmatprep.subr.mxu0 0.0
  %5758 = vmatpush1.msra.mxu0 0.0
  %5759 = vmatprep.subr.mxu0 0.0
  %5760 = vmatpush1.msra.mxu0 0.0
  %5761 = vmatprep.subr.mxu0 0.0
  %5762 = vmatpush1.msra.mxu0 0.0
  %5763 = vmatprep.subr.mxu0 0.0
  %5764 = vmatpush1.msra.mxu0 0.0
  %5765 = vmatprep.subr.mxu0 0.0
  %5766 = vmatpush1.msra.mxu0 0.0
  %5767 = vmatprep.subr.mxu0 0.0
  %5768 = vmatpush1.msra.mxu0 0.0
  %5769 = vmatprep.subr.mxu0 0.0
  %5770 = vmatpush1.msra.mxu0 0.0
  %5771 = vmatprep.subr.mxu0 0.0
  %5772 = vmatpush1.msra.mxu0 0.0
  %5773 = vmatprep.subr.mxu0 0.0
  %5774 = vmatpush1.msra.mxu0 0.0
  %5775 = vmatprep.subr.mxu0 0.0
  %5776 = vmatpush1.msra.mxu0 0.0
  %5777 = vmatprep.subr.mxu0 0.0
  %5778 = vmatpush1.msra.mxu0 0.0
  %5779 = vmatprep.subr.mxu0 0.0
  %5780 = vmatpush1.msra.mxu0 0.0
  %5781 = vmatprep.subr.mxu0 0.0
  %5782 = vmatpush1.msra.mxu0 0.0
  %5783 = vmatprep.subr.mxu0 0.0
  %5784 = vmatpush1.msra.mxu0 0.0
  %5785 = vmatprep.subr.mxu0 0.0
  %5786 = vmatpush1.msra.mxu0 0.0
  %5787 = vmatprep.subr.mxu0 0.0
  %5788 = vmatpush1.msra.mxu0 0.0
  %5789 = vmatprep.subr.mxu0 0.0
  %5790 = vmatpush1.msra.mxu0 0.0
  %5791 = vmatprep.subr.mxu0 0.0
  %5792 = vmatpush1.msra.mxu0 0.0
  %5793 = vmatprep.subr.mxu0 0.0
  %5794 = vmatpush1.msra.mxu0 0.0
  %5795 = vmatprep.mubr.f32.mxu0 0.0
  %5796 = vmatmul.mubr.f32.gmra.mrb[0].mxu0 %v5729
  %v5797 = vpop.f32.mrb[0].mxu0
  %v5798 = vadd.f32 0.0, %v5797
  %v5799 = vpop.f32.mrb[0].mxu0
  %5800 = vdwg.mxu0
  %v5801 = vadd.f32 %v5170, %v5798
  %v5802 = vxor.u32 %v5801, 2147483648
  %v5803 = vmul.f32 %v5802, 1.442695
  %v5804 = vpow.pop %v5803
  %v5805 = vadd.f32 %v5804, 1.0
  %v5806 = vrcp.pop %v5805
  %v5807 = vmul.f32 1.0, %v5806
  %v5808 = vtanh.pop %v5801
  %v5809 = vmul.f32 %v5807, %v5719
  %5811 = vrot.lane.b32.xlu0 %v5808, 120
  %v5812 = vpop.permute.xlu0 %5811
  %v5814 = vmul.f32 %v5807, %v5812
  %5816 = vrot.lane.b32.xlu0 %v5814, 4
  %v5817 = vpop.permute.xlu0 %5816
  %v5819 = vadd.f32 %v5809, %v5817
  %v5820 = vtanh.pop %v5819
  %5822 = vrot.lane.b32.xlu0 %v5820, 8
  %v5823 = vpop.permute.xlu0 %5822
  %v5825 = vmul.f32 %v5807, %v5823
  %5827 = vrot.lane.b32.xlu0 %v5825, 116
  %v5828 = vpop.permute.xlu0 %5827
  %v5829 = vsel %vm83, %v5828, 0
  %5831 = vmatprep.subr.mxu0 0.0
  %5832 = vmatpush1.msra.mxu0 %v5529
  %5833 = vmatprep.subr.mxu0 0.0
  %5834 = vmatpush1.msra.mxu0 0.0
  %5835 = vmatprep.subr.mxu0 0.0
  %5836 = vmatpush1.msra.mxu0 0.0
  %5837 = vmatprep.subr.mxu0 0.0
  %5838 = vmatpush1.msra.mxu0 0.0
  %5839 = vmatprep.subr.mxu0 0.0
  %5840 = vmatpush1.msra.mxu0 0.0
  %5841 = vmatprep.subr.mxu0 0.0
  %5842 = vmatpush1.msra.mxu0 0.0
  %5843 = vmatprep.subr.mxu0 0.0
  %5844 = vmatpush1.msra.mxu0 0.0
  %5845 = vmatprep.subr.mxu0 0.0
  %5846 = vmatpush1.msra.mxu0 0.0
  %5847 = vmatprep.subr.mxu0 0.0
  %5848 = vmatpush1.msra.mxu0 0.0
  %5849 = vmatprep.subr.mxu0 0.0
  %5850 = vmatpush1.msra.mxu0 0.0
  %5851 = vmatprep.subr.mxu0 0.0
  %5852 = vmatpush1.msra.mxu0 0.0
  %5853 = vmatprep.subr.mxu0 0.0
  %5854 = vmatpush1.msra.mxu0 0.0
  %5855 = vmatprep.subr.mxu0 0.0
  %5856 = vmatpush1.msra.mxu0 0.0
  %5857 = vmatprep.subr.mxu0 0.0
  %5858 = vmatpush1.msra.mxu0 0.0
  %5859 = vmatprep.subr.mxu0 0.0
  %5860 = vmatpush1.msra.mxu0 0.0
  %5861 = vmatprep.subr.mxu0 0.0
  %5862 = vmatpush1.msra.mxu0 0.0
  %5863 = vmatprep.subr.mxu0 0.0
  %5864 = vmatpush1.msra.mxu0 0.0
  %5865 = vmatprep.subr.mxu0 0.0
  %5866 = vmatpush1.msra.mxu0 0.0
  %5867 = vmatprep.subr.mxu0 0.0
  %5868 = vmatpush1.msra.mxu0 0.0
  %5869 = vmatprep.subr.mxu0 0.0
  %5870 = vmatpush1.msra.mxu0 0.0
  %5871 = vmatprep.subr.mxu0 0.0
  %5872 = vmatpush1.msra.mxu0 0.0
  %5873 = vmatprep.subr.mxu0 0.0
  %5874 = vmatpush1.msra.mxu0 0.0
  %5875 = vmatprep.subr.mxu0 0.0
  %5876 = vmatpush1.msra.mxu0 0.0
  %5877 = vmatprep.subr.mxu0 0.0
  %5878 = vmatpush1.msra.mxu0 0.0
  %5879 = vmatprep.subr.mxu0 0.0
  %5880 = vmatpush1.msra.mxu0 0.0
  %5881 = vmatprep.subr.mxu0 0.0
  %5882 = vmatpush1.msra.mxu0 0.0
  %5883 = vmatprep.subr.mxu0 0.0
  %5884 = vmatpush1.msra.mxu0 0.0
  %5885 = vmatprep.subr.mxu0 0.0
  %5886 = vmatpush1.msra.mxu0 0.0
  %5887 = vmatprep.subr.mxu0 0.0
  %5888 = vmatpush1.msra.mxu0 0.0
  %5889 = vmatprep.subr.mxu0 0.0
  %5890 = vmatpush1.msra.mxu0 0.0
  %5891 = vmatprep.subr.mxu0 0.0
  %5892 = vmatpush1.msra.mxu0 0.0
  %5893 = vmatprep.subr.mxu0 0.0
  %5894 = vmatpush1.msra.mxu0 0.0
  %5895 = vmatprep.mubr.f32.mxu0 0.0
  %5896 = vmatmul.mubr.f32.gmra.mrb[0].mxu0 %v5829
  %v5897 = vpop.f32.mrb[0].mxu0
  %v5898 = vadd.f32 0.0, %v5897
  %v5899 = vpop.f32.mrb[0].mxu0
  %5900 = vdwg.mxu0
  %v5901 = vadd.f32 %v5240, %v5898
  %v5902 = vxor.u32 %v5901, 2147483648
  %v5903 = vmul.f32 %v5902, 1.442695
  %v5904 = vpow.pop %v5903
  %v5905 = vadd.f32 %v5904, 1.0
  %v5906 = vrcp.pop %v5905
  %v5907 = vmul.f32 1.0, %v5906
  %v5908 = vtanh.pop %v5901
  %v5909 = vmul.f32 %v5907, %v5819
  %5911 = vrot.lane.b32.xlu0 %v5908, 120
  %v5912 = vpop.permute.xlu0 %5911
  %v5914 = vmul.f32 %v5907, %v5912
  %5916 = vrot.lane.b32.xlu0 %v5914, 4
  %v5917 = vpop.permute.xlu0 %5916
  %v5919 = vadd.f32 %v5909, %v5917
  %v5920 = vtanh.pop %v5919
  %5922 = vrot.lane.b32.xlu0 %v5920, 8
  %v5923 = vpop.permute.xlu0 %5922
  %v5925 = vmul.f32 %v5907, %v5923
  %5927 = vrot.lane.b32.xlu0 %v5925, 116
  %v5928 = vpop.permute.xlu0 %5927
  %v5929 = vsel %vm83, %v5928, 0
  %5931 = vmatprep.subr.mxu0 0.0
  %5932 = vmatpush1.msra.mxu0 %v5529
  %5933 = vmatprep.subr.mxu0 0.0
  %5934 = vmatpush1.msra.mxu0 0.0
  %5935 = vmatprep.subr.mxu0 0.0
  %5936 = vmatpush1.msra.mxu0 0.0
  %5937 = vmatprep.subr.mxu0 0.0
  %5938 = vmatpush1.msra.mxu0 0.0
  %5939 = vmatprep.subr.mxu0 0.0
  %5940 = vmatpush1.msra.mxu0 0.0
  %5941 = vmatprep.subr.mxu0 0.0
  %5942 = vmatpush1.msra.mxu0 0.0
  %5943 = vmatprep.subr.mxu0 0.0
  %5944 = vmatpush1.msra.mxu0 0.0
  %5945 = vmatprep.subr.mxu0 0.0
  %5946 = vmatpush1.msra.mxu0 0.0
  %5947 = vmatprep.subr.mxu0 0.0
  %5948 = vmatpush1.msra.mxu0 0.0
  %5949 = vmatprep.subr.mxu0 0.0
  %5950 = vmatpush1.msra.mxu0 0.0
  %5951 = vmatprep.subr.mxu0 0.0
  %5952 = vmatpush1.msra.mxu0 0.0
  %5953 = vmatprep.subr.mxu0 0.0
  %5954 = vmatpush1.msra.mxu0 0.0
  %5955 = vmatprep.subr.mxu0 0.0
  %5956 = vmatpush1.msra.mxu0 0.0
  %5957 = vmatprep.subr.mxu0 0.0
  %5958 = vmatpush1.msra.mxu0 0.0
  %5959 = vmatprep.subr.mxu0 0.0
  %5960 = vmatpush1.msra.mxu0 0.0
  %5961 = vmatprep.subr.mxu0 0.0
  %5962 = vmatpush1.msra.mxu0 0.0
  %5963 = vmatprep.subr.mxu0 0.0
  %5964 = vmatpush1.msra.mxu0 0.0
  %5965 = vmatprep.subr.mxu0 0.0
  %5966 = vmatpush1.msra.mxu0 0.0
  %5967 = vmatprep.subr.mxu0 0.0
  %5968 = vmatpush1.msra.mxu0 0.0
  %5969 = vmatprep.subr.mxu0 0.0
  %5970 = vmatpush1.msra.mxu0 0.0
  %5971 = vmatprep.subr.mxu0 0.0
  %5972 = vmatpush1.msra.mxu0 0.0
  %5973 = vmatprep.subr.mxu0 0.0
  %5974 = vmatpush1.msra.mxu0 0.0
  %5975 = vmatprep.subr.mxu0 0.0
  %5976 = vmatpush1.msra.mxu0 0.0
  %5977 = vmatprep.subr.mxu0 0.0
  %5978 = vmatpush1.msra.mxu0 0.0
  %5979 = vmatprep.subr.mxu0 0.0
  %5980 = vmatpush1.msra.mxu0 0.0
  %5981 = vmatprep.subr.mxu0 0.0
  %5982 = vmatpush1.msra.mxu0 0.0
  %5983 = vmatprep.subr.mxu0 0.0
  %5984 = vmatpush1.msra.mxu0 0.0
  %5985 = vmatprep.subr.mxu0 0.0
  %5986 = vmatpush1.msra.mxu0 0.0
  %5987 = vmatprep.subr.mxu0 0.0
  %5988 = vmatpush1.msra.mxu0 0.0
  %5989 = vmatprep.subr.mxu0 0.0
  %5990 = vmatpush1.msra.mxu0 0.0
  %5991 = vmatprep.subr.mxu0 0.0
  %5992 = vmatpush1.msra.mxu0 0.0
  %5993 = vmatprep.subr.mxu0 0.0
  %5994 = vmatpush1.msra.mxu0 0.0
  %5995 = vmatprep.mubr.f32.mxu0 0.0
  %5996 = vmatmul.mubr.f32.gmra.mrb[0].mxu0 %v5929
  %v5997 = vpop.f32.mrb[0].mxu0
  %v5998 = vadd.f32 0.0, %v5997
  %v5999 = vpop.f32.mrb[0].mxu0
  %6000 = vdwg.mxu0
  %v6001 = vadd.f32 %v5310, %v5998
  %v6002 = vxor.u32 %v6001, 2147483648
  %v6003 = vmul.f32 %v6002, 1.442695
  %v6004 = vpow.pop %v6003
  %v6005 = vadd.f32 %v6004, 1.0
  %v6006 = vrcp.pop %v6005
  %v6007 = vmul.f32 1.0, %v6006
  %v6008 = vtanh.pop %v6001
  %v6009 = vmul.f32 %v6007, %v5919
  %6011 = vrot.lane.b32.xlu0 %v6008, 120
  %v6012 = vpop.permute.xlu0 %6011
  %v6014 = vmul.f32 %v6007, %v6012
  %6016 = vrot.lane.b32.xlu0 %v6014, 4
  %v6017 = vpop.permute.xlu0 %6016
  %v6019 = vadd.f32 %v6009, %v6017
  %v6020 = vtanh.pop %v6019
  %6022 = vrot.lane.b32.xlu0 %v6020, 8
  %v6023 = vpop.permute.xlu0 %6022
  %v6025 = vmul.f32 %v6007, %v6023
  %6027 = vrot.lane.b32.xlu0 %v6025, 116
  %v6028 = vpop.permute.xlu0 %6027
  %v6029 = vsel %vm83, %v6028, 0
  %6031 = vmatprep.subr.mxu0 0.0
  %6032 = vmatpush1.msra.mxu0 %v5529
  %6033 = vmatprep.subr.mxu0 0.0
  %6034 = vmatpush1.msra.mxu0 0.0
  %6035 = vmatprep.subr.mxu0 0.0
  %6036 = vmatpush1.msra.mxu0 0.0
  %6037 = vmatprep.subr.mxu0 0.0
  %6038 = vmatpush1.msra.mxu0 0.0
  %6039 = vmatprep.subr.mxu0 0.0
  %6040 = vmatpush1.msra.mxu0 0.0
  %6041 = vmatprep.subr.mxu0 0.0
  %6042 = vmatpush1.msra.mxu0 0.0
  %6043 = vmatprep.subr.mxu0 0.0
  %6044 = vmatpush1.msra.mxu0 0.0
  %6045 = vmatprep.subr.mxu0 0.0
  %6046 = vmatpush1.msra.mxu0 0.0
  %6047 = vmatprep.subr.mxu0 0.0
  %6048 = vmatpush1.msra.mxu0 0.0
  %6049 = vmatprep.subr.mxu0 0.0
  %6050 = vmatpush1.msra.mxu0 0.0
  %6051 = vmatprep.subr.mxu0 0.0
  %6052 = vmatpush1.msra.mxu0 0.0
  %6053 = vmatprep.subr.mxu0 0.0
  %6054 = vmatpush1.msra.mxu0 0.0
  %6055 = vmatprep.subr.mxu0 0.0
  %6056 = vmatpush1.msra.mxu0 0.0
  %6057 = vmatprep.subr.mxu0 0.0
  %6058 = vmatpush1.msra.mxu0 0.0
  %6059 = vmatprep.subr.mxu0 0.0
  %6060 = vmatpush1.msra.mxu0 0.0
  %6061 = vmatprep.subr.mxu0 0.0
  %6062 = vmatpush1.msra.mxu0 0.0
  %6063 = vmatprep.subr.mxu0 0.0
  %6064 = vmatpush1.msra.mxu0 0.0
  %6065 = vmatprep.subr.mxu0 0.0
  %6066 = vmatpush1.msra.mxu0 0.0
  %6067 = vmatprep.subr.mxu0 0.0
  %6068 = vmatpush1.msra.mxu0 0.0
  %6069 = vmatprep.subr.mxu0 0.0
  %6070 = vmatpush1.msra.mxu0 0.0
  %6071 = vmatprep.subr.mxu0 0.0
  %6072 = vmatpush1.msra.mxu0 0.0
  %6073 = vmatprep.subr.mxu0 0.0
  %6074 = vmatpush1.msra.mxu0 0.0
  %6075 = vmatprep.subr.mxu0 0.0
  %6076 = vmatpush1.msra.mxu0 0.0
  %6077 = vmatprep.subr.mxu0 0.0
  %6078 = vmatpush1.msra.mxu0 0.0
  %6079 = vmatprep.subr.mxu0 0.0
  %6080 = vmatpush1.msra.mxu0 0.0
  %6081 = vmatprep.subr.mxu0 0.0
  %6082 = vmatpush1.msra.mxu0 0.0
  %6083 = vmatprep.subr.mxu0 0.0
  %6084 = vmatpush1.msra.mxu0 0.0
  %6085 = vmatprep.subr.mxu0 0.0
  %6086 = vmatpush1.msra.mxu0 0.0
  %6087 = vmatprep.subr.mxu0 0.0
  %6088 = vmatpush1.msra.mxu0 0.0
  %6089 = vmatprep.subr.mxu0 0.0
  %6090 = vmatpush1.msra.mxu0 0.0
  %6091 = vmatprep.subr.mxu0 0.0
  %6092 = vmatpush1.msra.mxu0 0.0
  %6093 = vmatprep.subr.mxu0 0.0
  %6094 = vmatpush1.msra.mxu0 0.0
  %6095 = vmatprep.mubr.f32.mxu0 0.0
  %6096 = vmatmul.mubr.f32.gmra.mrb[0].mxu0 %v6029
  %v6097 = vpop.f32.mrb[0].mxu0
  %v6098 = vadd.f32 0.0, %v6097
  %v6099 = vpop.f32.mrb[0].mxu0
  %6100 = vdwg.mxu0
  %v6101 = vadd.f32 %v5380, %v6098
  %v6102 = vxor.u32 %v6101, 2147483648
  %v6103 = vmul.f32 %v6102, 1.442695
  %v6104 = vpow.pop %v6103
  %v6105 = vadd.f32 %v6104, 1.0
  %v6106 = vrcp.pop %v6105
  %v6107 = vmul.f32 1.0, %v6106
  %v6108 = vtanh.pop %v6101
  %v6109 = vmul.f32 %v6107, %v6019
  %6111 = vrot.lane.b32.xlu0 %v6108, 120
  %v6112 = vpop.permute.xlu0 %6111
  %v6114 = vmul.f32 %v6107, %v6112
  %6116 = vrot.lane.b32.xlu0 %v6114, 4
  %v6117 = vpop.permute.xlu0 %6116
  %v6119 = vadd.f32 %v6109, %v6117
  %v6120 = vtanh.pop %v6119
  %6122 = vrot.lane.b32.xlu0 %v6120, 8
  %v6123 = vpop.permute.xlu0 %6122
  %v6125 = vmul.f32 %v6107, %v6123
  %6127 = vrot.lane.b32.xlu0 %v6125, 116
  %v6128 = vpop.permute.xlu0 %6127
  %v6129 = vsel %vm83, %v6128, 0
  %6131 = vmatprep.subr.mxu0 0.0
  %6132 = vmatpush1.msra.mxu0 %v5529
  %6133 = vmatprep.subr.mxu0 0.0
  %6134 = vmatpush1.msra.mxu0 0.0
  %6135 = vmatprep.subr.mxu0 0.0
  %6136 = vmatpush1.msra.mxu0 0.0
  %6137 = vmatprep.subr.mxu0 0.0
  %6138 = vmatpush1.msra.mxu0 0.0
  %6139 = vmatprep.subr.mxu0 0.0
  %6140 = vmatpush1.msra.mxu0 0.0
  %6141 = vmatprep.subr.mxu0 0.0
  %6142 = vmatpush1.msra.mxu0 0.0
  %6143 = vmatprep.subr.mxu0 0.0
  %6144 = vmatpush1.msra.mxu0 0.0
  %6145 = vmatprep.subr.mxu0 0.0
  %6146 = vmatpush1.msra.mxu0 0.0
  %6147 = vmatprep.subr.mxu0 0.0
  %6148 = vmatpush1.msra.mxu0 0.0
  %6149 = vmatprep.subr.mxu0 0.0
  %6150 = vmatpush1.msra.mxu0 0.0
  %6151 = vmatprep.subr.mxu0 0.0
  %6152 = vmatpush1.msra.mxu0 0.0
  %6153 = vmatprep.subr.mxu0 0.0
  %6154 = vmatpush1.msra.mxu0 0.0
  %6155 = vmatprep.subr.mxu0 0.0
  %6156 = vmatpush1.msra.mxu0 0.0
  %6157 = vmatprep.subr.mxu0 0.0
  %6158 = vmatpush1.msra.mxu0 0.0
  %6159 = vmatprep.subr.mxu0 0.0
  %6160 = vmatpush1.msra.mxu0 0.0
  %6161 = vmatprep.subr.mxu0 0.0
  %6162 = vmatpush1.msra.mxu0 0.0
  %6163 = vmatprep.subr.mxu0 0.0
  %6164 = vmatpush1.msra.mxu0 0.0
  %6165 = vmatprep.subr.mxu0 0.0
  %6166 = vmatpush1.msra.mxu0 0.0
  %6167 = vmatprep.subr.mxu0 0.0
  %6168 = vmatpush1.msra.mxu0 0.0
  %6169 = vmatprep.subr.mxu0 0.0
  %6170 = vmatpush1.msra.mxu0 0.0
  %6171 = vmatprep.subr.mxu0 0.0
  %6172 = vmatpush1.msra.mxu0 0.0
  %6173 = vmatprep.subr.mxu0 0.0
  %6174 = vmatpush1.msra.mxu0 0.0
  %6175 = vmatprep.subr.mxu0 0.0
  %6176 = vmatpush1.msra.mxu0 0.0
  %6177 = vmatprep.subr.mxu0 0.0
  %6178 = vmatpush1.msra.mxu0 0.0
  %6179 = vmatprep.subr.mxu0 0.0
  %6180 = vmatpush1.msra.mxu0 0.0
  %6181 = vmatprep.subr.mxu0 0.0
  %6182 = vmatpush1.msra.mxu0 0.0
  %6183 = vmatprep.subr.mxu0 0.0
  %6184 = vmatpush1.msra.mxu0 0.0
  %6185 = vmatprep.subr.mxu0 0.0
  %6186 = vmatpush1.msra.mxu0 0.0
  %6187 = vmatprep.subr.mxu0 0.0
  %6188 = vmatpush1.msra.mxu0 0.0
  %6189 = vmatprep.subr.mxu0 0.0
  %6190 = vmatpush1.msra.mxu0 0.0
  %6191 = vmatprep.subr.mxu0 0.0
  %6192 = vmatpush1.msra.mxu0 0.0
  %6193 = vmatprep.subr.mxu0 0.0
  %6194 = vmatpush1.msra.mxu0 0.0
  %6195 = vmatprep.mubr.f32.mxu0 0.0
  %6196 = vmatmul.mubr.f32.gmra.mrb[0].mxu0 %v6129
  %v6197 = vpop.f32.mrb[0].mxu0
  %v6198 = vadd.f32 0.0, %v6197
  %v6199 = vpop.f32.mrb[0].mxu0
  %6200 = vdwg.mxu0
  %v6201 = vadd.f32 %v5450, %v6198
  %v6202 = vxor.u32 %v6201, 2147483648
  %v6203 = vmul.f32 %v6202, 1.442695
  %v6204 = vpow.pop %v6203
  %v6205 = vadd.f32 %v6204, 1.0
  %v6206 = vrcp.pop %v6205
  %v6207 = vmul.f32 1.0, %v6206
  %v6208 = vtanh.pop %v6201
  %v6209 = vmul.f32 %v6207, %v6119
  %6211 = vrot.lane.b32.xlu0 %v6208, 120
  %v6212 = vpop.permute.xlu0 %6211
  %v6214 = vmul.f32 %v6207, %v6212
  %6216 = vrot.lane.b32.xlu0 %v6214, 4
  %v6217 = vpop.permute.xlu0 %6216
  %v6219 = vadd.f32 %v6209, %v6217
  %v6220 = vtanh.pop %v6219
  %6222 = vrot.lane.b32.xlu0 %v6220, 8
  %v6223 = vpop.permute.xlu0 %6222
  %v6225 = vmul.f32 %v6207, %v6223
  %6227 = vrot.lane.b32.xlu0 %v6225, 116
  %v6228 = vpop.permute.xlu0 %6227
  %v6229 = vsel %vm83, %v6228, 0
  %6231 = vmatprep.subr.mxu0 0.0
  %6232 = vmatpush1.msra.mxu0 %v5529
  %6233 = vmatprep.subr.mxu0 0.0
  %6234 = vmatpush1.msra.mxu0 0.0
  %6235 = vmatprep.subr.mxu0 0.0
  %6236 = vmatpush1.msra.mxu0 0.0
  %6237 = vmatprep.subr.mxu0 0.0
  %6238 = vmatpush1.msra.mxu0 0.0
  %6239 = vmatprep.subr.mxu0 0.0
  %6240 = vmatpush1.msra.mxu0 0.0
  %6241 = vmatprep.subr.mxu0 0.0
  %6242 = vmatpush1.msra.mxu0 0.0
  %6243 = vmatprep.subr.mxu0 0.0
  %6244 = vmatpush1.msra.mxu0 0.0
  %6245 = vmatprep.subr.mxu0 0.0
  %6246 = vmatpush1.msra.mxu0 0.0
  %6247 = vmatprep.subr.mxu0 0.0
  %6248 = vmatpush1.msra.mxu0 0.0
  %6249 = vmatprep.subr.mxu0 0.0
  %6250 = vmatpush1.msra.mxu0 0.0
  %6251 = vmatprep.subr.mxu0 0.0
  %6252 = vmatpush1.msra.mxu0 0.0
  %6253 = vmatprep.subr.mxu0 0.0
  %6254 = vmatpush1.msra.mxu0 0.0
  %6255 = vmatprep.subr.mxu0 0.0
  %6256 = vmatpush1.msra.mxu0 0.0
  %6257 = vmatprep.subr.mxu0 0.0
  %6258 = vmatpush1.msra.mxu0 0.0
  %6259 = vmatprep.subr.mxu0 0.0
  %6260 = vmatpush1.msra.mxu0 0.0
  %6261 = vmatprep.subr.mxu0 0.0
  %6262 = vmatpush1.msra.mxu0 0.0
  %6263 = vmatprep.subr.mxu0 0.0
  %6264 = vmatpush1.msra.mxu0 0.0
  %6265 = vmatprep.subr.mxu0 0.0
  %6266 = vmatpush1.msra.mxu0 0.0
  %6267 = vmatprep.subr.mxu0 0.0
  %6268 = vmatpush1.msra.mxu0 0.0
  %6269 = vmatprep.subr.mxu0 0.0
  %6270 = vmatpush1.msra.mxu0 0.0
  %6271 = vmatprep.subr.mxu0 0.0
  %6272 = vmatpush1.msra.mxu0 0.0
  %6273 = vmatprep.subr.mxu0 0.0
  %6274 = vmatpush1.msra.mxu0 0.0
  %6275 = vmatprep.subr.mxu0 0.0
  %6276 = vmatpush1.msra.mxu0 0.0
  %6277 = vmatprep.subr.mxu0 0.0
  %6278 = vmatpush1.msra.mxu0 0.0
  %6279 = vmatprep.subr.mxu0 0.0
  %6280 = vmatpush1.msra.mxu0 0.0
  %6281 = vmatprep.subr.mxu0 0.0
  %6282 = vmatpush1.msra.mxu0 0.0
  %6283 = vmatprep.subr.mxu0 0.0
  %6284 = vmatpush1.msra.mxu0 0.0
  %6285 = vmatprep.subr.mxu0 0.0
  %6286 = vmatpush1.msra.mxu0 0.0
  %6287 = vmatprep.subr.mxu0 0.0
  %6288 = vmatpush1.msra.mxu0 0.0
  %6289 = vmatprep.subr.mxu0 0.0
  %6290 = vmatpush1.msra.mxu0 0.0
  %6291 = vmatprep.subr.mxu0 0.0
  %6292 = vmatpush1.msra.mxu0 0.0
  %6293 = vmatprep.subr.mxu0 0.0
  %6294 = vmatpush1.msra.mxu0 0.0
  %6295 = vmatprep.mubr.f32.mxu0 0.0
  %6296 = vmatmul.mubr.f32.gmra.mrb[0].mxu0 %v6229
  %v6297 = vpop.f32.mrb[0].mxu0
  %v6298 = vadd.f32 0.0, %v6297
  %v6299 = vpop.f32.mrb[0].mxu0
  %6300 = vdwg.mxu0
  %v6301 = vadd.f32 %v5525, %v6298
  %v6302 = vxor.u32 %v6301, 2147483648
  %v6303 = vmul.f32 %v6302, 1.442695
  %v6304 = vpow.pop %v6303
  %v6305 = vadd.f32 %v6304, 1.0
  %v6306 = vrcp.pop %v6305
  %v6307 = vmul.f32 1.0, %v6306
  %v6308 = vtanh.pop %v6301
  %v6309 = vmul.f32 %v6307, %v6219
  %6311 = vrot.lane.b32.xlu0 %v6308, 120
  %v6312 = vpop.permute.xlu0 %6311
  %v6314 = vmul.f32 %v6307, %v6312
  %6316 = vrot.lane.b32.xlu0 %v6314, 4
  %v6317 = vpop.permute.xlu0 %6316
  %v6319 = vadd.f32 %v6309, %v6317
  %v6320 = vtanh.pop %v6319
  %6322 = vrot.lane.b32.xlu0 %v6320, 8
  %v6323 = vpop.permute.xlu0 %6322
  %v6325 = vmul.f32 %v6307, %v6323
  %vm6327 = vcmask 25600
  %6328 = vst.msk [vmem:[%s17] sm:$0x3] %vm6327, %v5628
  %s6330 = scalar_lea.vmem %s17, 2
  %6331 = vst.msk [vmem:[%s6330] sm:$0x3] %vm6327, %v5728
  %s6333 = scalar_lea.vmem %s17, 4
  %6334 = vst.msk [vmem:[%s6333] sm:$0x3] %vm6327, %v5828
  %s6336 = scalar_lea.vmem %s17, 6
  %6337 = vst.msk [vmem:[%s6336] sm:$0x3] %vm6327, %v5928
  %s6339 = scalar_lea.vmem %s17, 8
  %6340 = vst.msk [vmem:[%s6339] sm:$0x3] %vm6327, %v6028
  %s6342 = scalar_lea.vmem %s17, 10
  %6343 = vst.msk [vmem:[%s6342] sm:$0x3] %vm6327, %v6128
  %s6345 = scalar_lea.vmem %s17, 12
  %6346 = vst.msk [vmem:[%s6345] sm:$0x3] %vm6327, %v6228
  %6348 = vrot.lane.b32.xlu0 %v6325, 116
  %v6349 = vpop.permute.xlu0 %6348
  %s6351 = scalar_lea.vmem %s17, 14
  %6352 = vst.msk [vmem:[%s6351] sm:$0x3] %vm6327, %v6349
  // Predicated region
  $region70: #{autoencoder_forward.1} parent=0 // pred_check
    _
  $region71: #{autoencoder_forward.1} parent=0 // pred_check_branch
    %6354 = sbr.rel (0) target = $region73
  $region72: #{autoencoder_forward.1} parent=0 // pred_region
    _
  $region73: #{autoencoder_forward.1} parent=0 // pred_fallthru
    _
  // Predicated region
  $region74: #{autoencoder_forward.1} parent=0 // pred_check
    _
  $region75: #{autoencoder_forward.1} parent=0 // pred_check_branch
    %6356 = sbr.rel (0) target = $region77
  $region76: #{autoencoder_forward.1} parent=0 // pred_region
    _
  $region77: #{autoencoder_forward.1} parent=0 // pred_fallthru
    _

</llo_original>
